<compile_context>
chip_gen: v5e
topology: v5e:2x2
jax: 0.10.0
libtpu: 0.0.40
codegen_flags: <defaults>
</compile_context>

<pallas_src>
import functools

import jax
import jax.numpy as jnp
from jax.experimental import pallas as pl
from jax.experimental.pallas import tpu as pltpu

E = 300            # embedding_size
C = 300            # output_size (conv out_channels)
NGRAMS = 3
NTAPS = 1 + 2 + 3  # total conv taps across the three ngram sizes


def rl_cnn_kernel(x_ref, w_ref, b_ref, o_ref):
    """One grid step: MB sentences -> (MB, C) pooled representations."""
    MB, S, E_ = x_ref.shape
    C_ = o_ref.shape[-1]
    M = MB * S

    # One tall LHS for the whole sentence block: (MB*S, E).
    x0 = x_ref[...].reshape(M, E_)                     # f32
    # xs[i][r] == x_flat[r + i]; rows that wrap across sentence / block
    # boundaries only reach conv positions t > S - n, which are masked below.
    xs = (x0, jnp.roll(x0, -1, axis=0), jnp.roll(x0, -2, axis=0))
    xs = tuple(v.astype(jnp.bfloat16) for v in xs)     # bf16 operands for MXU

    # Position-within-sentence index, for validity masking along the S axis.
    t_idx = jax.lax.broadcasted_iota(jnp.int32, (1, S, 1), 1)

    total = jnp.zeros((MB, C_), jnp.float32)
    tap = 0
    for n in range(1, NGRAMS + 1):                     # unrolled: n = 1, 2, 3
        # conv_n[r, c] = sum_i dot(x_flat[r + i], W_n[c, 0, i, :])
        c = jnp.dot(xs[0], w_ref[tap], preferred_element_type=jnp.float32)
        tap += 1
        for i in range(1, n):
            c = c + jnp.dot(xs[i], w_ref[tap],
                            preferred_element_type=jnp.float32)
            tap += 1
        c = c.reshape(MB, S, C_)
        if n > 1:
            # Valid conv positions are t <= S - n; mask the rest to -inf so
            # the time-max ignores them (incl. cross-sentence wrapped rows).
            c = jnp.where(t_idx <= S - n, c, -jnp.inf)
        pooled = jnp.max(c, axis=1)                    # (MB, C) time-max
        # Bias + ReLU are monotone, so applying them after the max is exact
        # and does S x less elementwise work than applying them per row.
        pooled = jnp.maximum(pooled + b_ref[n - 1], 0.0)
        total = total + pooled

    o_ref[...] = total.astype(o_ref.dtype)


@functools.partial(jax.jit, static_argnames=("block_b",))
def rl_cnn_pallas(x, w_packed, b_packed, *, block_b=16):
    """Batched forward: x (B, S, E) -> (B, C); each row == module forward."""
    B, S, E_ = x.shape
    C_ = w_packed.shape[-1]
    assert S >= NGRAMS, "sentences must have at least NGRAMS words"

    # Pad the batch up to a multiple of the per-step sentence block.
    n_blocks = pl.cdiv(B, block_b)
    Bp = n_blocks * block_b
    if Bp != B:
        x = jnp.pad(x, ((0, Bp - B), (0, 0), (0, 0)))

    flops = 2 * Bp * S * NTAPS * E_ * C_
    bytes_accessed = (w_packed.size * 2 + Bp * S * E_ * 4
                      + Bp * C_ * 4 + b_packed.size * 4)

    out = pl.pallas_call(
        rl_cnn_kernel,
        out_shape=jax.ShapeDtypeStruct((Bp, C_), jnp.float32),
        grid=(n_blocks,),
        in_specs=[
            pl.BlockSpec((block_b, S, E_), lambda b: (b, 0, 0)),
            # Constant block index: weights are DMA'd once and stay resident.
            pl.BlockSpec((NTAPS, E_, C_), lambda b: (0, 0, 0)),
            pl.BlockSpec((NGRAMS, 1, C_), lambda b: (0, 0, 0)),
        ],
        out_specs=pl.BlockSpec((block_b, C_), lambda b: (b, 0)),
        compiler_params=pltpu.CompilerParams(
            dimension_semantics=("parallel",),
        ),
        cost_estimate=pl.CostEstimate(
            flops=flops, transcendentals=0, bytes_accessed=bytes_accessed),
    )(x, w_packed, b_packed)
    return out[:B]


def rl_cnn_single(x_se, w_packed, b_packed):
    """Exact module interface: (S, E) sentence matrix -> (1, C)."""
    return rl_cnn_pallas(x_se[None], w_packed, b_packed, block_b=8)


def init_params(key):
    """Deterministic Conv2d-style params: weight (C, 1, n, E), bias (C,)."""
    weights, biases = [], []
    for n in (1, 2, 3):
        key, kw, kb = jax.random.split(key, 3)
        bound = 1.0 / jnp.sqrt(n * E)
        w = jax.random.uniform(kw, (C, 1, n, E), jnp.float32, -bound, bound)
        b = jax.random.uniform(kb, (C,), jnp.float32, -bound, bound)
        weights.append(w)
        biases.append(b)
    return weights, biases


def pack_params(weights, biases):
    """Conv weights -> tight per-tap matmul weights (6, E, C) bf16; biases (3,1,C) f32."""
    taps = []
    for n, w in enumerate(weights, start=1):          # w: (C, 1, n, E)
        for i in range(n):
            taps.append(jnp.transpose(w[:, 0, i, :], (1, 0)))        # (E, C)
    w_packed = jnp.stack(taps, axis=0).astype(jnp.bfloat16)          # (6, E, C)
    b_packed = jnp.stack([b.reshape(1, C) for b in biases], axis=0)  # (3, 1, C)
    return w_packed, b_packed


def reference_forward(x, weights, biases):
    """Pure-JAX reference of the PyTorch forward for one sentence, using the
    same bf16-rounded operands the kernel consumes (f32 accumulation)."""
    S = x.shape[0]
    xb = x.astype(jnp.bfloat16).astype(jnp.float32)
    pooled = []
    for n, (w, b) in enumerate(zip(weights, biases), start=1):
        wb = w[:, 0].astype(jnp.bfloat16).astype(jnp.float32)        # (C, n, E)
        L = S - n + 1
        windows = jnp.stack([xb[t:t + n] for t in range(L)], axis=0)  # (L,n,E)
        conv = jnp.einsum("lne,cne->lc", windows, wb) + b             # (L, C)
        pooled.append(jnp.max(jax.nn.relu(conv), axis=0))             # (C,)
    return (pooled[0] + pooled[1] + pooled[2]).reshape(1, C)


if __name__ == "__main__":
    key = jax.random.PRNGKey(0)
    key, kx = jax.random.split(key)

    S = 8    # sentence length (number of words)
    B = 20   # batch of sentences (not a multiple of block_b; exercises pad)
    x = jax.random.normal(kx, (B, S, E), jnp.float32)

    weights, biases = init_params(jax.random.PRNGKey(0))
    w_packed, b_packed = pack_params(weights, biases)  # (6,300,300) bf16, (3,1,300) f32

    # Batched path (weights fetched once, M = 16*8 = 128 per matmul).
    out = rl_cnn_pallas(x, w_packed, b_packed, block_b=16)
    out = jax.block_until_ready(out)

    ref = jnp.stack(
        [reference_forward(x[b], weights, biases)[0] for b in range(B)])
    assert out.shape == (B, C), out.shape
    assert jnp.allclose(out, ref, atol=2e-3, rtol=2e-3), (
        float(jnp.max(jnp.abs(out - ref))))

    # Single-sentence path matching the original module's forward signature.
    out1 = jax.block_until_ready(rl_cnn_single(x[0], w_packed, b_packed))
    assert out1.shape == (1, C), out1.shape
    assert jnp.allclose(out1, ref[0:1], atol=2e-3, rtol=2e-3), (
        float(jnp.max(jnp.abs(out1 - ref[0:1]))))

    print("KERNEL_OK")
</pallas_src>

<mosaic_0001>
module attributes {stable_mosaic.version = 11 : i64} {
  func.func @rl_cnn_kernel(%arg0: i32, %arg1: memref<16x8x300xf32, #tpu.memory_space<vmem>>, %arg2: memref<6x300x300xbf16, #tpu.memory_space<vmem>>, %arg3: memref<3x1x300xf32, #tpu.memory_space<vmem>>, %arg4: memref<16x300xf32, #tpu.memory_space<vmem>>) attributes {dimension_semantics = [#tpu.dimension_semantics<parallel>], iteration_bounds = array<i64: 2>, scalar_prefetch = 0 : i64, scratch_operands = 0 : i64, tpu.core_type = #tpu.core_type<tc>, window_params = [{transform_indices = @transform_0, window_bounds = array<i64: 16, 8, 300>}, {pipeline_mode = #tpu.pipeline_mode<synchronous>, transform_indices = @transform_1, window_bounds = array<i64: 6, 300, 300>}, {pipeline_mode = #tpu.pipeline_mode<synchronous>, transform_indices = @transform_2, window_bounds = array<i64: 3, 1, 300>}, {transform_indices = @transform_3, window_bounds = array<i64: 16, 300>}]} {
    %c0 = arith.constant 0 : index
    %c0_0 = arith.constant 0 : index
    %c0_1 = arith.constant 0 : index
    %0 = vector.load %arg1[%c0, %c0_0, %c0_1] : memref<16x8x300xf32, #tpu.memory_space<vmem>>, vector<16x8x300xf32>
    %1 = vector.shape_cast %0 : vector<16x8x300xf32> to vector<128x300xf32>
    %2 = vector.extract_strided_slice %1 {offsets = [1, 0], sizes = [127, 300], strides = [1, 1]} : vector<128x300xf32> to vector<127x300xf32>
    %3 = vector.extract_strided_slice %1 {offsets = [0, 0], sizes = [1, 300], strides = [1, 1]} : vector<128x300xf32> to vector<1x300xf32>
    %4 = tpu.concatenate %2, %3 in 0 : vector<127x300xf32>, vector<1x300xf32> -> vector<128x300xf32>
    %5 = vector.extract_strided_slice %1 {offsets = [2, 0], sizes = [126, 300], strides = [1, 1]} : vector<128x300xf32> to vector<126x300xf32>
    %6 = vector.extract_strided_slice %1 {offsets = [0, 0], sizes = [2, 300], strides = [1, 1]} : vector<128x300xf32> to vector<2x300xf32>
    %7 = tpu.concatenate %5, %6 in 0 : vector<126x300xf32>, vector<2x300xf32> -> vector<128x300xf32>
    %8 = arith.truncf %1 : vector<128x300xf32> to vector<128x300xbf16>
    %9 = arith.truncf %4 : vector<128x300xf32> to vector<128x300xbf16>
    %10 = arith.truncf %7 : vector<128x300xf32> to vector<128x300xbf16>
    %11 = tpu.iota {dimensions = array<i32: 1>} : vector<1x8x1xi32>
    %cst = arith.constant 0.000000e+00 : f32
    %12 = vector.broadcast %cst : f32 to vector<16x300xf32>
    %c0_2 = arith.constant 0 : index
    %c0_3 = arith.constant 0 : index
    %c0_4 = arith.constant 0 : index
    %13 = vector.load %arg2[%c0_2, %c0_3, %c0_4] : memref<6x300x300xbf16, #tpu.memory_space<vmem>>, vector<1x300x300xbf16>
    %14 = vector.shape_cast %13 : vector<1x300x300xbf16> to vector<300x300xbf16>
    %cst_5 = arith.constant dense<0.000000e+00> : vector<128x300xf32>
    %15 = tpu.matmul %8, %14, %cst_5 {dimension_numbers = #tpu.dot_dimension_numbers<[1], [0], [0], [1], [0, 0, 1, 1], [], []>} : vector<128x300xbf16>, vector<300x300xbf16>, vector<128x300xf32> -> vector<128x300xf32>
    %16 = vector.shape_cast %15 : vector<128x300xf32> to vector<16x8x300xf32>
    %cst_6 = arith.constant dense<0xFF800000> : vector<16x300xf32>
    %17 = vector.multi_reduction <maximumf>, %16, %cst_6 [1] : vector<16x8x300xf32> to vector<16x300xf32>
    %c0_7 = arith.constant 0 : index
    %c0_8 = arith.constant 0 : index
    %c0_9 = arith.constant 0 : index
    %18 = vector.load %arg3[%c0_7, %c0_8, %c0_9] : memref<3x1x300xf32, #tpu.memory_space<vmem>>, vector<1x1x300xf32>
    %19 = vector.shape_cast %18 : vector<1x1x300xf32> to vector<1x300xf32>
    %20 = vector.broadcast %19 : vector<1x300xf32> to vector<16x300xf32>
    %21 = arith.addf %17, %20 : vector<16x300xf32>
    %cst_10 = arith.constant 0.000000e+00 : f32
    %22 = vector.broadcast %cst_10 : f32 to vector<16x300xf32>
    %23 = arith.maximumf %21, %22 : vector<16x300xf32>
    %24 = arith.addf %12, %23 : vector<16x300xf32>
    %c1 = arith.constant 1 : index
    %c0_11 = arith.constant 0 : index
    %c0_12 = arith.constant 0 : index
    %25 = vector.load %arg2[%c1, %c0_11, %c0_12] : memref<6x300x300xbf16, #tpu.memory_space<vmem>>, vector<1x300x300xbf16>
    %26 = vector.shape_cast %25 : vector<1x300x300xbf16> to vector<300x300xbf16>
    %cst_13 = arith.constant dense<0.000000e+00> : vector<128x300xf32>
    %27 = tpu.matmul %8, %26, %cst_13 {dimension_numbers = #tpu.dot_dimension_numbers<[1], [0], [0], [1], [0, 0, 1, 1], [], []>} : vector<128x300xbf16>, vector<300x300xbf16>, vector<128x300xf32> -> vector<128x300xf32>
    %c2 = arith.constant 2 : index
    %c0_14 = arith.constant 0 : index
    %c0_15 = arith.constant 0 : index
    %28 = vector.load %arg2[%c2, %c0_14, %c0_15] : memref<6x300x300xbf16, #tpu.memory_space<vmem>>, vector<1x300x300xbf16>
    %29 = vector.shape_cast %28 : vector<1x300x300xbf16> to vector<300x300xbf16>
    %cst_16 = arith.constant dense<0.000000e+00> : vector<128x300xf32>
    %30 = tpu.matmul %9, %29, %cst_16 {dimension_numbers = #tpu.dot_dimension_numbers<[1], [0], [0], [1], [0, 0, 1, 1], [], []>} : vector<128x300xbf16>, vector<300x300xbf16>, vector<128x300xf32> -> vector<128x300xf32>
    %31 = arith.addf %27, %30 : vector<128x300xf32>
    %32 = vector.shape_cast %31 : vector<128x300xf32> to vector<16x8x300xf32>
    %c6_i32 = arith.constant 6 : i32
    %33 = vector.broadcast %c6_i32 : i32 to vector<1x8x1xi32>
    %34 = arith.cmpi sle, %11, %33 : vector<1x8x1xi32>
    %cst_17 = arith.constant 0xFF800000 : f32
    %35 = vector.shape_cast %34 : vector<1x8x1xi1> to vector<1x8x1xi1>
    %36 = vector.broadcast %35 : vector<1x8x1xi1> to vector<16x8x300xi1>
    %37 = vector.broadcast %cst_17 : f32 to vector<16x8x300xf32>
    %38 = arith.select %36, %32, %37 : vector<16x8x300xi1>, vector<16x8x300xf32>
    %cst_18 = arith.constant dense<0xFF800000> : vector<16x300xf32>
    %39 = vector.multi_reduction <maximumf>, %38, %cst_18 [1] : vector<16x8x300xf32> to vector<16x300xf32>
    %c1_19 = arith.constant 1 : index
    %c0_20 = arith.constant 0 : index
    %c0_21 = arith.constant 0 : index
    %40 = vector.load %arg3[%c1_19, %c0_20, %c0_21] : memref<3x1x300xf32, #tpu.memory_space<vmem>>, vector<1x1x300xf32>
    %41 = vector.shape_cast %40 : vector<1x1x300xf32> to vector<1x300xf32>
    %42 = vector.broadcast %41 : vector<1x300xf32> to vector<16x300xf32>
    %43 = arith.addf %39, %42 : vector<16x300xf32>
    %cst_22 = arith.constant 0.000000e+00 : f32
    %44 = vector.broadcast %cst_22 : f32 to vector<16x300xf32>
    %45 = arith.maximumf %43, %44 : vector<16x300xf32>
    %46 = arith.addf %24, %45 : vector<16x300xf32>
    %c3 = arith.constant 3 : index
    %c0_23 = arith.constant 0 : index
    %c0_24 = arith.constant 0 : index
    %47 = vector.load %arg2[%c3, %c0_23, %c0_24] : memref<6x300x300xbf16, #tpu.memory_space<vmem>>, vector<1x300x300xbf16>
    %48 = vector.shape_cast %47 : vector<1x300x300xbf16> to vector<300x300xbf16>
    %cst_25 = arith.constant dense<0.000000e+00> : vector<128x300xf32>
    %49 = tpu.matmul %8, %48, %cst_25 {dimension_numbers = #tpu.dot_dimension_numbers<[1], [0], [0], [1], [0, 0, 1, 1], [], []>} : vector<128x300xbf16>, vector<300x300xbf16>, vector<128x300xf32> -> vector<128x300xf32>
    %c4 = arith.constant 4 : index
    %c0_26 = arith.constant 0 : index
    %c0_27 = arith.constant 0 : index
    %50 = vector.load %arg2[%c4, %c0_26, %c0_27] : memref<6x300x300xbf16, #tpu.memory_space<vmem>>, vector<1x300x300xbf16>
    %51 = vector.shape_cast %50 : vector<1x300x300xbf16> to vector<300x300xbf16>
    %cst_28 = arith.constant dense<0.000000e+00> : vector<128x300xf32>
    %52 = tpu.matmul %9, %51, %cst_28 {dimension_numbers = #tpu.dot_dimension_numbers<[1], [0], [0], [1], [0, 0, 1, 1], [], []>} : vector<128x300xbf16>, vector<300x300xbf16>, vector<128x300xf32> -> vector<128x300xf32>
    %53 = arith.addf %49, %52 : vector<128x300xf32>
    %c5 = arith.constant 5 : index
    %c0_29 = arith.constant 0 : index
    %c0_30 = arith.constant 0 : index
    %54 = vector.load %arg2[%c5, %c0_29, %c0_30] : memref<6x300x300xbf16, #tpu.memory_space<vmem>>, vector<1x300x300xbf16>
    %55 = vector.shape_cast %54 : vector<1x300x300xbf16> to vector<300x300xbf16>
    %cst_31 = arith.constant dense<0.000000e+00> : vector<128x300xf32>
    %56 = tpu.matmul %10, %55, %cst_31 {dimension_numbers = #tpu.dot_dimension_numbers<[1], [0], [0], [1], [0, 0, 1, 1], [], []>} : vector<128x300xbf16>, vector<300x300xbf16>, vector<128x300xf32> -> vector<128x300xf32>
    %57 = arith.addf %53, %56 : vector<128x300xf32>
    %58 = vector.shape_cast %57 : vector<128x300xf32> to vector<16x8x300xf32>
    %c5_i32 = arith.constant 5 : i32
    %59 = vector.broadcast %c5_i32 : i32 to vector<1x8x1xi32>
    %60 = arith.cmpi sle, %11, %59 : vector<1x8x1xi32>
    %cst_32 = arith.constant 0xFF800000 : f32
    %61 = vector.shape_cast %60 : vector<1x8x1xi1> to vector<1x8x1xi1>
    %62 = vector.broadcast %61 : vector<1x8x1xi1> to vector<16x8x300xi1>
    %63 = vector.broadcast %cst_32 : f32 to vector<16x8x300xf32>
    %64 = arith.select %62, %58, %63 : vector<16x8x300xi1>, vector<16x8x300xf32>
    %cst_33 = arith.constant dense<0xFF800000> : vector<16x300xf32>
    %65 = vector.multi_reduction <maximumf>, %64, %cst_33 [1] : vector<16x8x300xf32> to vector<16x300xf32>
    %c2_34 = arith.constant 2 : index
    %c0_35 = arith.constant 0 : index
    %c0_36 = arith.constant 0 : index
    %66 = vector.load %arg3[%c2_34, %c0_35, %c0_36] : memref<3x1x300xf32, #tpu.memory_space<vmem>>, vector<1x1x300xf32>
    %67 = vector.shape_cast %66 : vector<1x1x300xf32> to vector<1x300xf32>
    %68 = vector.broadcast %67 : vector<1x300xf32> to vector<16x300xf32>
    %69 = arith.addf %65, %68 : vector<16x300xf32>
    %cst_37 = arith.constant 0.000000e+00 : f32
    %70 = vector.broadcast %cst_37 : f32 to vector<16x300xf32>
    %71 = arith.maximumf %69, %70 : vector<16x300xf32>
    %72 = arith.addf %46, %71 : vector<16x300xf32>
    %c0_38 = arith.constant 0 : index
    %c0_39 = arith.constant 0 : index
    %73 = vector.load %arg4[%c0_38, %c0_39] : memref<16x300xf32, #tpu.memory_space<vmem>>, vector<16x300xf32>
    tpu.vector_store %arg4[%c0_38, %c0_39], %72 {strides = array<i32>} : memref<16x300xf32, #tpu.memory_space<vmem>>, vector<16x300xf32>,
    return
  }
  func.func @transform_0(%arg0: i32) -> (i32, i32, i32) {
    %c0_i32 = arith.constant 0 : i32
    %c0_i32_0 = arith.constant 0 : i32
    %c0_i32_1 = arith.constant 0 : i32
    return %arg0, %c0_i32, %c0_i32_0 : i32, i32, i32
  }
  func.func @transform_1(%arg0: i32) -> (i32, i32, i32) {
    %c0_i32 = arith.constant 0 : i32
    %c0_i32_0 = arith.constant 0 : i32
    %c0_i32_1 = arith.constant 0 : i32
    %c0_i32_2 = arith.constant 0 : i32
    return %c0_i32, %c0_i32_0, %c0_i32_1 : i32, i32, i32
  }
  func.func @transform_2(%arg0: i32) -> (i32, i32, i32) {
    %c0_i32 = arith.constant 0 : i32
    %c0_i32_0 = arith.constant 0 : i32
    %c0_i32_1 = arith.constant 0 : i32
    %c0_i32_2 = arith.constant 0 : i32
    return %c0_i32, %c0_i32_0, %c0_i32_1 : i32, i32, i32
  }
  func.func @transform_3(%arg0: i32) -> (i32, i32) {
    %c0_i32 = arith.constant 0 : i32
    %c0_i32_0 = arith.constant 0 : i32
    return %arg0, %c0_i32 : i32, i32
  }
}

</mosaic_0001>

<llo_original>
// kernel: rl_cnn_pallas.1
$region0: #{rl_cnn_pallas.1}
  #allocation0 [shape = 'u32[]', space=smem, size = 0x4, offset = 0x4, fixed_abs, tag = 'smem constant byte address 0x4 - core index']
  #allocation1 [shape = 'u32[72,128]{1,0:T(1,128)}', space=vmem, size = 0x9000, scoped, tag = 'internal scratch']
  %s0 = inlined_call_operand.vmem [shape: f32[32,8,300], index: 0, kind: input, shape index: {}]
  %s1 = inlined_call_operand.hbm [shape: bf16[6,300,300], index: 1, kind: input, shape index: {}]
  %s2 = inlined_call_operand.hbm [shape: f32[3,1,300], index: 2, kind: input, shape index: {}]
  %s3 = inlined_call_operand.vmem [shape: f32[32,300], index: 3, kind: output, shape index: {}]
  %s4 = sld [smem:[#allocation0]]
  $region53: #{rl_cnn_pallas.1} parent=0
    _
  %s6 = ssub.s32 1, %s4
  %s7 = scalar_select 0, %s6, %s4
  $region1: #{rl_cnn_pallas.1} parent=0
    #allocation2 [shape = 'u8[1400832]{0}', space=vmem, size = 0x156000, scoped, tag = 'input window, operand 1, single buffered']
    #allocation3 [shape = 's32[2]{0}', space=sflag, size = 0x8, scoped, tag = 'scoped memory for rl_cnn_pallas.1']
    #allocation4 [shape = 'u8[4608]{0}', space=vmem, size = 0x1400, scoped, tag = 'input window, operand 2, single buffered']
    #allocation5 [shape = 's32[1]{0}', space=sflag, size = 0x4, scoped, tag = 'scoped memory for rl_cnn_pallas.1']
    %8 = vsyncpa [#allocation3], 0
    %9 = vsyncpa [#allocation5], 0
    loop: start=0, step=1, limit=4
    $region2: #{rl_cnn_pallas.1} parent=1 // loop_pre_header
      _
    $region3: #{rl_cnn_pallas.1} parent=1 // loop_header
      %s11 = sphi 0, %s15
      %p12 = scmp.ge.s32.totalorder %s11, 4
      %s21 = sphi 0, %s23
      %s24 = sphi 0, %s21
      %s25 = sphi 0, %s24
      %s41 = sphi 0, %s25
      %s45 = sphi 0, %s45
      %s47 = sphi 0, %s45
      %s48 = sphi 0, %s47
      %s62 = sphi 0, %s48
      %s66 = sphi 0, %s66
      %s68 = sphi 0, %s66
      %s69 = sphi 0, %s68
      %s83 = sphi 0, %s69
      %s89 = sphi 0, %s91
      %s92 = sphi 0, %s89
      %s93 = sphi 0, %s92
      %s109 = sphi 0, %s93
    $region4: #{rl_cnn_pallas.1} parent=1 // loop_header_branch
      %14 = sbr.rel (%p12) target = $region8
    $region5: #{rl_cnn_pallas.1} parent=1 // loop_body
      %s16 = ssub.s32 %s11, 1
      %s17 = ssub.s32 %s11, 2
      %s18 = sadd.s32 %s11, 1
      %s19 = ssub.s32 %s11, %s18
      %p20 = scmp.eq.s32.totalorder %s19, 0
      %s22 = sadd.s32 %s21, 1
      %s23 = scalar_select %p20, %s21, %s22
      %p26 = pneg %p20
      %p27 = scmp.eq.s32.totalorder %s11, 1
      %p28 = por %p26, %p27
      %p29 = scmp.ne.s32.totalorder %s21, %s24
      %p30 = scmp.eq.s32.totalorder %s11, 0
      %p31 = por %p29, %p30
      %p32 = scmp.ne.s32.totalorder %s21, %s24
      %p33 = scmp.eq.s32.totalorder %s16, 1
      %p34 = por %p32, %p33
      %p35 = scmp.ne.s32.totalorder %s24, %s25
      %p36 = scmp.eq.s32.totalorder %s16, 0
      %p37 = por %p35, %p36
      %p38 = scmp.ne.s32.totalorder %s24, %s25
      %p39 = scmp.eq.s32.totalorder %s17, 1
      %p40 = por %p38, %p39
      %p42 = scmp.ne.s32.totalorder %s25, %s41
      %p43 = scmp.eq.s32.totalorder %s17, 0
      %p44 = por %p42, %p43
      %s46 = sadd.s32 %s45, 1
      %p49 = scmp.eq.s32.totalorder %s11, 1
      %p50 = scmp.ne.s32.totalorder %s45, %s47
      %p51 = scmp.eq.s32.totalorder %s11, 0
      %p52 = por %p50, %p51
      %p53 = scmp.ne.s32.totalorder %s45, %s47
      %p54 = scmp.eq.s32.totalorder %s16, 1
      %p55 = por %p53, %p54
      %p56 = scmp.ne.s32.totalorder %s47, %s48
      %p57 = scmp.eq.s32.totalorder %s16, 0
      %p58 = por %p56, %p57
      %p59 = scmp.ne.s32.totalorder %s47, %s48
      %p60 = scmp.eq.s32.totalorder %s17, 1
      %p61 = por %p59, %p60
      %p63 = scmp.ne.s32.totalorder %s48, %s62
      %p64 = scmp.eq.s32.totalorder %s17, 0
      %p65 = por %p63, %p64
      %s67 = sadd.s32 %s66, 1
      %p70 = scmp.eq.s32.totalorder %s11, 1
      %p71 = scmp.ne.s32.totalorder %s66, %s68
      %p72 = scmp.eq.s32.totalorder %s11, 0
      %p73 = por %p71, %p72
      %p74 = scmp.ne.s32.totalorder %s66, %s68
      %p75 = scmp.eq.s32.totalorder %s16, 1
      %p76 = por %p74, %p75
      %p77 = scmp.ne.s32.totalorder %s68, %s69
      %p78 = scmp.eq.s32.totalorder %s16, 0
      %p79 = por %p77, %p78
      %p80 = scmp.ne.s32.totalorder %s68, %s69
      %p81 = scmp.eq.s32.totalorder %s17, 1
      %p82 = por %p80, %p81
      %p84 = scmp.ne.s32.totalorder %s69, %s83
      %p85 = scmp.eq.s32.totalorder %s17, 0
      %p86 = por %p84, %p85
      %s87 = ssub.s32 %s11, %s18
      %p88 = scmp.eq.s32.totalorder %s87, 0
      %s90 = sadd.s32 %s89, 1
      %s91 = scalar_select %p88, %s89, %s90
      %p94 = pneg %p88
      %p95 = scmp.eq.s32.totalorder %s11, 1
      %p96 = por %p94, %p95
      %p97 = scmp.ne.s32.totalorder %s89, %s92
      %p98 = scmp.eq.s32.totalorder %s11, 0
      %p99 = por %p97, %p98
      %p100 = scmp.ne.s32.totalorder %s89, %s92
      %p101 = scmp.eq.s32.totalorder %s16, 1
      %p102 = por %p100, %p101
      %p103 = scmp.ne.s32.totalorder %s92, %s93
      %p104 = scmp.eq.s32.totalorder %s16, 0
      %p105 = por %p103, %p104
      %p106 = scmp.ne.s32.totalorder %s92, %s93
      %p107 = scmp.eq.s32.totalorder %s17, 1
      %p108 = por %p106, %p107
      %p110 = scmp.ne.s32.totalorder %s93, %s109
      %p111 = scmp.eq.s32.totalorder %s17, 0
      %p112 = por %p110, %p111
      %p113 = scmp.le.s32.totalorder 1, %s11
      %p114 = scmp.lt.s32.totalorder %s11, 3
      %p115 = pnand %p113, %p114
      %p116 = pneg %p115
      // Predicated region
      $region9: #{rl_cnn_pallas.1} parent=5 // pred_check
        _
      $region10: #{rl_cnn_pallas.1} parent=5 // pred_check_branch
        %118 = sbr.rel (%p115) target = $region12
      $region11: #{rl_cnn_pallas.1} parent=5 // pred_region
        %s119 = ssub.s32 %s11, 1
        // Predicated region
        $region13: #{rl_cnn_pallas.1} parent=11 // pred_check
          %p120 = pneg %p58
        $region14: #{rl_cnn_pallas.1} parent=11 // pred_check_branch
          %122 = sbr.rel (%p120) target = $region16
        $region15: #{rl_cnn_pallas.1} parent=11 // pred_region
          %124 = vsyncadd [#allocation3], 0
          %s125 = sshll.u32 %s1, 4
          %s126 = int_to_ptr.hbm [resolvable:$true] %s125
          %s127 = sshll.u32 [#allocation2], 4
          %s128 = int_to_ptr.vmem [resolvable:$true] %s127
          %133 = dma.hbm_to_vmem [thread:$0]  %s126, 43776, %s128, [#allocation3], 192, 192, 12
        $region16: #{rl_cnn_pallas.1} parent=11 // pred_fallthru
          _
        // Predicated region
        $region17: #{rl_cnn_pallas.1} parent=11 // pred_check
          %p134 = pneg %p79
        $region18: #{rl_cnn_pallas.1} parent=11 // pred_check_branch
          %136 = sbr.rel (%p134) target = $region20
        $region19: #{rl_cnn_pallas.1} parent=11 // pred_region
          %138 = vsyncadd [#allocation5], 0
          %s139 = sshll.u32 %s2, 4
          %s140 = int_to_ptr.hbm [resolvable:$true] %s139
          %s141 = sshll.u32 [#allocation4], 4
          %s142 = int_to_ptr.vmem [resolvable:$true] %s141
          %147 = dma.hbm_to_vmem [thread:$0]  %s140, 144, %s142, [#allocation5], 48, 48, 3
        $region20: #{rl_cnn_pallas.1} parent=11 // pred_fallthru
          _
      $region12: #{rl_cnn_pallas.1} parent=5 // pred_fallthru
        _
      %p148 = scmp.lt.s32.totalorder %s11, 2
      // Predicated region
      $region21: #{rl_cnn_pallas.1} parent=5 // pred_check
        %p149 = pneg %p148
      $region22: #{rl_cnn_pallas.1} parent=5 // pred_check_branch
        %151 = sbr.rel (%p149) target = $region24
      $region23: #{rl_cnn_pallas.1} parent=5 // pred_region
        // Predicated region
        $region25: #{rl_cnn_pallas.1} parent=23 // pred_check
          %p152 = pneg %p31
        $region26: #{rl_cnn_pallas.1} parent=23 // pred_check_branch
          %154 = sbr.rel (%p152) target = $region28
        $region27: #{rl_cnn_pallas.1} parent=23 // pred_region
          %s155 = smul.u32 16, %s11
          %p156 = scmp.lt.s32.totalorder %s155, 31
          %s157 = scalar_select %p156, %s155, 31
          %s158 = smul.addr %s157, 3
          %s159 = smul.addr %s158, 8
          %s160 = scalar_lea.vmem %s0, %s159
          %s161 = smul.u32 16, %s11
        $region28: #{rl_cnn_pallas.1} parent=23 // pred_fallthru
          _
      $region24: #{rl_cnn_pallas.1} parent=5 // pred_fallthru
        _
      %p162 = scmp.le.s32.totalorder 1, %s11
      %p163 = scmp.lt.s32.totalorder %s11, 3
      %p164 = pnand %p162, %p163
      %p165 = pneg %p164
      // Predicated region
      $region29: #{rl_cnn_pallas.1} parent=5 // pred_check
        _
      $region30: #{rl_cnn_pallas.1} parent=5 // pred_check_branch
        %167 = sbr.rel (%p164) target = $region32
      $region31: #{rl_cnn_pallas.1} parent=5 // pred_region
        %s168 = ssub.s32 %s11, 1
        // Predicated region
        $region33: #{rl_cnn_pallas.1} parent=31 // pred_check
          %p169 = pneg %p58
        $region34: #{rl_cnn_pallas.1} parent=31 // pred_check_branch
          %171 = sbr.rel (%p169) target = $region36
        $region35: #{rl_cnn_pallas.1} parent=31 // pred_region
          %173 = dma.done [#allocation3], 43776
        $region36: #{rl_cnn_pallas.1} parent=31 // pred_fallthru
          _
        // Predicated region
        $region37: #{rl_cnn_pallas.1} parent=31 // pred_check
          %p174 = pneg %p79
        $region38: #{rl_cnn_pallas.1} parent=31 // pred_check_branch
          %176 = sbr.rel (%p174) target = $region40
        $region39: #{rl_cnn_pallas.1} parent=31 // pred_region
          %178 = dma.done [#allocation5], 144
        $region40: #{rl_cnn_pallas.1} parent=31 // pred_fallthru
          _
        %s179 = smul.u32 16, %s16
        %p180 = scmp.lt.s32.totalorder %s179, 31
        %s181 = scalar_select %p180, %s179, 31
        %s182 = smul.addr %s181, 3
        %s183 = smul.addr %s182, 8
        %s184 = scalar_lea.vmem %s0, %s183
        %p185 = pneg %p37
        %p186 = pneg %p34
        %p187 = pneg %p58
        %p188 = pneg %p55
        %p189 = pneg %p79
        %p190 = pneg %p76
        %p191 = pneg %p105
        %p192 = pneg %p102
        %s193 = smul.u32 2, %s16
        %p194 = scmp.lt.s32.totalorder %s193, 3
        %s195 = scalar_select %p194, %s193, 3
        %s196 = smul.addr %s195, 3
        %s197 = smul.addr %s196, 8
        %s198 = scalar_lea.vmem %s3, %s197
        %s199 = smul.u32 16, %s16
        %p200 = scmp.lt.s32.totalorder %s199, 31
        %s201 = scalar_select %p200, %s199, 31
        %s202 = smul.addr %s201, 3
        %s203 = smul.addr %s202, 8
        %s204 = scalar_lea.vmem %s0, %s203
        %s205 = smul.u32 16, %s16
        %s206 = smul.u32 2, %s16
        %p207 = scmp.lt.s32.totalorder %s206, 3
        %s208 = scalar_select %p207, %s206, 3
        %s209 = smul.addr %s208, 3
        %s210 = smul.addr %s209, 8
        %s211 = scalar_lea.vmem %s3, %s210
        %s212 = smul.u32 2, %s16
        %v214 = vld [vmem:[%s204] sm:$0xff]
        %v215 = vld [vmem:[%s204 + $0x8] sm:$0xff]
        %v216 = vld [vmem:[%s204 + $0x10] sm:$0xff]
        %v217 = vld [vmem:[%s204 + $0x18] sm:$0xff]
        %v218 = vld [vmem:[%s204 + $0x20] sm:$0xff]
        %v219 = vld [vmem:[%s204 + $0x28] sm:$0xff]
        %v220 = vld [vmem:[%s204 + $0x30] sm:$0xff]
        %v221 = vld [vmem:[%s204 + $0x38] sm:$0xff]
        %v222 = vld [vmem:[%s204 + $0x40] sm:$0xff]
        %v223 = vld [vmem:[%s204 + $0x48] sm:$0xff]
        %v224 = vld [vmem:[%s204 + $0x50] sm:$0xff]
        %v225 = vld [vmem:[%s204 + $0x58] sm:$0xff]
        %v226 = vld [vmem:[%s204 + $0x60] sm:$0xff]
        %v227 = vld [vmem:[%s204 + $0x68] sm:$0xff]
        %v228 = vld [vmem:[%s204 + $0x70] sm:$0xff]
        %v229 = vld [vmem:[%s204 + $0x78] sm:$0xff]
        %v230 = vld [vmem:[%s204 + $0x80] sm:$0xff]
        %v231 = vld [vmem:[%s204 + $0x88] sm:$0xff]
        %v232 = vld [vmem:[%s204 + $0x90] sm:$0xff]
        %v233 = vld [vmem:[%s204 + $0x98] sm:$0xff]
        %v234 = vld [vmem:[%s204 + $0xa0] sm:$0xff]
        %v235 = vld [vmem:[%s204 + $0xa8] sm:$0xff]
        %v236 = vld [vmem:[%s204 + $0xb0] sm:$0xff]
        %v237 = vld [vmem:[%s204 + $0xb8] sm:$0xff]
        %v238 = vld [vmem:[%s204 + $0xc0] sm:$0xff]
        %v239 = vld [vmem:[%s204 + $0xc8] sm:$0xff]
        %v240 = vld [vmem:[%s204 + $0xd0] sm:$0xff]
        %v241 = vld [vmem:[%s204 + $0xd8] sm:$0xff]
        %v242 = vld [vmem:[%s204 + $0xe0] sm:$0xff]
        %v243 = vld [vmem:[%s204 + $0xe8] sm:$0xff]
        %v244 = vld [vmem:[%s204 + $0xf0] sm:$0xff]
        %v245 = vld [vmem:[%s204 + $0xf8] sm:$0xff]
        %v246 = vld [vmem:[%s204 + $0x100] sm:$0xff]
        %v247 = vld [vmem:[%s204 + $0x108] sm:$0xff]
        %v248 = vld [vmem:[%s204 + $0x110] sm:$0xff]
        %v249 = vld [vmem:[%s204 + $0x118] sm:$0xff]
        %v250 = vld [vmem:[%s204 + $0x120] sm:$0xff]
        %v251 = vld [vmem:[%s204 + $0x128] sm:$0xff]
        %v252 = vld [vmem:[%s204 + $0x130] sm:$0xff]
        %v253 = vld [vmem:[%s204 + $0x138] sm:$0xff]
        %v254 = vld [vmem:[%s204 + $0x140] sm:$0xff]
        %v255 = vld [vmem:[%s204 + $0x148] sm:$0xff]
        %v256 = vld [vmem:[%s204 + $0x150] sm:$0xff]
        %v257 = vld [vmem:[%s204 + $0x158] sm:$0xff]
        %v258 = vld [vmem:[%s204 + $0x160] sm:$0xff]
        %v259 = vld [vmem:[%s204 + $0x168] sm:$0xff]
        %v260 = vld [vmem:[%s204 + $0x170] sm:$0xff]
        %v261 = vld [vmem:[%s204 + $0x178] sm:$0xff]
        %vm310 = vcmask 1046528
        %v311 = vrot.slane %v214, 1
        %v312 = vrot.slane %v217, 1
        %v313 = vsel %vm310, %v311, %v312
        %v314 = vrot.slane %v215, 1
        %v315 = vrot.slane %v218, 1
        %v316 = vsel %vm310, %v314, %v315
        %v317 = vrot.slane %v216, 1
        %v318 = vrot.slane %v219, 1
        %v319 = vsel %vm310, %v317, %v318
        %v320 = vrot.slane %v220, 1
        %v321 = vsel %vm310, %v312, %v320
        %v322 = vrot.slane %v221, 1
        %v323 = vsel %vm310, %v315, %v322
        %v324 = vrot.slane %v222, 1
        %v325 = vsel %vm310, %v318, %v324
        %v326 = vrot.slane %v223, 1
        %v327 = vsel %vm310, %v320, %v326
        %v328 = vrot.slane %v224, 1
        %v329 = vsel %vm310, %v322, %v328
        %v330 = vrot.slane %v225, 1
        %v331 = vsel %vm310, %v324, %v330
        %v332 = vrot.slane %v226, 1
        %v333 = vsel %vm310, %v326, %v332
        %v334 = vrot.slane %v227, 1
        %v335 = vsel %vm310, %v328, %v334
        %v336 = vrot.slane %v228, 1
        %v337 = vsel %vm310, %v330, %v336
        %v338 = vrot.slane %v229, 1
        %v339 = vsel %vm310, %v332, %v338
        %v340 = vrot.slane %v230, 1
        %v341 = vsel %vm310, %v334, %v340
        %v342 = vrot.slane %v231, 1
        %v343 = vsel %vm310, %v336, %v342
        %v344 = vrot.slane %v232, 1
        %v345 = vsel %vm310, %v338, %v344
        %v346 = vrot.slane %v233, 1
        %v347 = vsel %vm310, %v340, %v346
        %v348 = vrot.slane %v234, 1
        %v349 = vsel %vm310, %v342, %v348
        %v350 = vrot.slane %v235, 1
        %v351 = vsel %vm310, %v344, %v350
        %v352 = vrot.slane %v236, 1
        %v353 = vsel %vm310, %v346, %v352
        %v354 = vrot.slane %v237, 1
        %v355 = vsel %vm310, %v348, %v354
        %v356 = vrot.slane %v238, 1
        %v357 = vsel %vm310, %v350, %v356
        %v358 = vrot.slane %v239, 1
        %v359 = vsel %vm310, %v352, %v358
        %v360 = vrot.slane %v240, 1
        %v361 = vsel %vm310, %v354, %v360
        %v362 = vrot.slane %v241, 1
        %v363 = vsel %vm310, %v356, %v362
        %v364 = vrot.slane %v242, 1
        %v365 = vsel %vm310, %v358, %v364
        %v366 = vrot.slane %v243, 1
        %v367 = vsel %vm310, %v360, %v366
        %v368 = vrot.slane %v244, 1
        %v369 = vsel %vm310, %v362, %v368
        %v370 = vrot.slane %v245, 1
        %v371 = vsel %vm310, %v364, %v370
        %v372 = vrot.slane %v246, 1
        %v373 = vsel %vm310, %v366, %v372
        %v374 = vrot.slane %v247, 1
        %v375 = vsel %vm310, %v368, %v374
        %v376 = vrot.slane %v248, 1
        %v377 = vsel %vm310, %v370, %v376
        %v378 = vrot.slane %v249, 1
        %v379 = vsel %vm310, %v372, %v378
        %v380 = vrot.slane %v250, 1
        %v381 = vsel %vm310, %v374, %v380
        %v382 = vrot.slane %v251, 1
        %v383 = vsel %vm310, %v376, %v382
        %v384 = vrot.slane %v252, 1
        %v385 = vsel %vm310, %v378, %v384
        %v386 = vrot.slane %v253, 1
        %v387 = vsel %vm310, %v380, %v386
        %v388 = vrot.slane %v254, 1
        %v389 = vsel %vm310, %v382, %v388
        %v390 = vrot.slane %v255, 1
        %v391 = vsel %vm310, %v384, %v390
        %v392 = vrot.slane %v256, 1
        %v393 = vsel %vm310, %v386, %v392
        %v394 = vrot.slane %v257, 1
        %v395 = vsel %vm310, %v388, %v394
        %v396 = vrot.slane %v258, 1
        %v397 = vsel %vm310, %v390, %v396
        %v398 = vrot.slane %v259, 1
        %v399 = vsel %vm310, %v392, %v398
        %v400 = vrot.slane %v260, 1
        %v401 = vsel %vm310, %v394, %v400
        %v402 = vrot.slane %v261, 1
        %v403 = vsel %vm310, %v396, %v402
        %v455 = vsel %vm310, %v398, %v311
        %v456 = vsel %vm310, %v400, %v314
        %v457 = vsel %vm310, %v402, %v317
        %vm458 = vcmask 1045504
        %v459 = vrot.slane %v214, 2
        %v460 = vrot.slane %v217, 2
        %v461 = vsel %vm458, %v459, %v460
        %v462 = vrot.slane %v215, 2
        %v463 = vrot.slane %v218, 2
        %v464 = vsel %vm458, %v462, %v463
        %v465 = vrot.slane %v216, 2
        %v466 = vrot.slane %v219, 2
        %v467 = vsel %vm458, %v465, %v466
        %v468 = vrot.slane %v220, 2
        %v469 = vsel %vm458, %v460, %v468
        %v470 = vrot.slane %v221, 2
        %v471 = vsel %vm458, %v463, %v470
        %v472 = vrot.slane %v222, 2
        %v473 = vsel %vm458, %v466, %v472
        %v474 = vrot.slane %v223, 2
        %v475 = vsel %vm458, %v468, %v474
        %v476 = vrot.slane %v224, 2
        %v477 = vsel %vm458, %v470, %v476
        %v478 = vrot.slane %v225, 2
        %v479 = vsel %vm458, %v472, %v478
        %v480 = vrot.slane %v226, 2
        %v481 = vsel %vm458, %v474, %v480
        %v482 = vrot.slane %v227, 2
        %v483 = vsel %vm458, %v476, %v482
        %v484 = vrot.slane %v228, 2
        %v485 = vsel %vm458, %v478, %v484
        %v486 = vrot.slane %v229, 2
        %v487 = vsel %vm458, %v480, %v486
        %v488 = vrot.slane %v230, 2
        %v489 = vsel %vm458, %v482, %v488
        %v490 = vrot.slane %v231, 2
        %v491 = vsel %vm458, %v484, %v490
        %v492 = vrot.slane %v232, 2
        %v493 = vsel %vm458, %v486, %v492
        %v494 = vrot.slane %v233, 2
        %v495 = vsel %vm458, %v488, %v494
        %v496 = vrot.slane %v234, 2
        %v497 = vsel %vm458, %v490, %v496
        %v498 = vrot.slane %v235, 2
        %v499 = vsel %vm458, %v492, %v498
        %v500 = vrot.slane %v236, 2
        %v501 = vsel %vm458, %v494, %v500
        %v502 = vrot.slane %v237, 2
        %v503 = vsel %vm458, %v496, %v502
        %v504 = vrot.slane %v238, 2
        %v505 = vsel %vm458, %v498, %v504
        %v506 = vrot.slane %v239, 2
        %v507 = vsel %vm458, %v500, %v506
        %v508 = vrot.slane %v240, 2
        %v509 = vsel %vm458, %v502, %v508
        %v510 = vrot.slane %v241, 2
        %v511 = vsel %vm458, %v504, %v510
        %v512 = vrot.slane %v242, 2
        %v513 = vsel %vm458, %v506, %v512
        %v514 = vrot.slane %v243, 2
        %v515 = vsel %vm458, %v508, %v514
        %v516 = vrot.slane %v244, 2
        %v517 = vsel %vm458, %v510, %v516
        %v518 = vrot.slane %v245, 2
        %v519 = vsel %vm458, %v512, %v518
        %v520 = vrot.slane %v246, 2
        %v521 = vsel %vm458, %v514, %v520
        %v522 = vrot.slane %v247, 2
        %v523 = vsel %vm458, %v516, %v522
        %v524 = vrot.slane %v248, 2
        %v525 = vsel %vm458, %v518, %v524
        %v526 = vrot.slane %v249, 2
        %v527 = vsel %vm458, %v520, %v526
        %v528 = vrot.slane %v250, 2
        %v529 = vsel %vm458, %v522, %v528
        %v530 = vrot.slane %v251, 2
        %v531 = vsel %vm458, %v524, %v530
        %v532 = vrot.slane %v252, 2
        %v533 = vsel %vm458, %v526, %v532
        %v534 = vrot.slane %v253, 2
        %v535 = vsel %vm458, %v528, %v534
        %v536 = vrot.slane %v254, 2
        %v537 = vsel %vm458, %v530, %v536
        %v538 = vrot.slane %v255, 2
        %v539 = vsel %vm458, %v532, %v538
        %v540 = vrot.slane %v256, 2
        %v541 = vsel %vm458, %v534, %v540
        %v542 = vrot.slane %v257, 2
        %v543 = vsel %vm458, %v536, %v542
        %v544 = vrot.slane %v258, 2
        %v545 = vsel %vm458, %v538, %v544
        %v546 = vrot.slane %v259, 2
        %v547 = vsel %vm458, %v540, %v546
        %v548 = vrot.slane %v260, 2
        %v549 = vsel %vm458, %v542, %v548
        %v550 = vrot.slane %v261, 2
        %v551 = vsel %vm458, %v544, %v550
        %v603 = vsel %vm458, %v546, %v459
        %v604 = vsel %vm458, %v548, %v462
        %v605 = vsel %vm458, %v550, %v465
        %v606 = vpack.c.bf16 %v217, %v214
        %v607 = vpack.c.bf16 %v218, %v215
        %v608 = vpack.c.bf16 %v219, %v216
        %v609 = vpack.c.bf16 %v223, %v220
        %v610 = vpack.c.bf16 %v224, %v221
        %v611 = vpack.c.bf16 %v225, %v222
        %v612 = vpack.c.bf16 %v229, %v226
        %v613 = vpack.c.bf16 %v230, %v227
        %v614 = vpack.c.bf16 %v231, %v228
        %v615 = vpack.c.bf16 %v235, %v232
        %v616 = vpack.c.bf16 %v236, %v233
        %v617 = vpack.c.bf16 %v237, %v234
        %v618 = vpack.c.bf16 %v241, %v238
        %v619 = vpack.c.bf16 %v242, %v239
        %v620 = vpack.c.bf16 %v243, %v240
        %v621 = vpack.c.bf16 %v247, %v244
        %v622 = vpack.c.bf16 %v248, %v245
        %v623 = vpack.c.bf16 %v249, %v246
        %v624 = vpack.c.bf16 %v253, %v250
        %v625 = vpack.c.bf16 %v254, %v251
        %v626 = vpack.c.bf16 %v255, %v252
        %v627 = vpack.c.bf16 %v259, %v256
        %v628 = vpack.c.bf16 %v260, %v257
        %v629 = vpack.c.bf16 %v261, %v258
        %v630 = vpack.c.bf16 %v321, %v313
        %v631 = vpack.c.bf16 %v323, %v316
        %v632 = vpack.c.bf16 %v325, %v319
        %v633 = vpack.c.bf16 %v333, %v327
        %v634 = vpack.c.bf16 %v335, %v329
        %v635 = vpack.c.bf16 %v337, %v331
        %v636 = vpack.c.bf16 %v345, %v339
        %v637 = vpack.c.bf16 %v347, %v341
        %v638 = vpack.c.bf16 %v349, %v343
        %v639 = vpack.c.bf16 %v357, %v351
        %v640 = vpack.c.bf16 %v359, %v353
        %v641 = vpack.c.bf16 %v361, %v355
        %v642 = vpack.c.bf16 %v369, %v363
        %v643 = vpack.c.bf16 %v371, %v365
        %v644 = vpack.c.bf16 %v373, %v367
        %v645 = vpack.c.bf16 %v381, %v375
        %v646 = vpack.c.bf16 %v383, %v377
        %v647 = vpack.c.bf16 %v385, %v379
        %v648 = vpack.c.bf16 %v393, %v387
        %v649 = vpack.c.bf16 %v395, %v389
        %v650 = vpack.c.bf16 %v397, %v391
        %v651 = vpack.c.bf16 %v455, %v399
        %v652 = vpack.c.bf16 %v456, %v401
        %v653 = vpack.c.bf16 %v457, %v403
        %v654 = vpack.c.bf16 %v469, %v461
        %v655 = vpack.c.bf16 %v471, %v464
        %v656 = vpack.c.bf16 %v473, %v467
        %v657 = vpack.c.bf16 %v481, %v475
        %v658 = vpack.c.bf16 %v483, %v477
        %v659 = vpack.c.bf16 %v485, %v479
        %v660 = vpack.c.bf16 %v493, %v487
        %v661 = vpack.c.bf16 %v495, %v489
        %v662 = vpack.c.bf16 %v497, %v491
        %v663 = vpack.c.bf16 %v505, %v499
        %v664 = vpack.c.bf16 %v507, %v501
        %v665 = vpack.c.bf16 %v509, %v503
        %v666 = vpack.c.bf16 %v517, %v511
        %v667 = vpack.c.bf16 %v519, %v513
        %v668 = vpack.c.bf16 %v521, %v515
        %v669 = vpack.c.bf16 %v529, %v523
        %v670 = vpack.c.bf16 %v531, %v525
        %v671 = vpack.c.bf16 %v533, %v527
        %v672 = vpack.c.bf16 %v541, %v535
        %v673 = vpack.c.bf16 %v543, %v537
        %v674 = vpack.c.bf16 %v545, %v539
        %v675 = vpack.c.bf16 %v603, %v547
        %v676 = vpack.c.bf16 %v604, %v549
        %v677 = vpack.c.bf16 %v605, %v551
        %v678 = vlaneseq
        %v679 = vshrl.u32 %v678, 7
        %v680 = vld [vmem:[#allocation2] sm:$0xff]
        %v681 = vld [vmem:[#allocation2 + $0x8] sm:$0xf]
        %v682 = vld [vmem:[#allocation2 + $0xc] sm:$0xff]
        %v683 = vld [vmem:[#allocation2 + $0x14] sm:$0xf]
        %v684 = vld [vmem:[#allocation2 + $0x18] sm:$0xff]
        %v685 = vld [vmem:[#allocation2 + $0x20] sm:$0xf]
        %v686 = vld [vmem:[#allocation2 + $0x24] sm:$0xff]
        %v687 = vld [vmem:[#allocation2 + $0x2c] sm:$0xf]
        %v688 = vld [vmem:[#allocation2 + $0x30] sm:$0xff]
        %v689 = vld [vmem:[#allocation2 + $0x38] sm:$0xf]
        %v690 = vld [vmem:[#allocation2 + $0x3c] sm:$0xff]
        %v691 = vld [vmem:[#allocation2 + $0x44] sm:$0xf]
        %v692 = vld [vmem:[#allocation2 + $0x48] sm:$0xff]
        %v693 = vld [vmem:[#allocation2 + $0x50] sm:$0xf]
        %v694 = vld [vmem:[#allocation2 + $0x54] sm:$0xff]
        %v695 = vld [vmem:[#allocation2 + $0x5c] sm:$0xf]
        %v696 = vld [vmem:[#allocation2 + $0x60] sm:$0xff]
        %v697 = vld [vmem:[#allocation2 + $0x68] sm:$0xf]
        %v698 = vld [vmem:[#allocation2 + $0x6c] sm:$0xff]
        %v699 = vld [vmem:[#allocation2 + $0x74] sm:$0xf]
        %v700 = vld [vmem:[#allocation2 + $0x78] sm:$0xff]
        %v701 = vld [vmem:[#allocation2 + $0x80] sm:$0xf]
        %v702 = vld [vmem:[#allocation2 + $0x84] sm:$0xff]
        %v703 = vld [vmem:[#allocation2 + $0x8c] sm:$0xf]
        %v704 = vld [vmem:[#allocation2 + $0x90] sm:$0xff]
        %v705 = vld [vmem:[#allocation2 + $0x98] sm:$0xf]
        %v706 = vld [vmem:[#allocation2 + $0x9c] sm:$0xff]
        %v707 = vld [vmem:[#allocation2 + $0xa4] sm:$0xf]
        %v708 = vld [vmem:[#allocation2 + $0xa8] sm:$0xff]
        %v709 = vld [vmem:[#allocation2 + $0xb0] sm:$0xf]
        %v710 = vld [vmem:[#allocation2 + $0xb4] sm:$0xff]
        %v711 = vld [vmem:[#allocation2 + $0xbc] sm:$0xf]
        %v712 = vld [vmem:[#allocation2 + $0xc0] sm:$0xff]
        %v713 = vld [vmem:[#allocation2 + $0xc8] sm:$0xf]
        %v714 = vld [vmem:[#allocation2 + $0xcc] sm:$0xff]
        %v715 = vld [vmem:[#allocation2 + $0xd4] sm:$0xf]
        %v716 = vld [vmem:[#allocation2 + $0xd8] sm:$0xff]
        %v717 = vld [vmem:[#allocation2 + $0xe0] sm:$0xf]
        %v718 = vld [vmem:[#allocation2 + $0xe4] sm:$0xff]
        %v719 = vld [vmem:[#allocation2 + $0xec] sm:$0xf]
        %v720 = vld [vmem:[#allocation2 + $0xf0] sm:$0xff]
        %v721 = vld [vmem:[#allocation2 + $0xf8] sm:$0xf]
        %v722 = vld [vmem:[#allocation2 + $0xfc] sm:$0xff]
        %v723 = vld [vmem:[#allocation2 + $0x104] sm:$0xf]
        %v724 = vld [vmem:[#allocation2 + $0x108] sm:$0xff]
        %v725 = vld [vmem:[#allocation2 + $0x110] sm:$0xf]
        %v726 = vld [vmem:[#allocation2 + $0x114] sm:$0xff]
        %v727 = vld [vmem:[#allocation2 + $0x11c] sm:$0xf]
        %v728 = vld [vmem:[#allocation2 + $0x120] sm:$0xff]
        %v729 = vld [vmem:[#allocation2 + $0x128] sm:$0xf]
        %v730 = vld [vmem:[#allocation2 + $0x12c] sm:$0xff]
        %v731 = vld [vmem:[#allocation2 + $0x134] sm:$0xf]
        %v732 = vld [vmem:[#allocation2 + $0x138] sm:$0xff]
        %v733 = vld [vmem:[#allocation2 + $0x140] sm:$0xf]
        %v734 = vld [vmem:[#allocation2 + $0x144] sm:$0xff]
        %v735 = vld [vmem:[#allocation2 + $0x14c] sm:$0xf]
        %v736 = vld [vmem:[#allocation2 + $0x150] sm:$0xff]
        %v737 = vld [vmem:[#allocation2 + $0x158] sm:$0xf]
        %v738 = vld [vmem:[#allocation2 + $0x15c] sm:$0xff]
        %v739 = vld [vmem:[#allocation2 + $0x164] sm:$0xf]
        %v740 = vld [vmem:[#allocation2 + $0x168] sm:$0xff]
        %v741 = vld [vmem:[#allocation2 + $0x170] sm:$0xf]
        %v742 = vld [vmem:[#allocation2 + $0x174] sm:$0xff]
        %v743 = vld [vmem:[#allocation2 + $0x17c] sm:$0xf]
        %v744 = vld [vmem:[#allocation2 + $0x180] sm:$0xff]
        %v745 = vld [vmem:[#allocation2 + $0x188] sm:$0xf]
        %v746 = vld [vmem:[#allocation2 + $0x18c] sm:$0xff]
        %v747 = vld [vmem:[#allocation2 + $0x194] sm:$0xf]
        %v748 = vld [vmem:[#allocation2 + $0x198] sm:$0xff]
        %v749 = vld [vmem:[#allocation2 + $0x1a0] sm:$0xf]
        %v750 = vld [vmem:[#allocation2 + $0x1a4] sm:$0xff]
        %v751 = vld [vmem:[#allocation2 + $0x1ac] sm:$0xf]
        %v752 = vld [vmem:[#allocation2 + $0x1b0] sm:$0xff]
        %v753 = vld [vmem:[#allocation2 + $0x1b8] sm:$0xf]
        %v754 = vld [vmem:[#allocation2 + $0x1bc] sm:$0x33]
        %v755 = vld [vmem:[#allocation2 + $0x1c4] sm:$0x3]
        %v832 = vunpack.c.l.b16 %v680
        %v833 = vunpack.c.h.b16 %v680
        %v834 = vunpack.c.l.b16 %v681
        %v835 = vunpack.c.l.b16 %v682
        %v836 = vunpack.c.h.b16 %v682
        %v837 = vunpack.c.l.b16 %v683
        %v838 = vunpack.c.l.b16 %v684
        %v839 = vunpack.c.h.b16 %v684
        %v840 = vunpack.c.l.b16 %v685
        %v841 = vunpack.c.l.b16 %v686
        %v842 = vunpack.c.h.b16 %v686
        %v843 = vunpack.c.l.b16 %v687
        %v844 = vunpack.c.l.b16 %v688
        %v845 = vunpack.c.h.b16 %v688
        %v846 = vunpack.c.l.b16 %v689
        %v847 = vunpack.c.l.b16 %v690
        %v848 = vunpack.c.h.b16 %v690
        %v849 = vunpack.c.l.b16 %v691
        %v850 = vunpack.c.l.b16 %v692
        %v851 = vunpack.c.h.b16 %v692
        %v852 = vunpack.c.l.b16 %v693
        %v853 = vunpack.c.l.b16 %v694
        %v854 = vunpack.c.h.b16 %v694
        %v855 = vunpack.c.l.b16 %v695
        %v856 = vunpack.c.l.b16 %v696
        %v857 = vunpack.c.h.b16 %v696
        %v858 = vunpack.c.l.b16 %v697
        %v859 = vunpack.c.l.b16 %v698
        %v860 = vunpack.c.h.b16 %v698
        %v861 = vunpack.c.l.b16 %v699
        %v862 = vunpack.c.l.b16 %v700
        %v863 = vunpack.c.h.b16 %v700
        %v864 = vunpack.c.l.b16 %v701
        %v865 = vunpack.c.l.b16 %v702
        %v866 = vunpack.c.h.b16 %v702
        %v867 = vunpack.c.l.b16 %v703
        %v868 = vunpack.c.l.b16 %v704
        %v869 = vunpack.c.h.b16 %v704
        %v870 = vunpack.c.l.b16 %v705
        %v871 = vunpack.c.l.b16 %v706
        %v872 = vunpack.c.h.b16 %v706
        %v873 = vunpack.c.l.b16 %v707
        %v874 = vunpack.c.l.b16 %v708
        %v875 = vunpack.c.h.b16 %v708
        %v876 = vunpack.c.l.b16 %v709
        %v877 = vunpack.c.l.b16 %v710
        %v878 = vunpack.c.h.b16 %v710
        %v879 = vunpack.c.l.b16 %v711
        %v880 = vunpack.c.l.b16 %v712
        %v881 = vunpack.c.h.b16 %v712
        %v882 = vunpack.c.l.b16 %v713
        %v883 = vunpack.c.l.b16 %v714
        %v884 = vunpack.c.h.b16 %v714
        %v885 = vunpack.c.l.b16 %v715
        %v886 = vunpack.c.l.b16 %v716
        %v887 = vunpack.c.h.b16 %v716
        %v888 = vunpack.c.l.b16 %v717
        %v889 = vunpack.c.l.b16 %v718
        %v890 = vunpack.c.h.b16 %v718
        %v891 = vunpack.c.l.b16 %v719
        %v892 = vunpack.c.l.b16 %v720
        %v893 = vunpack.c.h.b16 %v720
        %v894 = vunpack.c.l.b16 %v721
        %v895 = vunpack.c.l.b16 %v722
        %v896 = vunpack.c.h.b16 %v722
        %v897 = vunpack.c.l.b16 %v723
        %v898 = vunpack.c.l.b16 %v724
        %v899 = vunpack.c.h.b16 %v724
        %v900 = vunpack.c.l.b16 %v725
        %v901 = vunpack.c.l.b16 %v726
        %v902 = vunpack.c.h.b16 %v726
        %v903 = vunpack.c.l.b16 %v727
        %v904 = vunpack.c.l.b16 %v728
        %v905 = vunpack.c.h.b16 %v728
        %v906 = vunpack.c.l.b16 %v729
        %v907 = vunpack.c.l.b16 %v730
        %v908 = vunpack.c.h.b16 %v730
        %v909 = vunpack.c.l.b16 %v731
        %v910 = vunpack.c.l.b16 %v732
        %v911 = vunpack.c.h.b16 %v732
        %v912 = vunpack.c.l.b16 %v733
        %v913 = vunpack.c.l.b16 %v734
        %v914 = vunpack.c.h.b16 %v734
        %v915 = vunpack.c.l.b16 %v735
        %v916 = vunpack.c.l.b16 %v736
        %v917 = vunpack.c.h.b16 %v736
        %v918 = vunpack.c.l.b16 %v737
        %v919 = vunpack.c.l.b16 %v738
        %v920 = vunpack.c.h.b16 %v738
        %v921 = vunpack.c.l.b16 %v739
        %v922 = vunpack.c.l.b16 %v740
        %v923 = vunpack.c.h.b16 %v740
        %v924 = vunpack.c.l.b16 %v741
        %v925 = vunpack.c.l.b16 %v742
        %v926 = vunpack.c.h.b16 %v742
        %v927 = vunpack.c.l.b16 %v743
        %v928 = vunpack.c.l.b16 %v744
        %v929 = vunpack.c.h.b16 %v744
        %v930 = vunpack.c.l.b16 %v745
        %v931 = vunpack.c.l.b16 %v746
        %v932 = vunpack.c.h.b16 %v746
        %v933 = vunpack.c.l.b16 %v747
        %v934 = vunpack.c.l.b16 %v748
        %v935 = vunpack.c.h.b16 %v748
        %v936 = vunpack.c.l.b16 %v749
        %v937 = vunpack.c.l.b16 %v750
        %v938 = vunpack.c.h.b16 %v750
        %v939 = vunpack.c.l.b16 %v751
        %v940 = vunpack.c.l.b16 %v752
        %v941 = vunpack.c.h.b16 %v752
        %v942 = vunpack.c.l.b16 %v753
        %v943 = vunpack.c.l.b16 %v754
        %v944 = vunpack.c.h.b16 %v754
        %v945 = vunpack.c.l.b16 %v755
        %v946 = vpack.c.b16 %v835, %v832
        %v947 = vpack.c.b16 %v836, %v833
        %v948 = vpack.c.b16 %v837, %v834
        %v949 = vpack.c.b16 %v841, %v838
        %v950 = vpack.c.b16 %v842, %v839
        %v951 = vpack.c.b16 %v843, %v840
        %v952 = vpack.c.b16 %v847, %v844
        %v953 = vpack.c.b16 %v848, %v845
        %v954 = vpack.c.b16 %v849, %v846
        %v955 = vpack.c.b16 %v853, %v850
        %v956 = vpack.c.b16 %v854, %v851
        %v957 = vpack.c.b16 %v855, %v852
        %v958 = vpack.c.b16 %v859, %v856
        %v959 = vpack.c.b16 %v860, %v857
        %v960 = vpack.c.b16 %v861, %v858
        %v961 = vpack.c.b16 %v865, %v862
        %v962 = vpack.c.b16 %v866, %v863
        %v963 = vpack.c.b16 %v867, %v864
        %v964 = vpack.c.b16 %v871, %v868
        %v965 = vpack.c.b16 %v872, %v869
        %v966 = vpack.c.b16 %v873, %v870
        %v967 = vpack.c.b16 %v877, %v874
        %v968 = vpack.c.b16 %v878, %v875
        %v969 = vpack.c.b16 %v879, %v876
        %v970 = vpack.c.b16 %v883, %v880
        %v971 = vpack.c.b16 %v884, %v881
        %v972 = vpack.c.b16 %v885, %v882
        %v973 = vpack.c.b16 %v889, %v886
        %v974 = vpack.c.b16 %v890, %v887
        %v975 = vpack.c.b16 %v891, %v888
        %v976 = vpack.c.b16 %v895, %v892
        %v977 = vpack.c.b16 %v896, %v893
        %v978 = vpack.c.b16 %v897, %v894
        %v979 = vpack.c.b16 %v901, %v898
        %v980 = vpack.c.b16 %v902, %v899
        %v981 = vpack.c.b16 %v903, %v900
        %v982 = vpack.c.b16 %v907, %v904
        %v983 = vpack.c.b16 %v908, %v905
        %v984 = vpack.c.b16 %v909, %v906
        %v985 = vpack.c.b16 %v913, %v910
        %v986 = vpack.c.b16 %v914, %v911
        %v987 = vpack.c.b16 %v915, %v912
        %v988 = vpack.c.b16 %v919, %v916
        %v989 = vpack.c.b16 %v920, %v917
        %v990 = vpack.c.b16 %v921, %v918
        %v991 = vpack.c.b16 %v925, %v922
        %v992 = vpack.c.b16 %v926, %v923
        %v993 = vpack.c.b16 %v927, %v924
        %v994 = vpack.c.b16 %v931, %v928
        %v995 = vpack.c.b16 %v932, %v929
        %v996 = vpack.c.b16 %v933, %v930
        %v997 = vpack.c.b16 %v937, %v934
        %v998 = vpack.c.b16 %v938, %v935
        %v999 = vpack.c.b16 %v939, %v936
        %v1000 = vpack.c.b16 %v943, %v940
        %v1001 = vpack.c.b16 %v944, %v941
        %v1002 = vpack.c.b16 %v945, %v942
        %vm1057 = vcmask 359424
        %v1059 = vsel %vm1057, %v608, 0
        %v1062 = vsel %vm1057, %v611, 0
        %v1065 = vsel %vm1057, %v614, 0
        %v1068 = vsel %vm1057, %v617, 0
        %v1071 = vsel %vm1057, %v620, 0
        %v1074 = vsel %vm1057, %v623, 0
        %v1077 = vsel %vm1057, %v626, 0
        %v1080 = vsel %vm1057, %v629, 0
        %v1083 = vsel %vm458, %v1000, 0
        %v1086 = vsel %vm458, %v1001, 0
        %v1089 = vsel %vm458, %v1002, 0
        %1091 = vmatpush.bf16.msra.mxu0 %v967
        %1092 = vmatpush.bf16.msra.mxu0 %v964
        %1093 = vmatpush.bf16.msra.mxu0 %v961
        %1094 = vmatpush.bf16.msra.mxu0 %v958
        %1095 = vmatpush.bf16.msra.mxu0 %v955
        %1096 = vmatpush.bf16.msra.mxu0 %v952
        %1097 = vmatpush.bf16.msra.mxu0 %v949
        %1098 = vmatpush.bf16.msra.mxu0 %v946
        %1099 = vmatmul.bf16.gmra.mxu0 %v606
        %v1100 = vpop.f32.mrf.mxu0
        %v1101 = vadd.f32 0.0, %v1100
        %v1102 = vpop.f32.mrf.mxu0
        %v1103 = vadd.f32 0.0, %v1102
        %1104 = vmatmul.bf16.gmra.mxu0 %v609
        %v1105 = vpop.f32.mrf.mxu0
        %v1106 = vadd.f32 0.0, %v1105
        %v1107 = vpop.f32.mrf.mxu0
        %v1108 = vadd.f32 0.0, %v1107
        %1109 = vmatmul.bf16.gmra.mxu0 %v612
        %v1110 = vpop.f32.mrf.mxu0
        %v1111 = vadd.f32 0.0, %v1110
        %v1112 = vpop.f32.mrf.mxu0
        %v1113 = vadd.f32 0.0, %v1112
        %1114 = vmatmul.bf16.gmra.mxu0 %v615
        %v1115 = vpop.f32.mrf.mxu0
        %v1116 = vadd.f32 0.0, %v1115
        %v1117 = vpop.f32.mrf.mxu0
        %v1118 = vadd.f32 0.0, %v1117
        %1119 = vmatmul.bf16.gmra.mxu0 %v618
        %v1120 = vpop.f32.mrf.mxu0
        %v1121 = vadd.f32 0.0, %v1120
        %v1122 = vpop.f32.mrf.mxu0
        %v1123 = vadd.f32 0.0, %v1122
        %1124 = vmatmul.bf16.gmra.mxu0 %v621
        %v1125 = vpop.f32.mrf.mxu0
        %v1126 = vadd.f32 0.0, %v1125
        %v1127 = vpop.f32.mrf.mxu0
        %v1128 = vadd.f32 0.0, %v1127
        %1129 = vmatmul.bf16.gmra.mxu0 %v624
        %v1130 = vpop.f32.mrf.mxu0
        %v1131 = vadd.f32 0.0, %v1130
        %v1132 = vpop.f32.mrf.mxu0
        %v1133 = vadd.f32 0.0, %v1132
        %1134 = vmatmul.bf16.gmra.mxu0 %v627
        %v1135 = vpop.f32.mrf.mxu0
        %v1136 = vadd.f32 0.0, %v1135
        %v1137 = vpop.f32.mrf.mxu0
        %v1138 = vadd.f32 0.0, %v1137
        %1139 = vdwg.mxu0
        %1140 = vmatpush.bf16.msra.mxu0 %v991
        %1141 = vmatpush.bf16.msra.mxu0 %v988
        %1142 = vmatpush.bf16.msra.mxu0 %v985
        %1143 = vmatpush.bf16.msra.mxu0 %v982
        %1144 = vmatpush.bf16.msra.mxu0 %v979
        %1145 = vmatpush.bf16.msra.mxu0 %v976
        %1146 = vmatpush.bf16.msra.mxu0 %v973
        %1147 = vmatpush.bf16.msra.mxu0 %v970
        %1148 = vmatmul.bf16.gmra.mxu0 %v607
        %v1149 = vpop.f32.mrf.mxu0
        %v1150 = vadd.f32 %v1101, %v1149
        %v1151 = vpop.f32.mrf.mxu0
        %v1152 = vadd.f32 %v1103, %v1151
        %1153 = vmatmul.bf16.gmra.mxu0 %v610
        %v1154 = vpop.f32.mrf.mxu0
        %v1155 = vadd.f32 %v1106, %v1154
        %v1156 = vpop.f32.mrf.mxu0
        %v1157 = vadd.f32 %v1108, %v1156
        %1158 = vmatmul.bf16.gmra.mxu0 %v613
        %v1159 = vpop.f32.mrf.mxu0
        %v1160 = vadd.f32 %v1111, %v1159
        %v1161 = vpop.f32.mrf.mxu0
        %v1162 = vadd.f32 %v1113, %v1161
        %1163 = vmatmul.bf16.gmra.mxu0 %v616
        %v1164 = vpop.f32.mrf.mxu0
        %v1165 = vadd.f32 %v1116, %v1164
        %v1166 = vpop.f32.mrf.mxu0
        %v1167 = vadd.f32 %v1118, %v1166
        %1168 = vmatmul.bf16.gmra.mxu0 %v619
        %v1169 = vpop.f32.mrf.mxu0
        %v1170 = vadd.f32 %v1121, %v1169
        %v1171 = vpop.f32.mrf.mxu0
        %v1172 = vadd.f32 %v1123, %v1171
        %1173 = vmatmul.bf16.gmra.mxu0 %v622
        %v1174 = vpop.f32.mrf.mxu0
        %v1175 = vadd.f32 %v1126, %v1174
        %v1176 = vpop.f32.mrf.mxu0
        %v1177 = vadd.f32 %v1128, %v1176
        %1178 = vmatmul.bf16.gmra.mxu0 %v625
        %v1179 = vpop.f32.mrf.mxu0
        %v1180 = vadd.f32 %v1131, %v1179
        %v1181 = vpop.f32.mrf.mxu0
        %v1182 = vadd.f32 %v1133, %v1181
        %1183 = vmatmul.bf16.gmra.mxu0 %v628
        %v1184 = vpop.f32.mrf.mxu0
        %v1185 = vadd.f32 %v1136, %v1184
        %v1186 = vpop.f32.mrf.mxu0
        %v1187 = vadd.f32 %v1138, %v1186
        %1188 = vdwg.mxu0
        %1189 = vmatpush.bf16.msra.mxu0 0
        %1190 = vmatpush.bf16.msra.mxu0 0
        %1191 = vmatpush.bf16.msra.mxu0 0
        %1192 = vmatpush.bf16.msra.mxu0 0
        %1193 = vmatpush.bf16.msra.mxu0 0
        %1194 = vmatpush.bf16.msra.mxu0 %v1083
        %1195 = vmatpush.bf16.msra.mxu0 %v997
        %1196 = vmatpush.bf16.msra.mxu0 %v994
        %1197 = vmatmul.bf16.gmra.mxu0 %v1059
        %v1198 = vpop.f32.mrf.mxu0
        %v1199 = vadd.f32 %v1150, %v1198
        %v1200 = vpop.f32.mrf.mxu0
        %v1201 = vadd.f32 %v1152, %v1200
        %1202 = vmatmul.bf16.gmra.mxu0 %v1062
        %v1203 = vpop.f32.mrf.mxu0
        %v1204 = vadd.f32 %v1155, %v1203
        %v1205 = vpop.f32.mrf.mxu0
        %v1206 = vadd.f32 %v1157, %v1205
        %1207 = vmatmul.bf16.gmra.mxu0 %v1065
        %v1208 = vpop.f32.mrf.mxu0
        %v1209 = vadd.f32 %v1160, %v1208
        %v1210 = vpop.f32.mrf.mxu0
        %v1211 = vadd.f32 %v1162, %v1210
        %1212 = vmatmul.bf16.gmra.mxu0 %v1068
        %v1213 = vpop.f32.mrf.mxu0
        %v1214 = vadd.f32 %v1165, %v1213
        %v1215 = vpop.f32.mrf.mxu0
        %v1216 = vadd.f32 %v1167, %v1215
        %1217 = vmatmul.bf16.gmra.mxu0 %v1071
        %v1218 = vpop.f32.mrf.mxu0
        %v1219 = vadd.f32 %v1170, %v1218
        %v1220 = vpop.f32.mrf.mxu0
        %v1221 = vadd.f32 %v1172, %v1220
        %1222 = vmatmul.bf16.gmra.mxu0 %v1074
        %v1223 = vpop.f32.mrf.mxu0
        %v1224 = vadd.f32 %v1175, %v1223
        %v1225 = vpop.f32.mrf.mxu0
        %v1226 = vadd.f32 %v1177, %v1225
        %1227 = vmatmul.bf16.gmra.mxu0 %v1077
        %v1228 = vpop.f32.mrf.mxu0
        %v1229 = vadd.f32 %v1180, %v1228
        %v1230 = vpop.f32.mrf.mxu0
        %v1231 = vadd.f32 %v1182, %v1230
        %1232 = vmatmul.bf16.gmra.mxu0 %v1080
        %v1233 = vpop.f32.mrf.mxu0
        %v1234 = vadd.f32 %v1185, %v1233
        %v1235 = vpop.f32.mrf.mxu0
        %v1236 = vadd.f32 %v1187, %v1235
        %1237 = vdwg.mxu0
        %1238 = vmatpush.bf16.msra.mxu0 %v968
        %1239 = vmatpush.bf16.msra.mxu0 %v965
        %1240 = vmatpush.bf16.msra.mxu0 %v962
        %1241 = vmatpush.bf16.msra.mxu0 %v959
        %1242 = vmatpush.bf16.msra.mxu0 %v956
        %1243 = vmatpush.bf16.msra.mxu0 %v953
        %1244 = vmatpush.bf16.msra.mxu0 %v950
        %1245 = vmatpush.bf16.msra.mxu0 %v947
        %1246 = vmatmul.bf16.gmra.mxu0 %v606
        %v1247 = vpop.f32.mrf.mxu0
        %v1248 = vadd.f32 0.0, %v1247
        %v1249 = vpop.f32.mrf.mxu0
        %v1250 = vadd.f32 0.0, %v1249
        %1251 = vmatmul.bf16.gmra.mxu0 %v609
        %v1252 = vpop.f32.mrf.mxu0
        %v1253 = vadd.f32 0.0, %v1252
        %v1254 = vpop.f32.mrf.mxu0
        %v1255 = vadd.f32 0.0, %v1254
        %1256 = vmatmul.bf16.gmra.mxu0 %v612
        %v1257 = vpop.f32.mrf.mxu0
        %v1258 = vadd.f32 0.0, %v1257
        %v1259 = vpop.f32.mrf.mxu0
        %v1260 = vadd.f32 0.0, %v1259
        %1261 = vmatmul.bf16.gmra.mxu0 %v615
        %v1262 = vpop.f32.mrf.mxu0
        %v1263 = vadd.f32 0.0, %v1262
        %v1264 = vpop.f32.mrf.mxu0
        %v1265 = vadd.f32 0.0, %v1264
        %1266 = vmatmul.bf16.gmra.mxu0 %v618
        %v1267 = vpop.f32.mrf.mxu0
        %v1268 = vadd.f32 0.0, %v1267
        %v1269 = vpop.f32.mrf.mxu0
        %v1270 = vadd.f32 0.0, %v1269
        %1271 = vmatmul.bf16.gmra.mxu0 %v621
        %v1272 = vpop.f32.mrf.mxu0
        %v1273 = vadd.f32 0.0, %v1272
        %v1274 = vpop.f32.mrf.mxu0
        %v1275 = vadd.f32 0.0, %v1274
        %1276 = vmatmul.bf16.gmra.mxu0 %v624
        %v1277 = vpop.f32.mrf.mxu0
        %v1278 = vadd.f32 0.0, %v1277
        %v1279 = vpop.f32.mrf.mxu0
        %v1280 = vadd.f32 0.0, %v1279
        %1281 = vmatmul.bf16.gmra.mxu0 %v627
        %v1282 = vpop.f32.mrf.mxu0
        %v1283 = vadd.f32 0.0, %v1282
        %v1284 = vpop.f32.mrf.mxu0
        %v1285 = vadd.f32 0.0, %v1284
        %1286 = vdwg.mxu0
        %1287 = vmatpush.bf16.msra.mxu0 %v992
        %1288 = vmatpush.bf16.msra.mxu0 %v989
        %1289 = vmatpush.bf16.msra.mxu0 %v986
        %1290 = vmatpush.bf16.msra.mxu0 %v983
        %1291 = vmatpush.bf16.msra.mxu0 %v980
        %1292 = vmatpush.bf16.msra.mxu0 %v977
        %1293 = vmatpush.bf16.msra.mxu0 %v974
        %1294 = vmatpush.bf16.msra.mxu0 %v971
        %1295 = vmatmul.bf16.gmra.mxu0 %v607
        %v1296 = vpop.f32.mrf.mxu0
        %v1297 = vadd.f32 %v1248, %v1296
        %v1298 = vpop.f32.mrf.mxu0
        %v1299 = vadd.f32 %v1250, %v1298
        %1300 = vmatmul.bf16.gmra.mxu0 %v610
        %v1301 = vpop.f32.mrf.mxu0
        %v1302 = vadd.f32 %v1253, %v1301
        %v1303 = vpop.f32.mrf.mxu0
        %v1304 = vadd.f32 %v1255, %v1303
        %1305 = vmatmul.bf16.gmra.mxu0 %v613
        %v1306 = vpop.f32.mrf.mxu0
        %v1307 = vadd.f32 %v1258, %v1306
        %v1308 = vpop.f32.mrf.mxu0
        %v1309 = vadd.f32 %v1260, %v1308
        %1310 = vmatmul.bf16.gmra.mxu0 %v616
        %v1311 = vpop.f32.mrf.mxu0
        %v1312 = vadd.f32 %v1263, %v1311
        %v1313 = vpop.f32.mrf.mxu0
        %v1314 = vadd.f32 %v1265, %v1313
        %1315 = vmatmul.bf16.gmra.mxu0 %v619
        %v1316 = vpop.f32.mrf.mxu0
        %v1317 = vadd.f32 %v1268, %v1316
        %v1318 = vpop.f32.mrf.mxu0
        %v1319 = vadd.f32 %v1270, %v1318
        %1320 = vmatmul.bf16.gmra.mxu0 %v622
        %v1321 = vpop.f32.mrf.mxu0
        %v1322 = vadd.f32 %v1273, %v1321
        %v1323 = vpop.f32.mrf.mxu0
        %v1324 = vadd.f32 %v1275, %v1323
        %1325 = vmatmul.bf16.gmra.mxu0 %v625
        %v1326 = vpop.f32.mrf.mxu0
        %v1327 = vadd.f32 %v1278, %v1326
        %v1328 = vpop.f32.mrf.mxu0
        %v1329 = vadd.f32 %v1280, %v1328
        %1330 = vmatmul.bf16.gmra.mxu0 %v628
        %v1331 = vpop.f32.mrf.mxu0
        %v1332 = vadd.f32 %v1283, %v1331
        %v1333 = vpop.f32.mrf.mxu0
        %v1334 = vadd.f32 %v1285, %v1333
        %1335 = vdwg.mxu0
        %1336 = vmatpush.bf16.msra.mxu0 0
        %1337 = vmatpush.bf16.msra.mxu0 0
        %1338 = vmatpush.bf16.msra.mxu0 0
        %1339 = vmatpush.bf16.msra.mxu0 0
        %1340 = vmatpush.bf16.msra.mxu0 0
        %1341 = vmatpush.bf16.msra.mxu0 %v1086
        %1342 = vmatpush.bf16.msra.mxu0 %v998
        %1343 = vmatpush.bf16.msra.mxu0 %v995
        %1344 = vmatmul.bf16.gmra.mxu0 %v1059
        %v1345 = vpop.f32.mrf.mxu0
        %v1346 = vadd.f32 %v1297, %v1345
        %v1347 = vpop.f32.mrf.mxu0
        %v1348 = vadd.f32 %v1299, %v1347
        %1349 = vmatmul.bf16.gmra.mxu0 %v1062
        %v1350 = vpop.f32.mrf.mxu0
        %v1351 = vadd.f32 %v1302, %v1350
        %v1352 = vpop.f32.mrf.mxu0
        %v1353 = vadd.f32 %v1304, %v1352
        %1354 = vmatmul.bf16.gmra.mxu0 %v1065
        %v1355 = vpop.f32.mrf.mxu0
        %v1356 = vadd.f32 %v1307, %v1355
        %v1357 = vpop.f32.mrf.mxu0
        %v1358 = vadd.f32 %v1309, %v1357
        %1359 = vmatmul.bf16.gmra.mxu0 %v1068
        %v1360 = vpop.f32.mrf.mxu0
        %v1361 = vadd.f32 %v1312, %v1360
        %v1362 = vpop.f32.mrf.mxu0
        %v1363 = vadd.f32 %v1314, %v1362
        %1364 = vmatmul.bf16.gmra.mxu0 %v1071
        %v1365 = vpop.f32.mrf.mxu0
        %v1366 = vadd.f32 %v1317, %v1365
        %v1367 = vpop.f32.mrf.mxu0
        %v1368 = vadd.f32 %v1319, %v1367
        %1369 = vmatmul.bf16.gmra.mxu0 %v1074
        %v1370 = vpop.f32.mrf.mxu0
        %v1371 = vadd.f32 %v1322, %v1370
        %v1372 = vpop.f32.mrf.mxu0
        %v1373 = vadd.f32 %v1324, %v1372
        %1374 = vmatmul.bf16.gmra.mxu0 %v1077
        %v1375 = vpop.f32.mrf.mxu0
        %v1376 = vadd.f32 %v1327, %v1375
        %v1377 = vpop.f32.mrf.mxu0
        %v1378 = vadd.f32 %v1329, %v1377
        %1379 = vmatmul.bf16.gmra.mxu0 %v1080
        %v1380 = vpop.f32.mrf.mxu0
        %v1381 = vadd.f32 %v1332, %v1380
        %v1382 = vpop.f32.mrf.mxu0
        %v1383 = vadd.f32 %v1334, %v1382
        %1384 = vdwg.mxu0
        %1385 = vmatpush.bf16.msra.mxu0 %v969
        %1386 = vmatpush.bf16.msra.mxu0 %v966
        %1387 = vmatpush.bf16.msra.mxu0 %v963
        %1388 = vmatpush.bf16.msra.mxu0 %v960
        %1389 = vmatpush.bf16.msra.mxu0 %v957
        %1390 = vmatpush.bf16.msra.mxu0 %v954
        %1391 = vmatpush.bf16.msra.mxu0 %v951
        %1392 = vmatpush.bf16.msra.mxu0 %v948
        %1393 = vmatmul.bf16.gmra.mxu0 %v606
        %v1394 = vpop.f32.mrf.mxu0
        %v1395 = vadd.f32 0.0, %v1394
        %v1396 = vpop.f32.mrf.mxu0
        %v1397 = vadd.f32 0.0, %v1396
        %1398 = vmatmul.bf16.gmra.mxu0 %v609
        %v1399 = vpop.f32.mrf.mxu0
        %v1400 = vadd.f32 0.0, %v1399
        %v1401 = vpop.f32.mrf.mxu0
        %v1402 = vadd.f32 0.0, %v1401
        %1403 = vmatmul.bf16.gmra.mxu0 %v612
        %v1404 = vpop.f32.mrf.mxu0
        %v1405 = vadd.f32 0.0, %v1404
        %v1406 = vpop.f32.mrf.mxu0
        %v1407 = vadd.f32 0.0, %v1406
        %1408 = vmatmul.bf16.gmra.mxu0 %v615
        %v1409 = vpop.f32.mrf.mxu0
        %v1410 = vadd.f32 0.0, %v1409
        %v1411 = vpop.f32.mrf.mxu0
        %v1412 = vadd.f32 0.0, %v1411
        %1413 = vmatmul.bf16.gmra.mxu0 %v618
        %v1414 = vpop.f32.mrf.mxu0
        %v1415 = vadd.f32 0.0, %v1414
        %v1416 = vpop.f32.mrf.mxu0
        %v1417 = vadd.f32 0.0, %v1416
        %1418 = vmatmul.bf16.gmra.mxu0 %v621
        %v1419 = vpop.f32.mrf.mxu0
        %v1420 = vadd.f32 0.0, %v1419
        %v1421 = vpop.f32.mrf.mxu0
        %v1422 = vadd.f32 0.0, %v1421
        %1423 = vmatmul.bf16.gmra.mxu0 %v624
        %v1424 = vpop.f32.mrf.mxu0
        %v1425 = vadd.f32 0.0, %v1424
        %v1426 = vpop.f32.mrf.mxu0
        %v1427 = vadd.f32 0.0, %v1426
        %1428 = vmatmul.bf16.gmra.mxu0 %v627
        %v1429 = vpop.f32.mrf.mxu0
        %v1430 = vadd.f32 0.0, %v1429
        %v1431 = vpop.f32.mrf.mxu0
        %v1432 = vadd.f32 0.0, %v1431
        %1433 = vdwg.mxu0
        %1434 = vmatpush.bf16.msra.mxu0 %v993
        %1435 = vmatpush.bf16.msra.mxu0 %v990
        %1436 = vmatpush.bf16.msra.mxu0 %v987
        %1437 = vmatpush.bf16.msra.mxu0 %v984
        %1438 = vmatpush.bf16.msra.mxu0 %v981
        %1439 = vmatpush.bf16.msra.mxu0 %v978
        %1440 = vmatpush.bf16.msra.mxu0 %v975
        %1441 = vmatpush.bf16.msra.mxu0 %v972
        %1442 = vmatmul.bf16.gmra.mxu0 %v607
        %v1443 = vpop.f32.mrf.mxu0
        %v1444 = vadd.f32 %v1395, %v1443
        %v1445 = vpop.f32.mrf.mxu0
        %v1446 = vadd.f32 %v1397, %v1445
        %1447 = vmatmul.bf16.gmra.mxu0 %v610
        %v1448 = vpop.f32.mrf.mxu0
        %v1449 = vadd.f32 %v1400, %v1448
        %v1450 = vpop.f32.mrf.mxu0
        %v1451 = vadd.f32 %v1402, %v1450
        %1452 = vmatmul.bf16.gmra.mxu0 %v613
        %v1453 = vpop.f32.mrf.mxu0
        %v1454 = vadd.f32 %v1405, %v1453
        %v1455 = vpop.f32.mrf.mxu0
        %v1456 = vadd.f32 %v1407, %v1455
        %1457 = vmatmul.bf16.gmra.mxu0 %v616
        %v1458 = vpop.f32.mrf.mxu0
        %v1459 = vadd.f32 %v1410, %v1458
        %v1460 = vpop.f32.mrf.mxu0
        %v1461 = vadd.f32 %v1412, %v1460
        %1462 = vmatmul.bf16.gmra.mxu0 %v619
        %v1463 = vpop.f32.mrf.mxu0
        %v1464 = vadd.f32 %v1415, %v1463
        %v1465 = vpop.f32.mrf.mxu0
        %v1466 = vadd.f32 %v1417, %v1465
        %1467 = vmatmul.bf16.gmra.mxu0 %v622
        %v1468 = vpop.f32.mrf.mxu0
        %v1469 = vadd.f32 %v1420, %v1468
        %v1470 = vpop.f32.mrf.mxu0
        %v1471 = vadd.f32 %v1422, %v1470
        %1472 = vmatmul.bf16.gmra.mxu0 %v625
        %v1473 = vpop.f32.mrf.mxu0
        %v1474 = vadd.f32 %v1425, %v1473
        %v1475 = vpop.f32.mrf.mxu0
        %v1476 = vadd.f32 %v1427, %v1475
        %1477 = vmatmul.bf16.gmra.mxu0 %v628
        %v1478 = vpop.f32.mrf.mxu0
        %v1479 = vadd.f32 %v1430, %v1478
        %v1480 = vpop.f32.mrf.mxu0
        %v1481 = vadd.f32 %v1432, %v1480
        %1482 = vdwg.mxu0
        %1483 = vmatpush.bf16.msra.mxu0 0
        %1484 = vmatpush.bf16.msra.mxu0 0
        %1485 = vmatpush.bf16.msra.mxu0 0
        %1486 = vmatpush.bf16.msra.mxu0 0
        %1487 = vmatpush.bf16.msra.mxu0 0
        %1488 = vmatpush.bf16.msra.mxu0 %v1089
        %1489 = vmatpush.bf16.msra.mxu0 %v999
        %1490 = vmatpush.bf16.msra.mxu0 %v996
        %1491 = vmatmul.bf16.gmra.mxu0 %v1059
        %v1492 = vpop.f32.mrf.mxu0
        %v1493 = vadd.f32 %v1444, %v1492
        %v1494 = vpop.f32.mrf.mxu0
        %v1495 = vadd.f32 %v1446, %v1494
        %1496 = vmatmul.bf16.gmra.mxu0 %v1062
        %v1497 = vpop.f32.mrf.mxu0
        %v1498 = vadd.f32 %v1449, %v1497
        %v1499 = vpop.f32.mrf.mxu0
        %v1500 = vadd.f32 %v1451, %v1499
        %1501 = vmatmul.bf16.gmra.mxu0 %v1065
        %v1502 = vpop.f32.mrf.mxu0
        %v1503 = vadd.f32 %v1454, %v1502
        %v1504 = vpop.f32.mrf.mxu0
        %v1505 = vadd.f32 %v1456, %v1504
        %1506 = vmatmul.bf16.gmra.mxu0 %v1068
        %v1507 = vpop.f32.mrf.mxu0
        %v1508 = vadd.f32 %v1459, %v1507
        %v1509 = vpop.f32.mrf.mxu0
        %v1510 = vadd.f32 %v1461, %v1509
        %1511 = vmatmul.bf16.gmra.mxu0 %v1071
        %v1512 = vpop.f32.mrf.mxu0
        %v1513 = vadd.f32 %v1464, %v1512
        %v1514 = vpop.f32.mrf.mxu0
        %v1515 = vadd.f32 %v1466, %v1514
        %1516 = vmatmul.bf16.gmra.mxu0 %v1074
        %v1517 = vpop.f32.mrf.mxu0
        %v1518 = vadd.f32 %v1469, %v1517
        %v1519 = vpop.f32.mrf.mxu0
        %v1520 = vadd.f32 %v1471, %v1519
        %1521 = vmatmul.bf16.gmra.mxu0 %v1077
        %v1522 = vpop.f32.mrf.mxu0
        %v1523 = vadd.f32 %v1474, %v1522
        %v1524 = vpop.f32.mrf.mxu0
        %v1525 = vadd.f32 %v1476, %v1524
        %1526 = vmatmul.bf16.gmra.mxu0 %v1080
        %v1527 = vpop.f32.mrf.mxu0
        %v1528 = vadd.f32 %v1479, %v1527
        %v1529 = vpop.f32.mrf.mxu0
        %v1530 = vadd.f32 %v1481, %v1529
        %1531 = vdwg.mxu0
        %v1532 = vrot.slane %v1199, 4
        %v1533 = vmax.f32 %v1199, %v1532
        %v1534 = vrot.slane %v1533, 2
        %v1535 = vmax.f32 %v1533, %v1534
        %v1536 = vrot.slane %v1535, 1
        %v1537 = vmax.f32 %v1535, %v1536
        %v1538 = vrot.slane %v1346, 4
        %v1539 = vmax.f32 %v1346, %v1538
        %v1540 = vrot.slane %v1539, 2
        %v1541 = vmax.f32 %v1539, %v1540
        %v1542 = vrot.slane %v1541, 1
        %v1543 = vmax.f32 %v1541, %v1542
        %v1544 = vsel %vm1057, %v1493, -inf
        %v1545 = vrot.slane %v1544, 4
        %v1546 = vmax.f32 %v1544, %v1545
        %v1547 = vrot.slane %v1546, 2
        %v1548 = vmax.f32 %v1546, %v1547
        %v1549 = vrot.slane %v1548, 1
        %v1550 = vmax.f32 %v1548, %v1549
        %v1551 = vrot.slane %v1201, 4
        %v1552 = vmax.f32 %v1201, %v1551
        %v1553 = vrot.slane %v1552, 2
        %v1554 = vmax.f32 %v1552, %v1553
        %v1555 = vrot.slane %v1554, 1
        %v1556 = vmax.f32 %v1554, %v1555
        %v1557 = vrot.slane %v1348, 4
        %v1558 = vmax.f32 %v1348, %v1557
        %v1559 = vrot.slane %v1558, 2
        %v1560 = vmax.f32 %v1558, %v1559
        %v1561 = vrot.slane %v1560, 1
        %v1562 = vmax.f32 %v1560, %v1561
        %v1563 = vsel %vm1057, %v1495, -inf
        %v1564 = vrot.slane %v1563, 4
        %v1565 = vmax.f32 %v1563, %v1564
        %v1566 = vrot.slane %v1565, 2
        %v1567 = vmax.f32 %v1565, %v1566
        %v1568 = vrot.slane %v1567, 1
        %v1569 = vmax.f32 %v1567, %v1568
        %v1570 = vrot.slane %v1204, 4
        %v1571 = vmax.f32 %v1204, %v1570
        %v1572 = vrot.slane %v1571, 2
        %v1573 = vmax.f32 %v1571, %v1572
        %v1574 = vrot.slane %v1573, 1
        %v1575 = vmax.f32 %v1573, %v1574
        %v1576 = vrot.slane %v1351, 4
        %v1577 = vmax.f32 %v1351, %v1576
        %v1578 = vrot.slane %v1577, 2
        %v1579 = vmax.f32 %v1577, %v1578
        %v1580 = vrot.slane %v1579, 1
        %v1581 = vmax.f32 %v1579, %v1580
        %v1582 = vsel %vm1057, %v1498, -inf
        %v1583 = vrot.slane %v1582, 4
        %v1584 = vmax.f32 %v1582, %v1583
        %v1585 = vrot.slane %v1584, 2
        %v1586 = vmax.f32 %v1584, %v1585
        %v1587 = vrot.slane %v1586, 1
        %v1588 = vmax.f32 %v1586, %v1587
        %v1589 = vrot.slane %v1206, 4
        %v1590 = vmax.f32 %v1206, %v1589
        %v1591 = vrot.slane %v1590, 2
        %v1592 = vmax.f32 %v1590, %v1591
        %v1593 = vrot.slane %v1592, 1
        %v1594 = vmax.f32 %v1592, %v1593
        %v1595 = vrot.slane %v1353, 4
        %v1596 = vmax.f32 %v1353, %v1595
        %v1597 = vrot.slane %v1596, 2
        %v1598 = vmax.f32 %v1596, %v1597
        %v1599 = vrot.slane %v1598, 1
        %v1600 = vmax.f32 %v1598, %v1599
        %v1601 = vsel %vm1057, %v1500, -inf
        %v1602 = vrot.slane %v1601, 4
        %v1603 = vmax.f32 %v1601, %v1602
        %v1604 = vrot.slane %v1603, 2
        %v1605 = vmax.f32 %v1603, %v1604
        %v1606 = vrot.slane %v1605, 1
        %v1607 = vmax.f32 %v1605, %v1606
        %v1608 = vrot.slane %v1209, 4
        %v1609 = vmax.f32 %v1209, %v1608
        %v1610 = vrot.slane %v1609, 2
        %v1611 = vmax.f32 %v1609, %v1610
        %v1612 = vrot.slane %v1611, 1
        %v1613 = vmax.f32 %v1611, %v1612
        %v1614 = vrot.slane %v1356, 4
        %v1615 = vmax.f32 %v1356, %v1614
        %v1616 = vrot.slane %v1615, 2
        %v1617 = vmax.f32 %v1615, %v1616
        %v1618 = vrot.slane %v1617, 1
        %v1619 = vmax.f32 %v1617, %v1618
        %v1620 = vsel %vm1057, %v1503, -inf
        %v1621 = vrot.slane %v1620, 4
        %v1622 = vmax.f32 %v1620, %v1621
        %v1623 = vrot.slane %v1622, 2
        %v1624 = vmax.f32 %v1622, %v1623
        %v1625 = vrot.slane %v1624, 1
        %v1626 = vmax.f32 %v1624, %v1625
        %v1627 = vrot.slane %v1211, 4
        %v1628 = vmax.f32 %v1211, %v1627
        %v1629 = vrot.slane %v1628, 2
        %v1630 = vmax.f32 %v1628, %v1629
        %v1631 = vrot.slane %v1630, 1
        %v1632 = vmax.f32 %v1630, %v1631
        %v1633 = vrot.slane %v1358, 4
        %v1634 = vmax.f32 %v1358, %v1633
        %v1635 = vrot.slane %v1634, 2
        %v1636 = vmax.f32 %v1634, %v1635
        %v1637 = vrot.slane %v1636, 1
        %v1638 = vmax.f32 %v1636, %v1637
        %v1639 = vsel %vm1057, %v1505, -inf
        %v1640 = vrot.slane %v1639, 4
        %v1641 = vmax.f32 %v1639, %v1640
        %v1642 = vrot.slane %v1641, 2
        %v1643 = vmax.f32 %v1641, %v1642
        %v1644 = vrot.slane %v1643, 1
        %v1645 = vmax.f32 %v1643, %v1644
        %v1646 = vrot.slane %v1214, 4
        %v1647 = vmax.f32 %v1214, %v1646
        %v1648 = vrot.slane %v1647, 2
        %v1649 = vmax.f32 %v1647, %v1648
        %v1650 = vrot.slane %v1649, 1
        %v1651 = vmax.f32 %v1649, %v1650
        %v1652 = vrot.slane %v1361, 4
        %v1653 = vmax.f32 %v1361, %v1652
        %v1654 = vrot.slane %v1653, 2
        %v1655 = vmax.f32 %v1653, %v1654
        %v1656 = vrot.slane %v1655, 1
        %v1657 = vmax.f32 %v1655, %v1656
        %v1658 = vsel %vm1057, %v1508, -inf
        %v1659 = vrot.slane %v1658, 4
        %v1660 = vmax.f32 %v1658, %v1659
        %v1661 = vrot.slane %v1660, 2
        %v1662 = vmax.f32 %v1660, %v1661
        %v1663 = vrot.slane %v1662, 1
        %v1664 = vmax.f32 %v1662, %v1663
        %v1665 = vrot.slane %v1216, 4
        %v1666 = vmax.f32 %v1216, %v1665
        %v1667 = vrot.slane %v1666, 2
        %v1668 = vmax.f32 %v1666, %v1667
        %v1669 = vrot.slane %v1668, 1
        %v1670 = vmax.f32 %v1668, %v1669
        %v1671 = vrot.slane %v1363, 4
        %v1672 = vmax.f32 %v1363, %v1671
        %v1673 = vrot.slane %v1672, 2
        %v1674 = vmax.f32 %v1672, %v1673
        %v1675 = vrot.slane %v1674, 1
        %v1676 = vmax.f32 %v1674, %v1675
        %v1677 = vsel %vm1057, %v1510, -inf
        %v1678 = vrot.slane %v1677, 4
        %v1679 = vmax.f32 %v1677, %v1678
        %v1680 = vrot.slane %v1679, 2
        %v1681 = vmax.f32 %v1679, %v1680
        %v1682 = vrot.slane %v1681, 1
        %v1683 = vmax.f32 %v1681, %v1682
        %v1684 = vrot.slane %v1219, 4
        %v1685 = vmax.f32 %v1219, %v1684
        %v1686 = vrot.slane %v1685, 2
        %v1687 = vmax.f32 %v1685, %v1686
        %v1688 = vrot.slane %v1687, 1
        %v1689 = vmax.f32 %v1687, %v1688
        %v1690 = vrot.slane %v1366, 4
        %v1691 = vmax.f32 %v1366, %v1690
        %v1692 = vrot.slane %v1691, 2
        %v1693 = vmax.f32 %v1691, %v1692
        %v1694 = vrot.slane %v1693, 1
        %v1695 = vmax.f32 %v1693, %v1694
        %v1696 = vsel %vm1057, %v1513, -inf
        %v1697 = vrot.slane %v1696, 4
        %v1698 = vmax.f32 %v1696, %v1697
        %v1699 = vrot.slane %v1698, 2
        %v1700 = vmax.f32 %v1698, %v1699
        %v1701 = vrot.slane %v1700, 1
        %v1702 = vmax.f32 %v1700, %v1701
        %v1703 = vrot.slane %v1221, 4
        %v1704 = vmax.f32 %v1221, %v1703
        %v1705 = vrot.slane %v1704, 2
        %v1706 = vmax.f32 %v1704, %v1705
        %v1707 = vrot.slane %v1706, 1
        %v1708 = vmax.f32 %v1706, %v1707
        %v1709 = vrot.slane %v1368, 4
        %v1710 = vmax.f32 %v1368, %v1709
        %v1711 = vrot.slane %v1710, 2
        %v1712 = vmax.f32 %v1710, %v1711
        %v1713 = vrot.slane %v1712, 1
        %v1714 = vmax.f32 %v1712, %v1713
        %v1715 = vsel %vm1057, %v1515, -inf
        %v1716 = vrot.slane %v1715, 4
        %v1717 = vmax.f32 %v1715, %v1716
        %v1718 = vrot.slane %v1717, 2
        %v1719 = vmax.f32 %v1717, %v1718
        %v1720 = vrot.slane %v1719, 1
        %v1721 = vmax.f32 %v1719, %v1720
        %v1722 = vrot.slane %v1224, 4
        %v1723 = vmax.f32 %v1224, %v1722
        %v1724 = vrot.slane %v1723, 2
        %v1725 = vmax.f32 %v1723, %v1724
        %v1726 = vrot.slane %v1725, 1
        %v1727 = vmax.f32 %v1725, %v1726
        %v1728 = vrot.slane %v1371, 4
        %v1729 = vmax.f32 %v1371, %v1728
        %v1730 = vrot.slane %v1729, 2
        %v1731 = vmax.f32 %v1729, %v1730
        %v1732 = vrot.slane %v1731, 1
        %v1733 = vmax.f32 %v1731, %v1732
        %v1734 = vsel %vm1057, %v1518, -inf
        %v1735 = vrot.slane %v1734, 4
        %v1736 = vmax.f32 %v1734, %v1735
        %v1737 = vrot.slane %v1736, 2
        %v1738 = vmax.f32 %v1736, %v1737
        %v1739 = vrot.slane %v1738, 1
        %v1740 = vmax.f32 %v1738, %v1739
        %v1741 = vrot.slane %v1226, 4
        %v1742 = vmax.f32 %v1226, %v1741
        %v1743 = vrot.slane %v1742, 2
        %v1744 = vmax.f32 %v1742, %v1743
        %v1745 = vrot.slane %v1744, 1
        %v1746 = vmax.f32 %v1744, %v1745
        %v1747 = vrot.slane %v1373, 4
        %v1748 = vmax.f32 %v1373, %v1747
        %v1749 = vrot.slane %v1748, 2
        %v1750 = vmax.f32 %v1748, %v1749
        %v1751 = vrot.slane %v1750, 1
        %v1752 = vmax.f32 %v1750, %v1751
        %v1753 = vsel %vm1057, %v1520, -inf
        %v1754 = vrot.slane %v1753, 4
        %v1755 = vmax.f32 %v1753, %v1754
        %v1756 = vrot.slane %v1755, 2
        %v1757 = vmax.f32 %v1755, %v1756
        %v1758 = vrot.slane %v1757, 1
        %v1759 = vmax.f32 %v1757, %v1758
        %v1760 = vrot.slane %v1229, 4
        %v1761 = vmax.f32 %v1229, %v1760
        %v1762 = vrot.slane %v1761, 2
        %v1763 = vmax.f32 %v1761, %v1762
        %v1764 = vrot.slane %v1763, 1
        %v1765 = vmax.f32 %v1763, %v1764
        %v1766 = vrot.slane %v1376, 4
        %v1767 = vmax.f32 %v1376, %v1766
        %v1768 = vrot.slane %v1767, 2
        %v1769 = vmax.f32 %v1767, %v1768
        %v1770 = vrot.slane %v1769, 1
        %v1771 = vmax.f32 %v1769, %v1770
        %v1772 = vsel %vm1057, %v1523, -inf
        %v1773 = vrot.slane %v1772, 4
        %v1774 = vmax.f32 %v1772, %v1773
        %v1775 = vrot.slane %v1774, 2
        %v1776 = vmax.f32 %v1774, %v1775
        %v1777 = vrot.slane %v1776, 1
        %v1778 = vmax.f32 %v1776, %v1777
        %v1779 = vrot.slane %v1231, 4
        %v1780 = vmax.f32 %v1231, %v1779
        %v1781 = vrot.slane %v1780, 2
        %v1782 = vmax.f32 %v1780, %v1781
        %v1783 = vrot.slane %v1782, 1
        %v1784 = vmax.f32 %v1782, %v1783
        %v1785 = vrot.slane %v1378, 4
        %v1786 = vmax.f32 %v1378, %v1785
        %v1787 = vrot.slane %v1786, 2
        %v1788 = vmax.f32 %v1786, %v1787
        %v1789 = vrot.slane %v1788, 1
        %v1790 = vmax.f32 %v1788, %v1789
        %v1791 = vsel %vm1057, %v1525, -inf
        %v1792 = vrot.slane %v1791, 4
        %v1793 = vmax.f32 %v1791, %v1792
        %v1794 = vrot.slane %v1793, 2
        %v1795 = vmax.f32 %v1793, %v1794
        %v1796 = vrot.slane %v1795, 1
        %v1797 = vmax.f32 %v1795, %v1796
        %v1798 = vrot.slane %v1234, 4
        %v1799 = vmax.f32 %v1234, %v1798
        %v1800 = vrot.slane %v1799, 2
        %v1801 = vmax.f32 %v1799, %v1800
        %v1802 = vrot.slane %v1801, 1
        %v1803 = vmax.f32 %v1801, %v1802
        %v1804 = vrot.slane %v1381, 4
        %v1805 = vmax.f32 %v1381, %v1804
        %v1806 = vrot.slane %v1805, 2
        %v1807 = vmax.f32 %v1805, %v1806
        %v1808 = vrot.slane %v1807, 1
        %v1809 = vmax.f32 %v1807, %v1808
        %v1810 = vsel %vm1057, %v1528, -inf
        %v1811 = vrot.slane %v1810, 4
        %v1812 = vmax.f32 %v1810, %v1811
        %v1813 = vrot.slane %v1812, 2
        %v1814 = vmax.f32 %v1812, %v1813
        %v1815 = vrot.slane %v1814, 1
        %v1816 = vmax.f32 %v1814, %v1815
        %v1817 = vrot.slane %v1236, 4
        %v1818 = vmax.f32 %v1236, %v1817
        %v1819 = vrot.slane %v1818, 2
        %v1820 = vmax.f32 %v1818, %v1819
        %v1821 = vrot.slane %v1820, 1
        %v1822 = vmax.f32 %v1820, %v1821
        %v1823 = vrot.slane %v1383, 4
        %v1824 = vmax.f32 %v1383, %v1823
        %v1825 = vrot.slane %v1824, 2
        %v1826 = vmax.f32 %v1824, %v1825
        %v1827 = vrot.slane %v1826, 1
        %v1828 = vmax.f32 %v1826, %v1827
        %v1829 = vsel %vm1057, %v1530, -inf
        %v1830 = vrot.slane %v1829, 4
        %v1831 = vmax.f32 %v1829, %v1830
        %v1832 = vrot.slane %v1831, 2
        %v1833 = vmax.f32 %v1831, %v1832
        %v1834 = vrot.slane %v1833, 1
        %v1835 = vmax.f32 %v1833, %v1834
        %v1836 = vld [vmem:[#allocation4] sm:$0x7]
        %v1838 = vperm.slane %v1836, 0
        %v1839 = vperm.slane %v1836, 1
        %v1840 = vperm.slane %v1836, 2
        %v1844 = vadd.f32 %v1537, %v1838
        %v1845 = vadd.f32 %v1543, %v1839
        %v1846 = vadd.f32 %v1550, %v1840
        %v1847 = vadd.f32 %v1556, %v1838
        %v1848 = vadd.f32 %v1562, %v1839
        %v1849 = vadd.f32 %v1569, %v1840
        %v1850 = vadd.f32 %v1575, %v1838
        %v1851 = vadd.f32 %v1581, %v1839
        %v1852 = vadd.f32 %v1588, %v1840
        %v1853 = vadd.f32 %v1594, %v1838
        %v1854 = vadd.f32 %v1600, %v1839
        %v1855 = vadd.f32 %v1607, %v1840
        %v1856 = vadd.f32 %v1613, %v1838
        %v1857 = vadd.f32 %v1619, %v1839
        %v1858 = vadd.f32 %v1626, %v1840
        %v1859 = vadd.f32 %v1632, %v1838
        %v1860 = vadd.f32 %v1638, %v1839
        %v1861 = vadd.f32 %v1645, %v1840
        %v1862 = vadd.f32 %v1651, %v1838
        %v1863 = vadd.f32 %v1657, %v1839
        %v1864 = vadd.f32 %v1664, %v1840
        %v1865 = vadd.f32 %v1670, %v1838
        %v1866 = vadd.f32 %v1676, %v1839
        %v1867 = vadd.f32 %v1683, %v1840
        %v1868 = vadd.f32 %v1689, %v1838
        %v1869 = vadd.f32 %v1695, %v1839
        %v1870 = vadd.f32 %v1702, %v1840
        %v1871 = vadd.f32 %v1708, %v1838
        %v1872 = vadd.f32 %v1714, %v1839
        %v1873 = vadd.f32 %v1721, %v1840
        %v1874 = vadd.f32 %v1727, %v1838
        %v1875 = vadd.f32 %v1733, %v1839
        %v1876 = vadd.f32 %v1740, %v1840
        %v1877 = vadd.f32 %v1746, %v1838
        %v1878 = vadd.f32 %v1752, %v1839
        %v1879 = vadd.f32 %v1759, %v1840
        %v1880 = vadd.f32 %v1765, %v1838
        %v1881 = vadd.f32 %v1771, %v1839
        %v1882 = vadd.f32 %v1778, %v1840
        %v1883 = vadd.f32 %v1784, %v1838
        %v1884 = vadd.f32 %v1790, %v1839
        %v1885 = vadd.f32 %v1797, %v1840
        %v1886 = vadd.f32 %v1803, %v1838
        %v1887 = vadd.f32 %v1809, %v1839
        %v1888 = vadd.f32 %v1816, %v1840
        %v1889 = vadd.f32 %v1822, %v1838
        %v1890 = vadd.f32 %v1828, %v1839
        %v1891 = vadd.f32 %v1835, %v1840
        %v1892 = vmax.f32 %v1844, 0.0
        %v1893 = vmax.f32 %v1845, 0.0
        %v1894 = vmax.f32 %v1846, 0.0
        %v1895 = vmax.f32 %v1847, 0.0
        %v1896 = vmax.f32 %v1848, 0.0
        %v1897 = vmax.f32 %v1849, 0.0
        %v1898 = vmax.f32 %v1850, 0.0
        %v1899 = vmax.f32 %v1851, 0.0
        %v1900 = vmax.f32 %v1852, 0.0
        %v1901 = vmax.f32 %v1853, 0.0
        %v1902 = vmax.f32 %v1854, 0.0
        %v1903 = vmax.f32 %v1855, 0.0
        %v1904 = vmax.f32 %v1856, 0.0
        %v1905 = vmax.f32 %v1857, 0.0
        %v1906 = vmax.f32 %v1858, 0.0
        %v1907 = vmax.f32 %v1859, 0.0
        %v1908 = vmax.f32 %v1860, 0.0
        %v1909 = vmax.f32 %v1861, 0.0
        %v1910 = vmax.f32 %v1862, 0.0
        %v1911 = vmax.f32 %v1863, 0.0
        %v1912 = vmax.f32 %v1864, 0.0
        %v1913 = vmax.f32 %v1865, 0.0
        %v1914 = vmax.f32 %v1866, 0.0
        %v1915 = vmax.f32 %v1867, 0.0
        %v1916 = vmax.f32 %v1868, 0.0
        %v1917 = vmax.f32 %v1869, 0.0
        %v1918 = vmax.f32 %v1870, 0.0
        %v1919 = vmax.f32 %v1871, 0.0
        %v1920 = vmax.f32 %v1872, 0.0
        %v1921 = vmax.f32 %v1873, 0.0
        %v1922 = vmax.f32 %v1874, 0.0
        %v1923 = vmax.f32 %v1875, 0.0
        %v1924 = vmax.f32 %v1876, 0.0
        %v1925 = vmax.f32 %v1877, 0.0
        %v1926 = vmax.f32 %v1878, 0.0
        %v1927 = vmax.f32 %v1879, 0.0
        %v1928 = vmax.f32 %v1880, 0.0
        %v1929 = vmax.f32 %v1881, 0.0
        %v1930 = vmax.f32 %v1882, 0.0
        %v1931 = vmax.f32 %v1883, 0.0
        %v1932 = vmax.f32 %v1884, 0.0
        %v1933 = vmax.f32 %v1885, 0.0
        %v1934 = vmax.f32 %v1886, 0.0
        %v1935 = vmax.f32 %v1887, 0.0
        %v1936 = vmax.f32 %v1888, 0.0
        %v1937 = vmax.f32 %v1889, 0.0
        %v1938 = vmax.f32 %v1890, 0.0
        %v1939 = vmax.f32 %v1891, 0.0
        %v1940 = vadd.f32 %v1892, 0.0
        %v1941 = vadd.f32 %v1893, 0.0
        %v1942 = vadd.f32 %v1894, 0.0
        %v1943 = vadd.f32 %v1895, 0.0
        %v1944 = vadd.f32 %v1896, 0.0
        %v1945 = vadd.f32 %v1897, 0.0
        %v1946 = vadd.f32 %v1898, 0.0
        %v1947 = vadd.f32 %v1899, 0.0
        %v1948 = vadd.f32 %v1900, 0.0
        %v1949 = vadd.f32 %v1901, 0.0
        %v1950 = vadd.f32 %v1902, 0.0
        %v1951 = vadd.f32 %v1903, 0.0
        %v1952 = vadd.f32 %v1904, 0.0
        %v1953 = vadd.f32 %v1905, 0.0
        %v1954 = vadd.f32 %v1906, 0.0
        %v1955 = vadd.f32 %v1907, 0.0
        %v1956 = vadd.f32 %v1908, 0.0
        %v1957 = vadd.f32 %v1909, 0.0
        %v1958 = vadd.f32 %v1910, 0.0
        %v1959 = vadd.f32 %v1911, 0.0
        %v1960 = vadd.f32 %v1912, 0.0
        %v1961 = vadd.f32 %v1913, 0.0
        %v1962 = vadd.f32 %v1914, 0.0
        %v1963 = vadd.f32 %v1915, 0.0
        %v1964 = vadd.f32 %v1916, 0.0
        %v1965 = vadd.f32 %v1917, 0.0
        %v1966 = vadd.f32 %v1918, 0.0
        %v1967 = vadd.f32 %v1919, 0.0
        %v1968 = vadd.f32 %v1920, 0.0
        %v1969 = vadd.f32 %v1921, 0.0
        %v1970 = vadd.f32 %v1922, 0.0
        %v1971 = vadd.f32 %v1923, 0.0
        %v1972 = vadd.f32 %v1924, 0.0
        %v1973 = vadd.f32 %v1925, 0.0
        %v1974 = vadd.f32 %v1926, 0.0
        %v1975 = vadd.f32 %v1927, 0.0
        %v1976 = vadd.f32 %v1928, 0.0
        %v1977 = vadd.f32 %v1929, 0.0
        %v1978 = vadd.f32 %v1930, 0.0
        %v1979 = vadd.f32 %v1931, 0.0
        %v1980 = vadd.f32 %v1932, 0.0
        %v1981 = vadd.f32 %v1933, 0.0
        %v1982 = vadd.f32 %v1934, 0.0
        %v1983 = vadd.f32 %v1935, 0.0
        %v1984 = vadd.f32 %v1936, 0.0
        %v1985 = vadd.f32 %v1937, 0.0
        %v1986 = vadd.f32 %v1938, 0.0
        %v1987 = vadd.f32 %v1939, 0.0
        %s1988 = scalar_lea.vmem [#allocation2], 456
        %v1989 = vld [vmem:[%s1988] sm:$0xff]
        %v1990 = vld [vmem:[%s1988 + $0x8] sm:$0xf]
        %v1991 = vld [vmem:[%s1988 + $0xc] sm:$0xff]
        %v1992 = vld [vmem:[%s1988 + $0x14] sm:$0xf]
        %v1993 = vld [vmem:[%s1988 + $0x18] sm:$0xff]
        %v1994 = vld [vmem:[%s1988 + $0x20] sm:$0xf]
        %v1995 = vld [vmem:[%s1988 + $0x24] sm:$0xff]
        %v1996 = vld [vmem:[%s1988 + $0x2c] sm:$0xf]
        %v1997 = vld [vmem:[%s1988 + $0x30] sm:$0xff]
        %v1998 = vld [vmem:[%s1988 + $0x38] sm:$0xf]
        %v1999 = vld [vmem:[%s1988 + $0x3c] sm:$0xff]
        %v2000 = vld [vmem:[%s1988 + $0x44] sm:$0xf]
        %v2001 = vld [vmem:[%s1988 + $0x48] sm:$0xff]
        %v2002 = vld [vmem:[%s1988 + $0x50] sm:$0xf]
        %v2003 = vld [vmem:[%s1988 + $0x54] sm:$0xff]
        %v2004 = vld [vmem:[%s1988 + $0x5c] sm:$0xf]
        %v2005 = vld [vmem:[%s1988 + $0x60] sm:$0xff]
        %v2006 = vld [vmem:[%s1988 + $0x68] sm:$0xf]
        %v2007 = vld [vmem:[%s1988 + $0x6c] sm:$0xff]
        %v2008 = vld [vmem:[%s1988 + $0x74] sm:$0xf]
        %v2009 = vld [vmem:[%s1988 + $0x78] sm:$0xff]
        %v2010 = vld [vmem:[%s1988 + $0x80] sm:$0xf]
        %v2011 = vld [vmem:[%s1988 + $0x84] sm:$0xff]
        %v2012 = vld [vmem:[%s1988 + $0x8c] sm:$0xf]
        %v2013 = vld [vmem:[%s1988 + $0x90] sm:$0xff]
        %v2014 = vld [vmem:[%s1988 + $0x98] sm:$0xf]
        %v2015 = vld [vmem:[%s1988 + $0x9c] sm:$0xff]
        %v2016 = vld [vmem:[%s1988 + $0xa4] sm:$0xf]
        %v2017 = vld [vmem:[%s1988 + $0xa8] sm:$0xff]
        %v2018 = vld [vmem:[%s1988 + $0xb0] sm:$0xf]
        %v2019 = vld [vmem:[%s1988 + $0xb4] sm:$0xff]
        %v2020 = vld [vmem:[%s1988 + $0xbc] sm:$0xf]
        %v2021 = vld [vmem:[%s1988 + $0xc0] sm:$0xff]
        %v2022 = vld [vmem:[%s1988 + $0xc8] sm:$0xf]
        %v2023 = vld [vmem:[%s1988 + $0xcc] sm:$0xff]
        %v2024 = vld [vmem:[%s1988 + $0xd4] sm:$0xf]
        %v2025 = vld [vmem:[%s1988 + $0xd8] sm:$0xff]
        %v2026 = vld [vmem:[%s1988 + $0xe0] sm:$0xf]
        %v2027 = vld [vmem:[%s1988 + $0xe4] sm:$0xff]
        %v2028 = vld [vmem:[%s1988 + $0xec] sm:$0xf]
        %v2029 = vld [vmem:[%s1988 + $0xf0] sm:$0xff]
        %v2030 = vld [vmem:[%s1988 + $0xf8] sm:$0xf]
        %v2031 = vld [vmem:[%s1988 + $0xfc] sm:$0xff]
        %v2032 = vld [vmem:[%s1988 + $0x104] sm:$0xf]
        %v2033 = vld [vmem:[%s1988 + $0x108] sm:$0xff]
        %v2034 = vld [vmem:[%s1988 + $0x110] sm:$0xf]
        %v2035 = vld [vmem:[%s1988 + $0x114] sm:$0xff]
        %v2036 = vld [vmem:[%s1988 + $0x11c] sm:$0xf]
        %v2037 = vld [vmem:[%s1988 + $0x120] sm:$0xff]
        %v2038 = vld [vmem:[%s1988 + $0x128] sm:$0xf]
        %v2039 = vld [vmem:[%s1988 + $0x12c] sm:$0xff]
        %v2040 = vld [vmem:[%s1988 + $0x134] sm:$0xf]
        %v2041 = vld [vmem:[%s1988 + $0x138] sm:$0xff]
        %v2042 = vld [vmem:[%s1988 + $0x140] sm:$0xf]
        %v2043 = vld [vmem:[%s1988 + $0x144] sm:$0xff]
        %v2044 = vld [vmem:[%s1988 + $0x14c] sm:$0xf]
        %v2045 = vld [vmem:[%s1988 + $0x150] sm:$0xff]
        %v2046 = vld [vmem:[%s1988 + $0x158] sm:$0xf]
        %v2047 = vld [vmem:[%s1988 + $0x15c] sm:$0xff]
        %v2048 = vld [vmem:[%s1988 + $0x164] sm:$0xf]
        %v2049 = vld [vmem:[%s1988 + $0x168] sm:$0xff]
        %v2050 = vld [vmem:[%s1988 + $0x170] sm:$0xf]
        %v2051 = vld [vmem:[%s1988 + $0x174] sm:$0xff]
        %v2052 = vld [vmem:[%s1988 + $0x17c] sm:$0xf]
        %v2053 = vld [vmem:[%s1988 + $0x180] sm:$0xff]
        %v2054 = vld [vmem:[%s1988 + $0x188] sm:$0xf]
        %v2055 = vld [vmem:[%s1988 + $0x18c] sm:$0xff]
        %v2056 = vld [vmem:[%s1988 + $0x194] sm:$0xf]
        %v2057 = vld [vmem:[%s1988 + $0x198] sm:$0xff]
        %v2058 = vld [vmem:[%s1988 + $0x1a0] sm:$0xf]
        %v2059 = vld [vmem:[%s1988 + $0x1a4] sm:$0xff]
        %v2060 = vld [vmem:[%s1988 + $0x1ac] sm:$0xf]
        %v2061 = vld [vmem:[%s1988 + $0x1b0] sm:$0xff]
        %v2062 = vld [vmem:[%s1988 + $0x1b8] sm:$0xf]
        %v2063 = vld [vmem:[%s1988 + $0x1bc] sm:$0x33]
        %v2064 = vld [vmem:[%s1988 + $0x1c4] sm:$0x3]
        %s2065 = scalar_lea.vmem [#allocation2], 912
        %v2066 = vld [vmem:[%s2065] sm:$0xff]
        %v2067 = vld [vmem:[%s2065 + $0x8] sm:$0xf]
        %v2068 = vld [vmem:[%s2065 + $0xc] sm:$0xff]
        %v2069 = vld [vmem:[%s2065 + $0x14] sm:$0xf]
        %v2070 = vld [vmem:[%s2065 + $0x18] sm:$0xff]
        %v2071 = vld [vmem:[%s2065 + $0x20] sm:$0xf]
        %v2072 = vld [vmem:[%s2065 + $0x24] sm:$0xff]
        %v2073 = vld [vmem:[%s2065 + $0x2c] sm:$0xf]
        %v2074 = vld [vmem:[%s2065 + $0x30] sm:$0xff]
        %v2075 = vld [vmem:[%s2065 + $0x38] sm:$0xf]
        %v2076 = vld [vmem:[%s2065 + $0x3c] sm:$0xff]
        %v2077 = vld [vmem:[%s2065 + $0x44] sm:$0xf]
        %v2078 = vld [vmem:[%s2065 + $0x48] sm:$0xff]
        %v2079 = vld [vmem:[%s2065 + $0x50] sm:$0xf]
        %v2080 = vld [vmem:[%s2065 + $0x54] sm:$0xff]
        %v2081 = vld [vmem:[%s2065 + $0x5c] sm:$0xf]
        %v2082 = vld [vmem:[%s2065 + $0x60] sm:$0xff]
        %v2083 = vld [vmem:[%s2065 + $0x68] sm:$0xf]
        %v2084 = vld [vmem:[%s2065 + $0x6c] sm:$0xff]
        %v2085 = vld [vmem:[%s2065 + $0x74] sm:$0xf]
        %v2086 = vld [vmem:[%s2065 + $0x78] sm:$0xff]
        %v2087 = vld [vmem:[%s2065 + $0x80] sm:$0xf]
        %v2088 = vld [vmem:[%s2065 + $0x84] sm:$0xff]
        %v2089 = vld [vmem:[%s2065 + $0x8c] sm:$0xf]
        %v2090 = vld [vmem:[%s2065 + $0x90] sm:$0xff]
        %v2091 = vld [vmem:[%s2065 + $0x98] sm:$0xf]
        %v2092 = vld [vmem:[%s2065 + $0x9c] sm:$0xff]
        %v2093 = vld [vmem:[%s2065 + $0xa4] sm:$0xf]
        %v2094 = vld [vmem:[%s2065 + $0xa8] sm:$0xff]
        %v2095 = vld [vmem:[%s2065 + $0xb0] sm:$0xf]
        %v2096 = vld [vmem:[%s2065 + $0xb4] sm:$0xff]
        %v2097 = vld [vmem:[%s2065 + $0xbc] sm:$0xf]
        %v2098 = vld [vmem:[%s2065 + $0xc0] sm:$0xff]
        %v2099 = vld [vmem:[%s2065 + $0xc8] sm:$0xf]
        %v2100 = vld [vmem:[%s2065 + $0xcc] sm:$0xff]
        %v2101 = vld [vmem:[%s2065 + $0xd4] sm:$0xf]
        %v2102 = vld [vmem:[%s2065 + $0xd8] sm:$0xff]
        %v2103 = vld [vmem:[%s2065 + $0xe0] sm:$0xf]
        %v2104 = vld [vmem:[%s2065 + $0xe4] sm:$0xff]
        %v2105 = vld [vmem:[%s2065 + $0xec] sm:$0xf]
        %v2106 = vld [vmem:[%s2065 + $0xf0] sm:$0xff]
        %v2107 = vld [vmem:[%s2065 + $0xf8] sm:$0xf]
        %v2108 = vld [vmem:[%s2065 + $0xfc] sm:$0xff]
        %v2109 = vld [vmem:[%s2065 + $0x104] sm:$0xf]
        %v2110 = vld [vmem:[%s2065 + $0x108] sm:$0xff]
        %v2111 = vld [vmem:[%s2065 + $0x110] sm:$0xf]
        %v2112 = vld [vmem:[%s2065 + $0x114] sm:$0xff]
        %v2113 = vld [vmem:[%s2065 + $0x11c] sm:$0xf]
        %v2114 = vld [vmem:[%s2065 + $0x120] sm:$0xff]
        %v2115 = vld [vmem:[%s2065 + $0x128] sm:$0xf]
        %v2116 = vld [vmem:[%s2065 + $0x12c] sm:$0xff]
        %v2117 = vld [vmem:[%s2065 + $0x134] sm:$0xf]
        %v2118 = vld [vmem:[%s2065 + $0x138] sm:$0xff]
        %v2119 = vld [vmem:[%s2065 + $0x140] sm:$0xf]
        %v2120 = vld [vmem:[%s2065 + $0x144] sm:$0xff]
        %v2121 = vld [vmem:[%s2065 + $0x14c] sm:$0xf]
        %v2122 = vld [vmem:[%s2065 + $0x150] sm:$0xff]
        %v2123 = vld [vmem:[%s2065 + $0x158] sm:$0xf]
        %v2124 = vld [vmem:[%s2065 + $0x15c] sm:$0xff]
        %v2125 = vld [vmem:[%s2065 + $0x164] sm:$0xf]
        %v2126 = vld [vmem:[%s2065 + $0x168] sm:$0xff]
        %v2127 = vld [vmem:[%s2065 + $0x170] sm:$0xf]
        %v2128 = vld [vmem:[%s2065 + $0x174] sm:$0xff]
        %v2129 = vld [vmem:[%s2065 + $0x17c] sm:$0xf]
        %v2130 = vld [vmem:[%s2065 + $0x180] sm:$0xff]
        %v2131 = vld [vmem:[%s2065 + $0x188] sm:$0xf]
        %v2132 = vld [vmem:[%s2065 + $0x18c] sm:$0xff]
        %v2133 = vld [vmem:[%s2065 + $0x194] sm:$0xf]
        %v2134 = vld [vmem:[%s2065 + $0x198] sm:$0xff]
        %v2135 = vld [vmem:[%s2065 + $0x1a0] sm:$0xf]
        %v2136 = vld [vmem:[%s2065 + $0x1a4] sm:$0xff]
        %v2137 = vld [vmem:[%s2065 + $0x1ac] sm:$0xf]
        %v2138 = vld [vmem:[%s2065 + $0x1b0] sm:$0xff]
        %v2139 = vld [vmem:[%s2065 + $0x1b8] sm:$0xf]
        %v2140 = vld [vmem:[%s2065 + $0x1bc] sm:$0x33]
        %v2141 = vld [vmem:[%s2065 + $0x1c4] sm:$0x3]
        %v2218 = vunpack.c.l.b16 %v2066
        %v2219 = vunpack.c.h.b16 %v2066
        %v2220 = vunpack.c.l.b16 %v2067
        %v2221 = vunpack.c.l.b16 %v2068
        %v2222 = vunpack.c.h.b16 %v2068
        %v2223 = vunpack.c.l.b16 %v2069
        %v2224 = vunpack.c.l.b16 %v2070
        %v2225 = vunpack.c.h.b16 %v2070
        %v2226 = vunpack.c.l.b16 %v2071
        %v2227 = vunpack.c.l.b16 %v2072
        %v2228 = vunpack.c.h.b16 %v2072
        %v2229 = vunpack.c.l.b16 %v2073
        %v2230 = vunpack.c.l.b16 %v2074
        %v2231 = vunpack.c.h.b16 %v2074
        %v2232 = vunpack.c.l.b16 %v2075
        %v2233 = vunpack.c.l.b16 %v2076
        %v2234 = vunpack.c.h.b16 %v2076
        %v2235 = vunpack.c.l.b16 %v2077
        %v2236 = vunpack.c.l.b16 %v2078
        %v2237 = vunpack.c.h.b16 %v2078
        %v2238 = vunpack.c.l.b16 %v2079
        %v2239 = vunpack.c.l.b16 %v2080
        %v2240 = vunpack.c.h.b16 %v2080
        %v2241 = vunpack.c.l.b16 %v2081
        %v2242 = vunpack.c.l.b16 %v2082
        %v2243 = vunpack.c.h.b16 %v2082
        %v2244 = vunpack.c.l.b16 %v2083
        %v2245 = vunpack.c.l.b16 %v2084
        %v2246 = vunpack.c.h.b16 %v2084
        %v2247 = vunpack.c.l.b16 %v2085
        %v2248 = vunpack.c.l.b16 %v2086
        %v2249 = vunpack.c.h.b16 %v2086
        %v2250 = vunpack.c.l.b16 %v2087
        %v2251 = vunpack.c.l.b16 %v2088
        %v2252 = vunpack.c.h.b16 %v2088
        %v2253 = vunpack.c.l.b16 %v2089
        %v2254 = vunpack.c.l.b16 %v2090
        %v2255 = vunpack.c.h.b16 %v2090
        %v2256 = vunpack.c.l.b16 %v2091
        %v2257 = vunpack.c.l.b16 %v2092
        %v2258 = vunpack.c.h.b16 %v2092
        %v2259 = vunpack.c.l.b16 %v2093
        %v2260 = vunpack.c.l.b16 %v2094
        %v2261 = vunpack.c.h.b16 %v2094
        %v2262 = vunpack.c.l.b16 %v2095
        %v2263 = vunpack.c.l.b16 %v2096
        %v2264 = vunpack.c.h.b16 %v2096
        %v2265 = vunpack.c.l.b16 %v2097
        %v2266 = vunpack.c.l.b16 %v2098
        %v2267 = vunpack.c.h.b16 %v2098
        %v2268 = vunpack.c.l.b16 %v2099
        %v2269 = vunpack.c.l.b16 %v2100
        %v2270 = vunpack.c.h.b16 %v2100
        %v2271 = vunpack.c.l.b16 %v2101
        %v2272 = vunpack.c.l.b16 %v2102
        %v2273 = vunpack.c.h.b16 %v2102
        %v2274 = vunpack.c.l.b16 %v2103
        %v2275 = vunpack.c.l.b16 %v2104
        %v2276 = vunpack.c.h.b16 %v2104
        %v2277 = vunpack.c.l.b16 %v2105
        %v2278 = vunpack.c.l.b16 %v2106
        %v2279 = vunpack.c.h.b16 %v2106
        %v2280 = vunpack.c.l.b16 %v2107
        %v2281 = vunpack.c.l.b16 %v2108
        %v2282 = vunpack.c.h.b16 %v2108
        %v2283 = vunpack.c.l.b16 %v2109
        %v2284 = vunpack.c.l.b16 %v2110
        %v2285 = vunpack.c.h.b16 %v2110
        %v2286 = vunpack.c.l.b16 %v2111
        %v2287 = vunpack.c.l.b16 %v2112
        %v2288 = vunpack.c.h.b16 %v2112
        %v2289 = vunpack.c.l.b16 %v2113
        %v2290 = vunpack.c.l.b16 %v2114
        %v2291 = vunpack.c.h.b16 %v2114
        %v2292 = vunpack.c.l.b16 %v2115
        %v2293 = vunpack.c.l.b16 %v2116
        %v2294 = vunpack.c.h.b16 %v2116
        %v2295 = vunpack.c.l.b16 %v2117
        %v2296 = vunpack.c.l.b16 %v2118
        %v2297 = vunpack.c.h.b16 %v2118
        %v2298 = vunpack.c.l.b16 %v2119
        %v2299 = vunpack.c.l.b16 %v2120
        %v2300 = vunpack.c.h.b16 %v2120
        %v2301 = vunpack.c.l.b16 %v2121
        %v2302 = vunpack.c.l.b16 %v2122
        %v2303 = vunpack.c.h.b16 %v2122
        %v2304 = vunpack.c.l.b16 %v2123
        %v2305 = vunpack.c.l.b16 %v2124
        %v2306 = vunpack.c.h.b16 %v2124
        %v2307 = vunpack.c.l.b16 %v2125
        %v2308 = vunpack.c.l.b16 %v2126
        %v2309 = vunpack.c.h.b16 %v2126
        %v2310 = vunpack.c.l.b16 %v2127
        %v2311 = vunpack.c.l.b16 %v2128
        %v2312 = vunpack.c.h.b16 %v2128
        %v2313 = vunpack.c.l.b16 %v2129
        %v2314 = vunpack.c.l.b16 %v2130
        %v2315 = vunpack.c.h.b16 %v2130
        %v2316 = vunpack.c.l.b16 %v2131
        %v2317 = vunpack.c.l.b16 %v2132
        %v2318 = vunpack.c.h.b16 %v2132
        %v2319 = vunpack.c.l.b16 %v2133
        %v2320 = vunpack.c.l.b16 %v2134
        %v2321 = vunpack.c.h.b16 %v2134
        %v2322 = vunpack.c.l.b16 %v2135
        %v2323 = vunpack.c.l.b16 %v2136
        %v2324 = vunpack.c.h.b16 %v2136
        %v2325 = vunpack.c.l.b16 %v2137
        %v2326 = vunpack.c.l.b16 %v2138
        %v2327 = vunpack.c.h.b16 %v2138
        %v2328 = vunpack.c.l.b16 %v2139
        %v2329 = vunpack.c.l.b16 %v2140
        %v2330 = vunpack.c.h.b16 %v2140
        %v2331 = vunpack.c.l.b16 %v2141
        %v2332 = vpack.c.b16 %v2221, %v2218
        %v2333 = vpack.c.b16 %v2222, %v2219
        %v2334 = vpack.c.b16 %v2223, %v2220
        %v2335 = vpack.c.b16 %v2227, %v2224
        %v2336 = vpack.c.b16 %v2228, %v2225
        %v2337 = vpack.c.b16 %v2229, %v2226
        %v2338 = vpack.c.b16 %v2233, %v2230
        %v2339 = vpack.c.b16 %v2234, %v2231
        %v2340 = vpack.c.b16 %v2235, %v2232
        %v2341 = vpack.c.b16 %v2239, %v2236
        %v2342 = vpack.c.b16 %v2240, %v2237
        %v2343 = vpack.c.b16 %v2241, %v2238
        %v2344 = vpack.c.b16 %v2245, %v2242
        %v2345 = vpack.c.b16 %v2246, %v2243
        %v2346 = vpack.c.b16 %v2247, %v2244
        %v2347 = vpack.c.b16 %v2251, %v2248
        %v2348 = vpack.c.b16 %v2252, %v2249
        %v2349 = vpack.c.b16 %v2253, %v2250
        %v2350 = vpack.c.b16 %v2257, %v2254
        %v2351 = vpack.c.b16 %v2258, %v2255
        %v2352 = vpack.c.b16 %v2259, %v2256
        %v2353 = vpack.c.b16 %v2263, %v2260
        %v2354 = vpack.c.b16 %v2264, %v2261
        %v2355 = vpack.c.b16 %v2265, %v2262
        %v2356 = vpack.c.b16 %v2269, %v2266
        %v2357 = vpack.c.b16 %v2270, %v2267
        %v2358 = vpack.c.b16 %v2271, %v2268
        %v2359 = vpack.c.b16 %v2275, %v2272
        %v2360 = vpack.c.b16 %v2276, %v2273
        %v2361 = vpack.c.b16 %v2277, %v2274
        %v2362 = vpack.c.b16 %v2281, %v2278
        %v2363 = vpack.c.b16 %v2282, %v2279
        %v2364 = vpack.c.b16 %v2283, %v2280
        %v2365 = vpack.c.b16 %v2287, %v2284
        %v2366 = vpack.c.b16 %v2288, %v2285
        %v2367 = vpack.c.b16 %v2289, %v2286
        %v2368 = vpack.c.b16 %v2293, %v2290
        %v2369 = vpack.c.b16 %v2294, %v2291
        %v2370 = vpack.c.b16 %v2295, %v2292
        %v2371 = vpack.c.b16 %v2299, %v2296
        %v2372 = vpack.c.b16 %v2300, %v2297
        %v2373 = vpack.c.b16 %v2301, %v2298
        %v2374 = vpack.c.b16 %v2305, %v2302
        %v2375 = vpack.c.b16 %v2306, %v2303
        %v2376 = vpack.c.b16 %v2307, %v2304
        %v2377 = vpack.c.b16 %v2311, %v2308
        %v2378 = vpack.c.b16 %v2312, %v2309
        %v2379 = vpack.c.b16 %v2313, %v2310
        %v2380 = vpack.c.b16 %v2317, %v2314
        %v2381 = vpack.c.b16 %v2318, %v2315
        %v2382 = vpack.c.b16 %v2319, %v2316
        %v2383 = vpack.c.b16 %v2323, %v2320
        %v2384 = vpack.c.b16 %v2324, %v2321
        %v2385 = vpack.c.b16 %v2325, %v2322
        %v2386 = vpack.c.b16 %v2329, %v2326
        %v2387 = vpack.c.b16 %v2330, %v2327
        %v2388 = vpack.c.b16 %v2331, %v2328
        %v2444 = vsel %vm1057, %v632, 0
        %v2447 = vsel %vm1057, %v635, 0
        %v2450 = vsel %vm1057, %v638, 0
        %v2453 = vsel %vm1057, %v641, 0
        %v2456 = vsel %vm1057, %v644, 0
        %v2459 = vsel %vm1057, %v647, 0
        %v2462 = vsel %vm1057, %v650, 0
        %v2465 = vsel %vm1057, %v653, 0
        %v2468 = vsel %vm458, %v2386, 0
        %v2471 = vsel %vm458, %v2387, 0
        %v2474 = vsel %vm458, %v2388, 0
        %2476 = vmatpush.bf16.msra.mxu0 %v2353
        %2477 = vmatpush.bf16.msra.mxu0 %v2350
        %2478 = vmatpush.bf16.msra.mxu0 %v2347
        %2479 = vmatpush.bf16.msra.mxu0 %v2344
        %2480 = vmatpush.bf16.msra.mxu0 %v2341
        %2481 = vmatpush.bf16.msra.mxu0 %v2338
        %2482 = vmatpush.bf16.msra.mxu0 %v2335
        %2483 = vmatpush.bf16.msra.mxu0 %v2332
        %2484 = vmatmul.bf16.gmra.mxu0 %v630
        %v2485 = vpop.f32.mrf.mxu0
        %v2486 = vadd.f32 0.0, %v2485
        %v2487 = vpop.f32.mrf.mxu0
        %v2488 = vadd.f32 0.0, %v2487
        %2489 = vmatmul.bf16.gmra.mxu0 %v633
        %v2490 = vpop.f32.mrf.mxu0
        %v2491 = vadd.f32 0.0, %v2490
        %v2492 = vpop.f32.mrf.mxu0
        %v2493 = vadd.f32 0.0, %v2492
        %2494 = vmatmul.bf16.gmra.mxu0 %v636
        %v2495 = vpop.f32.mrf.mxu0
        %v2496 = vadd.f32 0.0, %v2495
        %v2497 = vpop.f32.mrf.mxu0
        %v2498 = vadd.f32 0.0, %v2497
        %2499 = vmatmul.bf16.gmra.mxu0 %v639
        %v2500 = vpop.f32.mrf.mxu0
        %v2501 = vadd.f32 0.0, %v2500
        %v2502 = vpop.f32.mrf.mxu0
        %v2503 = vadd.f32 0.0, %v2502
        %2504 = vmatmul.bf16.gmra.mxu0 %v642
        %v2505 = vpop.f32.mrf.mxu0
        %v2506 = vadd.f32 0.0, %v2505
        %v2507 = vpop.f32.mrf.mxu0
        %v2508 = vadd.f32 0.0, %v2507
        %2509 = vmatmul.bf16.gmra.mxu0 %v645
        %v2510 = vpop.f32.mrf.mxu0
        %v2511 = vadd.f32 0.0, %v2510
        %v2512 = vpop.f32.mrf.mxu0
        %v2513 = vadd.f32 0.0, %v2512
        %2514 = vmatmul.bf16.gmra.mxu0 %v648
        %v2515 = vpop.f32.mrf.mxu0
        %v2516 = vadd.f32 0.0, %v2515
        %v2517 = vpop.f32.mrf.mxu0
        %v2518 = vadd.f32 0.0, %v2517
        %2519 = vmatmul.bf16.gmra.mxu0 %v651
        %v2520 = vpop.f32.mrf.mxu0
        %v2521 = vadd.f32 0.0, %v2520
        %v2522 = vpop.f32.mrf.mxu0
        %v2523 = vadd.f32 0.0, %v2522
        %2524 = vdwg.mxu0
        %2525 = vmatpush.bf16.msra.mxu0 %v2377
        %2526 = vmatpush.bf16.msra.mxu0 %v2374
        %2527 = vmatpush.bf16.msra.mxu0 %v2371
        %2528 = vmatpush.bf16.msra.mxu0 %v2368
        %2529 = vmatpush.bf16.msra.mxu0 %v2365
        %2530 = vmatpush.bf16.msra.mxu0 %v2362
        %2531 = vmatpush.bf16.msra.mxu0 %v2359
        %2532 = vmatpush.bf16.msra.mxu0 %v2356
        %2533 = vmatmul.bf16.gmra.mxu0 %v631
        %v2534 = vpop.f32.mrf.mxu0
        %v2535 = vadd.f32 %v2486, %v2534
        %v2536 = vpop.f32.mrf.mxu0
        %v2537 = vadd.f32 %v2488, %v2536
        %2538 = vmatmul.bf16.gmra.mxu0 %v634
        %v2539 = vpop.f32.mrf.mxu0
        %v2540 = vadd.f32 %v2491, %v2539
        %v2541 = vpop.f32.mrf.mxu0
        %v2542 = vadd.f32 %v2493, %v2541
        %2543 = vmatmul.bf16.gmra.mxu0 %v637
        %v2544 = vpop.f32.mrf.mxu0
        %v2545 = vadd.f32 %v2496, %v2544
        %v2546 = vpop.f32.mrf.mxu0
        %v2547 = vadd.f32 %v2498, %v2546
        %2548 = vmatmul.bf16.gmra.mxu0 %v640
        %v2549 = vpop.f32.mrf.mxu0
        %v2550 = vadd.f32 %v2501, %v2549
        %v2551 = vpop.f32.mrf.mxu0
        %v2552 = vadd.f32 %v2503, %v2551
        %2553 = vmatmul.bf16.gmra.mxu0 %v643
        %v2554 = vpop.f32.mrf.mxu0
        %v2555 = vadd.f32 %v2506, %v2554
        %v2556 = vpop.f32.mrf.mxu0
        %v2557 = vadd.f32 %v2508, %v2556
        %2558 = vmatmul.bf16.gmra.mxu0 %v646
        %v2559 = vpop.f32.mrf.mxu0
        %v2560 = vadd.f32 %v2511, %v2559
        %v2561 = vpop.f32.mrf.mxu0
        %v2562 = vadd.f32 %v2513, %v2561
        %2563 = vmatmul.bf16.gmra.mxu0 %v649
        %v2564 = vpop.f32.mrf.mxu0
        %v2565 = vadd.f32 %v2516, %v2564
        %v2566 = vpop.f32.mrf.mxu0
        %v2567 = vadd.f32 %v2518, %v2566
        %2568 = vmatmul.bf16.gmra.mxu0 %v652
        %v2569 = vpop.f32.mrf.mxu0
        %v2570 = vadd.f32 %v2521, %v2569
        %v2571 = vpop.f32.mrf.mxu0
        %v2572 = vadd.f32 %v2523, %v2571
        %2573 = vdwg.mxu0
        %2574 = vmatpush.bf16.msra.mxu0 0
        %2575 = vmatpush.bf16.msra.mxu0 0
        %2576 = vmatpush.bf16.msra.mxu0 0
        %2577 = vmatpush.bf16.msra.mxu0 0
        %2578 = vmatpush.bf16.msra.mxu0 0
        %2579 = vmatpush.bf16.msra.mxu0 %v2468
        %2580 = vmatpush.bf16.msra.mxu0 %v2383
        %2581 = vmatpush.bf16.msra.mxu0 %v2380
        %2582 = vmatmul.bf16.gmra.mxu0 %v2444
        %v2583 = vpop.f32.mrf.mxu0
        %v2584 = vadd.f32 %v2535, %v2583
        %v2585 = vpop.f32.mrf.mxu0
        %v2586 = vadd.f32 %v2537, %v2585
        %2587 = vmatmul.bf16.gmra.mxu0 %v2447
        %v2588 = vpop.f32.mrf.mxu0
        %v2589 = vadd.f32 %v2540, %v2588
        %v2590 = vpop.f32.mrf.mxu0
        %v2591 = vadd.f32 %v2542, %v2590
        %2592 = vmatmul.bf16.gmra.mxu0 %v2450
        %v2593 = vpop.f32.mrf.mxu0
        %v2594 = vadd.f32 %v2545, %v2593
        %v2595 = vpop.f32.mrf.mxu0
        %v2596 = vadd.f32 %v2547, %v2595
        %2597 = vmatmul.bf16.gmra.mxu0 %v2453
        %v2598 = vpop.f32.mrf.mxu0
        %v2599 = vadd.f32 %v2550, %v2598
        %v2600 = vpop.f32.mrf.mxu0
        %v2601 = vadd.f32 %v2552, %v2600
        %2602 = vmatmul.bf16.gmra.mxu0 %v2456
        %v2603 = vpop.f32.mrf.mxu0
        %v2604 = vadd.f32 %v2555, %v2603
        %v2605 = vpop.f32.mrf.mxu0
        %v2606 = vadd.f32 %v2557, %v2605
        %2607 = vmatmul.bf16.gmra.mxu0 %v2459
        %v2608 = vpop.f32.mrf.mxu0
        %v2609 = vadd.f32 %v2560, %v2608
        %v2610 = vpop.f32.mrf.mxu0
        %v2611 = vadd.f32 %v2562, %v2610
        %2612 = vmatmul.bf16.gmra.mxu0 %v2462
        %v2613 = vpop.f32.mrf.mxu0
        %v2614 = vadd.f32 %v2565, %v2613
        %v2615 = vpop.f32.mrf.mxu0
        %v2616 = vadd.f32 %v2567, %v2615
        %2617 = vmatmul.bf16.gmra.mxu0 %v2465
        %v2618 = vpop.f32.mrf.mxu0
        %v2619 = vadd.f32 %v2570, %v2618
        %v2620 = vpop.f32.mrf.mxu0
        %v2621 = vadd.f32 %v2572, %v2620
        %2622 = vdwg.mxu0
        %2623 = vmatpush.bf16.msra.mxu0 %v2354
        %2624 = vmatpush.bf16.msra.mxu0 %v2351
        %2625 = vmatpush.bf16.msra.mxu0 %v2348
        %2626 = vmatpush.bf16.msra.mxu0 %v2345
        %2627 = vmatpush.bf16.msra.mxu0 %v2342
        %2628 = vmatpush.bf16.msra.mxu0 %v2339
        %2629 = vmatpush.bf16.msra.mxu0 %v2336
        %2630 = vmatpush.bf16.msra.mxu0 %v2333
        %2631 = vmatmul.bf16.gmra.mxu0 %v630
        %v2632 = vpop.f32.mrf.mxu0
        %v2633 = vadd.f32 0.0, %v2632
        %v2634 = vpop.f32.mrf.mxu0
        %v2635 = vadd.f32 0.0, %v2634
        %2636 = vmatmul.bf16.gmra.mxu0 %v633
        %v2637 = vpop.f32.mrf.mxu0
        %v2638 = vadd.f32 0.0, %v2637
        %v2639 = vpop.f32.mrf.mxu0
        %v2640 = vadd.f32 0.0, %v2639
        %2641 = vmatmul.bf16.gmra.mxu0 %v636
        %v2642 = vpop.f32.mrf.mxu0
        %v2643 = vadd.f32 0.0, %v2642
        %v2644 = vpop.f32.mrf.mxu0
        %v2645 = vadd.f32 0.0, %v2644
        %2646 = vmatmul.bf16.gmra.mxu0 %v639
        %v2647 = vpop.f32.mrf.mxu0
        %v2648 = vadd.f32 0.0, %v2647
        %v2649 = vpop.f32.mrf.mxu0
        %v2650 = vadd.f32 0.0, %v2649
        %2651 = vmatmul.bf16.gmra.mxu0 %v642
        %v2652 = vpop.f32.mrf.mxu0
        %v2653 = vadd.f32 0.0, %v2652
        %v2654 = vpop.f32.mrf.mxu0
        %v2655 = vadd.f32 0.0, %v2654
        %2656 = vmatmul.bf16.gmra.mxu0 %v645
        %v2657 = vpop.f32.mrf.mxu0
        %v2658 = vadd.f32 0.0, %v2657
        %v2659 = vpop.f32.mrf.mxu0
        %v2660 = vadd.f32 0.0, %v2659
        %2661 = vmatmul.bf16.gmra.mxu0 %v648
        %v2662 = vpop.f32.mrf.mxu0
        %v2663 = vadd.f32 0.0, %v2662
        %v2664 = vpop.f32.mrf.mxu0
        %v2665 = vadd.f32 0.0, %v2664
        %2666 = vmatmul.bf16.gmra.mxu0 %v651
        %v2667 = vpop.f32.mrf.mxu0
        %v2668 = vadd.f32 0.0, %v2667
        %v2669 = vpop.f32.mrf.mxu0
        %v2670 = vadd.f32 0.0, %v2669
        %2671 = vdwg.mxu0
        %2672 = vmatpush.bf16.msra.mxu0 %v2378
        %2673 = vmatpush.bf16.msra.mxu0 %v2375
        %2674 = vmatpush.bf16.msra.mxu0 %v2372
        %2675 = vmatpush.bf16.msra.mxu0 %v2369
        %2676 = vmatpush.bf16.msra.mxu0 %v2366
        %2677 = vmatpush.bf16.msra.mxu0 %v2363
        %2678 = vmatpush.bf16.msra.mxu0 %v2360
        %2679 = vmatpush.bf16.msra.mxu0 %v2357
        %2680 = vmatmul.bf16.gmra.mxu0 %v631
        %v2681 = vpop.f32.mrf.mxu0
        %v2682 = vadd.f32 %v2633, %v2681
        %v2683 = vpop.f32.mrf.mxu0
        %v2684 = vadd.f32 %v2635, %v2683
        %2685 = vmatmul.bf16.gmra.mxu0 %v634
        %v2686 = vpop.f32.mrf.mxu0
        %v2687 = vadd.f32 %v2638, %v2686
        %v2688 = vpop.f32.mrf.mxu0
        %v2689 = vadd.f32 %v2640, %v2688
        %2690 = vmatmul.bf16.gmra.mxu0 %v637
        %v2691 = vpop.f32.mrf.mxu0
        %v2692 = vadd.f32 %v2643, %v2691
        %v2693 = vpop.f32.mrf.mxu0
        %v2694 = vadd.f32 %v2645, %v2693
        %2695 = vmatmul.bf16.gmra.mxu0 %v640
        %v2696 = vpop.f32.mrf.mxu0
        %v2697 = vadd.f32 %v2648, %v2696
        %v2698 = vpop.f32.mrf.mxu0
        %v2699 = vadd.f32 %v2650, %v2698
        %2700 = vmatmul.bf16.gmra.mxu0 %v643
        %v2701 = vpop.f32.mrf.mxu0
        %v2702 = vadd.f32 %v2653, %v2701
        %v2703 = vpop.f32.mrf.mxu0
        %v2704 = vadd.f32 %v2655, %v2703
        %2705 = vmatmul.bf16.gmra.mxu0 %v646
        %v2706 = vpop.f32.mrf.mxu0
        %v2707 = vadd.f32 %v2658, %v2706
        %v2708 = vpop.f32.mrf.mxu0
        %v2709 = vadd.f32 %v2660, %v2708
        %2710 = vmatmul.bf16.gmra.mxu0 %v649
        %v2711 = vpop.f32.mrf.mxu0
        %v2712 = vadd.f32 %v2663, %v2711
        %v2713 = vpop.f32.mrf.mxu0
        %v2714 = vadd.f32 %v2665, %v2713
        %2715 = vmatmul.bf16.gmra.mxu0 %v652
        %v2716 = vpop.f32.mrf.mxu0
        %v2717 = vadd.f32 %v2668, %v2716
        %v2718 = vpop.f32.mrf.mxu0
        %v2719 = vadd.f32 %v2670, %v2718
        %2720 = vdwg.mxu0
        %2721 = vmatpush.bf16.msra.mxu0 0
        %2722 = vmatpush.bf16.msra.mxu0 0
        %2723 = vmatpush.bf16.msra.mxu0 0
        %2724 = vmatpush.bf16.msra.mxu0 0
        %2725 = vmatpush.bf16.msra.mxu0 0
        %2726 = vmatpush.bf16.msra.mxu0 %v2471
        %2727 = vmatpush.bf16.msra.mxu0 %v2384
        %2728 = vmatpush.bf16.msra.mxu0 %v2381
        %2729 = vmatmul.bf16.gmra.mxu0 %v2444
        %v2730 = vpop.f32.mrf.mxu0
        %v2731 = vadd.f32 %v2682, %v2730
        %v2732 = vpop.f32.mrf.mxu0
        %v2733 = vadd.f32 %v2684, %v2732
        %2734 = vmatmul.bf16.gmra.mxu0 %v2447
        %v2735 = vpop.f32.mrf.mxu0
        %v2736 = vadd.f32 %v2687, %v2735
        %v2737 = vpop.f32.mrf.mxu0
        %v2738 = vadd.f32 %v2689, %v2737
        %2739 = vmatmul.bf16.gmra.mxu0 %v2450
        %v2740 = vpop.f32.mrf.mxu0
        %v2741 = vadd.f32 %v2692, %v2740
        %v2742 = vpop.f32.mrf.mxu0
        %v2743 = vadd.f32 %v2694, %v2742
        %2744 = vmatmul.bf16.gmra.mxu0 %v2453
        %v2745 = vpop.f32.mrf.mxu0
        %v2746 = vadd.f32 %v2697, %v2745
        %v2747 = vpop.f32.mrf.mxu0
        %v2748 = vadd.f32 %v2699, %v2747
        %2749 = vmatmul.bf16.gmra.mxu0 %v2456
        %v2750 = vpop.f32.mrf.mxu0
        %v2751 = vadd.f32 %v2702, %v2750
        %v2752 = vpop.f32.mrf.mxu0
        %v2753 = vadd.f32 %v2704, %v2752
        %2754 = vmatmul.bf16.gmra.mxu0 %v2459
        %v2755 = vpop.f32.mrf.mxu0
        %v2756 = vadd.f32 %v2707, %v2755
        %v2757 = vpop.f32.mrf.mxu0
        %v2758 = vadd.f32 %v2709, %v2757
        %2759 = vmatmul.bf16.gmra.mxu0 %v2462
        %v2760 = vpop.f32.mrf.mxu0
        %v2761 = vadd.f32 %v2712, %v2760
        %v2762 = vpop.f32.mrf.mxu0
        %v2763 = vadd.f32 %v2714, %v2762
        %2764 = vmatmul.bf16.gmra.mxu0 %v2465
        %v2765 = vpop.f32.mrf.mxu0
        %v2766 = vadd.f32 %v2717, %v2765
        %v2767 = vpop.f32.mrf.mxu0
        %v2768 = vadd.f32 %v2719, %v2767
        %2769 = vdwg.mxu0
        %2770 = vmatpush.bf16.msra.mxu0 %v2355
        %2771 = vmatpush.bf16.msra.mxu0 %v2352
        %2772 = vmatpush.bf16.msra.mxu0 %v2349
        %2773 = vmatpush.bf16.msra.mxu0 %v2346
        %2774 = vmatpush.bf16.msra.mxu0 %v2343
        %2775 = vmatpush.bf16.msra.mxu0 %v2340
        %2776 = vmatpush.bf16.msra.mxu0 %v2337
        %2777 = vmatpush.bf16.msra.mxu0 %v2334
        %2778 = vmatmul.bf16.gmra.mxu0 %v630
        %v2779 = vpop.f32.mrf.mxu0
        %v2780 = vadd.f32 0.0, %v2779
        %v2781 = vpop.f32.mrf.mxu0
        %v2782 = vadd.f32 0.0, %v2781
        %2783 = vmatmul.bf16.gmra.mxu0 %v633
        %v2784 = vpop.f32.mrf.mxu0
        %v2785 = vadd.f32 0.0, %v2784
        %v2786 = vpop.f32.mrf.mxu0
        %v2787 = vadd.f32 0.0, %v2786
        %2788 = vmatmul.bf16.gmra.mxu0 %v636
        %v2789 = vpop.f32.mrf.mxu0
        %v2790 = vadd.f32 0.0, %v2789
        %v2791 = vpop.f32.mrf.mxu0
        %v2792 = vadd.f32 0.0, %v2791
        %2793 = vmatmul.bf16.gmra.mxu0 %v639
        %v2794 = vpop.f32.mrf.mxu0
        %v2795 = vadd.f32 0.0, %v2794
        %v2796 = vpop.f32.mrf.mxu0
        %v2797 = vadd.f32 0.0, %v2796
        %2798 = vmatmul.bf16.gmra.mxu0 %v642
        %v2799 = vpop.f32.mrf.mxu0
        %v2800 = vadd.f32 0.0, %v2799
        %v2801 = vpop.f32.mrf.mxu0
        %v2802 = vadd.f32 0.0, %v2801
        %2803 = vmatmul.bf16.gmra.mxu0 %v645
        %v2804 = vpop.f32.mrf.mxu0
        %v2805 = vadd.f32 0.0, %v2804
        %v2806 = vpop.f32.mrf.mxu0
        %v2807 = vadd.f32 0.0, %v2806
        %2808 = vmatmul.bf16.gmra.mxu0 %v648
        %v2809 = vpop.f32.mrf.mxu0
        %v2810 = vadd.f32 0.0, %v2809
        %v2811 = vpop.f32.mrf.mxu0
        %v2812 = vadd.f32 0.0, %v2811
        %2813 = vmatmul.bf16.gmra.mxu0 %v651
        %v2814 = vpop.f32.mrf.mxu0
        %v2815 = vadd.f32 0.0, %v2814
        %v2816 = vpop.f32.mrf.mxu0
        %v2817 = vadd.f32 0.0, %v2816
        %2818 = vdwg.mxu0
        %2819 = vmatpush.bf16.msra.mxu0 %v2379
        %2820 = vmatpush.bf16.msra.mxu0 %v2376
        %2821 = vmatpush.bf16.msra.mxu0 %v2373
        %2822 = vmatpush.bf16.msra.mxu0 %v2370
        %2823 = vmatpush.bf16.msra.mxu0 %v2367
        %2824 = vmatpush.bf16.msra.mxu0 %v2364
        %2825 = vmatpush.bf16.msra.mxu0 %v2361
        %2826 = vmatpush.bf16.msra.mxu0 %v2358
        %2827 = vmatmul.bf16.gmra.mxu0 %v631
        %v2828 = vpop.f32.mrf.mxu0
        %v2829 = vadd.f32 %v2780, %v2828
        %v2830 = vpop.f32.mrf.mxu0
        %v2831 = vadd.f32 %v2782, %v2830
        %2832 = vmatmul.bf16.gmra.mxu0 %v634
        %v2833 = vpop.f32.mrf.mxu0
        %v2834 = vadd.f32 %v2785, %v2833
        %v2835 = vpop.f32.mrf.mxu0
        %v2836 = vadd.f32 %v2787, %v2835
        %2837 = vmatmul.bf16.gmra.mxu0 %v637
        %v2838 = vpop.f32.mrf.mxu0
        %v2839 = vadd.f32 %v2790, %v2838
        %v2840 = vpop.f32.mrf.mxu0
        %v2841 = vadd.f32 %v2792, %v2840
        %2842 = vmatmul.bf16.gmra.mxu0 %v640
        %v2843 = vpop.f32.mrf.mxu0
        %v2844 = vadd.f32 %v2795, %v2843
        %v2845 = vpop.f32.mrf.mxu0
        %v2846 = vadd.f32 %v2797, %v2845
        %2847 = vmatmul.bf16.gmra.mxu0 %v643
        %v2848 = vpop.f32.mrf.mxu0
        %v2849 = vadd.f32 %v2800, %v2848
        %v2850 = vpop.f32.mrf.mxu0
        %v2851 = vadd.f32 %v2802, %v2850
        %2852 = vmatmul.bf16.gmra.mxu0 %v646
        %v2853 = vpop.f32.mrf.mxu0
        %v2854 = vadd.f32 %v2805, %v2853
        %v2855 = vpop.f32.mrf.mxu0
        %v2856 = vadd.f32 %v2807, %v2855
        %2857 = vmatmul.bf16.gmra.mxu0 %v649
        %v2858 = vpop.f32.mrf.mxu0
        %v2859 = vadd.f32 %v2810, %v2858
        %v2860 = vpop.f32.mrf.mxu0
        %v2861 = vadd.f32 %v2812, %v2860
        %2862 = vmatmul.bf16.gmra.mxu0 %v652
        %v2863 = vpop.f32.mrf.mxu0
        %v2864 = vadd.f32 %v2815, %v2863
        %v2865 = vpop.f32.mrf.mxu0
        %v2866 = vadd.f32 %v2817, %v2865
        %2867 = vdwg.mxu0
        %2868 = vmatpush.bf16.msra.mxu0 0
        %2869 = vmatpush.bf16.msra.mxu0 0
        %2870 = vmatpush.bf16.msra.mxu0 0
        %2871 = vmatpush.bf16.msra.mxu0 0
        %2872 = vmatpush.bf16.msra.mxu0 0
        %2873 = vmatpush.bf16.msra.mxu0 %v2474
        %2874 = vmatpush.bf16.msra.mxu0 %v2385
        %2875 = vmatpush.bf16.msra.mxu0 %v2382
        %2876 = vmatmul.bf16.gmra.mxu0 %v2444
        %v2877 = vpop.f32.mrf.mxu0
        %v2878 = vadd.f32 %v2829, %v2877
        %v2879 = vpop.f32.mrf.mxu0
        %v2880 = vadd.f32 %v2831, %v2879
        %2881 = vmatmul.bf16.gmra.mxu0 %v2447
        %v2882 = vpop.f32.mrf.mxu0
        %v2883 = vadd.f32 %v2834, %v2882
        %v2884 = vpop.f32.mrf.mxu0
        %v2885 = vadd.f32 %v2836, %v2884
        %2886 = vmatmul.bf16.gmra.mxu0 %v2450
        %v2887 = vpop.f32.mrf.mxu0
        %v2888 = vadd.f32 %v2839, %v2887
        %v2889 = vpop.f32.mrf.mxu0
        %v2890 = vadd.f32 %v2841, %v2889
        %2891 = vmatmul.bf16.gmra.mxu0 %v2453
        %v2892 = vpop.f32.mrf.mxu0
        %v2893 = vadd.f32 %v2844, %v2892
        %v2894 = vpop.f32.mrf.mxu0
        %v2895 = vadd.f32 %v2846, %v2894
        %2896 = vmatmul.bf16.gmra.mxu0 %v2456
        %v2897 = vpop.f32.mrf.mxu0
        %v2898 = vadd.f32 %v2849, %v2897
        %v2899 = vpop.f32.mrf.mxu0
        %v2900 = vadd.f32 %v2851, %v2899
        %2901 = vmatmul.bf16.gmra.mxu0 %v2459
        %v2902 = vpop.f32.mrf.mxu0
        %v2903 = vadd.f32 %v2854, %v2902
        %v2904 = vpop.f32.mrf.mxu0
        %v2905 = vadd.f32 %v2856, %v2904
        %2906 = vmatmul.bf16.gmra.mxu0 %v2462
        %v2907 = vpop.f32.mrf.mxu0
        %v2908 = vadd.f32 %v2859, %v2907
        %v2909 = vpop.f32.mrf.mxu0
        %v2910 = vadd.f32 %v2861, %v2909
        %2911 = vmatmul.bf16.gmra.mxu0 %v2465
        %v2912 = vpop.f32.mrf.mxu0
        %v2913 = vadd.f32 %v2864, %v2912
        %v2914 = vpop.f32.mrf.mxu0
        %v2915 = vadd.f32 %v2866, %v2914
        %2916 = vdwg.mxu0
        %v2993 = vunpack.c.l.b16 %v1989
        %v2994 = vunpack.c.h.b16 %v1989
        %v2995 = vunpack.c.l.b16 %v1990
        %v2996 = vunpack.c.l.b16 %v1991
        %v2997 = vunpack.c.h.b16 %v1991
        %v2998 = vunpack.c.l.b16 %v1992
        %v2999 = vunpack.c.l.b16 %v1993
        %v3000 = vunpack.c.h.b16 %v1993
        %v3001 = vunpack.c.l.b16 %v1994
        %v3002 = vunpack.c.l.b16 %v1995
        %v3003 = vunpack.c.h.b16 %v1995
        %v3004 = vunpack.c.l.b16 %v1996
        %v3005 = vunpack.c.l.b16 %v1997
        %v3006 = vunpack.c.h.b16 %v1997
        %v3007 = vunpack.c.l.b16 %v1998
        %v3008 = vunpack.c.l.b16 %v1999
        %v3009 = vunpack.c.h.b16 %v1999
        %v3010 = vunpack.c.l.b16 %v2000
        %v3011 = vunpack.c.l.b16 %v2001
        %v3012 = vunpack.c.h.b16 %v2001
        %v3013 = vunpack.c.l.b16 %v2002
        %v3014 = vunpack.c.l.b16 %v2003
        %v3015 = vunpack.c.h.b16 %v2003
        %v3016 = vunpack.c.l.b16 %v2004
        %v3017 = vunpack.c.l.b16 %v2005
        %v3018 = vunpack.c.h.b16 %v2005
        %v3019 = vunpack.c.l.b16 %v2006
        %v3020 = vunpack.c.l.b16 %v2007
        %v3021 = vunpack.c.h.b16 %v2007
        %v3022 = vunpack.c.l.b16 %v2008
        %v3023 = vunpack.c.l.b16 %v2009
        %v3024 = vunpack.c.h.b16 %v2009
        %v3025 = vunpack.c.l.b16 %v2010
        %v3026 = vunpack.c.l.b16 %v2011
        %v3027 = vunpack.c.h.b16 %v2011
        %v3028 = vunpack.c.l.b16 %v2012
        %v3029 = vunpack.c.l.b16 %v2013
        %v3030 = vunpack.c.h.b16 %v2013
        %v3031 = vunpack.c.l.b16 %v2014
        %v3032 = vunpack.c.l.b16 %v2015
        %v3033 = vunpack.c.h.b16 %v2015
        %v3034 = vunpack.c.l.b16 %v2016
        %v3035 = vunpack.c.l.b16 %v2017
        %v3036 = vunpack.c.h.b16 %v2017
        %v3037 = vunpack.c.l.b16 %v2018
        %v3038 = vunpack.c.l.b16 %v2019
        %v3039 = vunpack.c.h.b16 %v2019
        %v3040 = vunpack.c.l.b16 %v2020
        %v3041 = vunpack.c.l.b16 %v2021
        %v3042 = vunpack.c.h.b16 %v2021
        %v3043 = vunpack.c.l.b16 %v2022
        %v3044 = vunpack.c.l.b16 %v2023
        %v3045 = vunpack.c.h.b16 %v2023
        %v3046 = vunpack.c.l.b16 %v2024
        %v3047 = vunpack.c.l.b16 %v2025
        %v3048 = vunpack.c.h.b16 %v2025
        %v3049 = vunpack.c.l.b16 %v2026
        %v3050 = vunpack.c.l.b16 %v2027
        %v3051 = vunpack.c.h.b16 %v2027
        %v3052 = vunpack.c.l.b16 %v2028
        %v3053 = vunpack.c.l.b16 %v2029
        %v3054 = vunpack.c.h.b16 %v2029
        %v3055 = vunpack.c.l.b16 %v2030
        %v3056 = vunpack.c.l.b16 %v2031
        %v3057 = vunpack.c.h.b16 %v2031
        %v3058 = vunpack.c.l.b16 %v2032
        %v3059 = vunpack.c.l.b16 %v2033
        %v3060 = vunpack.c.h.b16 %v2033
        %v3061 = vunpack.c.l.b16 %v2034
        %v3062 = vunpack.c.l.b16 %v2035
        %v3063 = vunpack.c.h.b16 %v2035
        %v3064 = vunpack.c.l.b16 %v2036
        %v3065 = vunpack.c.l.b16 %v2037
        %v3066 = vunpack.c.h.b16 %v2037
        %v3067 = vunpack.c.l.b16 %v2038
        %v3068 = vunpack.c.l.b16 %v2039
        %v3069 = vunpack.c.h.b16 %v2039
        %v3070 = vunpack.c.l.b16 %v2040
        %v3071 = vunpack.c.l.b16 %v2041
        %v3072 = vunpack.c.h.b16 %v2041
        %v3073 = vunpack.c.l.b16 %v2042
        %v3074 = vunpack.c.l.b16 %v2043
        %v3075 = vunpack.c.h.b16 %v2043
        %v3076 = vunpack.c.l.b16 %v2044
        %v3077 = vunpack.c.l.b16 %v2045
        %v3078 = vunpack.c.h.b16 %v2045
        %v3079 = vunpack.c.l.b16 %v2046
        %v3080 = vunpack.c.l.b16 %v2047
        %v3081 = vunpack.c.h.b16 %v2047
        %v3082 = vunpack.c.l.b16 %v2048
        %v3083 = vunpack.c.l.b16 %v2049
        %v3084 = vunpack.c.h.b16 %v2049
        %v3085 = vunpack.c.l.b16 %v2050
        %v3086 = vunpack.c.l.b16 %v2051
        %v3087 = vunpack.c.h.b16 %v2051
        %v3088 = vunpack.c.l.b16 %v2052
        %v3089 = vunpack.c.l.b16 %v2053
        %v3090 = vunpack.c.h.b16 %v2053
        %v3091 = vunpack.c.l.b16 %v2054
        %v3092 = vunpack.c.l.b16 %v2055
        %v3093 = vunpack.c.h.b16 %v2055
        %v3094 = vunpack.c.l.b16 %v2056
        %v3095 = vunpack.c.l.b16 %v2057
        %v3096 = vunpack.c.h.b16 %v2057
        %v3097 = vunpack.c.l.b16 %v2058
        %v3098 = vunpack.c.l.b16 %v2059
        %v3099 = vunpack.c.h.b16 %v2059
        %v3100 = vunpack.c.l.b16 %v2060
        %v3101 = vunpack.c.l.b16 %v2061
        %v3102 = vunpack.c.h.b16 %v2061
        %v3103 = vunpack.c.l.b16 %v2062
        %v3104 = vunpack.c.l.b16 %v2063
        %v3105 = vunpack.c.h.b16 %v2063
        %v3106 = vunpack.c.l.b16 %v2064
        %v3107 = vpack.c.b16 %v2996, %v2993
        %v3108 = vpack.c.b16 %v2997, %v2994
        %v3109 = vpack.c.b16 %v2998, %v2995
        %v3110 = vpack.c.b16 %v3002, %v2999
        %v3111 = vpack.c.b16 %v3003, %v3000
        %v3112 = vpack.c.b16 %v3004, %v3001
        %v3113 = vpack.c.b16 %v3008, %v3005
        %v3114 = vpack.c.b16 %v3009, %v3006
        %v3115 = vpack.c.b16 %v3010, %v3007
        %v3116 = vpack.c.b16 %v3014, %v3011
        %v3117 = vpack.c.b16 %v3015, %v3012
        %v3118 = vpack.c.b16 %v3016, %v3013
        %v3119 = vpack.c.b16 %v3020, %v3017
        %v3120 = vpack.c.b16 %v3021, %v3018
        %v3121 = vpack.c.b16 %v3022, %v3019
        %v3122 = vpack.c.b16 %v3026, %v3023
        %v3123 = vpack.c.b16 %v3027, %v3024
        %v3124 = vpack.c.b16 %v3028, %v3025
        %v3125 = vpack.c.b16 %v3032, %v3029
        %v3126 = vpack.c.b16 %v3033, %v3030
        %v3127 = vpack.c.b16 %v3034, %v3031
        %v3128 = vpack.c.b16 %v3038, %v3035
        %v3129 = vpack.c.b16 %v3039, %v3036
        %v3130 = vpack.c.b16 %v3040, %v3037
        %v3131 = vpack.c.b16 %v3044, %v3041
        %v3132 = vpack.c.b16 %v3045, %v3042
        %v3133 = vpack.c.b16 %v3046, %v3043
        %v3134 = vpack.c.b16 %v3050, %v3047
        %v3135 = vpack.c.b16 %v3051, %v3048
        %v3136 = vpack.c.b16 %v3052, %v3049
        %v3137 = vpack.c.b16 %v3056, %v3053
        %v3138 = vpack.c.b16 %v3057, %v3054
        %v3139 = vpack.c.b16 %v3058, %v3055
        %v3140 = vpack.c.b16 %v3062, %v3059
        %v3141 = vpack.c.b16 %v3063, %v3060
        %v3142 = vpack.c.b16 %v3064, %v3061
        %v3143 = vpack.c.b16 %v3068, %v3065
        %v3144 = vpack.c.b16 %v3069, %v3066
        %v3145 = vpack.c.b16 %v3070, %v3067
        %v3146 = vpack.c.b16 %v3074, %v3071
        %v3147 = vpack.c.b16 %v3075, %v3072
        %v3148 = vpack.c.b16 %v3076, %v3073
        %v3149 = vpack.c.b16 %v3080, %v3077
        %v3150 = vpack.c.b16 %v3081, %v3078
        %v3151 = vpack.c.b16 %v3082, %v3079
        %v3152 = vpack.c.b16 %v3086, %v3083
        %v3153 = vpack.c.b16 %v3087, %v3084
        %v3154 = vpack.c.b16 %v3088, %v3085
        %v3155 = vpack.c.b16 %v3092, %v3089
        %v3156 = vpack.c.b16 %v3093, %v3090
        %v3157 = vpack.c.b16 %v3094, %v3091
        %v3158 = vpack.c.b16 %v3098, %v3095
        %v3159 = vpack.c.b16 %v3099, %v3096
        %v3160 = vpack.c.b16 %v3100, %v3097
        %v3161 = vpack.c.b16 %v3104, %v3101
        %v3162 = vpack.c.b16 %v3105, %v3102
        %v3163 = vpack.c.b16 %v3106, %v3103
        %v3219 = vsel %vm458, %v3161, 0
        %v3222 = vsel %vm458, %v3162, 0
        %v3225 = vsel %vm458, %v3163, 0
        %3227 = vmatpush.bf16.msra.mxu0 %v3128
        %3228 = vmatpush.bf16.msra.mxu0 %v3125
        %3229 = vmatpush.bf16.msra.mxu0 %v3122
        %3230 = vmatpush.bf16.msra.mxu0 %v3119
        %3231 = vmatpush.bf16.msra.mxu0 %v3116
        %3232 = vmatpush.bf16.msra.mxu0 %v3113
        %3233 = vmatpush.bf16.msra.mxu0 %v3110
        %3234 = vmatpush.bf16.msra.mxu0 %v3107
        %3235 = vmatmul.bf16.gmra.mxu0 %v606
        %v3236 = vpop.f32.mrf.mxu0
        %v3237 = vadd.f32 %v2584, %v3236
        %v3238 = vpop.f32.mrf.mxu0
        %v3239 = vadd.f32 %v2586, %v3238
        %3240 = vmatmul.bf16.gmra.mxu0 %v609
        %v3241 = vpop.f32.mrf.mxu0
        %v3242 = vadd.f32 %v2589, %v3241
        %v3243 = vpop.f32.mrf.mxu0
        %v3244 = vadd.f32 %v2591, %v3243
        %3245 = vmatmul.bf16.gmra.mxu0 %v612
        %v3246 = vpop.f32.mrf.mxu0
        %v3247 = vadd.f32 %v2594, %v3246
        %v3248 = vpop.f32.mrf.mxu0
        %v3249 = vadd.f32 %v2596, %v3248
        %3250 = vmatmul.bf16.gmra.mxu0 %v615
        %v3251 = vpop.f32.mrf.mxu0
        %v3252 = vadd.f32 %v2599, %v3251
        %v3253 = vpop.f32.mrf.mxu0
        %v3254 = vadd.f32 %v2601, %v3253
        %3255 = vmatmul.bf16.gmra.mxu0 %v618
        %v3256 = vpop.f32.mrf.mxu0
        %v3257 = vadd.f32 %v2604, %v3256
        %v3258 = vpop.f32.mrf.mxu0
        %v3259 = vadd.f32 %v2606, %v3258
        %3260 = vmatmul.bf16.gmra.mxu0 %v621
        %v3261 = vpop.f32.mrf.mxu0
        %v3262 = vadd.f32 %v2609, %v3261
        %v3263 = vpop.f32.mrf.mxu0
        %v3264 = vadd.f32 %v2611, %v3263
        %3265 = vmatmul.bf16.gmra.mxu0 %v624
        %v3266 = vpop.f32.mrf.mxu0
        %v3267 = vadd.f32 %v2614, %v3266
        %v3268 = vpop.f32.mrf.mxu0
        %v3269 = vadd.f32 %v2616, %v3268
        %3270 = vmatmul.bf16.gmra.mxu0 %v627
        %v3271 = vpop.f32.mrf.mxu0
        %v3272 = vadd.f32 %v2619, %v3271
        %v3273 = vpop.f32.mrf.mxu0
        %v3274 = vadd.f32 %v2621, %v3273
        %3275 = vdwg.mxu0
        %3276 = vmatpush.bf16.msra.mxu0 %v3152
        %3277 = vmatpush.bf16.msra.mxu0 %v3149
        %3278 = vmatpush.bf16.msra.mxu0 %v3146
        %3279 = vmatpush.bf16.msra.mxu0 %v3143
        %3280 = vmatpush.bf16.msra.mxu0 %v3140
        %3281 = vmatpush.bf16.msra.mxu0 %v3137
        %3282 = vmatpush.bf16.msra.mxu0 %v3134
        %3283 = vmatpush.bf16.msra.mxu0 %v3131
        %3284 = vmatmul.bf16.gmra.mxu0 %v607
        %v3285 = vpop.f32.mrf.mxu0
        %v3286 = vadd.f32 %v3237, %v3285
        %v3287 = vpop.f32.mrf.mxu0
        %v3288 = vadd.f32 %v3239, %v3287
        %3289 = vmatmul.bf16.gmra.mxu0 %v610
        %v3290 = vpop.f32.mrf.mxu0
        %v3291 = vadd.f32 %v3242, %v3290
        %v3292 = vpop.f32.mrf.mxu0
        %v3293 = vadd.f32 %v3244, %v3292
        %3294 = vmatmul.bf16.gmra.mxu0 %v613
        %v3295 = vpop.f32.mrf.mxu0
        %v3296 = vadd.f32 %v3247, %v3295
        %v3297 = vpop.f32.mrf.mxu0
        %v3298 = vadd.f32 %v3249, %v3297
        %3299 = vmatmul.bf16.gmra.mxu0 %v616
        %v3300 = vpop.f32.mrf.mxu0
        %v3301 = vadd.f32 %v3252, %v3300
        %v3302 = vpop.f32.mrf.mxu0
        %v3303 = vadd.f32 %v3254, %v3302
        %3304 = vmatmul.bf16.gmra.mxu0 %v619
        %v3305 = vpop.f32.mrf.mxu0
        %v3306 = vadd.f32 %v3257, %v3305
        %v3307 = vpop.f32.mrf.mxu0
        %v3308 = vadd.f32 %v3259, %v3307
        %3309 = vmatmul.bf16.gmra.mxu0 %v622
        %v3310 = vpop.f32.mrf.mxu0
        %v3311 = vadd.f32 %v3262, %v3310
        %v3312 = vpop.f32.mrf.mxu0
        %v3313 = vadd.f32 %v3264, %v3312
        %3314 = vmatmul.bf16.gmra.mxu0 %v625
        %v3315 = vpop.f32.mrf.mxu0
        %v3316 = vadd.f32 %v3267, %v3315
        %v3317 = vpop.f32.mrf.mxu0
        %v3318 = vadd.f32 %v3269, %v3317
        %3319 = vmatmul.bf16.gmra.mxu0 %v628
        %v3320 = vpop.f32.mrf.mxu0
        %v3321 = vadd.f32 %v3272, %v3320
        %v3322 = vpop.f32.mrf.mxu0
        %v3323 = vadd.f32 %v3274, %v3322
        %3324 = vdwg.mxu0
        %3325 = vmatpush.bf16.msra.mxu0 0
        %3326 = vmatpush.bf16.msra.mxu0 0
        %3327 = vmatpush.bf16.msra.mxu0 0
        %3328 = vmatpush.bf16.msra.mxu0 0
        %3329 = vmatpush.bf16.msra.mxu0 0
        %3330 = vmatpush.bf16.msra.mxu0 %v3219
        %3331 = vmatpush.bf16.msra.mxu0 %v3158
        %3332 = vmatpush.bf16.msra.mxu0 %v3155
        %3333 = vmatmul.bf16.gmra.mxu0 %v1059
        %v3334 = vpop.f32.mrf.mxu0
        %v3335 = vadd.f32 %v3286, %v3334
        %v3336 = vpop.f32.mrf.mxu0
        %v3337 = vadd.f32 %v3288, %v3336
        %3338 = vmatmul.bf16.gmra.mxu0 %v1062
        %v3339 = vpop.f32.mrf.mxu0
        %v3340 = vadd.f32 %v3291, %v3339
        %v3341 = vpop.f32.mrf.mxu0
        %v3342 = vadd.f32 %v3293, %v3341
        %3343 = vmatmul.bf16.gmra.mxu0 %v1065
        %v3344 = vpop.f32.mrf.mxu0
        %v3345 = vadd.f32 %v3296, %v3344
        %v3346 = vpop.f32.mrf.mxu0
        %v3347 = vadd.f32 %v3298, %v3346
        %3348 = vmatmul.bf16.gmra.mxu0 %v1068
        %v3349 = vpop.f32.mrf.mxu0
        %v3350 = vadd.f32 %v3301, %v3349
        %v3351 = vpop.f32.mrf.mxu0
        %v3352 = vadd.f32 %v3303, %v3351
        %3353 = vmatmul.bf16.gmra.mxu0 %v1071
        %v3354 = vpop.f32.mrf.mxu0
        %v3355 = vadd.f32 %v3306, %v3354
        %v3356 = vpop.f32.mrf.mxu0
        %v3357 = vadd.f32 %v3308, %v3356
        %3358 = vmatmul.bf16.gmra.mxu0 %v1074
        %v3359 = vpop.f32.mrf.mxu0
        %v3360 = vadd.f32 %v3311, %v3359
        %v3361 = vpop.f32.mrf.mxu0
        %v3362 = vadd.f32 %v3313, %v3361
        %3363 = vmatmul.bf16.gmra.mxu0 %v1077
        %v3364 = vpop.f32.mrf.mxu0
        %v3365 = vadd.f32 %v3316, %v3364
        %v3366 = vpop.f32.mrf.mxu0
        %v3367 = vadd.f32 %v3318, %v3366
        %3368 = vmatmul.bf16.gmra.mxu0 %v1080
        %v3369 = vpop.f32.mrf.mxu0
        %v3370 = vadd.f32 %v3321, %v3369
        %v3371 = vpop.f32.mrf.mxu0
        %v3372 = vadd.f32 %v3323, %v3371
        %3373 = vdwg.mxu0
        %3374 = vmatpush.bf16.msra.mxu0 %v3129
        %3375 = vmatpush.bf16.msra.mxu0 %v3126
        %3376 = vmatpush.bf16.msra.mxu0 %v3123
        %3377 = vmatpush.bf16.msra.mxu0 %v3120
        %3378 = vmatpush.bf16.msra.mxu0 %v3117
        %3379 = vmatpush.bf16.msra.mxu0 %v3114
        %3380 = vmatpush.bf16.msra.mxu0 %v3111
        %3381 = vmatpush.bf16.msra.mxu0 %v3108
        %3382 = vmatmul.bf16.gmra.mxu0 %v606
        %v3383 = vpop.f32.mrf.mxu0
        %v3384 = vadd.f32 %v2731, %v3383
        %v3385 = vpop.f32.mrf.mxu0
        %v3386 = vadd.f32 %v2733, %v3385
        %3387 = vmatmul.bf16.gmra.mxu0 %v609
        %v3388 = vpop.f32.mrf.mxu0
        %v3389 = vadd.f32 %v2736, %v3388
        %v3390 = vpop.f32.mrf.mxu0
        %v3391 = vadd.f32 %v2738, %v3390
        %3392 = vmatmul.bf16.gmra.mxu0 %v612
        %v3393 = vpop.f32.mrf.mxu0
        %v3394 = vadd.f32 %v2741, %v3393
        %v3395 = vpop.f32.mrf.mxu0
        %v3396 = vadd.f32 %v2743, %v3395
        %3397 = vmatmul.bf16.gmra.mxu0 %v615
        %v3398 = vpop.f32.mrf.mxu0
        %v3399 = vadd.f32 %v2746, %v3398
        %v3400 = vpop.f32.mrf.mxu0
        %v3401 = vadd.f32 %v2748, %v3400
        %3402 = vmatmul.bf16.gmra.mxu0 %v618
        %v3403 = vpop.f32.mrf.mxu0
        %v3404 = vadd.f32 %v2751, %v3403
        %v3405 = vpop.f32.mrf.mxu0
        %v3406 = vadd.f32 %v2753, %v3405
        %3407 = vmatmul.bf16.gmra.mxu0 %v621
        %v3408 = vpop.f32.mrf.mxu0
        %v3409 = vadd.f32 %v2756, %v3408
        %v3410 = vpop.f32.mrf.mxu0
        %v3411 = vadd.f32 %v2758, %v3410
        %3412 = vmatmul.bf16.gmra.mxu0 %v624
        %v3413 = vpop.f32.mrf.mxu0
        %v3414 = vadd.f32 %v2761, %v3413
        %v3415 = vpop.f32.mrf.mxu0
        %v3416 = vadd.f32 %v2763, %v3415
        %3417 = vmatmul.bf16.gmra.mxu0 %v627
        %v3418 = vpop.f32.mrf.mxu0
        %v3419 = vadd.f32 %v2766, %v3418
        %v3420 = vpop.f32.mrf.mxu0
        %v3421 = vadd.f32 %v2768, %v3420
        %3422 = vdwg.mxu0
        %3423 = vmatpush.bf16.msra.mxu0 %v3153
        %3424 = vmatpush.bf16.msra.mxu0 %v3150
        %3425 = vmatpush.bf16.msra.mxu0 %v3147
        %3426 = vmatpush.bf16.msra.mxu0 %v3144
        %3427 = vmatpush.bf16.msra.mxu0 %v3141
        %3428 = vmatpush.bf16.msra.mxu0 %v3138
        %3429 = vmatpush.bf16.msra.mxu0 %v3135
        %3430 = vmatpush.bf16.msra.mxu0 %v3132
        %3431 = vmatmul.bf16.gmra.mxu0 %v607
        %v3432 = vpop.f32.mrf.mxu0
        %v3433 = vadd.f32 %v3384, %v3432
        %v3434 = vpop.f32.mrf.mxu0
        %v3435 = vadd.f32 %v3386, %v3434
        %3436 = vmatmul.bf16.gmra.mxu0 %v610
        %v3437 = vpop.f32.mrf.mxu0
        %v3438 = vadd.f32 %v3389, %v3437
        %v3439 = vpop.f32.mrf.mxu0
        %v3440 = vadd.f32 %v3391, %v3439
        %3441 = vmatmul.bf16.gmra.mxu0 %v613
        %v3442 = vpop.f32.mrf.mxu0
        %v3443 = vadd.f32 %v3394, %v3442
        %v3444 = vpop.f32.mrf.mxu0
        %v3445 = vadd.f32 %v3396, %v3444
        %3446 = vmatmul.bf16.gmra.mxu0 %v616
        %v3447 = vpop.f32.mrf.mxu0
        %v3448 = vadd.f32 %v3399, %v3447
        %v3449 = vpop.f32.mrf.mxu0
        %v3450 = vadd.f32 %v3401, %v3449
        %3451 = vmatmul.bf16.gmra.mxu0 %v619
        %v3452 = vpop.f32.mrf.mxu0
        %v3453 = vadd.f32 %v3404, %v3452
        %v3454 = vpop.f32.mrf.mxu0
        %v3455 = vadd.f32 %v3406, %v3454
        %3456 = vmatmul.bf16.gmra.mxu0 %v622
        %v3457 = vpop.f32.mrf.mxu0
        %v3458 = vadd.f32 %v3409, %v3457
        %v3459 = vpop.f32.mrf.mxu0
        %v3460 = vadd.f32 %v3411, %v3459
        %3461 = vmatmul.bf16.gmra.mxu0 %v625
        %v3462 = vpop.f32.mrf.mxu0
        %v3463 = vadd.f32 %v3414, %v3462
        %v3464 = vpop.f32.mrf.mxu0
        %v3465 = vadd.f32 %v3416, %v3464
        %3466 = vmatmul.bf16.gmra.mxu0 %v628
        %v3467 = vpop.f32.mrf.mxu0
        %v3468 = vadd.f32 %v3419, %v3467
        %v3469 = vpop.f32.mrf.mxu0
        %v3470 = vadd.f32 %v3421, %v3469
        %3471 = vdwg.mxu0
        %3472 = vmatpush.bf16.msra.mxu0 0
        %3473 = vmatpush.bf16.msra.mxu0 0
        %3474 = vmatpush.bf16.msra.mxu0 0
        %3475 = vmatpush.bf16.msra.mxu0 0
        %3476 = vmatpush.bf16.msra.mxu0 0
        %3477 = vmatpush.bf16.msra.mxu0 %v3222
        %3478 = vmatpush.bf16.msra.mxu0 %v3159
        %3479 = vmatpush.bf16.msra.mxu0 %v3156
        %3480 = vmatmul.bf16.gmra.mxu0 %v1059
        %v3481 = vpop.f32.mrf.mxu0
        %v3482 = vadd.f32 %v3433, %v3481
        %v3483 = vpop.f32.mrf.mxu0
        %v3484 = vadd.f32 %v3435, %v3483
        %3485 = vmatmul.bf16.gmra.mxu0 %v1062
        %v3486 = vpop.f32.mrf.mxu0
        %v3487 = vadd.f32 %v3438, %v3486
        %v3488 = vpop.f32.mrf.mxu0
        %v3489 = vadd.f32 %v3440, %v3488
        %3490 = vmatmul.bf16.gmra.mxu0 %v1065
        %v3491 = vpop.f32.mrf.mxu0
        %v3492 = vadd.f32 %v3443, %v3491
        %v3493 = vpop.f32.mrf.mxu0
        %v3494 = vadd.f32 %v3445, %v3493
        %3495 = vmatmul.bf16.gmra.mxu0 %v1068
        %v3496 = vpop.f32.mrf.mxu0
        %v3497 = vadd.f32 %v3448, %v3496
        %v3498 = vpop.f32.mrf.mxu0
        %v3499 = vadd.f32 %v3450, %v3498
        %3500 = vmatmul.bf16.gmra.mxu0 %v1071
        %v3501 = vpop.f32.mrf.mxu0
        %v3502 = vadd.f32 %v3453, %v3501
        %v3503 = vpop.f32.mrf.mxu0
        %v3504 = vadd.f32 %v3455, %v3503
        %3505 = vmatmul.bf16.gmra.mxu0 %v1074
        %v3506 = vpop.f32.mrf.mxu0
        %v3507 = vadd.f32 %v3458, %v3506
        %v3508 = vpop.f32.mrf.mxu0
        %v3509 = vadd.f32 %v3460, %v3508
        %3510 = vmatmul.bf16.gmra.mxu0 %v1077
        %v3511 = vpop.f32.mrf.mxu0
        %v3512 = vadd.f32 %v3463, %v3511
        %v3513 = vpop.f32.mrf.mxu0
        %v3514 = vadd.f32 %v3465, %v3513
        %3515 = vmatmul.bf16.gmra.mxu0 %v1080
        %v3516 = vpop.f32.mrf.mxu0
        %v3517 = vadd.f32 %v3468, %v3516
        %v3518 = vpop.f32.mrf.mxu0
        %v3519 = vadd.f32 %v3470, %v3518
        %3520 = vdwg.mxu0
        %3521 = vmatpush.bf16.msra.mxu0 %v3130
        %3522 = vmatpush.bf16.msra.mxu0 %v3127
        %3523 = vmatpush.bf16.msra.mxu0 %v3124
        %3524 = vmatpush.bf16.msra.mxu0 %v3121
        %3525 = vmatpush.bf16.msra.mxu0 %v3118
        %3526 = vmatpush.bf16.msra.mxu0 %v3115
        %3527 = vmatpush.bf16.msra.mxu0 %v3112
        %3528 = vmatpush.bf16.msra.mxu0 %v3109
        %3529 = vmatmul.bf16.gmra.mxu0 %v606
        %v3530 = vpop.f32.mrf.mxu0
        %v3531 = vadd.f32 %v2878, %v3530
        %v3532 = vpop.f32.mrf.mxu0
        %v3533 = vadd.f32 %v2880, %v3532
        %3534 = vmatmul.bf16.gmra.mxu0 %v609
        %v3535 = vpop.f32.mrf.mxu0
        %v3536 = vadd.f32 %v2883, %v3535
        %v3537 = vpop.f32.mrf.mxu0
        %v3538 = vadd.f32 %v2885, %v3537
        %3539 = vmatmul.bf16.gmra.mxu0 %v612
        %v3540 = vpop.f32.mrf.mxu0
        %v3541 = vadd.f32 %v2888, %v3540
        %v3542 = vpop.f32.mrf.mxu0
        %v3543 = vadd.f32 %v2890, %v3542
        %3544 = vmatmul.bf16.gmra.mxu0 %v615
        %v3545 = vpop.f32.mrf.mxu0
        %v3546 = vadd.f32 %v2893, %v3545
        %v3547 = vpop.f32.mrf.mxu0
        %v3548 = vadd.f32 %v2895, %v3547
        %3549 = vmatmul.bf16.gmra.mxu0 %v618
        %v3550 = vpop.f32.mrf.mxu0
        %v3551 = vadd.f32 %v2898, %v3550
        %v3552 = vpop.f32.mrf.mxu0
        %v3553 = vadd.f32 %v2900, %v3552
        %3554 = vmatmul.bf16.gmra.mxu0 %v621
        %v3555 = vpop.f32.mrf.mxu0
        %v3556 = vadd.f32 %v2903, %v3555
        %v3557 = vpop.f32.mrf.mxu0
        %v3558 = vadd.f32 %v2905, %v3557
        %3559 = vmatmul.bf16.gmra.mxu0 %v624
        %v3560 = vpop.f32.mrf.mxu0
        %v3561 = vadd.f32 %v2908, %v3560
        %v3562 = vpop.f32.mrf.mxu0
        %v3563 = vadd.f32 %v2910, %v3562
        %3564 = vmatmul.bf16.gmra.mxu0 %v627
        %v3565 = vpop.f32.mrf.mxu0
        %v3566 = vadd.f32 %v2913, %v3565
        %v3567 = vpop.f32.mrf.mxu0
        %v3568 = vadd.f32 %v2915, %v3567
        %3569 = vdwg.mxu0
        %3570 = vmatpush.bf16.msra.mxu0 %v3154
        %3571 = vmatpush.bf16.msra.mxu0 %v3151
        %3572 = vmatpush.bf16.msra.mxu0 %v3148
        %3573 = vmatpush.bf16.msra.mxu0 %v3145
        %3574 = vmatpush.bf16.msra.mxu0 %v3142
        %3575 = vmatpush.bf16.msra.mxu0 %v3139
        %3576 = vmatpush.bf16.msra.mxu0 %v3136
        %3577 = vmatpush.bf16.msra.mxu0 %v3133
        %3578 = vmatmul.bf16.gmra.mxu0 %v607
        %v3579 = vpop.f32.mrf.mxu0
        %v3580 = vadd.f32 %v3531, %v3579
        %v3581 = vpop.f32.mrf.mxu0
        %v3582 = vadd.f32 %v3533, %v3581
        %3583 = vmatmul.bf16.gmra.mxu0 %v610
        %v3584 = vpop.f32.mrf.mxu0
        %v3585 = vadd.f32 %v3536, %v3584
        %v3586 = vpop.f32.mrf.mxu0
        %v3587 = vadd.f32 %v3538, %v3586
        %3588 = vmatmul.bf16.gmra.mxu0 %v613
        %v3589 = vpop.f32.mrf.mxu0
        %v3590 = vadd.f32 %v3541, %v3589
        %v3591 = vpop.f32.mrf.mxu0
        %v3592 = vadd.f32 %v3543, %v3591
        %3593 = vmatmul.bf16.gmra.mxu0 %v616
        %v3594 = vpop.f32.mrf.mxu0
        %v3595 = vadd.f32 %v3546, %v3594
        %v3596 = vpop.f32.mrf.mxu0
        %v3597 = vadd.f32 %v3548, %v3596
        %3598 = vmatmul.bf16.gmra.mxu0 %v619
        %v3599 = vpop.f32.mrf.mxu0
        %v3600 = vadd.f32 %v3551, %v3599
        %v3601 = vpop.f32.mrf.mxu0
        %v3602 = vadd.f32 %v3553, %v3601
        %3603 = vmatmul.bf16.gmra.mxu0 %v622
        %v3604 = vpop.f32.mrf.mxu0
        %v3605 = vadd.f32 %v3556, %v3604
        %v3606 = vpop.f32.mrf.mxu0
        %v3607 = vadd.f32 %v3558, %v3606
        %3608 = vmatmul.bf16.gmra.mxu0 %v625
        %v3609 = vpop.f32.mrf.mxu0
        %v3610 = vadd.f32 %v3561, %v3609
        %v3611 = vpop.f32.mrf.mxu0
        %v3612 = vadd.f32 %v3563, %v3611
        %3613 = vmatmul.bf16.gmra.mxu0 %v628
        %v3614 = vpop.f32.mrf.mxu0
        %v3615 = vadd.f32 %v3566, %v3614
        %v3616 = vpop.f32.mrf.mxu0
        %v3617 = vadd.f32 %v3568, %v3616
        %3618 = vdwg.mxu0
        %3619 = vmatpush.bf16.msra.mxu0 0
        %3620 = vmatpush.bf16.msra.mxu0 0
        %3621 = vmatpush.bf16.msra.mxu0 0
        %3622 = vmatpush.bf16.msra.mxu0 0
        %3623 = vmatpush.bf16.msra.mxu0 0
        %3624 = vmatpush.bf16.msra.mxu0 %v3225
        %3625 = vmatpush.bf16.msra.mxu0 %v3160
        %3626 = vmatpush.bf16.msra.mxu0 %v3157
        %3627 = vmatmul.bf16.gmra.mxu0 %v1059
        %v3628 = vpop.f32.mrf.mxu0
        %v3629 = vadd.f32 %v3580, %v3628
        %v3630 = vpop.f32.mrf.mxu0
        %v3631 = vadd.f32 %v3582, %v3630
        %3632 = vmatmul.bf16.gmra.mxu0 %v1062
        %v3633 = vpop.f32.mrf.mxu0
        %v3634 = vadd.f32 %v3585, %v3633
        %v3635 = vpop.f32.mrf.mxu0
        %v3636 = vadd.f32 %v3587, %v3635
        %3637 = vmatmul.bf16.gmra.mxu0 %v1065
        %v3638 = vpop.f32.mrf.mxu0
        %v3639 = vadd.f32 %v3590, %v3638
        %v3640 = vpop.f32.mrf.mxu0
        %v3641 = vadd.f32 %v3592, %v3640
        %3642 = vmatmul.bf16.gmra.mxu0 %v1068
        %v3643 = vpop.f32.mrf.mxu0
        %v3644 = vadd.f32 %v3595, %v3643
        %v3645 = vpop.f32.mrf.mxu0
        %v3646 = vadd.f32 %v3597, %v3645
        %3647 = vmatmul.bf16.gmra.mxu0 %v1071
        %v3648 = vpop.f32.mrf.mxu0
        %v3649 = vadd.f32 %v3600, %v3648
        %v3650 = vpop.f32.mrf.mxu0
        %v3651 = vadd.f32 %v3602, %v3650
        %3652 = vmatmul.bf16.gmra.mxu0 %v1074
        %v3653 = vpop.f32.mrf.mxu0
        %v3654 = vadd.f32 %v3605, %v3653
        %v3655 = vpop.f32.mrf.mxu0
        %v3656 = vadd.f32 %v3607, %v3655
        %3657 = vmatmul.bf16.gmra.mxu0 %v1077
        %v3658 = vpop.f32.mrf.mxu0
        %v3659 = vadd.f32 %v3610, %v3658
        %v3660 = vpop.f32.mrf.mxu0
        %v3661 = vadd.f32 %v3612, %v3660
        %3662 = vmatmul.bf16.gmra.mxu0 %v1080
        %v3663 = vpop.f32.mrf.mxu0
        %v3664 = vadd.f32 %v3615, %v3663
        %v3665 = vpop.f32.mrf.mxu0
        %v3666 = vadd.f32 %v3617, %v3665
        %3667 = vdwg.mxu0
        %vm3668 = vcmp.le.s32.totalorder %v679, 6
        %v3669 = vsel %vm3668, 1, 0
        %vm3670 = vcmp.eq.s32.totalorder %v3669, 1
        %v3671 = vsel %vm3670, %v3335, -inf
        %v3672 = vsel %vm3670, %v3482, -inf
        %v3673 = vsel %vm3670, %v3629, -inf
        %v3674 = vsel %vm3670, %v3337, -inf
        %v3675 = vsel %vm3670, %v3484, -inf
        %v3676 = vsel %vm3670, %v3631, -inf
        %v3677 = vsel %vm3670, %v3340, -inf
        %v3678 = vsel %vm3670, %v3487, -inf
        %v3679 = vsel %vm3670, %v3634, -inf
        %v3680 = vsel %vm3670, %v3342, -inf
        %v3681 = vsel %vm3670, %v3489, -inf
        %v3682 = vsel %vm3670, %v3636, -inf
        %v3683 = vsel %vm3670, %v3345, -inf
        %v3684 = vsel %vm3670, %v3492, -inf
        %v3685 = vsel %vm3670, %v3639, -inf
        %v3686 = vsel %vm3670, %v3347, -inf
        %v3687 = vsel %vm3670, %v3494, -inf
        %v3688 = vsel %vm3670, %v3641, -inf
        %v3689 = vsel %vm3670, %v3350, -inf
        %v3690 = vsel %vm3670, %v3497, -inf
        %v3691 = vsel %vm3670, %v3644, -inf
        %v3692 = vsel %vm3670, %v3352, -inf
        %v3693 = vsel %vm3670, %v3499, -inf
        %v3694 = vsel %vm3670, %v3646, -inf
        %v3695 = vsel %vm3670, %v3355, -inf
        %v3696 = vsel %vm3670, %v3502, -inf
        %v3697 = vsel %vm3670, %v3649, -inf
        %v3698 = vsel %vm3670, %v3357, -inf
        %v3699 = vsel %vm3670, %v3504, -inf
        %v3700 = vsel %vm3670, %v3651, -inf
        %v3701 = vsel %vm3670, %v3360, -inf
        %v3702 = vsel %vm3670, %v3507, -inf
        %v3703 = vsel %vm3670, %v3654, -inf
        %v3704 = vsel %vm3670, %v3362, -inf
        %v3705 = vsel %vm3670, %v3509, -inf
        %v3706 = vsel %vm3670, %v3656, -inf
        %v3707 = vsel %vm3670, %v3365, -inf
        %v3708 = vsel %vm3670, %v3512, -inf
        %v3709 = vsel %vm3670, %v3659, -inf
        %v3710 = vsel %vm3670, %v3367, -inf
        %v3711 = vsel %vm3670, %v3514, -inf
        %v3712 = vsel %vm3670, %v3661, -inf
        %v3713 = vsel %vm3670, %v3370, -inf
        %v3714 = vsel %vm3670, %v3517, -inf
        %v3715 = vsel %vm3670, %v3664, -inf
        %v3716 = vsel %vm3670, %v3372, -inf
        %v3717 = vsel %vm3670, %v3519, -inf
        %v3718 = vsel %vm3670, %v3666, -inf
        %v3719 = vrot.slane %v3671, 4
        %v3720 = vmax.f32 %v3671, %v3719
        %v3721 = vrot.slane %v3720, 2
        %v3722 = vmax.f32 %v3720, %v3721
        %v3723 = vrot.slane %v3722, 1
        %v3724 = vmax.f32 %v3722, %v3723
        %v3725 = vrot.slane %v3672, 4
        %v3726 = vmax.f32 %v3672, %v3725
        %v3727 = vrot.slane %v3726, 2
        %v3728 = vmax.f32 %v3726, %v3727
        %v3729 = vrot.slane %v3728, 1
        %v3730 = vmax.f32 %v3728, %v3729
        %v3731 = vsel %vm1057, %v3673, -inf
        %v3732 = vrot.slane %v3731, 4
        %v3733 = vmax.f32 %v3731, %v3732
        %v3734 = vrot.slane %v3733, 2
        %v3735 = vmax.f32 %v3733, %v3734
        %v3736 = vrot.slane %v3735, 1
        %v3737 = vmax.f32 %v3735, %v3736
        %v3738 = vrot.slane %v3674, 4
        %v3739 = vmax.f32 %v3674, %v3738
        %v3740 = vrot.slane %v3739, 2
        %v3741 = vmax.f32 %v3739, %v3740
        %v3742 = vrot.slane %v3741, 1
        %v3743 = vmax.f32 %v3741, %v3742
        %v3744 = vrot.slane %v3675, 4
        %v3745 = vmax.f32 %v3675, %v3744
        %v3746 = vrot.slane %v3745, 2
        %v3747 = vmax.f32 %v3745, %v3746
        %v3748 = vrot.slane %v3747, 1
        %v3749 = vmax.f32 %v3747, %v3748
        %v3750 = vsel %vm1057, %v3676, -inf
        %v3751 = vrot.slane %v3750, 4
        %v3752 = vmax.f32 %v3750, %v3751
        %v3753 = vrot.slane %v3752, 2
        %v3754 = vmax.f32 %v3752, %v3753
        %v3755 = vrot.slane %v3754, 1
        %v3756 = vmax.f32 %v3754, %v3755
        %v3757 = vrot.slane %v3677, 4
        %v3758 = vmax.f32 %v3677, %v3757
        %v3759 = vrot.slane %v3758, 2
        %v3760 = vmax.f32 %v3758, %v3759
        %v3761 = vrot.slane %v3760, 1
        %v3762 = vmax.f32 %v3760, %v3761
        %v3763 = vrot.slane %v3678, 4
        %v3764 = vmax.f32 %v3678, %v3763
        %v3765 = vrot.slane %v3764, 2
        %v3766 = vmax.f32 %v3764, %v3765
        %v3767 = vrot.slane %v3766, 1
        %v3768 = vmax.f32 %v3766, %v3767
        %v3769 = vsel %vm1057, %v3679, -inf
        %v3770 = vrot.slane %v3769, 4
        %v3771 = vmax.f32 %v3769, %v3770
        %v3772 = vrot.slane %v3771, 2
        %v3773 = vmax.f32 %v3771, %v3772
        %v3774 = vrot.slane %v3773, 1
        %v3775 = vmax.f32 %v3773, %v3774
        %v3776 = vrot.slane %v3680, 4
        %v3777 = vmax.f32 %v3680, %v3776
        %v3778 = vrot.slane %v3777, 2
        %v3779 = vmax.f32 %v3777, %v3778
        %v3780 = vrot.slane %v3779, 1
        %v3781 = vmax.f32 %v3779, %v3780
        %v3782 = vrot.slane %v3681, 4
        %v3783 = vmax.f32 %v3681, %v3782
        %v3784 = vrot.slane %v3783, 2
        %v3785 = vmax.f32 %v3783, %v3784
        %v3786 = vrot.slane %v3785, 1
        %v3787 = vmax.f32 %v3785, %v3786
        %v3788 = vsel %vm1057, %v3682, -inf
        %v3789 = vrot.slane %v3788, 4
        %v3790 = vmax.f32 %v3788, %v3789
        %v3791 = vrot.slane %v3790, 2
        %v3792 = vmax.f32 %v3790, %v3791
        %v3793 = vrot.slane %v3792, 1
        %v3794 = vmax.f32 %v3792, %v3793
        %v3795 = vrot.slane %v3683, 4
        %v3796 = vmax.f32 %v3683, %v3795
        %v3797 = vrot.slane %v3796, 2
        %v3798 = vmax.f32 %v3796, %v3797
        %v3799 = vrot.slane %v3798, 1
        %v3800 = vmax.f32 %v3798, %v3799
        %v3801 = vrot.slane %v3684, 4
        %v3802 = vmax.f32 %v3684, %v3801
        %v3803 = vrot.slane %v3802, 2
        %v3804 = vmax.f32 %v3802, %v3803
        %v3805 = vrot.slane %v3804, 1
        %v3806 = vmax.f32 %v3804, %v3805
        %v3807 = vsel %vm1057, %v3685, -inf
        %v3808 = vrot.slane %v3807, 4
        %v3809 = vmax.f32 %v3807, %v3808
        %v3810 = vrot.slane %v3809, 2
        %v3811 = vmax.f32 %v3809, %v3810
        %v3812 = vrot.slane %v3811, 1
        %v3813 = vmax.f32 %v3811, %v3812
        %v3814 = vrot.slane %v3686, 4
        %v3815 = vmax.f32 %v3686, %v3814
        %v3816 = vrot.slane %v3815, 2
        %v3817 = vmax.f32 %v3815, %v3816
        %v3818 = vrot.slane %v3817, 1
        %v3819 = vmax.f32 %v3817, %v3818
        %v3820 = vrot.slane %v3687, 4
        %v3821 = vmax.f32 %v3687, %v3820
        %v3822 = vrot.slane %v3821, 2
        %v3823 = vmax.f32 %v3821, %v3822
        %v3824 = vrot.slane %v3823, 1
        %v3825 = vmax.f32 %v3823, %v3824
        %v3826 = vsel %vm1057, %v3688, -inf
        %v3827 = vrot.slane %v3826, 4
        %v3828 = vmax.f32 %v3826, %v3827
        %v3829 = vrot.slane %v3828, 2
        %v3830 = vmax.f32 %v3828, %v3829
        %v3831 = vrot.slane %v3830, 1
        %v3832 = vmax.f32 %v3830, %v3831
        %v3833 = vrot.slane %v3689, 4
        %v3834 = vmax.f32 %v3689, %v3833
        %v3835 = vrot.slane %v3834, 2
        %v3836 = vmax.f32 %v3834, %v3835
        %v3837 = vrot.slane %v3836, 1
        %v3838 = vmax.f32 %v3836, %v3837
        %v3839 = vrot.slane %v3690, 4
        %v3840 = vmax.f32 %v3690, %v3839
        %v3841 = vrot.slane %v3840, 2
        %v3842 = vmax.f32 %v3840, %v3841
        %v3843 = vrot.slane %v3842, 1
        %v3844 = vmax.f32 %v3842, %v3843
        %v3845 = vsel %vm1057, %v3691, -inf
        %v3846 = vrot.slane %v3845, 4
        %v3847 = vmax.f32 %v3845, %v3846
        %v3848 = vrot.slane %v3847, 2
        %v3849 = vmax.f32 %v3847, %v3848
        %v3850 = vrot.slane %v3849, 1
        %v3851 = vmax.f32 %v3849, %v3850
        %v3852 = vrot.slane %v3692, 4
        %v3853 = vmax.f32 %v3692, %v3852
        %v3854 = vrot.slane %v3853, 2
        %v3855 = vmax.f32 %v3853, %v3854
        %v3856 = vrot.slane %v3855, 1
        %v3857 = vmax.f32 %v3855, %v3856
        %v3858 = vrot.slane %v3693, 4
        %v3859 = vmax.f32 %v3693, %v3858
        %v3860 = vrot.slane %v3859, 2
        %v3861 = vmax.f32 %v3859, %v3860
        %v3862 = vrot.slane %v3861, 1
        %v3863 = vmax.f32 %v3861, %v3862
        %v3864 = vsel %vm1057, %v3694, -inf
        %v3865 = vrot.slane %v3864, 4
        %v3866 = vmax.f32 %v3864, %v3865
        %v3867 = vrot.slane %v3866, 2
        %v3868 = vmax.f32 %v3866, %v3867
        %v3869 = vrot.slane %v3868, 1
        %v3870 = vmax.f32 %v3868, %v3869
        %v3871 = vrot.slane %v3695, 4
        %v3872 = vmax.f32 %v3695, %v3871
        %v3873 = vrot.slane %v3872, 2
        %v3874 = vmax.f32 %v3872, %v3873
        %v3875 = vrot.slane %v3874, 1
        %v3876 = vmax.f32 %v3874, %v3875
        %v3877 = vrot.slane %v3696, 4
        %v3878 = vmax.f32 %v3696, %v3877
        %v3879 = vrot.slane %v3878, 2
        %v3880 = vmax.f32 %v3878, %v3879
        %v3881 = vrot.slane %v3880, 1
        %v3882 = vmax.f32 %v3880, %v3881
        %v3883 = vsel %vm1057, %v3697, -inf
        %v3884 = vrot.slane %v3883, 4
        %v3885 = vmax.f32 %v3883, %v3884
        %v3886 = vrot.slane %v3885, 2
        %v3887 = vmax.f32 %v3885, %v3886
        %v3888 = vrot.slane %v3887, 1
        %v3889 = vmax.f32 %v3887, %v3888
        %v3890 = vrot.slane %v3698, 4
        %v3891 = vmax.f32 %v3698, %v3890
        %v3892 = vrot.slane %v3891, 2
        %v3893 = vmax.f32 %v3891, %v3892
        %v3894 = vrot.slane %v3893, 1
        %v3895 = vmax.f32 %v3893, %v3894
        %v3896 = vrot.slane %v3699, 4
        %v3897 = vmax.f32 %v3699, %v3896
        %v3898 = vrot.slane %v3897, 2
        %v3899 = vmax.f32 %v3897, %v3898
        %v3900 = vrot.slane %v3899, 1
        %v3901 = vmax.f32 %v3899, %v3900
        %v3902 = vsel %vm1057, %v3700, -inf
        %v3903 = vrot.slane %v3902, 4
        %v3904 = vmax.f32 %v3902, %v3903
        %v3905 = vrot.slane %v3904, 2
        %v3906 = vmax.f32 %v3904, %v3905
        %v3907 = vrot.slane %v3906, 1
        %v3908 = vmax.f32 %v3906, %v3907
        %v3909 = vrot.slane %v3701, 4
        %v3910 = vmax.f32 %v3701, %v3909
        %v3911 = vrot.slane %v3910, 2
        %v3912 = vmax.f32 %v3910, %v3911
        %v3913 = vrot.slane %v3912, 1
        %v3914 = vmax.f32 %v3912, %v3913
        %v3915 = vrot.slane %v3702, 4
        %v3916 = vmax.f32 %v3702, %v3915
        %v3917 = vrot.slane %v3916, 2
        %v3918 = vmax.f32 %v3916, %v3917
        %v3919 = vrot.slane %v3918, 1
        %v3920 = vmax.f32 %v3918, %v3919
        %v3921 = vsel %vm1057, %v3703, -inf
        %v3922 = vrot.slane %v3921, 4
        %v3923 = vmax.f32 %v3921, %v3922
        %v3924 = vrot.slane %v3923, 2
        %v3925 = vmax.f32 %v3923, %v3924
        %v3926 = vrot.slane %v3925, 1
        %v3927 = vmax.f32 %v3925, %v3926
        %v3928 = vrot.slane %v3704, 4
        %v3929 = vmax.f32 %v3704, %v3928
        %v3930 = vrot.slane %v3929, 2
        %v3931 = vmax.f32 %v3929, %v3930
        %v3932 = vrot.slane %v3931, 1
        %v3933 = vmax.f32 %v3931, %v3932
        %v3934 = vrot.slane %v3705, 4
        %v3935 = vmax.f32 %v3705, %v3934
        %v3936 = vrot.slane %v3935, 2
        %v3937 = vmax.f32 %v3935, %v3936
        %v3938 = vrot.slane %v3937, 1
        %v3939 = vmax.f32 %v3937, %v3938
        %v3940 = vsel %vm1057, %v3706, -inf
        %v3941 = vrot.slane %v3940, 4
        %v3942 = vmax.f32 %v3940, %v3941
        %v3943 = vrot.slane %v3942, 2
        %v3944 = vmax.f32 %v3942, %v3943
        %v3945 = vrot.slane %v3944, 1
        %v3946 = vmax.f32 %v3944, %v3945
        %v3947 = vrot.slane %v3707, 4
        %v3948 = vmax.f32 %v3707, %v3947
        %v3949 = vrot.slane %v3948, 2
        %v3950 = vmax.f32 %v3948, %v3949
        %v3951 = vrot.slane %v3950, 1
        %v3952 = vmax.f32 %v3950, %v3951
        %v3953 = vrot.slane %v3708, 4
        %v3954 = vmax.f32 %v3708, %v3953
        %v3955 = vrot.slane %v3954, 2
        %v3956 = vmax.f32 %v3954, %v3955
        %v3957 = vrot.slane %v3956, 1
        %v3958 = vmax.f32 %v3956, %v3957
        %v3959 = vsel %vm1057, %v3709, -inf
        %v3960 = vrot.slane %v3959, 4
        %v3961 = vmax.f32 %v3959, %v3960
        %v3962 = vrot.slane %v3961, 2
        %v3963 = vmax.f32 %v3961, %v3962
        %v3964 = vrot.slane %v3963, 1
        %v3965 = vmax.f32 %v3963, %v3964
        %v3966 = vrot.slane %v3710, 4
        %v3967 = vmax.f32 %v3710, %v3966
        %v3968 = vrot.slane %v3967, 2
        %v3969 = vmax.f32 %v3967, %v3968
        %v3970 = vrot.slane %v3969, 1
        %v3971 = vmax.f32 %v3969, %v3970
        %v3972 = vrot.slane %v3711, 4
        %v3973 = vmax.f32 %v3711, %v3972
        %v3974 = vrot.slane %v3973, 2
        %v3975 = vmax.f32 %v3973, %v3974
        %v3976 = vrot.slane %v3975, 1
        %v3977 = vmax.f32 %v3975, %v3976
        %v3978 = vsel %vm1057, %v3712, -inf
        %v3979 = vrot.slane %v3978, 4
        %v3980 = vmax.f32 %v3978, %v3979
        %v3981 = vrot.slane %v3980, 2
        %v3982 = vmax.f32 %v3980, %v3981
        %v3983 = vrot.slane %v3982, 1
        %v3984 = vmax.f32 %v3982, %v3983
        %v3985 = vrot.slane %v3713, 4
        %v3986 = vmax.f32 %v3713, %v3985
        %v3987 = vrot.slane %v3986, 2
        %v3988 = vmax.f32 %v3986, %v3987
        %v3989 = vrot.slane %v3988, 1
        %v3990 = vmax.f32 %v3988, %v3989
        %v3991 = vrot.slane %v3714, 4
        %v3992 = vmax.f32 %v3714, %v3991
        %v3993 = vrot.slane %v3992, 2
        %v3994 = vmax.f32 %v3992, %v3993
        %v3995 = vrot.slane %v3994, 1
        %v3996 = vmax.f32 %v3994, %v3995
        %v3997 = vsel %vm1057, %v3715, -inf
        %v3998 = vrot.slane %v3997, 4
        %v3999 = vmax.f32 %v3997, %v3998
        %v4000 = vrot.slane %v3999, 2
        %v4001 = vmax.f32 %v3999, %v4000
        %v4002 = vrot.slane %v4001, 1
        %v4003 = vmax.f32 %v4001, %v4002
        %v4004 = vrot.slane %v3716, 4
        %v4005 = vmax.f32 %v3716, %v4004
        %v4006 = vrot.slane %v4005, 2
        %v4007 = vmax.f32 %v4005, %v4006
        %v4008 = vrot.slane %v4007, 1
        %v4009 = vmax.f32 %v4007, %v4008
        %v4010 = vrot.slane %v3717, 4
        %v4011 = vmax.f32 %v3717, %v4010
        %v4012 = vrot.slane %v4011, 2
        %v4013 = vmax.f32 %v4011, %v4012
        %v4014 = vrot.slane %v4013, 1
        %v4015 = vmax.f32 %v4013, %v4014
        %v4016 = vsel %vm1057, %v3718, -inf
        %v4017 = vrot.slane %v4016, 4
        %v4018 = vmax.f32 %v4016, %v4017
        %v4019 = vrot.slane %v4018, 2
        %v4020 = vmax.f32 %v4018, %v4019
        %v4021 = vrot.slane %v4020, 1
        %v4022 = vmax.f32 %v4020, %v4021
        %s4023 = scalar_lea.vmem [#allocation4], 3
        %v4024 = vld [vmem:[%s4023] sm:$0x7]
        %v4026 = vperm.slane %v4024, 0
        %v4027 = vperm.slane %v4024, 1
        %v4028 = vperm.slane %v4024, 2
        %v4032 = vadd.f32 %v3724, %v4026
        %v4033 = vadd.f32 %v3730, %v4027
        %v4034 = vadd.f32 %v3737, %v4028
        %v4035 = vadd.f32 %v3743, %v4026
        %v4036 = vadd.f32 %v3749, %v4027
        %v4037 = vadd.f32 %v3756, %v4028
        %v4038 = vadd.f32 %v3762, %v4026
        %v4039 = vadd.f32 %v3768, %v4027
        %v4040 = vadd.f32 %v3775, %v4028
        %v4041 = vadd.f32 %v3781, %v4026
        %v4042 = vadd.f32 %v3787, %v4027
        %v4043 = vadd.f32 %v3794, %v4028
        %v4044 = vadd.f32 %v3800, %v4026
        %v4045 = vadd.f32 %v3806, %v4027
        %v4046 = vadd.f32 %v3813, %v4028
        %v4047 = vadd.f32 %v3819, %v4026
        %v4048 = vadd.f32 %v3825, %v4027
        %v4049 = vadd.f32 %v3832, %v4028
        %v4050 = vadd.f32 %v3838, %v4026
        %v4051 = vadd.f32 %v3844, %v4027
        %v4052 = vadd.f32 %v3851, %v4028
        %v4053 = vadd.f32 %v3857, %v4026
        %v4054 = vadd.f32 %v3863, %v4027
        %v4055 = vadd.f32 %v3870, %v4028
        %v4056 = vadd.f32 %v3876, %v4026
        %v4057 = vadd.f32 %v3882, %v4027
        %v4058 = vadd.f32 %v3889, %v4028
        %v4059 = vadd.f32 %v3895, %v4026
        %v4060 = vadd.f32 %v3901, %v4027
        %v4061 = vadd.f32 %v3908, %v4028
        %v4062 = vadd.f32 %v3914, %v4026
        %v4063 = vadd.f32 %v3920, %v4027
        %v4064 = vadd.f32 %v3927, %v4028
        %v4065 = vadd.f32 %v3933, %v4026
        %v4066 = vadd.f32 %v3939, %v4027
        %v4067 = vadd.f32 %v3946, %v4028
        %v4068 = vadd.f32 %v3952, %v4026
        %v4069 = vadd.f32 %v3958, %v4027
        %v4070 = vadd.f32 %v3965, %v4028
        %v4071 = vadd.f32 %v3971, %v4026
        %v4072 = vadd.f32 %v3977, %v4027
        %v4073 = vadd.f32 %v3984, %v4028
        %v4074 = vadd.f32 %v3990, %v4026
        %v4075 = vadd.f32 %v3996, %v4027
        %v4076 = vadd.f32 %v4003, %v4028
        %v4077 = vadd.f32 %v4009, %v4026
        %v4078 = vadd.f32 %v4015, %v4027
        %v4079 = vadd.f32 %v4022, %v4028
        %v4080 = vmax.f32 %v4032, 0.0
        %v4081 = vmax.f32 %v4033, 0.0
        %v4082 = vmax.f32 %v4034, 0.0
        %v4083 = vmax.f32 %v4035, 0.0
        %v4084 = vmax.f32 %v4036, 0.0
        %v4085 = vmax.f32 %v4037, 0.0
        %v4086 = vmax.f32 %v4038, 0.0
        %v4087 = vmax.f32 %v4039, 0.0
        %v4088 = vmax.f32 %v4040, 0.0
        %v4089 = vmax.f32 %v4041, 0.0
        %v4090 = vmax.f32 %v4042, 0.0
        %v4091 = vmax.f32 %v4043, 0.0
        %v4092 = vmax.f32 %v4044, 0.0
        %v4093 = vmax.f32 %v4045, 0.0
        %v4094 = vmax.f32 %v4046, 0.0
        %v4095 = vmax.f32 %v4047, 0.0
        %v4096 = vmax.f32 %v4048, 0.0
        %v4097 = vmax.f32 %v4049, 0.0
        %v4098 = vmax.f32 %v4050, 0.0
        %v4099 = vmax.f32 %v4051, 0.0
        %v4100 = vmax.f32 %v4052, 0.0
        %v4101 = vmax.f32 %v4053, 0.0
        %v4102 = vmax.f32 %v4054, 0.0
        %v4103 = vmax.f32 %v4055, 0.0
        %v4104 = vmax.f32 %v4056, 0.0
        %v4105 = vmax.f32 %v4057, 0.0
        %v4106 = vmax.f32 %v4058, 0.0
        %v4107 = vmax.f32 %v4059, 0.0
        %v4108 = vmax.f32 %v4060, 0.0
        %v4109 = vmax.f32 %v4061, 0.0
        %v4110 = vmax.f32 %v4062, 0.0
        %v4111 = vmax.f32 %v4063, 0.0
        %v4112 = vmax.f32 %v4064, 0.0
        %v4113 = vmax.f32 %v4065, 0.0
        %v4114 = vmax.f32 %v4066, 0.0
        %v4115 = vmax.f32 %v4067, 0.0
        %v4116 = vmax.f32 %v4068, 0.0
        %v4117 = vmax.f32 %v4069, 0.0
        %v4118 = vmax.f32 %v4070, 0.0
        %v4119 = vmax.f32 %v4071, 0.0
        %v4120 = vmax.f32 %v4072, 0.0
        %v4121 = vmax.f32 %v4073, 0.0
        %v4122 = vmax.f32 %v4074, 0.0
        %v4123 = vmax.f32 %v4075, 0.0
        %v4124 = vmax.f32 %v4076, 0.0
        %v4125 = vmax.f32 %v4077, 0.0
        %v4126 = vmax.f32 %v4078, 0.0
        %v4127 = vmax.f32 %v4079, 0.0
        %v4128 = vadd.f32 %v1940, %v4080
        %v4129 = vadd.f32 %v1941, %v4081
        %v4130 = vadd.f32 %v1942, %v4082
        %v4131 = vadd.f32 %v1943, %v4083
        %v4132 = vadd.f32 %v1944, %v4084
        %v4133 = vadd.f32 %v1945, %v4085
        %v4134 = vadd.f32 %v1946, %v4086
        %v4135 = vadd.f32 %v1947, %v4087
        %v4136 = vadd.f32 %v1948, %v4088
        %v4137 = vadd.f32 %v1949, %v4089
        %v4138 = vadd.f32 %v1950, %v4090
        %v4139 = vadd.f32 %v1951, %v4091
        %v4140 = vadd.f32 %v1952, %v4092
        %v4141 = vadd.f32 %v1953, %v4093
        %v4142 = vadd.f32 %v1954, %v4094
        %v4143 = vadd.f32 %v1955, %v4095
        %v4144 = vadd.f32 %v1956, %v4096
        %v4145 = vadd.f32 %v1957, %v4097
        %v4146 = vadd.f32 %v1958, %v4098
        %v4147 = vadd.f32 %v1959, %v4099
        %v4148 = vadd.f32 %v1960, %v4100
        %v4149 = vadd.f32 %v1961, %v4101
        %v4150 = vadd.f32 %v1962, %v4102
        %v4151 = vadd.f32 %v1963, %v4103
        %v4152 = vadd.f32 %v1964, %v4104
        %v4153 = vadd.f32 %v1965, %v4105
        %v4154 = vadd.f32 %v1966, %v4106
        %v4155 = vadd.f32 %v1967, %v4107
        %v4156 = vadd.f32 %v1968, %v4108
        %v4157 = vadd.f32 %v1969, %v4109
        %v4158 = vadd.f32 %v1970, %v4110
        %v4159 = vadd.f32 %v1971, %v4111
        %v4160 = vadd.f32 %v1972, %v4112
        %v4161 = vadd.f32 %v1973, %v4113
        %v4162 = vadd.f32 %v1974, %v4114
        %v4163 = vadd.f32 %v1975, %v4115
        %v4164 = vadd.f32 %v1976, %v4116
        %v4165 = vadd.f32 %v1977, %v4117
        %v4166 = vadd.f32 %v1978, %v4118
        %v4167 = vadd.f32 %v1979, %v4119
        %v4168 = vadd.f32 %v1980, %v4120
        %v4169 = vadd.f32 %v1981, %v4121
        %v4170 = vadd.f32 %v1982, %v4122
        %v4171 = vadd.f32 %v1983, %v4123
        %v4172 = vadd.f32 %v1984, %v4124
        %v4173 = vadd.f32 %v1985, %v4125
        %v4174 = vadd.f32 %v1986, %v4126
        %v4175 = vadd.f32 %v1987, %v4127
        %s4176 = scalar_lea.vmem [#allocation2], 1368
        %v4177 = vld [vmem:[%s4176] sm:$0xff]
        %v4178 = vld [vmem:[%s4176 + $0x8] sm:$0xf]
        %v4179 = vld [vmem:[%s4176 + $0xc] sm:$0xff]
        %v4180 = vld [vmem:[%s4176 + $0x14] sm:$0xf]
        %v4181 = vld [vmem:[%s4176 + $0x18] sm:$0xff]
        %v4182 = vld [vmem:[%s4176 + $0x20] sm:$0xf]
        %v4183 = vld [vmem:[%s4176 + $0x24] sm:$0xff]
        %v4184 = vld [vmem:[%s4176 + $0x2c] sm:$0xf]
        %v4185 = vld [vmem:[%s4176 + $0x30] sm:$0xff]
        %v4186 = vld [vmem:[%s4176 + $0x38] sm:$0xf]
        %v4187 = vld [vmem:[%s4176 + $0x3c] sm:$0xff]
        %v4188 = vld [vmem:[%s4176 + $0x44] sm:$0xf]
        %v4189 = vld [vmem:[%s4176 + $0x48] sm:$0xff]
        %v4190 = vld [vmem:[%s4176 + $0x50] sm:$0xf]
        %v4191 = vld [vmem:[%s4176 + $0x54] sm:$0xff]
        %v4192 = vld [vmem:[%s4176 + $0x5c] sm:$0xf]
        %v4193 = vld [vmem:[%s4176 + $0x60] sm:$0xff]
        %v4194 = vld [vmem:[%s4176 + $0x68] sm:$0xf]
        %v4195 = vld [vmem:[%s4176 + $0x6c] sm:$0xff]
        %v4196 = vld [vmem:[%s4176 + $0x74] sm:$0xf]
        %v4197 = vld [vmem:[%s4176 + $0x78] sm:$0xff]
        %v4198 = vld [vmem:[%s4176 + $0x80] sm:$0xf]
        %v4199 = vld [vmem:[%s4176 + $0x84] sm:$0xff]
        %v4200 = vld [vmem:[%s4176 + $0x8c] sm:$0xf]
        %v4201 = vld [vmem:[%s4176 + $0x90] sm:$0xff]
        %v4202 = vld [vmem:[%s4176 + $0x98] sm:$0xf]
        %v4203 = vld [vmem:[%s4176 + $0x9c] sm:$0xff]
        %v4204 = vld [vmem:[%s4176 + $0xa4] sm:$0xf]
        %v4205 = vld [vmem:[%s4176 + $0xa8] sm:$0xff]
        %v4206 = vld [vmem:[%s4176 + $0xb0] sm:$0xf]
        %v4207 = vld [vmem:[%s4176 + $0xb4] sm:$0xff]
        %v4208 = vld [vmem:[%s4176 + $0xbc] sm:$0xf]
        %v4209 = vld [vmem:[%s4176 + $0xc0] sm:$0xff]
        %v4210 = vld [vmem:[%s4176 + $0xc8] sm:$0xf]
        %v4211 = vld [vmem:[%s4176 + $0xcc] sm:$0xff]
        %v4212 = vld [vmem:[%s4176 + $0xd4] sm:$0xf]
        %v4213 = vld [vmem:[%s4176 + $0xd8] sm:$0xff]
        %v4214 = vld [vmem:[%s4176 + $0xe0] sm:$0xf]
        %v4215 = vld [vmem:[%s4176 + $0xe4] sm:$0xff]
        %v4216 = vld [vmem:[%s4176 + $0xec] sm:$0xf]
        %v4217 = vld [vmem:[%s4176 + $0xf0] sm:$0xff]
        %v4218 = vld [vmem:[%s4176 + $0xf8] sm:$0xf]
        %v4219 = vld [vmem:[%s4176 + $0xfc] sm:$0xff]
        %v4220 = vld [vmem:[%s4176 + $0x104] sm:$0xf]
        %v4221 = vld [vmem:[%s4176 + $0x108] sm:$0xff]
        %v4222 = vld [vmem:[%s4176 + $0x110] sm:$0xf]
        %v4223 = vld [vmem:[%s4176 + $0x114] sm:$0xff]
        %v4224 = vld [vmem:[%s4176 + $0x11c] sm:$0xf]
        %v4225 = vld [vmem:[%s4176 + $0x120] sm:$0xff]
        %v4226 = vld [vmem:[%s4176 + $0x128] sm:$0xf]
        %v4227 = vld [vmem:[%s4176 + $0x12c] sm:$0xff]
        %v4228 = vld [vmem:[%s4176 + $0x134] sm:$0xf]
        %v4229 = vld [vmem:[%s4176 + $0x138] sm:$0xff]
        %v4230 = vld [vmem:[%s4176 + $0x140] sm:$0xf]
        %v4231 = vld [vmem:[%s4176 + $0x144] sm:$0xff]
        %v4232 = vld [vmem:[%s4176 + $0x14c] sm:$0xf]
        %v4233 = vld [vmem:[%s4176 + $0x150] sm:$0xff]
        %v4234 = vld [vmem:[%s4176 + $0x158] sm:$0xf]
        %v4235 = vld [vmem:[%s4176 + $0x15c] sm:$0xff]
        %v4236 = vld [vmem:[%s4176 + $0x164] sm:$0xf]
        %v4237 = vld [vmem:[%s4176 + $0x168] sm:$0xff]
        %v4238 = vld [vmem:[%s4176 + $0x170] sm:$0xf]
        %v4239 = vld [vmem:[%s4176 + $0x174] sm:$0xff]
        %v4240 = vld [vmem:[%s4176 + $0x17c] sm:$0xf]
        %v4241 = vld [vmem:[%s4176 + $0x180] sm:$0xff]
        %v4242 = vld [vmem:[%s4176 + $0x188] sm:$0xf]
        %v4243 = vld [vmem:[%s4176 + $0x18c] sm:$0xff]
        %v4244 = vld [vmem:[%s4176 + $0x194] sm:$0xf]
        %v4245 = vld [vmem:[%s4176 + $0x198] sm:$0xff]
        %v4246 = vld [vmem:[%s4176 + $0x1a0] sm:$0xf]
        %v4247 = vld [vmem:[%s4176 + $0x1a4] sm:$0xff]
        %v4248 = vld [vmem:[%s4176 + $0x1ac] sm:$0xf]
        %v4249 = vld [vmem:[%s4176 + $0x1b0] sm:$0xff]
        %v4250 = vld [vmem:[%s4176 + $0x1b8] sm:$0xf]
        %v4251 = vld [vmem:[%s4176 + $0x1bc] sm:$0x33]
        %v4252 = vld [vmem:[%s4176 + $0x1c4] sm:$0x3]
        %s4253 = scalar_lea.vmem [#allocation2], 1824
        %v4254 = vld [vmem:[%s4253] sm:$0xff]
        %v4255 = vld [vmem:[%s4253 + $0x8] sm:$0xf]
        %v4256 = vld [vmem:[%s4253 + $0xc] sm:$0xff]
        %v4257 = vld [vmem:[%s4253 + $0x14] sm:$0xf]
        %v4258 = vld [vmem:[%s4253 + $0x18] sm:$0xff]
        %v4259 = vld [vmem:[%s4253 + $0x20] sm:$0xf]
        %v4260 = vld [vmem:[%s4253 + $0x24] sm:$0xff]
        %v4261 = vld [vmem:[%s4253 + $0x2c] sm:$0xf]
        %v4262 = vld [vmem:[%s4253 + $0x30] sm:$0xff]
        %v4263 = vld [vmem:[%s4253 + $0x38] sm:$0xf]
        %v4264 = vld [vmem:[%s4253 + $0x3c] sm:$0xff]
        %v4265 = vld [vmem:[%s4253 + $0x44] sm:$0xf]
        %v4266 = vld [vmem:[%s4253 + $0x48] sm:$0xff]
        %v4267 = vld [vmem:[%s4253 + $0x50] sm:$0xf]
        %v4268 = vld [vmem:[%s4253 + $0x54] sm:$0xff]
        %v4269 = vld [vmem:[%s4253 + $0x5c] sm:$0xf]
        %v4270 = vld [vmem:[%s4253 + $0x60] sm:$0xff]
        %v4271 = vld [vmem:[%s4253 + $0x68] sm:$0xf]
        %v4272 = vld [vmem:[%s4253 + $0x6c] sm:$0xff]
        %v4273 = vld [vmem:[%s4253 + $0x74] sm:$0xf]
        %v4274 = vld [vmem:[%s4253 + $0x78] sm:$0xff]
        %v4275 = vld [vmem:[%s4253 + $0x80] sm:$0xf]
        %v4276 = vld [vmem:[%s4253 + $0x84] sm:$0xff]
        %v4277 = vld [vmem:[%s4253 + $0x8c] sm:$0xf]
        %v4278 = vld [vmem:[%s4253 + $0x90] sm:$0xff]
        %v4279 = vld [vmem:[%s4253 + $0x98] sm:$0xf]
        %v4280 = vld [vmem:[%s4253 + $0x9c] sm:$0xff]
        %v4281 = vld [vmem:[%s4253 + $0xa4] sm:$0xf]
        %v4282 = vld [vmem:[%s4253 + $0xa8] sm:$0xff]
        %v4283 = vld [vmem:[%s4253 + $0xb0] sm:$0xf]
        %v4284 = vld [vmem:[%s4253 + $0xb4] sm:$0xff]
        %v4285 = vld [vmem:[%s4253 + $0xbc] sm:$0xf]
        %v4286 = vld [vmem:[%s4253 + $0xc0] sm:$0xff]
        %v4287 = vld [vmem:[%s4253 + $0xc8] sm:$0xf]
        %v4288 = vld [vmem:[%s4253 + $0xcc] sm:$0xff]
        %v4289 = vld [vmem:[%s4253 + $0xd4] sm:$0xf]
        %v4290 = vld [vmem:[%s4253 + $0xd8] sm:$0xff]
        %v4291 = vld [vmem:[%s4253 + $0xe0] sm:$0xf]
        %v4292 = vld [vmem:[%s4253 + $0xe4] sm:$0xff]
        %v4293 = vld [vmem:[%s4253 + $0xec] sm:$0xf]
        %v4294 = vld [vmem:[%s4253 + $0xf0] sm:$0xff]
        %v4295 = vld [vmem:[%s4253 + $0xf8] sm:$0xf]
        %v4296 = vld [vmem:[%s4253 + $0xfc] sm:$0xff]
        %v4297 = vld [vmem:[%s4253 + $0x104] sm:$0xf]
        %v4298 = vld [vmem:[%s4253 + $0x108] sm:$0xff]
        %v4299 = vld [vmem:[%s4253 + $0x110] sm:$0xf]
        %v4300 = vld [vmem:[%s4253 + $0x114] sm:$0xff]
        %v4301 = vld [vmem:[%s4253 + $0x11c] sm:$0xf]
        %v4302 = vld [vmem:[%s4253 + $0x120] sm:$0xff]
        %v4303 = vld [vmem:[%s4253 + $0x128] sm:$0xf]
        %v4304 = vld [vmem:[%s4253 + $0x12c] sm:$0xff]
        %v4305 = vld [vmem:[%s4253 + $0x134] sm:$0xf]
        %v4306 = vld [vmem:[%s4253 + $0x138] sm:$0xff]
        %v4307 = vld [vmem:[%s4253 + $0x140] sm:$0xf]
        %v4308 = vld [vmem:[%s4253 + $0x144] sm:$0xff]
        %v4309 = vld [vmem:[%s4253 + $0x14c] sm:$0xf]
        %v4310 = vld [vmem:[%s4253 + $0x150] sm:$0xff]
        %v4311 = vld [vmem:[%s4253 + $0x158] sm:$0xf]
        %v4312 = vld [vmem:[%s4253 + $0x15c] sm:$0xff]
        %v4313 = vld [vmem:[%s4253 + $0x164] sm:$0xf]
        %v4314 = vld [vmem:[%s4253 + $0x168] sm:$0xff]
        %v4315 = vld [vmem:[%s4253 + $0x170] sm:$0xf]
        %v4316 = vld [vmem:[%s4253 + $0x174] sm:$0xff]
        %v4317 = vld [vmem:[%s4253 + $0x17c] sm:$0xf]
        %v4318 = vld [vmem:[%s4253 + $0x180] sm:$0xff]
        %v4319 = vld [vmem:[%s4253 + $0x188] sm:$0xf]
        %v4320 = vld [vmem:[%s4253 + $0x18c] sm:$0xff]
        %v4321 = vld [vmem:[%s4253 + $0x194] sm:$0xf]
        %v4322 = vld [vmem:[%s4253 + $0x198] sm:$0xff]
        %v4323 = vld [vmem:[%s4253 + $0x1a0] sm:$0xf]
        %v4324 = vld [vmem:[%s4253 + $0x1a4] sm:$0xff]
        %v4325 = vld [vmem:[%s4253 + $0x1ac] sm:$0xf]
        %v4326 = vld [vmem:[%s4253 + $0x1b0] sm:$0xff]
        %v4327 = vld [vmem:[%s4253 + $0x1b8] sm:$0xf]
        %v4328 = vld [vmem:[%s4253 + $0x1bc] sm:$0x33]
        %v4329 = vld [vmem:[%s4253 + $0x1c4] sm:$0x3]
        %v4406 = vunpack.c.l.b16 %v4254
        %v4407 = vunpack.c.h.b16 %v4254
        %v4408 = vunpack.c.l.b16 %v4255
        %v4409 = vunpack.c.l.b16 %v4256
        %v4410 = vunpack.c.h.b16 %v4256
        %v4411 = vunpack.c.l.b16 %v4257
        %v4412 = vunpack.c.l.b16 %v4258
        %v4413 = vunpack.c.h.b16 %v4258
        %v4414 = vunpack.c.l.b16 %v4259
        %v4415 = vunpack.c.l.b16 %v4260
        %v4416 = vunpack.c.h.b16 %v4260
        %v4417 = vunpack.c.l.b16 %v4261
        %v4418 = vunpack.c.l.b16 %v4262
        %v4419 = vunpack.c.h.b16 %v4262
        %v4420 = vunpack.c.l.b16 %v4263
        %v4421 = vunpack.c.l.b16 %v4264
        %v4422 = vunpack.c.h.b16 %v4264
        %v4423 = vunpack.c.l.b16 %v4265
        %v4424 = vunpack.c.l.b16 %v4266
        %v4425 = vunpack.c.h.b16 %v4266
        %v4426 = vunpack.c.l.b16 %v4267
        %v4427 = vunpack.c.l.b16 %v4268
        %v4428 = vunpack.c.h.b16 %v4268
        %v4429 = vunpack.c.l.b16 %v4269
        %v4430 = vunpack.c.l.b16 %v4270
        %v4431 = vunpack.c.h.b16 %v4270
        %v4432 = vunpack.c.l.b16 %v4271
        %v4433 = vunpack.c.l.b16 %v4272
        %v4434 = vunpack.c.h.b16 %v4272
        %v4435 = vunpack.c.l.b16 %v4273
        %v4436 = vunpack.c.l.b16 %v4274
        %v4437 = vunpack.c.h.b16 %v4274
        %v4438 = vunpack.c.l.b16 %v4275
        %v4439 = vunpack.c.l.b16 %v4276
        %v4440 = vunpack.c.h.b16 %v4276
        %v4441 = vunpack.c.l.b16 %v4277
        %v4442 = vunpack.c.l.b16 %v4278
        %v4443 = vunpack.c.h.b16 %v4278
        %v4444 = vunpack.c.l.b16 %v4279
        %v4445 = vunpack.c.l.b16 %v4280
        %v4446 = vunpack.c.h.b16 %v4280
        %v4447 = vunpack.c.l.b16 %v4281
        %v4448 = vunpack.c.l.b16 %v4282
        %v4449 = vunpack.c.h.b16 %v4282
        %v4450 = vunpack.c.l.b16 %v4283
        %v4451 = vunpack.c.l.b16 %v4284
        %v4452 = vunpack.c.h.b16 %v4284
        %v4453 = vunpack.c.l.b16 %v4285
        %v4454 = vunpack.c.l.b16 %v4286
        %v4455 = vunpack.c.h.b16 %v4286
        %v4456 = vunpack.c.l.b16 %v4287
        %v4457 = vunpack.c.l.b16 %v4288
        %v4458 = vunpack.c.h.b16 %v4288
        %v4459 = vunpack.c.l.b16 %v4289
        %v4460 = vunpack.c.l.b16 %v4290
        %v4461 = vunpack.c.h.b16 %v4290
        %v4462 = vunpack.c.l.b16 %v4291
        %v4463 = vunpack.c.l.b16 %v4292
        %v4464 = vunpack.c.h.b16 %v4292
        %v4465 = vunpack.c.l.b16 %v4293
        %v4466 = vunpack.c.l.b16 %v4294
        %v4467 = vunpack.c.h.b16 %v4294
        %v4468 = vunpack.c.l.b16 %v4295
        %v4469 = vunpack.c.l.b16 %v4296
        %v4470 = vunpack.c.h.b16 %v4296
        %v4471 = vunpack.c.l.b16 %v4297
        %v4472 = vunpack.c.l.b16 %v4298
        %v4473 = vunpack.c.h.b16 %v4298
        %v4474 = vunpack.c.l.b16 %v4299
        %v4475 = vunpack.c.l.b16 %v4300
        %v4476 = vunpack.c.h.b16 %v4300
        %v4477 = vunpack.c.l.b16 %v4301
        %v4478 = vunpack.c.l.b16 %v4302
        %v4479 = vunpack.c.h.b16 %v4302
        %v4480 = vunpack.c.l.b16 %v4303
        %v4481 = vunpack.c.l.b16 %v4304
        %v4482 = vunpack.c.h.b16 %v4304
        %v4483 = vunpack.c.l.b16 %v4305
        %v4484 = vunpack.c.l.b16 %v4306
        %v4485 = vunpack.c.h.b16 %v4306
        %v4486 = vunpack.c.l.b16 %v4307
        %v4487 = vunpack.c.l.b16 %v4308
        %v4488 = vunpack.c.h.b16 %v4308
        %v4489 = vunpack.c.l.b16 %v4309
        %v4490 = vunpack.c.l.b16 %v4310
        %v4491 = vunpack.c.h.b16 %v4310
        %v4492 = vunpack.c.l.b16 %v4311
        %v4493 = vunpack.c.l.b16 %v4312
        %v4494 = vunpack.c.h.b16 %v4312
        %v4495 = vunpack.c.l.b16 %v4313
        %v4496 = vunpack.c.l.b16 %v4314
        %v4497 = vunpack.c.h.b16 %v4314
        %v4498 = vunpack.c.l.b16 %v4315
        %v4499 = vunpack.c.l.b16 %v4316
        %v4500 = vunpack.c.h.b16 %v4316
        %v4501 = vunpack.c.l.b16 %v4317
        %v4502 = vunpack.c.l.b16 %v4318
        %v4503 = vunpack.c.h.b16 %v4318
        %v4504 = vunpack.c.l.b16 %v4319
        %v4505 = vunpack.c.l.b16 %v4320
        %v4506 = vunpack.c.h.b16 %v4320
        %v4507 = vunpack.c.l.b16 %v4321
        %v4508 = vunpack.c.l.b16 %v4322
        %v4509 = vunpack.c.h.b16 %v4322
        %v4510 = vunpack.c.l.b16 %v4323
        %v4511 = vunpack.c.l.b16 %v4324
        %v4512 = vunpack.c.h.b16 %v4324
        %v4513 = vunpack.c.l.b16 %v4325
        %v4514 = vunpack.c.l.b16 %v4326
        %v4515 = vunpack.c.h.b16 %v4326
        %v4516 = vunpack.c.l.b16 %v4327
        %v4517 = vunpack.c.l.b16 %v4328
        %v4518 = vunpack.c.h.b16 %v4328
        %v4519 = vunpack.c.l.b16 %v4329
        %v4520 = vpack.c.b16 %v4409, %v4406
        %v4521 = vpack.c.b16 %v4410, %v4407
        %v4522 = vpack.c.b16 %v4411, %v4408
        %v4523 = vpack.c.b16 %v4415, %v4412
        %v4524 = vpack.c.b16 %v4416, %v4413
        %v4525 = vpack.c.b16 %v4417, %v4414
        %v4526 = vpack.c.b16 %v4421, %v4418
        %v4527 = vpack.c.b16 %v4422, %v4419
        %v4528 = vpack.c.b16 %v4423, %v4420
        %v4529 = vpack.c.b16 %v4427, %v4424
        %v4530 = vpack.c.b16 %v4428, %v4425
        %v4531 = vpack.c.b16 %v4429, %v4426
        %v4532 = vpack.c.b16 %v4433, %v4430
        %v4533 = vpack.c.b16 %v4434, %v4431
        %v4534 = vpack.c.b16 %v4435, %v4432
        %v4535 = vpack.c.b16 %v4439, %v4436
        %v4536 = vpack.c.b16 %v4440, %v4437
        %v4537 = vpack.c.b16 %v4441, %v4438
        %v4538 = vpack.c.b16 %v4445, %v4442
        %v4539 = vpack.c.b16 %v4446, %v4443
        %v4540 = vpack.c.b16 %v4447, %v4444
        %v4541 = vpack.c.b16 %v4451, %v4448
        %v4542 = vpack.c.b16 %v4452, %v4449
        %v4543 = vpack.c.b16 %v4453, %v4450
        %v4544 = vpack.c.b16 %v4457, %v4454
        %v4545 = vpack.c.b16 %v4458, %v4455
        %v4546 = vpack.c.b16 %v4459, %v4456
        %v4547 = vpack.c.b16 %v4463, %v4460
        %v4548 = vpack.c.b16 %v4464, %v4461
        %v4549 = vpack.c.b16 %v4465, %v4462
        %v4550 = vpack.c.b16 %v4469, %v4466
        %v4551 = vpack.c.b16 %v4470, %v4467
        %v4552 = vpack.c.b16 %v4471, %v4468
        %v4553 = vpack.c.b16 %v4475, %v4472
        %v4554 = vpack.c.b16 %v4476, %v4473
        %v4555 = vpack.c.b16 %v4477, %v4474
        %v4556 = vpack.c.b16 %v4481, %v4478
        %v4557 = vpack.c.b16 %v4482, %v4479
        %v4558 = vpack.c.b16 %v4483, %v4480
        %v4559 = vpack.c.b16 %v4487, %v4484
        %v4560 = vpack.c.b16 %v4488, %v4485
        %v4561 = vpack.c.b16 %v4489, %v4486
        %v4562 = vpack.c.b16 %v4493, %v4490
        %v4563 = vpack.c.b16 %v4494, %v4491
        %v4564 = vpack.c.b16 %v4495, %v4492
        %v4565 = vpack.c.b16 %v4499, %v4496
        %v4566 = vpack.c.b16 %v4500, %v4497
        %v4567 = vpack.c.b16 %v4501, %v4498
        %v4568 = vpack.c.b16 %v4505, %v4502
        %v4569 = vpack.c.b16 %v4506, %v4503
        %v4570 = vpack.c.b16 %v4507, %v4504
        %v4571 = vpack.c.b16 %v4511, %v4508
        %v4572 = vpack.c.b16 %v4512, %v4509
        %v4573 = vpack.c.b16 %v4513, %v4510
        %v4574 = vpack.c.b16 %v4517, %v4514
        %v4575 = vpack.c.b16 %v4518, %v4515
        %v4576 = vpack.c.b16 %v4519, %v4516
        %v4632 = vsel %vm458, %v4574, 0
        %v4635 = vsel %vm458, %v4575, 0
        %v4638 = vsel %vm458, %v4576, 0
        %4640 = vmatpush.bf16.msra.mxu0 %v4541
        %4641 = vmatpush.bf16.msra.mxu0 %v4538
        %4642 = vmatpush.bf16.msra.mxu0 %v4535
        %4643 = vmatpush.bf16.msra.mxu0 %v4532
        %4644 = vmatpush.bf16.msra.mxu0 %v4529
        %4645 = vmatpush.bf16.msra.mxu0 %v4526
        %4646 = vmatpush.bf16.msra.mxu0 %v4523
        %4647 = vmatpush.bf16.msra.mxu0 %v4520
        %4648 = vmatmul.bf16.gmra.mxu0 %v630
        %v4649 = vpop.f32.mrf.mxu0
        %v4650 = vadd.f32 0.0, %v4649
        %v4651 = vpop.f32.mrf.mxu0
        %v4652 = vadd.f32 0.0, %v4651
        %4653 = vmatmul.bf16.gmra.mxu0 %v633
        %v4654 = vpop.f32.mrf.mxu0
        %v4655 = vadd.f32 0.0, %v4654
        %v4656 = vpop.f32.mrf.mxu0
        %v4657 = vadd.f32 0.0, %v4656
        %4658 = vmatmul.bf16.gmra.mxu0 %v636
        %v4659 = vpop.f32.mrf.mxu0
        %v4660 = vadd.f32 0.0, %v4659
        %v4661 = vpop.f32.mrf.mxu0
        %v4662 = vadd.f32 0.0, %v4661
        %4663 = vmatmul.bf16.gmra.mxu0 %v639
        %v4664 = vpop.f32.mrf.mxu0
        %v4665 = vadd.f32 0.0, %v4664
        %v4666 = vpop.f32.mrf.mxu0
        %v4667 = vadd.f32 0.0, %v4666
        %4668 = vmatmul.bf16.gmra.mxu0 %v642
        %v4669 = vpop.f32.mrf.mxu0
        %v4670 = vadd.f32 0.0, %v4669
        %v4671 = vpop.f32.mrf.mxu0
        %v4672 = vadd.f32 0.0, %v4671
        %4673 = vmatmul.bf16.gmra.mxu0 %v645
        %v4674 = vpop.f32.mrf.mxu0
        %v4675 = vadd.f32 0.0, %v4674
        %v4676 = vpop.f32.mrf.mxu0
        %v4677 = vadd.f32 0.0, %v4676
        %4678 = vmatmul.bf16.gmra.mxu0 %v648
        %v4679 = vpop.f32.mrf.mxu0
        %v4680 = vadd.f32 0.0, %v4679
        %v4681 = vpop.f32.mrf.mxu0
        %v4682 = vadd.f32 0.0, %v4681
        %4683 = vmatmul.bf16.gmra.mxu0 %v651
        %v4684 = vpop.f32.mrf.mxu0
        %v4685 = vadd.f32 0.0, %v4684
        %v4686 = vpop.f32.mrf.mxu0
        %v4687 = vadd.f32 0.0, %v4686
        %4688 = vdwg.mxu0
        %4689 = vmatpush.bf16.msra.mxu0 %v4565
        %4690 = vmatpush.bf16.msra.mxu0 %v4562
        %4691 = vmatpush.bf16.msra.mxu0 %v4559
        %4692 = vmatpush.bf16.msra.mxu0 %v4556
        %4693 = vmatpush.bf16.msra.mxu0 %v4553
        %4694 = vmatpush.bf16.msra.mxu0 %v4550
        %4695 = vmatpush.bf16.msra.mxu0 %v4547
        %4696 = vmatpush.bf16.msra.mxu0 %v4544
        %4697 = vmatmul.bf16.gmra.mxu0 %v631
        %v4698 = vpop.f32.mrf.mxu0
        %v4699 = vadd.f32 %v4650, %v4698
        %v4700 = vpop.f32.mrf.mxu0
        %v4701 = vadd.f32 %v4652, %v4700
        %4702 = vmatmul.bf16.gmra.mxu0 %v634
        %v4703 = vpop.f32.mrf.mxu0
        %v4704 = vadd.f32 %v4655, %v4703
        %v4705 = vpop.f32.mrf.mxu0
        %v4706 = vadd.f32 %v4657, %v4705
        %4707 = vmatmul.bf16.gmra.mxu0 %v637
        %v4708 = vpop.f32.mrf.mxu0
        %v4709 = vadd.f32 %v4660, %v4708
        %v4710 = vpop.f32.mrf.mxu0
        %v4711 = vadd.f32 %v4662, %v4710
        %4712 = vmatmul.bf16.gmra.mxu0 %v640
        %v4713 = vpop.f32.mrf.mxu0
        %v4714 = vadd.f32 %v4665, %v4713
        %v4715 = vpop.f32.mrf.mxu0
        %v4716 = vadd.f32 %v4667, %v4715
        %4717 = vmatmul.bf16.gmra.mxu0 %v643
        %v4718 = vpop.f32.mrf.mxu0
        %v4719 = vadd.f32 %v4670, %v4718
        %v4720 = vpop.f32.mrf.mxu0
        %v4721 = vadd.f32 %v4672, %v4720
        %4722 = vmatmul.bf16.gmra.mxu0 %v646
        %v4723 = vpop.f32.mrf.mxu0
        %v4724 = vadd.f32 %v4675, %v4723
        %v4725 = vpop.f32.mrf.mxu0
        %v4726 = vadd.f32 %v4677, %v4725
        %4727 = vmatmul.bf16.gmra.mxu0 %v649
        %v4728 = vpop.f32.mrf.mxu0
        %v4729 = vadd.f32 %v4680, %v4728
        %v4730 = vpop.f32.mrf.mxu0
        %v4731 = vadd.f32 %v4682, %v4730
        %4732 = vmatmul.bf16.gmra.mxu0 %v652
        %v4733 = vpop.f32.mrf.mxu0
        %v4734 = vadd.f32 %v4685, %v4733
        %v4735 = vpop.f32.mrf.mxu0
        %v4736 = vadd.f32 %v4687, %v4735
        %4737 = vdwg.mxu0
        %4738 = vmatpush.bf16.msra.mxu0 0
        %4739 = vmatpush.bf16.msra.mxu0 0
        %4740 = vmatpush.bf16.msra.mxu0 0
        %4741 = vmatpush.bf16.msra.mxu0 0
        %4742 = vmatpush.bf16.msra.mxu0 0
        %4743 = vmatpush.bf16.msra.mxu0 %v4632
        %4744 = vmatpush.bf16.msra.mxu0 %v4571
        %4745 = vmatpush.bf16.msra.mxu0 %v4568
        %4746 = vmatmul.bf16.gmra.mxu0 %v2444
        %v4747 = vpop.f32.mrf.mxu0
        %v4748 = vadd.f32 %v4699, %v4747
        %v4749 = vpop.f32.mrf.mxu0
        %v4750 = vadd.f32 %v4701, %v4749
        %4751 = vmatmul.bf16.gmra.mxu0 %v2447
        %v4752 = vpop.f32.mrf.mxu0
        %v4753 = vadd.f32 %v4704, %v4752
        %v4754 = vpop.f32.mrf.mxu0
        %v4755 = vadd.f32 %v4706, %v4754
        %4756 = vmatmul.bf16.gmra.mxu0 %v2450
        %v4757 = vpop.f32.mrf.mxu0
        %v4758 = vadd.f32 %v4709, %v4757
        %v4759 = vpop.f32.mrf.mxu0
        %v4760 = vadd.f32 %v4711, %v4759
        %4761 = vmatmul.bf16.gmra.mxu0 %v2453
        %v4762 = vpop.f32.mrf.mxu0
        %v4763 = vadd.f32 %v4714, %v4762
        %v4764 = vpop.f32.mrf.mxu0
        %v4765 = vadd.f32 %v4716, %v4764
        %4766 = vmatmul.bf16.gmra.mxu0 %v2456
        %v4767 = vpop.f32.mrf.mxu0
        %v4768 = vadd.f32 %v4719, %v4767
        %v4769 = vpop.f32.mrf.mxu0
        %v4770 = vadd.f32 %v4721, %v4769
        %4771 = vmatmul.bf16.gmra.mxu0 %v2459
        %v4772 = vpop.f32.mrf.mxu0
        %v4773 = vadd.f32 %v4724, %v4772
        %v4774 = vpop.f32.mrf.mxu0
        %v4775 = vadd.f32 %v4726, %v4774
        %4776 = vmatmul.bf16.gmra.mxu0 %v2462
        %v4777 = vpop.f32.mrf.mxu0
        %v4778 = vadd.f32 %v4729, %v4777
        %v4779 = vpop.f32.mrf.mxu0
        %v4780 = vadd.f32 %v4731, %v4779
        %4781 = vmatmul.bf16.gmra.mxu0 %v2465
        %v4782 = vpop.f32.mrf.mxu0
        %v4783 = vadd.f32 %v4734, %v4782
        %v4784 = vpop.f32.mrf.mxu0
        %v4785 = vadd.f32 %v4736, %v4784
        %4786 = vdwg.mxu0
        %4787 = vmatpush.bf16.msra.mxu0 %v4542
        %4788 = vmatpush.bf16.msra.mxu0 %v4539
        %4789 = vmatpush.bf16.msra.mxu0 %v4536
        %4790 = vmatpush.bf16.msra.mxu0 %v4533
        %4791 = vmatpush.bf16.msra.mxu0 %v4530
        %4792 = vmatpush.bf16.msra.mxu0 %v4527
        %4793 = vmatpush.bf16.msra.mxu0 %v4524
        %4794 = vmatpush.bf16.msra.mxu0 %v4521
        %4795 = vmatmul.bf16.gmra.mxu0 %v630
        %v4796 = vpop.f32.mrf.mxu0
        %v4797 = vadd.f32 0.0, %v4796
        %v4798 = vpop.f32.mrf.mxu0
        %v4799 = vadd.f32 0.0, %v4798
        %4800 = vmatmul.bf16.gmra.mxu0 %v633
        %v4801 = vpop.f32.mrf.mxu0
        %v4802 = vadd.f32 0.0, %v4801
        %v4803 = vpop.f32.mrf.mxu0
        %v4804 = vadd.f32 0.0, %v4803
        %4805 = vmatmul.bf16.gmra.mxu0 %v636
        %v4806 = vpop.f32.mrf.mxu0
        %v4807 = vadd.f32 0.0, %v4806
        %v4808 = vpop.f32.mrf.mxu0
        %v4809 = vadd.f32 0.0, %v4808
        %4810 = vmatmul.bf16.gmra.mxu0 %v639
        %v4811 = vpop.f32.mrf.mxu0
        %v4812 = vadd.f32 0.0, %v4811
        %v4813 = vpop.f32.mrf.mxu0
        %v4814 = vadd.f32 0.0, %v4813
        %4815 = vmatmul.bf16.gmra.mxu0 %v642
        %v4816 = vpop.f32.mrf.mxu0
        %v4817 = vadd.f32 0.0, %v4816
        %v4818 = vpop.f32.mrf.mxu0
        %v4819 = vadd.f32 0.0, %v4818
        %4820 = vmatmul.bf16.gmra.mxu0 %v645
        %v4821 = vpop.f32.mrf.mxu0
        %v4822 = vadd.f32 0.0, %v4821
        %v4823 = vpop.f32.mrf.mxu0
        %v4824 = vadd.f32 0.0, %v4823
        %4825 = vmatmul.bf16.gmra.mxu0 %v648
        %v4826 = vpop.f32.mrf.mxu0
        %v4827 = vadd.f32 0.0, %v4826
        %v4828 = vpop.f32.mrf.mxu0
        %v4829 = vadd.f32 0.0, %v4828
        %4830 = vmatmul.bf16.gmra.mxu0 %v651
        %v4831 = vpop.f32.mrf.mxu0
        %v4832 = vadd.f32 0.0, %v4831
        %v4833 = vpop.f32.mrf.mxu0
        %v4834 = vadd.f32 0.0, %v4833
        %4835 = vdwg.mxu0
        %4836 = vmatpush.bf16.msra.mxu0 %v4566
        %4837 = vmatpush.bf16.msra.mxu0 %v4563
        %4838 = vmatpush.bf16.msra.mxu0 %v4560
        %4839 = vmatpush.bf16.msra.mxu0 %v4557
        %4840 = vmatpush.bf16.msra.mxu0 %v4554
        %4841 = vmatpush.bf16.msra.mxu0 %v4551
        %4842 = vmatpush.bf16.msra.mxu0 %v4548
        %4843 = vmatpush.bf16.msra.mxu0 %v4545
        %4844 = vmatmul.bf16.gmra.mxu0 %v631
        %v4845 = vpop.f32.mrf.mxu0
        %v4846 = vadd.f32 %v4797, %v4845
        %v4847 = vpop.f32.mrf.mxu0
        %v4848 = vadd.f32 %v4799, %v4847
        %4849 = vmatmul.bf16.gmra.mxu0 %v634
        %v4850 = vpop.f32.mrf.mxu0
        %v4851 = vadd.f32 %v4802, %v4850
        %v4852 = vpop.f32.mrf.mxu0
        %v4853 = vadd.f32 %v4804, %v4852
        %4854 = vmatmul.bf16.gmra.mxu0 %v637
        %v4855 = vpop.f32.mrf.mxu0
        %v4856 = vadd.f32 %v4807, %v4855
        %v4857 = vpop.f32.mrf.mxu0
        %v4858 = vadd.f32 %v4809, %v4857
        %4859 = vmatmul.bf16.gmra.mxu0 %v640
        %v4860 = vpop.f32.mrf.mxu0
        %v4861 = vadd.f32 %v4812, %v4860
        %v4862 = vpop.f32.mrf.mxu0
        %v4863 = vadd.f32 %v4814, %v4862
        %4864 = vmatmul.bf16.gmra.mxu0 %v643
        %v4865 = vpop.f32.mrf.mxu0
        %v4866 = vadd.f32 %v4817, %v4865
        %v4867 = vpop.f32.mrf.mxu0
        %v4868 = vadd.f32 %v4819, %v4867
        %4869 = vmatmul.bf16.gmra.mxu0 %v646
        %v4870 = vpop.f32.mrf.mxu0
        %v4871 = vadd.f32 %v4822, %v4870
        %v4872 = vpop.f32.mrf.mxu0
        %v4873 = vadd.f32 %v4824, %v4872
        %4874 = vmatmul.bf16.gmra.mxu0 %v649
        %v4875 = vpop.f32.mrf.mxu0
        %v4876 = vadd.f32 %v4827, %v4875
        %v4877 = vpop.f32.mrf.mxu0
        %v4878 = vadd.f32 %v4829, %v4877
        %4879 = vmatmul.bf16.gmra.mxu0 %v652
        %v4880 = vpop.f32.mrf.mxu0
        %v4881 = vadd.f32 %v4832, %v4880
        %v4882 = vpop.f32.mrf.mxu0
        %v4883 = vadd.f32 %v4834, %v4882
        %4884 = vdwg.mxu0
        %4885 = vmatpush.bf16.msra.mxu0 0
        %4886 = vmatpush.bf16.msra.mxu0 0
        %4887 = vmatpush.bf16.msra.mxu0 0
        %4888 = vmatpush.bf16.msra.mxu0 0
        %4889 = vmatpush.bf16.msra.mxu0 0
        %4890 = vmatpush.bf16.msra.mxu0 %v4635
        %4891 = vmatpush.bf16.msra.mxu0 %v4572
        %4892 = vmatpush.bf16.msra.mxu0 %v4569
        %4893 = vmatmul.bf16.gmra.mxu0 %v2444
        %v4894 = vpop.f32.mrf.mxu0
        %v4895 = vadd.f32 %v4846, %v4894
        %v4896 = vpop.f32.mrf.mxu0
        %v4897 = vadd.f32 %v4848, %v4896
        %4898 = vmatmul.bf16.gmra.mxu0 %v2447
        %v4899 = vpop.f32.mrf.mxu0
        %v4900 = vadd.f32 %v4851, %v4899
        %v4901 = vpop.f32.mrf.mxu0
        %v4902 = vadd.f32 %v4853, %v4901
        %4903 = vmatmul.bf16.gmra.mxu0 %v2450
        %v4904 = vpop.f32.mrf.mxu0
        %v4905 = vadd.f32 %v4856, %v4904
        %v4906 = vpop.f32.mrf.mxu0
        %v4907 = vadd.f32 %v4858, %v4906
        %4908 = vmatmul.bf16.gmra.mxu0 %v2453
        %v4909 = vpop.f32.mrf.mxu0
        %v4910 = vadd.f32 %v4861, %v4909
        %v4911 = vpop.f32.mrf.mxu0
        %v4912 = vadd.f32 %v4863, %v4911
        %4913 = vmatmul.bf16.gmra.mxu0 %v2456
        %v4914 = vpop.f32.mrf.mxu0
        %v4915 = vadd.f32 %v4866, %v4914
        %v4916 = vpop.f32.mrf.mxu0
        %v4917 = vadd.f32 %v4868, %v4916
        %4918 = vmatmul.bf16.gmra.mxu0 %v2459
        %v4919 = vpop.f32.mrf.mxu0
        %v4920 = vadd.f32 %v4871, %v4919
        %v4921 = vpop.f32.mrf.mxu0
        %v4922 = vadd.f32 %v4873, %v4921
        %4923 = vmatmul.bf16.gmra.mxu0 %v2462
        %v4924 = vpop.f32.mrf.mxu0
        %v4925 = vadd.f32 %v4876, %v4924
        %v4926 = vpop.f32.mrf.mxu0
        %v4927 = vadd.f32 %v4878, %v4926
        %4928 = vmatmul.bf16.gmra.mxu0 %v2465
        %v4929 = vpop.f32.mrf.mxu0
        %v4930 = vadd.f32 %v4881, %v4929
        %v4931 = vpop.f32.mrf.mxu0
        %v4932 = vadd.f32 %v4883, %v4931
        %4933 = vdwg.mxu0
        %4934 = vmatpush.bf16.msra.mxu0 %v4543
        %4935 = vmatpush.bf16.msra.mxu0 %v4540
        %4936 = vmatpush.bf16.msra.mxu0 %v4537
        %4937 = vmatpush.bf16.msra.mxu0 %v4534
        %4938 = vmatpush.bf16.msra.mxu0 %v4531
        %4939 = vmatpush.bf16.msra.mxu0 %v4528
        %4940 = vmatpush.bf16.msra.mxu0 %v4525
        %4941 = vmatpush.bf16.msra.mxu0 %v4522
        %4942 = vmatmul.bf16.gmra.mxu0 %v630
        %v4943 = vpop.f32.mrf.mxu0
        %v4944 = vadd.f32 0.0, %v4943
        %v4945 = vpop.f32.mrf.mxu0
        %v4946 = vadd.f32 0.0, %v4945
        %4947 = vmatmul.bf16.gmra.mxu0 %v633
        %v4948 = vpop.f32.mrf.mxu0
        %v4949 = vadd.f32 0.0, %v4948
        %v4950 = vpop.f32.mrf.mxu0
        %v4951 = vadd.f32 0.0, %v4950
        %4952 = vmatmul.bf16.gmra.mxu0 %v636
        %v4953 = vpop.f32.mrf.mxu0
        %v4954 = vadd.f32 0.0, %v4953
        %v4955 = vpop.f32.mrf.mxu0
        %v4956 = vadd.f32 0.0, %v4955
        %4957 = vmatmul.bf16.gmra.mxu0 %v639
        %v4958 = vpop.f32.mrf.mxu0
        %v4959 = vadd.f32 0.0, %v4958
        %v4960 = vpop.f32.mrf.mxu0
        %v4961 = vadd.f32 0.0, %v4960
        %4962 = vmatmul.bf16.gmra.mxu0 %v642
        %v4963 = vpop.f32.mrf.mxu0
        %v4964 = vadd.f32 0.0, %v4963
        %v4965 = vpop.f32.mrf.mxu0
        %v4966 = vadd.f32 0.0, %v4965
        %4967 = vmatmul.bf16.gmra.mxu0 %v645
        %v4968 = vpop.f32.mrf.mxu0
        %v4969 = vadd.f32 0.0, %v4968
        %v4970 = vpop.f32.mrf.mxu0
        %v4971 = vadd.f32 0.0, %v4970
        %4972 = vmatmul.bf16.gmra.mxu0 %v648
        %v4973 = vpop.f32.mrf.mxu0
        %v4974 = vadd.f32 0.0, %v4973
        %v4975 = vpop.f32.mrf.mxu0
        %v4976 = vadd.f32 0.0, %v4975
        %4977 = vmatmul.bf16.gmra.mxu0 %v651
        %v4978 = vpop.f32.mrf.mxu0
        %v4979 = vadd.f32 0.0, %v4978
        %v4980 = vpop.f32.mrf.mxu0
        %v4981 = vadd.f32 0.0, %v4980
        %4982 = vdwg.mxu0
        %4983 = vmatpush.bf16.msra.mxu0 %v4567
        %4984 = vmatpush.bf16.msra.mxu0 %v4564
        %4985 = vmatpush.bf16.msra.mxu0 %v4561
        %4986 = vmatpush.bf16.msra.mxu0 %v4558
        %4987 = vmatpush.bf16.msra.mxu0 %v4555
        %4988 = vmatpush.bf16.msra.mxu0 %v4552
        %4989 = vmatpush.bf16.msra.mxu0 %v4549
        %4990 = vmatpush.bf16.msra.mxu0 %v4546
        %4991 = vmatmul.bf16.gmra.mxu0 %v631
        %v4992 = vpop.f32.mrf.mxu0
        %v4993 = vadd.f32 %v4944, %v4992
        %v4994 = vpop.f32.mrf.mxu0
        %v4995 = vadd.f32 %v4946, %v4994
        %4996 = vmatmul.bf16.gmra.mxu0 %v634
        %v4997 = vpop.f32.mrf.mxu0
        %v4998 = vadd.f32 %v4949, %v4997
        %v4999 = vpop.f32.mrf.mxu0
        %v5000 = vadd.f32 %v4951, %v4999
        %5001 = vmatmul.bf16.gmra.mxu0 %v637
        %v5002 = vpop.f32.mrf.mxu0
        %v5003 = vadd.f32 %v4954, %v5002
        %v5004 = vpop.f32.mrf.mxu0
        %v5005 = vadd.f32 %v4956, %v5004
        %5006 = vmatmul.bf16.gmra.mxu0 %v640
        %v5007 = vpop.f32.mrf.mxu0
        %v5008 = vadd.f32 %v4959, %v5007
        %v5009 = vpop.f32.mrf.mxu0
        %v5010 = vadd.f32 %v4961, %v5009
        %5011 = vmatmul.bf16.gmra.mxu0 %v643
        %v5012 = vpop.f32.mrf.mxu0
        %v5013 = vadd.f32 %v4964, %v5012
        %v5014 = vpop.f32.mrf.mxu0
        %v5015 = vadd.f32 %v4966, %v5014
        %5016 = vmatmul.bf16.gmra.mxu0 %v646
        %v5017 = vpop.f32.mrf.mxu0
        %v5018 = vadd.f32 %v4969, %v5017
        %v5019 = vpop.f32.mrf.mxu0
        %v5020 = vadd.f32 %v4971, %v5019
        %5021 = vmatmul.bf16.gmra.mxu0 %v649
        %v5022 = vpop.f32.mrf.mxu0
        %v5023 = vadd.f32 %v4974, %v5022
        %v5024 = vpop.f32.mrf.mxu0
        %v5025 = vadd.f32 %v4976, %v5024
        %5026 = vmatmul.bf16.gmra.mxu0 %v652
        %v5027 = vpop.f32.mrf.mxu0
        %v5028 = vadd.f32 %v4979, %v5027
        %v5029 = vpop.f32.mrf.mxu0
        %v5030 = vadd.f32 %v4981, %v5029
        %5031 = vdwg.mxu0
        %5032 = vmatpush.bf16.msra.mxu0 0
        %5033 = vmatpush.bf16.msra.mxu0 0
        %5034 = vmatpush.bf16.msra.mxu0 0
        %5035 = vmatpush.bf16.msra.mxu0 0
        %5036 = vmatpush.bf16.msra.mxu0 0
        %5037 = vmatpush.bf16.msra.mxu0 %v4638
        %5038 = vmatpush.bf16.msra.mxu0 %v4573
        %5039 = vmatpush.bf16.msra.mxu0 %v4570
        %5040 = vmatmul.bf16.gmra.mxu0 %v2444
        %v5041 = vpop.f32.mrf.mxu0
        %v5042 = vadd.f32 %v4993, %v5041
        %v5043 = vpop.f32.mrf.mxu0
        %v5044 = vadd.f32 %v4995, %v5043
        %5045 = vmatmul.bf16.gmra.mxu0 %v2447
        %v5046 = vpop.f32.mrf.mxu0
        %v5047 = vadd.f32 %v4998, %v5046
        %v5048 = vpop.f32.mrf.mxu0
        %v5049 = vadd.f32 %v5000, %v5048
        %5050 = vmatmul.bf16.gmra.mxu0 %v2450
        %v5051 = vpop.f32.mrf.mxu0
        %v5052 = vadd.f32 %v5003, %v5051
        %v5053 = vpop.f32.mrf.mxu0
        %v5054 = vadd.f32 %v5005, %v5053
        %5055 = vmatmul.bf16.gmra.mxu0 %v2453
        %v5056 = vpop.f32.mrf.mxu0
        %v5057 = vadd.f32 %v5008, %v5056
        %v5058 = vpop.f32.mrf.mxu0
        %v5059 = vadd.f32 %v5010, %v5058
        %5060 = vmatmul.bf16.gmra.mxu0 %v2456
        %v5061 = vpop.f32.mrf.mxu0
        %v5062 = vadd.f32 %v5013, %v5061
        %v5063 = vpop.f32.mrf.mxu0
        %v5064 = vadd.f32 %v5015, %v5063
        %5065 = vmatmul.bf16.gmra.mxu0 %v2459
        %v5066 = vpop.f32.mrf.mxu0
        %v5067 = vadd.f32 %v5018, %v5066
        %v5068 = vpop.f32.mrf.mxu0
        %v5069 = vadd.f32 %v5020, %v5068
        %5070 = vmatmul.bf16.gmra.mxu0 %v2462
        %v5071 = vpop.f32.mrf.mxu0
        %v5072 = vadd.f32 %v5023, %v5071
        %v5073 = vpop.f32.mrf.mxu0
        %v5074 = vadd.f32 %v5025, %v5073
        %5075 = vmatmul.bf16.gmra.mxu0 %v2465
        %v5076 = vpop.f32.mrf.mxu0
        %v5077 = vadd.f32 %v5028, %v5076
        %v5078 = vpop.f32.mrf.mxu0
        %v5079 = vadd.f32 %v5030, %v5078
        %5080 = vdwg.mxu0
        %v5157 = vunpack.c.l.b16 %v4177
        %v5158 = vunpack.c.h.b16 %v4177
        %v5159 = vunpack.c.l.b16 %v4178
        %v5160 = vunpack.c.l.b16 %v4179
        %v5161 = vunpack.c.h.b16 %v4179
        %v5162 = vunpack.c.l.b16 %v4180
        %v5163 = vunpack.c.l.b16 %v4181
        %v5164 = vunpack.c.h.b16 %v4181
        %v5165 = vunpack.c.l.b16 %v4182
        %v5166 = vunpack.c.l.b16 %v4183
        %v5167 = vunpack.c.h.b16 %v4183
        %v5168 = vunpack.c.l.b16 %v4184
        %v5169 = vunpack.c.l.b16 %v4185
        %v5170 = vunpack.c.h.b16 %v4185
        %v5171 = vunpack.c.l.b16 %v4186
        %v5172 = vunpack.c.l.b16 %v4187
        %v5173 = vunpack.c.h.b16 %v4187
        %v5174 = vunpack.c.l.b16 %v4188
        %v5175 = vunpack.c.l.b16 %v4189
        %v5176 = vunpack.c.h.b16 %v4189
        %v5177 = vunpack.c.l.b16 %v4190
        %v5178 = vunpack.c.l.b16 %v4191
        %v5179 = vunpack.c.h.b16 %v4191
        %v5180 = vunpack.c.l.b16 %v4192
        %v5181 = vunpack.c.l.b16 %v4193
        %v5182 = vunpack.c.h.b16 %v4193
        %v5183 = vunpack.c.l.b16 %v4194
        %v5184 = vunpack.c.l.b16 %v4195
        %v5185 = vunpack.c.h.b16 %v4195
        %v5186 = vunpack.c.l.b16 %v4196
        %v5187 = vunpack.c.l.b16 %v4197
        %v5188 = vunpack.c.h.b16 %v4197
        %v5189 = vunpack.c.l.b16 %v4198
        %v5190 = vunpack.c.l.b16 %v4199
        %v5191 = vunpack.c.h.b16 %v4199
        %v5192 = vunpack.c.l.b16 %v4200
        %v5193 = vunpack.c.l.b16 %v4201
        %v5194 = vunpack.c.h.b16 %v4201
        %v5195 = vunpack.c.l.b16 %v4202
        %v5196 = vunpack.c.l.b16 %v4203
        %v5197 = vunpack.c.h.b16 %v4203
        %v5198 = vunpack.c.l.b16 %v4204
        %v5199 = vunpack.c.l.b16 %v4205
        %v5200 = vunpack.c.h.b16 %v4205
        %v5201 = vunpack.c.l.b16 %v4206
        %v5202 = vunpack.c.l.b16 %v4207
        %v5203 = vunpack.c.h.b16 %v4207
        %v5204 = vunpack.c.l.b16 %v4208
        %v5205 = vunpack.c.l.b16 %v4209
        %v5206 = vunpack.c.h.b16 %v4209
        %v5207 = vunpack.c.l.b16 %v4210
        %v5208 = vunpack.c.l.b16 %v4211
        %v5209 = vunpack.c.h.b16 %v4211
        %v5210 = vunpack.c.l.b16 %v4212
        %v5211 = vunpack.c.l.b16 %v4213
        %v5212 = vunpack.c.h.b16 %v4213
        %v5213 = vunpack.c.l.b16 %v4214
        %v5214 = vunpack.c.l.b16 %v4215
        %v5215 = vunpack.c.h.b16 %v4215
        %v5216 = vunpack.c.l.b16 %v4216
        %v5217 = vunpack.c.l.b16 %v4217
        %v5218 = vunpack.c.h.b16 %v4217
        %v5219 = vunpack.c.l.b16 %v4218
        %v5220 = vunpack.c.l.b16 %v4219
        %v5221 = vunpack.c.h.b16 %v4219
        %v5222 = vunpack.c.l.b16 %v4220
        %v5223 = vunpack.c.l.b16 %v4221
        %v5224 = vunpack.c.h.b16 %v4221
        %v5225 = vunpack.c.l.b16 %v4222
        %v5226 = vunpack.c.l.b16 %v4223
        %v5227 = vunpack.c.h.b16 %v4223
        %v5228 = vunpack.c.l.b16 %v4224
        %v5229 = vunpack.c.l.b16 %v4225
        %v5230 = vunpack.c.h.b16 %v4225
        %v5231 = vunpack.c.l.b16 %v4226
        %v5232 = vunpack.c.l.b16 %v4227
        %v5233 = vunpack.c.h.b16 %v4227
        %v5234 = vunpack.c.l.b16 %v4228
        %v5235 = vunpack.c.l.b16 %v4229
        %v5236 = vunpack.c.h.b16 %v4229
        %v5237 = vunpack.c.l.b16 %v4230
        %v5238 = vunpack.c.l.b16 %v4231
        %v5239 = vunpack.c.h.b16 %v4231
        %v5240 = vunpack.c.l.b16 %v4232
        %v5241 = vunpack.c.l.b16 %v4233
        %v5242 = vunpack.c.h.b16 %v4233
        %v5243 = vunpack.c.l.b16 %v4234
        %v5244 = vunpack.c.l.b16 %v4235
        %v5245 = vunpack.c.h.b16 %v4235
        %v5246 = vunpack.c.l.b16 %v4236
        %v5247 = vunpack.c.l.b16 %v4237
        %v5248 = vunpack.c.h.b16 %v4237
        %v5249 = vunpack.c.l.b16 %v4238
        %v5250 = vunpack.c.l.b16 %v4239
        %v5251 = vunpack.c.h.b16 %v4239
        %v5252 = vunpack.c.l.b16 %v4240
        %v5253 = vunpack.c.l.b16 %v4241
        %v5254 = vunpack.c.h.b16 %v4241
        %v5255 = vunpack.c.l.b16 %v4242
        %v5256 = vunpack.c.l.b16 %v4243
        %v5257 = vunpack.c.h.b16 %v4243
        %v5258 = vunpack.c.l.b16 %v4244
        %v5259 = vunpack.c.l.b16 %v4245
        %v5260 = vunpack.c.h.b16 %v4245
        %v5261 = vunpack.c.l.b16 %v4246
        %v5262 = vunpack.c.l.b16 %v4247
        %v5263 = vunpack.c.h.b16 %v4247
        %v5264 = vunpack.c.l.b16 %v4248
        %v5265 = vunpack.c.l.b16 %v4249
        %v5266 = vunpack.c.h.b16 %v4249
        %v5267 = vunpack.c.l.b16 %v4250
        %v5268 = vunpack.c.l.b16 %v4251
        %v5269 = vunpack.c.h.b16 %v4251
        %v5270 = vunpack.c.l.b16 %v4252
        %v5271 = vpack.c.b16 %v5160, %v5157
        %v5272 = vpack.c.b16 %v5161, %v5158
        %v5273 = vpack.c.b16 %v5162, %v5159
        %v5274 = vpack.c.b16 %v5166, %v5163
        %v5275 = vpack.c.b16 %v5167, %v5164
        %v5276 = vpack.c.b16 %v5168, %v5165
        %v5277 = vpack.c.b16 %v5172, %v5169
        %v5278 = vpack.c.b16 %v5173, %v5170
        %v5279 = vpack.c.b16 %v5174, %v5171
        %v5280 = vpack.c.b16 %v5178, %v5175
        %v5281 = vpack.c.b16 %v5179, %v5176
        %v5282 = vpack.c.b16 %v5180, %v5177
        %v5283 = vpack.c.b16 %v5184, %v5181
        %v5284 = vpack.c.b16 %v5185, %v5182
        %v5285 = vpack.c.b16 %v5186, %v5183
        %v5286 = vpack.c.b16 %v5190, %v5187
        %v5287 = vpack.c.b16 %v5191, %v5188
        %v5288 = vpack.c.b16 %v5192, %v5189
        %v5289 = vpack.c.b16 %v5196, %v5193
        %v5290 = vpack.c.b16 %v5197, %v5194
        %v5291 = vpack.c.b16 %v5198, %v5195
        %v5292 = vpack.c.b16 %v5202, %v5199
        %v5293 = vpack.c.b16 %v5203, %v5200
        %v5294 = vpack.c.b16 %v5204, %v5201
        %v5295 = vpack.c.b16 %v5208, %v5205
        %v5296 = vpack.c.b16 %v5209, %v5206
        %v5297 = vpack.c.b16 %v5210, %v5207
        %v5298 = vpack.c.b16 %v5214, %v5211
        %v5299 = vpack.c.b16 %v5215, %v5212
        %v5300 = vpack.c.b16 %v5216, %v5213
        %v5301 = vpack.c.b16 %v5220, %v5217
        %v5302 = vpack.c.b16 %v5221, %v5218
        %v5303 = vpack.c.b16 %v5222, %v5219
        %v5304 = vpack.c.b16 %v5226, %v5223
        %v5305 = vpack.c.b16 %v5227, %v5224
        %v5306 = vpack.c.b16 %v5228, %v5225
        %v5307 = vpack.c.b16 %v5232, %v5229
        %v5308 = vpack.c.b16 %v5233, %v5230
        %v5309 = vpack.c.b16 %v5234, %v5231
        %v5310 = vpack.c.b16 %v5238, %v5235
        %v5311 = vpack.c.b16 %v5239, %v5236
        %v5312 = vpack.c.b16 %v5240, %v5237
        %v5313 = vpack.c.b16 %v5244, %v5241
        %v5314 = vpack.c.b16 %v5245, %v5242
        %v5315 = vpack.c.b16 %v5246, %v5243
        %v5316 = vpack.c.b16 %v5250, %v5247
        %v5317 = vpack.c.b16 %v5251, %v5248
        %v5318 = vpack.c.b16 %v5252, %v5249
        %v5319 = vpack.c.b16 %v5256, %v5253
        %v5320 = vpack.c.b16 %v5257, %v5254
        %v5321 = vpack.c.b16 %v5258, %v5255
        %v5322 = vpack.c.b16 %v5262, %v5259
        %v5323 = vpack.c.b16 %v5263, %v5260
        %v5324 = vpack.c.b16 %v5264, %v5261
        %v5325 = vpack.c.b16 %v5268, %v5265
        %v5326 = vpack.c.b16 %v5269, %v5266
        %v5327 = vpack.c.b16 %v5270, %v5267
        %v5383 = vsel %vm458, %v5325, 0
        %v5386 = vsel %vm458, %v5326, 0
        %v5389 = vsel %vm458, %v5327, 0
        %5391 = vmatpush.bf16.msra.mxu0 %v5292
        %5392 = vmatpush.bf16.msra.mxu0 %v5289
        %5393 = vmatpush.bf16.msra.mxu0 %v5286
        %5394 = vmatpush.bf16.msra.mxu0 %v5283
        %5395 = vmatpush.bf16.msra.mxu0 %v5280
        %5396 = vmatpush.bf16.msra.mxu0 %v5277
        %5397 = vmatpush.bf16.msra.mxu0 %v5274
        %5398 = vmatpush.bf16.msra.mxu0 %v5271
        %5399 = vmatmul.bf16.gmra.mxu0 %v606
        %v5400 = vpop.f32.mrf.mxu0
        %v5401 = vadd.f32 %v4748, %v5400
        %v5402 = vpop.f32.mrf.mxu0
        %v5403 = vadd.f32 %v4750, %v5402
        %5404 = vmatmul.bf16.gmra.mxu0 %v609
        %v5405 = vpop.f32.mrf.mxu0
        %v5406 = vadd.f32 %v4753, %v5405
        %v5407 = vpop.f32.mrf.mxu0
        %v5408 = vadd.f32 %v4755, %v5407
        %5409 = vmatmul.bf16.gmra.mxu0 %v612
        %v5410 = vpop.f32.mrf.mxu0
        %v5411 = vadd.f32 %v4758, %v5410
        %v5412 = vpop.f32.mrf.mxu0
        %v5413 = vadd.f32 %v4760, %v5412
        %5414 = vmatmul.bf16.gmra.mxu0 %v615
        %v5415 = vpop.f32.mrf.mxu0
        %v5416 = vadd.f32 %v4763, %v5415
        %v5417 = vpop.f32.mrf.mxu0
        %v5418 = vadd.f32 %v4765, %v5417
        %5419 = vmatmul.bf16.gmra.mxu0 %v618
        %v5420 = vpop.f32.mrf.mxu0
        %v5421 = vadd.f32 %v4768, %v5420
        %v5422 = vpop.f32.mrf.mxu0
        %v5423 = vadd.f32 %v4770, %v5422
        %5424 = vmatmul.bf16.gmra.mxu0 %v621
        %v5425 = vpop.f32.mrf.mxu0
        %v5426 = vadd.f32 %v4773, %v5425
        %v5427 = vpop.f32.mrf.mxu0
        %v5428 = vadd.f32 %v4775, %v5427
        %5429 = vmatmul.bf16.gmra.mxu0 %v624
        %v5430 = vpop.f32.mrf.mxu0
        %v5431 = vadd.f32 %v4778, %v5430
        %v5432 = vpop.f32.mrf.mxu0
        %v5433 = vadd.f32 %v4780, %v5432
        %5434 = vmatmul.bf16.gmra.mxu0 %v627
        %v5435 = vpop.f32.mrf.mxu0
        %v5436 = vadd.f32 %v4783, %v5435
        %v5437 = vpop.f32.mrf.mxu0
        %v5438 = vadd.f32 %v4785, %v5437
        %5439 = vdwg.mxu0
        %5440 = vmatpush.bf16.msra.mxu0 %v5316
        %5441 = vmatpush.bf16.msra.mxu0 %v5313
        %5442 = vmatpush.bf16.msra.mxu0 %v5310
        %5443 = vmatpush.bf16.msra.mxu0 %v5307
        %5444 = vmatpush.bf16.msra.mxu0 %v5304
        %5445 = vmatpush.bf16.msra.mxu0 %v5301
        %5446 = vmatpush.bf16.msra.mxu0 %v5298
        %5447 = vmatpush.bf16.msra.mxu0 %v5295
        %5448 = vmatmul.bf16.gmra.mxu0 %v607
        %v5449 = vpop.f32.mrf.mxu0
        %v5450 = vadd.f32 %v5401, %v5449
        %v5451 = vpop.f32.mrf.mxu0
        %v5452 = vadd.f32 %v5403, %v5451
        %5453 = vmatmul.bf16.gmra.mxu0 %v610
        %v5454 = vpop.f32.mrf.mxu0
        %v5455 = vadd.f32 %v5406, %v5454
        %v5456 = vpop.f32.mrf.mxu0
        %v5457 = vadd.f32 %v5408, %v5456
        %5458 = vmatmul.bf16.gmra.mxu0 %v613
        %v5459 = vpop.f32.mrf.mxu0
        %v5460 = vadd.f32 %v5411, %v5459
        %v5461 = vpop.f32.mrf.mxu0
        %v5462 = vadd.f32 %v5413, %v5461
        %5463 = vmatmul.bf16.gmra.mxu0 %v616
        %v5464 = vpop.f32.mrf.mxu0
        %v5465 = vadd.f32 %v5416, %v5464
        %v5466 = vpop.f32.mrf.mxu0
        %v5467 = vadd.f32 %v5418, %v5466
        %5468 = vmatmul.bf16.gmra.mxu0 %v619
        %v5469 = vpop.f32.mrf.mxu0
        %v5470 = vadd.f32 %v5421, %v5469
        %v5471 = vpop.f32.mrf.mxu0
        %v5472 = vadd.f32 %v5423, %v5471
        %5473 = vmatmul.bf16.gmra.mxu0 %v622
        %v5474 = vpop.f32.mrf.mxu0
        %v5475 = vadd.f32 %v5426, %v5474
        %v5476 = vpop.f32.mrf.mxu0
        %v5477 = vadd.f32 %v5428, %v5476
        %5478 = vmatmul.bf16.gmra.mxu0 %v625
        %v5479 = vpop.f32.mrf.mxu0
        %v5480 = vadd.f32 %v5431, %v5479
        %v5481 = vpop.f32.mrf.mxu0
        %v5482 = vadd.f32 %v5433, %v5481
        %5483 = vmatmul.bf16.gmra.mxu0 %v628
        %v5484 = vpop.f32.mrf.mxu0
        %v5485 = vadd.f32 %v5436, %v5484
        %v5486 = vpop.f32.mrf.mxu0
        %v5487 = vadd.f32 %v5438, %v5486
        %5488 = vdwg.mxu0
        %5489 = vmatpush.bf16.msra.mxu0 0
        %5490 = vmatpush.bf16.msra.mxu0 0
        %5491 = vmatpush.bf16.msra.mxu0 0
        %5492 = vmatpush.bf16.msra.mxu0 0
        %5493 = vmatpush.bf16.msra.mxu0 0
        %5494 = vmatpush.bf16.msra.mxu0 %v5383
        %5495 = vmatpush.bf16.msra.mxu0 %v5322
        %5496 = vmatpush.bf16.msra.mxu0 %v5319
        %5497 = vmatmul.bf16.gmra.mxu0 %v1059
        %v5498 = vpop.f32.mrf.mxu0
        %v5499 = vadd.f32 %v5450, %v5498
        %v5500 = vpop.f32.mrf.mxu0
        %v5501 = vadd.f32 %v5452, %v5500
        %5502 = vmatmul.bf16.gmra.mxu0 %v1062
        %v5503 = vpop.f32.mrf.mxu0
        %v5504 = vadd.f32 %v5455, %v5503
        %v5505 = vpop.f32.mrf.mxu0
        %v5506 = vadd.f32 %v5457, %v5505
        %5507 = vmatmul.bf16.gmra.mxu0 %v1065
        %v5508 = vpop.f32.mrf.mxu0
        %v5509 = vadd.f32 %v5460, %v5508
        %v5510 = vpop.f32.mrf.mxu0
        %v5511 = vadd.f32 %v5462, %v5510
        %5512 = vmatmul.bf16.gmra.mxu0 %v1068
        %v5513 = vpop.f32.mrf.mxu0
        %v5514 = vadd.f32 %v5465, %v5513
        %v5515 = vpop.f32.mrf.mxu0
        %v5516 = vadd.f32 %v5467, %v5515
        %5517 = vmatmul.bf16.gmra.mxu0 %v1071
        %v5518 = vpop.f32.mrf.mxu0
        %v5519 = vadd.f32 %v5470, %v5518
        %v5520 = vpop.f32.mrf.mxu0
        %v5521 = vadd.f32 %v5472, %v5520
        %5522 = vmatmul.bf16.gmra.mxu0 %v1074
        %v5523 = vpop.f32.mrf.mxu0
        %v5524 = vadd.f32 %v5475, %v5523
        %v5525 = vpop.f32.mrf.mxu0
        %v5526 = vadd.f32 %v5477, %v5525
        %5527 = vmatmul.bf16.gmra.mxu0 %v1077
        %v5528 = vpop.f32.mrf.mxu0
        %v5529 = vadd.f32 %v5480, %v5528
        %v5530 = vpop.f32.mrf.mxu0
        %v5531 = vadd.f32 %v5482, %v5530
        %5532 = vmatmul.bf16.gmra.mxu0 %v1080
        %v5533 = vpop.f32.mrf.mxu0
        %v5534 = vadd.f32 %v5485, %v5533
        %v5535 = vpop.f32.mrf.mxu0
        %v5536 = vadd.f32 %v5487, %v5535
        %5537 = vdwg.mxu0
        %5538 = vmatpush.bf16.msra.mxu0 %v5293
        %5539 = vmatpush.bf16.msra.mxu0 %v5290
        %5540 = vmatpush.bf16.msra.mxu0 %v5287
        %5541 = vmatpush.bf16.msra.mxu0 %v5284
        %5542 = vmatpush.bf16.msra.mxu0 %v5281
        %5543 = vmatpush.bf16.msra.mxu0 %v5278
        %5544 = vmatpush.bf16.msra.mxu0 %v5275
        %5545 = vmatpush.bf16.msra.mxu0 %v5272
        %5546 = vmatmul.bf16.gmra.mxu0 %v606
        %v5547 = vpop.f32.mrf.mxu0
        %v5548 = vadd.f32 %v4895, %v5547
        %v5549 = vpop.f32.mrf.mxu0
        %v5550 = vadd.f32 %v4897, %v5549
        %5551 = vmatmul.bf16.gmra.mxu0 %v609
        %v5552 = vpop.f32.mrf.mxu0
        %v5553 = vadd.f32 %v4900, %v5552
        %v5554 = vpop.f32.mrf.mxu0
        %v5555 = vadd.f32 %v4902, %v5554
        %5556 = vmatmul.bf16.gmra.mxu0 %v612
        %v5557 = vpop.f32.mrf.mxu0
        %v5558 = vadd.f32 %v4905, %v5557
        %v5559 = vpop.f32.mrf.mxu0
        %v5560 = vadd.f32 %v4907, %v5559
        %5561 = vmatmul.bf16.gmra.mxu0 %v615
        %v5562 = vpop.f32.mrf.mxu0
        %v5563 = vadd.f32 %v4910, %v5562
        %v5564 = vpop.f32.mrf.mxu0
        %v5565 = vadd.f32 %v4912, %v5564
        %5566 = vmatmul.bf16.gmra.mxu0 %v618
        %v5567 = vpop.f32.mrf.mxu0
        %v5568 = vadd.f32 %v4915, %v5567
        %v5569 = vpop.f32.mrf.mxu0
        %v5570 = vadd.f32 %v4917, %v5569
        %5571 = vmatmul.bf16.gmra.mxu0 %v621
        %v5572 = vpop.f32.mrf.mxu0
        %v5573 = vadd.f32 %v4920, %v5572
        %v5574 = vpop.f32.mrf.mxu0
        %v5575 = vadd.f32 %v4922, %v5574
        %5576 = vmatmul.bf16.gmra.mxu0 %v624
        %v5577 = vpop.f32.mrf.mxu0
        %v5578 = vadd.f32 %v4925, %v5577
        %v5579 = vpop.f32.mrf.mxu0
        %v5580 = vadd.f32 %v4927, %v5579
        %5581 = vmatmul.bf16.gmra.mxu0 %v627
        %v5582 = vpop.f32.mrf.mxu0
        %v5583 = vadd.f32 %v4930, %v5582
        %v5584 = vpop.f32.mrf.mxu0
        %v5585 = vadd.f32 %v4932, %v5584
        %5586 = vdwg.mxu0
        %5587 = vmatpush.bf16.msra.mxu0 %v5317
        %5588 = vmatpush.bf16.msra.mxu0 %v5314
        %5589 = vmatpush.bf16.msra.mxu0 %v5311
        %5590 = vmatpush.bf16.msra.mxu0 %v5308
        %5591 = vmatpush.bf16.msra.mxu0 %v5305
        %5592 = vmatpush.bf16.msra.mxu0 %v5302
        %5593 = vmatpush.bf16.msra.mxu0 %v5299
        %5594 = vmatpush.bf16.msra.mxu0 %v5296
        %5595 = vmatmul.bf16.gmra.mxu0 %v607
        %v5596 = vpop.f32.mrf.mxu0
        %v5597 = vadd.f32 %v5548, %v5596
        %v5598 = vpop.f32.mrf.mxu0
        %v5599 = vadd.f32 %v5550, %v5598
        %5600 = vmatmul.bf16.gmra.mxu0 %v610
        %v5601 = vpop.f32.mrf.mxu0
        %v5602 = vadd.f32 %v5553, %v5601
        %v5603 = vpop.f32.mrf.mxu0
        %v5604 = vadd.f32 %v5555, %v5603
        %5605 = vmatmul.bf16.gmra.mxu0 %v613
        %v5606 = vpop.f32.mrf.mxu0
        %v5607 = vadd.f32 %v5558, %v5606
        %v5608 = vpop.f32.mrf.mxu0
        %v5609 = vadd.f32 %v5560, %v5608
        %5610 = vmatmul.bf16.gmra.mxu0 %v616
        %v5611 = vpop.f32.mrf.mxu0
        %v5612 = vadd.f32 %v5563, %v5611
        %v5613 = vpop.f32.mrf.mxu0
        %v5614 = vadd.f32 %v5565, %v5613
        %5615 = vmatmul.bf16.gmra.mxu0 %v619
        %v5616 = vpop.f32.mrf.mxu0
        %v5617 = vadd.f32 %v5568, %v5616
        %v5618 = vpop.f32.mrf.mxu0
        %v5619 = vadd.f32 %v5570, %v5618
        %5620 = vmatmul.bf16.gmra.mxu0 %v622
        %v5621 = vpop.f32.mrf.mxu0
        %v5622 = vadd.f32 %v5573, %v5621
        %v5623 = vpop.f32.mrf.mxu0
        %v5624 = vadd.f32 %v5575, %v5623
        %5625 = vmatmul.bf16.gmra.mxu0 %v625
        %v5626 = vpop.f32.mrf.mxu0
        %v5627 = vadd.f32 %v5578, %v5626
        %v5628 = vpop.f32.mrf.mxu0
        %v5629 = vadd.f32 %v5580, %v5628
        %5630 = vmatmul.bf16.gmra.mxu0 %v628
        %v5631 = vpop.f32.mrf.mxu0
        %v5632 = vadd.f32 %v5583, %v5631
        %v5633 = vpop.f32.mrf.mxu0
        %v5634 = vadd.f32 %v5585, %v5633
        %5635 = vdwg.mxu0
        %5636 = vmatpush.bf16.msra.mxu0 0
        %5637 = vmatpush.bf16.msra.mxu0 0
        %5638 = vmatpush.bf16.msra.mxu0 0
        %5639 = vmatpush.bf16.msra.mxu0 0
        %5640 = vmatpush.bf16.msra.mxu0 0
        %5641 = vmatpush.bf16.msra.mxu0 %v5386
        %5642 = vmatpush.bf16.msra.mxu0 %v5323
        %5643 = vmatpush.bf16.msra.mxu0 %v5320
        %5644 = vmatmul.bf16.gmra.mxu0 %v1059
        %v5645 = vpop.f32.mrf.mxu0
        %v5646 = vadd.f32 %v5597, %v5645
        %v5647 = vpop.f32.mrf.mxu0
        %v5648 = vadd.f32 %v5599, %v5647
        %5649 = vmatmul.bf16.gmra.mxu0 %v1062
        %v5650 = vpop.f32.mrf.mxu0
        %v5651 = vadd.f32 %v5602, %v5650
        %v5652 = vpop.f32.mrf.mxu0
        %v5653 = vadd.f32 %v5604, %v5652
        %5654 = vmatmul.bf16.gmra.mxu0 %v1065
        %v5655 = vpop.f32.mrf.mxu0
        %v5656 = vadd.f32 %v5607, %v5655
        %v5657 = vpop.f32.mrf.mxu0
        %v5658 = vadd.f32 %v5609, %v5657
        %5659 = vmatmul.bf16.gmra.mxu0 %v1068
        %v5660 = vpop.f32.mrf.mxu0
        %v5661 = vadd.f32 %v5612, %v5660
        %v5662 = vpop.f32.mrf.mxu0
        %v5663 = vadd.f32 %v5614, %v5662
        %5664 = vmatmul.bf16.gmra.mxu0 %v1071
        %v5665 = vpop.f32.mrf.mxu0
        %v5666 = vadd.f32 %v5617, %v5665
        %v5667 = vpop.f32.mrf.mxu0
        %v5668 = vadd.f32 %v5619, %v5667
        %5669 = vmatmul.bf16.gmra.mxu0 %v1074
        %v5670 = vpop.f32.mrf.mxu0
        %v5671 = vadd.f32 %v5622, %v5670
        %v5672 = vpop.f32.mrf.mxu0
        %v5673 = vadd.f32 %v5624, %v5672
        %5674 = vmatmul.bf16.gmra.mxu0 %v1077
        %v5675 = vpop.f32.mrf.mxu0
        %v5676 = vadd.f32 %v5627, %v5675
        %v5677 = vpop.f32.mrf.mxu0
        %v5678 = vadd.f32 %v5629, %v5677
        %5679 = vmatmul.bf16.gmra.mxu0 %v1080
        %v5680 = vpop.f32.mrf.mxu0
        %v5681 = vadd.f32 %v5632, %v5680
        %v5682 = vpop.f32.mrf.mxu0
        %v5683 = vadd.f32 %v5634, %v5682
        %5684 = vdwg.mxu0
        %5685 = vmatpush.bf16.msra.mxu0 %v5294
        %5686 = vmatpush.bf16.msra.mxu0 %v5291
        %5687 = vmatpush.bf16.msra.mxu0 %v5288
        %5688 = vmatpush.bf16.msra.mxu0 %v5285
        %5689 = vmatpush.bf16.msra.mxu0 %v5282
        %5690 = vmatpush.bf16.msra.mxu0 %v5279
        %5691 = vmatpush.bf16.msra.mxu0 %v5276
        %5692 = vmatpush.bf16.msra.mxu0 %v5273
        %5693 = vmatmul.bf16.gmra.mxu0 %v606
        %v5694 = vpop.f32.mrf.mxu0
        %v5695 = vadd.f32 %v5042, %v5694
        %v5696 = vpop.f32.mrf.mxu0
        %v5697 = vadd.f32 %v5044, %v5696
        %5698 = vmatmul.bf16.gmra.mxu0 %v609
        %v5699 = vpop.f32.mrf.mxu0
        %v5700 = vadd.f32 %v5047, %v5699
        %v5701 = vpop.f32.mrf.mxu0
        %v5702 = vadd.f32 %v5049, %v5701
        %5703 = vmatmul.bf16.gmra.mxu0 %v612
        %v5704 = vpop.f32.mrf.mxu0
        %v5705 = vadd.f32 %v5052, %v5704
        %v5706 = vpop.f32.mrf.mxu0
        %v5707 = vadd.f32 %v5054, %v5706
        %5708 = vmatmul.bf16.gmra.mxu0 %v615
        %v5709 = vpop.f32.mrf.mxu0
        %v5710 = vadd.f32 %v5057, %v5709
        %v5711 = vpop.f32.mrf.mxu0
        %v5712 = vadd.f32 %v5059, %v5711
        %5713 = vmatmul.bf16.gmra.mxu0 %v618
        %v5714 = vpop.f32.mrf.mxu0
        %v5715 = vadd.f32 %v5062, %v5714
        %v5716 = vpop.f32.mrf.mxu0
        %v5717 = vadd.f32 %v5064, %v5716
        %5718 = vmatmul.bf16.gmra.mxu0 %v621
        %v5719 = vpop.f32.mrf.mxu0
        %v5720 = vadd.f32 %v5067, %v5719
        %v5721 = vpop.f32.mrf.mxu0
        %v5722 = vadd.f32 %v5069, %v5721
        %5723 = vmatmul.bf16.gmra.mxu0 %v624
        %v5724 = vpop.f32.mrf.mxu0
        %v5725 = vadd.f32 %v5072, %v5724
        %v5726 = vpop.f32.mrf.mxu0
        %v5727 = vadd.f32 %v5074, %v5726
        %5728 = vmatmul.bf16.gmra.mxu0 %v627
        %v5729 = vpop.f32.mrf.mxu0
        %v5730 = vadd.f32 %v5077, %v5729
        %v5731 = vpop.f32.mrf.mxu0
        %v5732 = vadd.f32 %v5079, %v5731
        %5733 = vdwg.mxu0
        %5734 = vmatpush.bf16.msra.mxu0 %v5318
        %5735 = vmatpush.bf16.msra.mxu0 %v5315
        %5736 = vmatpush.bf16.msra.mxu0 %v5312
        %5737 = vmatpush.bf16.msra.mxu0 %v5309
        %5738 = vmatpush.bf16.msra.mxu0 %v5306
        %5739 = vmatpush.bf16.msra.mxu0 %v5303
        %5740 = vmatpush.bf16.msra.mxu0 %v5300
        %5741 = vmatpush.bf16.msra.mxu0 %v5297
        %5742 = vmatmul.bf16.gmra.mxu0 %v607
        %v5743 = vpop.f32.mrf.mxu0
        %v5744 = vadd.f32 %v5695, %v5743
        %v5745 = vpop.f32.mrf.mxu0
        %v5746 = vadd.f32 %v5697, %v5745
        %5747 = vmatmul.bf16.gmra.mxu0 %v610
        %v5748 = vpop.f32.mrf.mxu0
        %v5749 = vadd.f32 %v5700, %v5748
        %v5750 = vpop.f32.mrf.mxu0
        %v5751 = vadd.f32 %v5702, %v5750
        %5752 = vmatmul.bf16.gmra.mxu0 %v613
        %v5753 = vpop.f32.mrf.mxu0
        %v5754 = vadd.f32 %v5705, %v5753
        %v5755 = vpop.f32.mrf.mxu0
        %v5756 = vadd.f32 %v5707, %v5755
        %5757 = vmatmul.bf16.gmra.mxu0 %v616
        %v5758 = vpop.f32.mrf.mxu0
        %v5759 = vadd.f32 %v5710, %v5758
        %v5760 = vpop.f32.mrf.mxu0
        %v5761 = vadd.f32 %v5712, %v5760
        %5762 = vmatmul.bf16.gmra.mxu0 %v619
        %v5763 = vpop.f32.mrf.mxu0
        %v5764 = vadd.f32 %v5715, %v5763
        %v5765 = vpop.f32.mrf.mxu0
        %v5766 = vadd.f32 %v5717, %v5765
        %5767 = vmatmul.bf16.gmra.mxu0 %v622
        %v5768 = vpop.f32.mrf.mxu0
        %v5769 = vadd.f32 %v5720, %v5768
        %v5770 = vpop.f32.mrf.mxu0
        %v5771 = vadd.f32 %v5722, %v5770
        %5772 = vmatmul.bf16.gmra.mxu0 %v625
        %v5773 = vpop.f32.mrf.mxu0
        %v5774 = vadd.f32 %v5725, %v5773
        %v5775 = vpop.f32.mrf.mxu0
        %v5776 = vadd.f32 %v5727, %v5775
        %5777 = vmatmul.bf16.gmra.mxu0 %v628
        %v5778 = vpop.f32.mrf.mxu0
        %v5779 = vadd.f32 %v5730, %v5778
        %v5780 = vpop.f32.mrf.mxu0
        %v5781 = vadd.f32 %v5732, %v5780
        %5782 = vdwg.mxu0
        %5783 = vmatpush.bf16.msra.mxu0 0
        %5784 = vmatpush.bf16.msra.mxu0 0
        %5785 = vmatpush.bf16.msra.mxu0 0
        %5786 = vmatpush.bf16.msra.mxu0 0
        %5787 = vmatpush.bf16.msra.mxu0 0
        %5788 = vmatpush.bf16.msra.mxu0 %v5389
        %5789 = vmatpush.bf16.msra.mxu0 %v5324
        %5790 = vmatpush.bf16.msra.mxu0 %v5321
        %5791 = vmatmul.bf16.gmra.mxu0 %v1059
        %v5792 = vpop.f32.mrf.mxu0
        %v5793 = vadd.f32 %v5744, %v5792
        %v5794 = vpop.f32.mrf.mxu0
        %v5795 = vadd.f32 %v5746, %v5794
        %5796 = vmatmul.bf16.gmra.mxu0 %v1062
        %v5797 = vpop.f32.mrf.mxu0
        %v5798 = vadd.f32 %v5749, %v5797
        %v5799 = vpop.f32.mrf.mxu0
        %v5800 = vadd.f32 %v5751, %v5799
        %5801 = vmatmul.bf16.gmra.mxu0 %v1065
        %v5802 = vpop.f32.mrf.mxu0
        %v5803 = vadd.f32 %v5754, %v5802
        %v5804 = vpop.f32.mrf.mxu0
        %v5805 = vadd.f32 %v5756, %v5804
        %5806 = vmatmul.bf16.gmra.mxu0 %v1068
        %v5807 = vpop.f32.mrf.mxu0
        %v5808 = vadd.f32 %v5759, %v5807
        %v5809 = vpop.f32.mrf.mxu0
        %v5810 = vadd.f32 %v5761, %v5809
        %5811 = vmatmul.bf16.gmra.mxu0 %v1071
        %v5812 = vpop.f32.mrf.mxu0
        %v5813 = vadd.f32 %v5764, %v5812
        %v5814 = vpop.f32.mrf.mxu0
        %v5815 = vadd.f32 %v5766, %v5814
        %5816 = vmatmul.bf16.gmra.mxu0 %v1074
        %v5817 = vpop.f32.mrf.mxu0
        %v5818 = vadd.f32 %v5769, %v5817
        %v5819 = vpop.f32.mrf.mxu0
        %v5820 = vadd.f32 %v5771, %v5819
        %5821 = vmatmul.bf16.gmra.mxu0 %v1077
        %v5822 = vpop.f32.mrf.mxu0
        %v5823 = vadd.f32 %v5774, %v5822
        %v5824 = vpop.f32.mrf.mxu0
        %v5825 = vadd.f32 %v5776, %v5824
        %5826 = vmatmul.bf16.gmra.mxu0 %v1080
        %v5827 = vpop.f32.mrf.mxu0
        %v5828 = vadd.f32 %v5779, %v5827
        %v5829 = vpop.f32.mrf.mxu0
        %v5830 = vadd.f32 %v5781, %v5829
        %5831 = vdwg.mxu0
        %s5832 = scalar_lea.vmem [#allocation2], 2280
        %v5833 = vld [vmem:[%s5832] sm:$0xff]
        %v5834 = vld [vmem:[%s5832 + $0x8] sm:$0xf]
        %v5835 = vld [vmem:[%s5832 + $0xc] sm:$0xff]
        %v5836 = vld [vmem:[%s5832 + $0x14] sm:$0xf]
        %v5837 = vld [vmem:[%s5832 + $0x18] sm:$0xff]
        %v5838 = vld [vmem:[%s5832 + $0x20] sm:$0xf]
        %v5839 = vld [vmem:[%s5832 + $0x24] sm:$0xff]
        %v5840 = vld [vmem:[%s5832 + $0x2c] sm:$0xf]
        %v5841 = vld [vmem:[%s5832 + $0x30] sm:$0xff]
        %v5842 = vld [vmem:[%s5832 + $0x38] sm:$0xf]
        %v5843 = vld [vmem:[%s5832 + $0x3c] sm:$0xff]
        %v5844 = vld [vmem:[%s5832 + $0x44] sm:$0xf]
        %v5845 = vld [vmem:[%s5832 + $0x48] sm:$0xff]
        %v5846 = vld [vmem:[%s5832 + $0x50] sm:$0xf]
        %v5847 = vld [vmem:[%s5832 + $0x54] sm:$0xff]
        %v5848 = vld [vmem:[%s5832 + $0x5c] sm:$0xf]
        %v5849 = vld [vmem:[%s5832 + $0x60] sm:$0xff]
        %v5850 = vld [vmem:[%s5832 + $0x68] sm:$0xf]
        %v5851 = vld [vmem:[%s5832 + $0x6c] sm:$0xff]
        %v5852 = vld [vmem:[%s5832 + $0x74] sm:$0xf]
        %v5853 = vld [vmem:[%s5832 + $0x78] sm:$0xff]
        %v5854 = vld [vmem:[%s5832 + $0x80] sm:$0xf]
        %v5855 = vld [vmem:[%s5832 + $0x84] sm:$0xff]
        %v5856 = vld [vmem:[%s5832 + $0x8c] sm:$0xf]
        %v5857 = vld [vmem:[%s5832 + $0x90] sm:$0xff]
        %v5858 = vld [vmem:[%s5832 + $0x98] sm:$0xf]
        %v5859 = vld [vmem:[%s5832 + $0x9c] sm:$0xff]
        %v5860 = vld [vmem:[%s5832 + $0xa4] sm:$0xf]
        %v5861 = vld [vmem:[%s5832 + $0xa8] sm:$0xff]
        %v5862 = vld [vmem:[%s5832 + $0xb0] sm:$0xf]
        %v5863 = vld [vmem:[%s5832 + $0xb4] sm:$0xff]
        %v5864 = vld [vmem:[%s5832 + $0xbc] sm:$0xf]
        %v5865 = vld [vmem:[%s5832 + $0xc0] sm:$0xff]
        %v5866 = vld [vmem:[%s5832 + $0xc8] sm:$0xf]
        %v5867 = vld [vmem:[%s5832 + $0xcc] sm:$0xff]
        %v5868 = vld [vmem:[%s5832 + $0xd4] sm:$0xf]
        %v5869 = vld [vmem:[%s5832 + $0xd8] sm:$0xff]
        %v5870 = vld [vmem:[%s5832 + $0xe0] sm:$0xf]
        %v5871 = vld [vmem:[%s5832 + $0xe4] sm:$0xff]
        %v5872 = vld [vmem:[%s5832 + $0xec] sm:$0xf]
        %v5873 = vld [vmem:[%s5832 + $0xf0] sm:$0xff]
        %v5874 = vld [vmem:[%s5832 + $0xf8] sm:$0xf]
        %v5875 = vld [vmem:[%s5832 + $0xfc] sm:$0xff]
        %v5876 = vld [vmem:[%s5832 + $0x104] sm:$0xf]
        %v5877 = vld [vmem:[%s5832 + $0x108] sm:$0xff]
        %v5878 = vld [vmem:[%s5832 + $0x110] sm:$0xf]
        %v5879 = vld [vmem:[%s5832 + $0x114] sm:$0xff]
        %v5880 = vld [vmem:[%s5832 + $0x11c] sm:$0xf]
        %v5881 = vld [vmem:[%s5832 + $0x120] sm:$0xff]
        %v5882 = vld [vmem:[%s5832 + $0x128] sm:$0xf]
        %v5883 = vld [vmem:[%s5832 + $0x12c] sm:$0xff]
        %v5884 = vld [vmem:[%s5832 + $0x134] sm:$0xf]
        %v5885 = vld [vmem:[%s5832 + $0x138] sm:$0xff]
        %v5886 = vld [vmem:[%s5832 + $0x140] sm:$0xf]
        %v5887 = vld [vmem:[%s5832 + $0x144] sm:$0xff]
        %v5888 = vld [vmem:[%s5832 + $0x14c] sm:$0xf]
        %v5889 = vld [vmem:[%s5832 + $0x150] sm:$0xff]
        %v5890 = vld [vmem:[%s5832 + $0x158] sm:$0xf]
        %v5891 = vld [vmem:[%s5832 + $0x15c] sm:$0xff]
        %v5892 = vld [vmem:[%s5832 + $0x164] sm:$0xf]
        %v5893 = vld [vmem:[%s5832 + $0x168] sm:$0xff]
        %v5894 = vld [vmem:[%s5832 + $0x170] sm:$0xf]
        %v5895 = vld [vmem:[%s5832 + $0x174] sm:$0xff]
        %v5896 = vld [vmem:[%s5832 + $0x17c] sm:$0xf]
        %v5897 = vld [vmem:[%s5832 + $0x180] sm:$0xff]
        %v5898 = vld [vmem:[%s5832 + $0x188] sm:$0xf]
        %v5899 = vld [vmem:[%s5832 + $0x18c] sm:$0xff]
        %v5900 = vld [vmem:[%s5832 + $0x194] sm:$0xf]
        %v5901 = vld [vmem:[%s5832 + $0x198] sm:$0xff]
        %v5902 = vld [vmem:[%s5832 + $0x1a0] sm:$0xf]
        %v5903 = vld [vmem:[%s5832 + $0x1a4] sm:$0xff]
        %v5904 = vld [vmem:[%s5832 + $0x1ac] sm:$0xf]
        %v5905 = vld [vmem:[%s5832 + $0x1b0] sm:$0xff]
        %v5906 = vld [vmem:[%s5832 + $0x1b8] sm:$0xf]
        %v5907 = vld [vmem:[%s5832 + $0x1bc] sm:$0x33]
        %v5908 = vld [vmem:[%s5832 + $0x1c4] sm:$0x3]
        %v5985 = vunpack.c.l.b16 %v5833
        %v5986 = vunpack.c.h.b16 %v5833
        %v5987 = vunpack.c.l.b16 %v5834
        %v5988 = vunpack.c.l.b16 %v5835
        %v5989 = vunpack.c.h.b16 %v5835
        %v5990 = vunpack.c.l.b16 %v5836
        %v5991 = vunpack.c.l.b16 %v5837
        %v5992 = vunpack.c.h.b16 %v5837
        %v5993 = vunpack.c.l.b16 %v5838
        %v5994 = vunpack.c.l.b16 %v5839
        %v5995 = vunpack.c.h.b16 %v5839
        %v5996 = vunpack.c.l.b16 %v5840
        %v5997 = vunpack.c.l.b16 %v5841
        %v5998 = vunpack.c.h.b16 %v5841
        %v5999 = vunpack.c.l.b16 %v5842
        %v6000 = vunpack.c.l.b16 %v5843
        %v6001 = vunpack.c.h.b16 %v5843
        %v6002 = vunpack.c.l.b16 %v5844
        %v6003 = vunpack.c.l.b16 %v5845
        %v6004 = vunpack.c.h.b16 %v5845
        %v6005 = vunpack.c.l.b16 %v5846
        %v6006 = vunpack.c.l.b16 %v5847
        %v6007 = vunpack.c.h.b16 %v5847
        %v6008 = vunpack.c.l.b16 %v5848
        %v6009 = vunpack.c.l.b16 %v5849
        %v6010 = vunpack.c.h.b16 %v5849
        %v6011 = vunpack.c.l.b16 %v5850
        %v6012 = vunpack.c.l.b16 %v5851
        %v6013 = vunpack.c.h.b16 %v5851
        %v6014 = vunpack.c.l.b16 %v5852
        %v6015 = vunpack.c.l.b16 %v5853
        %v6016 = vunpack.c.h.b16 %v5853
        %v6017 = vunpack.c.l.b16 %v5854
        %v6018 = vunpack.c.l.b16 %v5855
        %v6019 = vunpack.c.h.b16 %v5855
        %v6020 = vunpack.c.l.b16 %v5856
        %v6021 = vunpack.c.l.b16 %v5857
        %v6022 = vunpack.c.h.b16 %v5857
        %v6023 = vunpack.c.l.b16 %v5858
        %v6024 = vunpack.c.l.b16 %v5859
        %v6025 = vunpack.c.h.b16 %v5859
        %v6026 = vunpack.c.l.b16 %v5860
        %v6027 = vunpack.c.l.b16 %v5861
        %v6028 = vunpack.c.h.b16 %v5861
        %v6029 = vunpack.c.l.b16 %v5862
        %v6030 = vunpack.c.l.b16 %v5863
        %v6031 = vunpack.c.h.b16 %v5863
        %v6032 = vunpack.c.l.b16 %v5864
        %v6033 = vunpack.c.l.b16 %v5865
        %v6034 = vunpack.c.h.b16 %v5865
        %v6035 = vunpack.c.l.b16 %v5866
        %v6036 = vunpack.c.l.b16 %v5867
        %v6037 = vunpack.c.h.b16 %v5867
        %v6038 = vunpack.c.l.b16 %v5868
        %v6039 = vunpack.c.l.b16 %v5869
        %v6040 = vunpack.c.h.b16 %v5869
        %v6041 = vunpack.c.l.b16 %v5870
        %v6042 = vunpack.c.l.b16 %v5871
        %v6043 = vunpack.c.h.b16 %v5871
        %v6044 = vunpack.c.l.b16 %v5872
        %v6045 = vunpack.c.l.b16 %v5873
        %v6046 = vunpack.c.h.b16 %v5873
        %v6047 = vunpack.c.l.b16 %v5874
        %v6048 = vunpack.c.l.b16 %v5875
        %v6049 = vunpack.c.h.b16 %v5875
        %v6050 = vunpack.c.l.b16 %v5876
        %v6051 = vunpack.c.l.b16 %v5877
        %v6052 = vunpack.c.h.b16 %v5877
        %v6053 = vunpack.c.l.b16 %v5878
        %v6054 = vunpack.c.l.b16 %v5879
        %v6055 = vunpack.c.h.b16 %v5879
        %v6056 = vunpack.c.l.b16 %v5880
        %v6057 = vunpack.c.l.b16 %v5881
        %v6058 = vunpack.c.h.b16 %v5881
        %v6059 = vunpack.c.l.b16 %v5882
        %v6060 = vunpack.c.l.b16 %v5883
        %v6061 = vunpack.c.h.b16 %v5883
        %v6062 = vunpack.c.l.b16 %v5884
        %v6063 = vunpack.c.l.b16 %v5885
        %v6064 = vunpack.c.h.b16 %v5885
        %v6065 = vunpack.c.l.b16 %v5886
        %v6066 = vunpack.c.l.b16 %v5887
        %v6067 = vunpack.c.h.b16 %v5887
        %v6068 = vunpack.c.l.b16 %v5888
        %v6069 = vunpack.c.l.b16 %v5889
        %v6070 = vunpack.c.h.b16 %v5889
        %v6071 = vunpack.c.l.b16 %v5890
        %v6072 = vunpack.c.l.b16 %v5891
        %v6073 = vunpack.c.h.b16 %v5891
        %v6074 = vunpack.c.l.b16 %v5892
        %v6075 = vunpack.c.l.b16 %v5893
        %v6076 = vunpack.c.h.b16 %v5893
        %v6077 = vunpack.c.l.b16 %v5894
        %v6078 = vunpack.c.l.b16 %v5895
        %v6079 = vunpack.c.h.b16 %v5895
        %v6080 = vunpack.c.l.b16 %v5896
        %v6081 = vunpack.c.l.b16 %v5897
        %v6082 = vunpack.c.h.b16 %v5897
        %v6083 = vunpack.c.l.b16 %v5898
        %v6084 = vunpack.c.l.b16 %v5899
        %v6085 = vunpack.c.h.b16 %v5899
        %v6086 = vunpack.c.l.b16 %v5900
        %v6087 = vunpack.c.l.b16 %v5901
        %v6088 = vunpack.c.h.b16 %v5901
        %v6089 = vunpack.c.l.b16 %v5902
        %v6090 = vunpack.c.l.b16 %v5903
        %v6091 = vunpack.c.h.b16 %v5903
        %v6092 = vunpack.c.l.b16 %v5904
        %v6093 = vunpack.c.l.b16 %v5905
        %v6094 = vunpack.c.h.b16 %v5905
        %v6095 = vunpack.c.l.b16 %v5906
        %v6096 = vunpack.c.l.b16 %v5907
        %v6097 = vunpack.c.h.b16 %v5907
        %v6098 = vunpack.c.l.b16 %v5908
        %v6099 = vpack.c.b16 %v5988, %v5985
        %v6100 = vpack.c.b16 %v5989, %v5986
        %v6101 = vpack.c.b16 %v5990, %v5987
        %v6102 = vpack.c.b16 %v5994, %v5991
        %v6103 = vpack.c.b16 %v5995, %v5992
        %v6104 = vpack.c.b16 %v5996, %v5993
        %v6105 = vpack.c.b16 %v6000, %v5997
        %v6106 = vpack.c.b16 %v6001, %v5998
        %v6107 = vpack.c.b16 %v6002, %v5999
        %v6108 = vpack.c.b16 %v6006, %v6003
        %v6109 = vpack.c.b16 %v6007, %v6004
        %v6110 = vpack.c.b16 %v6008, %v6005
        %v6111 = vpack.c.b16 %v6012, %v6009
        %v6112 = vpack.c.b16 %v6013, %v6010
        %v6113 = vpack.c.b16 %v6014, %v6011
        %v6114 = vpack.c.b16 %v6018, %v6015
        %v6115 = vpack.c.b16 %v6019, %v6016
        %v6116 = vpack.c.b16 %v6020, %v6017
        %v6117 = vpack.c.b16 %v6024, %v6021
        %v6118 = vpack.c.b16 %v6025, %v6022
        %v6119 = vpack.c.b16 %v6026, %v6023
        %v6120 = vpack.c.b16 %v6030, %v6027
        %v6121 = vpack.c.b16 %v6031, %v6028
        %v6122 = vpack.c.b16 %v6032, %v6029
        %v6123 = vpack.c.b16 %v6036, %v6033
        %v6124 = vpack.c.b16 %v6037, %v6034
        %v6125 = vpack.c.b16 %v6038, %v6035
        %v6126 = vpack.c.b16 %v6042, %v6039
        %v6127 = vpack.c.b16 %v6043, %v6040
        %v6128 = vpack.c.b16 %v6044, %v6041
        %v6129 = vpack.c.b16 %v6048, %v6045
        %v6130 = vpack.c.b16 %v6049, %v6046
        %v6131 = vpack.c.b16 %v6050, %v6047
        %v6132 = vpack.c.b16 %v6054, %v6051
        %v6133 = vpack.c.b16 %v6055, %v6052
        %v6134 = vpack.c.b16 %v6056, %v6053
        %v6135 = vpack.c.b16 %v6060, %v6057
        %v6136 = vpack.c.b16 %v6061, %v6058
        %v6137 = vpack.c.b16 %v6062, %v6059
        %v6138 = vpack.c.b16 %v6066, %v6063
        %v6139 = vpack.c.b16 %v6067, %v6064
        %v6140 = vpack.c.b16 %v6068, %v6065
        %v6141 = vpack.c.b16 %v6072, %v6069
        %v6142 = vpack.c.b16 %v6073, %v6070
        %v6143 = vpack.c.b16 %v6074, %v6071
        %v6144 = vpack.c.b16 %v6078, %v6075
        %v6145 = vpack.c.b16 %v6079, %v6076
        %v6146 = vpack.c.b16 %v6080, %v6077
        %v6147 = vpack.c.b16 %v6084, %v6081
        %v6148 = vpack.c.b16 %v6085, %v6082
        %v6149 = vpack.c.b16 %v6086, %v6083
        %v6150 = vpack.c.b16 %v6090, %v6087
        %v6151 = vpack.c.b16 %v6091, %v6088
        %v6152 = vpack.c.b16 %v6092, %v6089
        %v6153 = vpack.c.b16 %v6096, %v6093
        %v6154 = vpack.c.b16 %v6097, %v6094
        %v6155 = vpack.c.b16 %v6098, %v6095
        %v6211 = vsel %vm1057, %v656, 0
        %v6214 = vsel %vm1057, %v659, 0
        %v6217 = vsel %vm1057, %v662, 0
        %v6220 = vsel %vm1057, %v665, 0
        %v6223 = vsel %vm1057, %v668, 0
        %v6226 = vsel %vm1057, %v671, 0
        %v6229 = vsel %vm1057, %v674, 0
        %v6232 = vsel %vm1057, %v677, 0
        %v6235 = vsel %vm458, %v6153, 0
        %v6238 = vsel %vm458, %v6154, 0
        %v6241 = vsel %vm458, %v6155, 0
        %6243 = vmatpush.bf16.msra.mxu0 %v6120
        %6244 = vmatpush.bf16.msra.mxu0 %v6117
        %6245 = vmatpush.bf16.msra.mxu0 %v6114
        %6246 = vmatpush.bf16.msra.mxu0 %v6111
        %6247 = vmatpush.bf16.msra.mxu0 %v6108
        %6248 = vmatpush.bf16.msra.mxu0 %v6105
        %6249 = vmatpush.bf16.msra.mxu0 %v6102
        %6250 = vmatpush.bf16.msra.mxu0 %v6099
        %6251 = vmatmul.bf16.gmra.mxu0 %v654
        %v6252 = vpop.f32.mrf.mxu0
        %v6253 = vadd.f32 0.0, %v6252
        %v6254 = vpop.f32.mrf.mxu0
        %v6255 = vadd.f32 0.0, %v6254
        %6256 = vmatmul.bf16.gmra.mxu0 %v657
        %v6257 = vpop.f32.mrf.mxu0
        %v6258 = vadd.f32 0.0, %v6257
        %v6259 = vpop.f32.mrf.mxu0
        %v6260 = vadd.f32 0.0, %v6259
        %6261 = vmatmul.bf16.gmra.mxu0 %v660
        %v6262 = vpop.f32.mrf.mxu0
        %v6263 = vadd.f32 0.0, %v6262
        %v6264 = vpop.f32.mrf.mxu0
        %v6265 = vadd.f32 0.0, %v6264
        %6266 = vmatmul.bf16.gmra.mxu0 %v663
        %v6267 = vpop.f32.mrf.mxu0
        %v6268 = vadd.f32 0.0, %v6267
        %v6269 = vpop.f32.mrf.mxu0
        %v6270 = vadd.f32 0.0, %v6269
        %6271 = vmatmul.bf16.gmra.mxu0 %v666
        %v6272 = vpop.f32.mrf.mxu0
        %v6273 = vadd.f32 0.0, %v6272
        %v6274 = vpop.f32.mrf.mxu0
        %v6275 = vadd.f32 0.0, %v6274
        %6276 = vmatmul.bf16.gmra.mxu0 %v669
        %v6277 = vpop.f32.mrf.mxu0
        %v6278 = vadd.f32 0.0, %v6277
        %v6279 = vpop.f32.mrf.mxu0
        %v6280 = vadd.f32 0.0, %v6279
        %6281 = vmatmul.bf16.gmra.mxu0 %v672
        %v6282 = vpop.f32.mrf.mxu0
        %v6283 = vadd.f32 0.0, %v6282
        %v6284 = vpop.f32.mrf.mxu0
        %v6285 = vadd.f32 0.0, %v6284
        %6286 = vmatmul.bf16.gmra.mxu0 %v675
        %v6287 = vpop.f32.mrf.mxu0
        %v6288 = vadd.f32 0.0, %v6287
        %v6289 = vpop.f32.mrf.mxu0
        %v6290 = vadd.f32 0.0, %v6289
        %6291 = vdwg.mxu0
        %6292 = vmatpush.bf16.msra.mxu0 %v6144
        %6293 = vmatpush.bf16.msra.mxu0 %v6141
        %6294 = vmatpush.bf16.msra.mxu0 %v6138
        %6295 = vmatpush.bf16.msra.mxu0 %v6135
        %6296 = vmatpush.bf16.msra.mxu0 %v6132
        %6297 = vmatpush.bf16.msra.mxu0 %v6129
        %6298 = vmatpush.bf16.msra.mxu0 %v6126
        %6299 = vmatpush.bf16.msra.mxu0 %v6123
        %6300 = vmatmul.bf16.gmra.mxu0 %v655
        %v6301 = vpop.f32.mrf.mxu0
        %v6302 = vadd.f32 %v6253, %v6301
        %v6303 = vpop.f32.mrf.mxu0
        %v6304 = vadd.f32 %v6255, %v6303
        %6305 = vmatmul.bf16.gmra.mxu0 %v658
        %v6306 = vpop.f32.mrf.mxu0
        %v6307 = vadd.f32 %v6258, %v6306
        %v6308 = vpop.f32.mrf.mxu0
        %v6309 = vadd.f32 %v6260, %v6308
        %6310 = vmatmul.bf16.gmra.mxu0 %v661
        %v6311 = vpop.f32.mrf.mxu0
        %v6312 = vadd.f32 %v6263, %v6311
        %v6313 = vpop.f32.mrf.mxu0
        %v6314 = vadd.f32 %v6265, %v6313
        %6315 = vmatmul.bf16.gmra.mxu0 %v664
        %v6316 = vpop.f32.mrf.mxu0
        %v6317 = vadd.f32 %v6268, %v6316
        %v6318 = vpop.f32.mrf.mxu0
        %v6319 = vadd.f32 %v6270, %v6318
        %6320 = vmatmul.bf16.gmra.mxu0 %v667
        %v6321 = vpop.f32.mrf.mxu0
        %v6322 = vadd.f32 %v6273, %v6321
        %v6323 = vpop.f32.mrf.mxu0
        %v6324 = vadd.f32 %v6275, %v6323
        %6325 = vmatmul.bf16.gmra.mxu0 %v670
        %v6326 = vpop.f32.mrf.mxu0
        %v6327 = vadd.f32 %v6278, %v6326
        %v6328 = vpop.f32.mrf.mxu0
        %v6329 = vadd.f32 %v6280, %v6328
        %6330 = vmatmul.bf16.gmra.mxu0 %v673
        %v6331 = vpop.f32.mrf.mxu0
        %v6332 = vadd.f32 %v6283, %v6331
        %v6333 = vpop.f32.mrf.mxu0
        %v6334 = vadd.f32 %v6285, %v6333
        %6335 = vmatmul.bf16.gmra.mxu0 %v676
        %v6336 = vpop.f32.mrf.mxu0
        %v6337 = vadd.f32 %v6288, %v6336
        %v6338 = vpop.f32.mrf.mxu0
        %v6339 = vadd.f32 %v6290, %v6338
        %6340 = vdwg.mxu0
        %6341 = vmatpush.bf16.msra.mxu0 0
        %6342 = vmatpush.bf16.msra.mxu0 0
        %6343 = vmatpush.bf16.msra.mxu0 0
        %6344 = vmatpush.bf16.msra.mxu0 0
        %6345 = vmatpush.bf16.msra.mxu0 0
        %6346 = vmatpush.bf16.msra.mxu0 %v6235
        %6347 = vmatpush.bf16.msra.mxu0 %v6150
        %6348 = vmatpush.bf16.msra.mxu0 %v6147
        %6349 = vmatmul.bf16.gmra.mxu0 %v6211
        %v6350 = vpop.f32.mrf.mxu0
        %v6351 = vadd.f32 %v6302, %v6350
        %v6352 = vpop.f32.mrf.mxu0
        %v6353 = vadd.f32 %v6304, %v6352
        %6354 = vmatmul.bf16.gmra.mxu0 %v6214
        %v6355 = vpop.f32.mrf.mxu0
        %v6356 = vadd.f32 %v6307, %v6355
        %v6357 = vpop.f32.mrf.mxu0
        %v6358 = vadd.f32 %v6309, %v6357
        %6359 = vmatmul.bf16.gmra.mxu0 %v6217
        %v6360 = vpop.f32.mrf.mxu0
        %v6361 = vadd.f32 %v6312, %v6360
        %v6362 = vpop.f32.mrf.mxu0
        %v6363 = vadd.f32 %v6314, %v6362
        %6364 = vmatmul.bf16.gmra.mxu0 %v6220
        %v6365 = vpop.f32.mrf.mxu0
        %v6366 = vadd.f32 %v6317, %v6365
        %v6367 = vpop.f32.mrf.mxu0
        %v6368 = vadd.f32 %v6319, %v6367
        %6369 = vmatmul.bf16.gmra.mxu0 %v6223
        %v6370 = vpop.f32.mrf.mxu0
        %v6371 = vadd.f32 %v6322, %v6370
        %v6372 = vpop.f32.mrf.mxu0
        %v6373 = vadd.f32 %v6324, %v6372
        %6374 = vmatmul.bf16.gmra.mxu0 %v6226
        %v6375 = vpop.f32.mrf.mxu0
        %v6376 = vadd.f32 %v6327, %v6375
        %v6377 = vpop.f32.mrf.mxu0
        %v6378 = vadd.f32 %v6329, %v6377
        %6379 = vmatmul.bf16.gmra.mxu0 %v6229
        %v6380 = vpop.f32.mrf.mxu0
        %v6381 = vadd.f32 %v6332, %v6380
        %v6382 = vpop.f32.mrf.mxu0
        %v6383 = vadd.f32 %v6334, %v6382
        %6384 = vmatmul.bf16.gmra.mxu0 %v6232
        %v6385 = vpop.f32.mrf.mxu0
        %v6386 = vadd.f32 %v6337, %v6385
        %v6387 = vpop.f32.mrf.mxu0
        %v6388 = vadd.f32 %v6339, %v6387
        %6389 = vdwg.mxu0
        %6390 = vmatpush.bf16.msra.mxu0 %v6121
        %6391 = vmatpush.bf16.msra.mxu0 %v6118
        %6392 = vmatpush.bf16.msra.mxu0 %v6115
        %6393 = vmatpush.bf16.msra.mxu0 %v6112
        %6394 = vmatpush.bf16.msra.mxu0 %v6109
        %6395 = vmatpush.bf16.msra.mxu0 %v6106
        %6396 = vmatpush.bf16.msra.mxu0 %v6103
        %6397 = vmatpush.bf16.msra.mxu0 %v6100
        %6398 = vmatmul.bf16.gmra.mxu0 %v654
        %v6399 = vpop.f32.mrf.mxu0
        %v6400 = vadd.f32 0.0, %v6399
        %v6401 = vpop.f32.mrf.mxu0
        %v6402 = vadd.f32 0.0, %v6401
        %6403 = vmatmul.bf16.gmra.mxu0 %v657
        %v6404 = vpop.f32.mrf.mxu0
        %v6405 = vadd.f32 0.0, %v6404
        %v6406 = vpop.f32.mrf.mxu0
        %v6407 = vadd.f32 0.0, %v6406
        %6408 = vmatmul.bf16.gmra.mxu0 %v660
        %v6409 = vpop.f32.mrf.mxu0
        %v6410 = vadd.f32 0.0, %v6409
        %v6411 = vpop.f32.mrf.mxu0
        %v6412 = vadd.f32 0.0, %v6411
        %6413 = vmatmul.bf16.gmra.mxu0 %v663
        %v6414 = vpop.f32.mrf.mxu0
        %v6415 = vadd.f32 0.0, %v6414
        %v6416 = vpop.f32.mrf.mxu0
        %v6417 = vadd.f32 0.0, %v6416
        %6418 = vmatmul.bf16.gmra.mxu0 %v666
        %v6419 = vpop.f32.mrf.mxu0
        %v6420 = vadd.f32 0.0, %v6419
        %v6421 = vpop.f32.mrf.mxu0
        %v6422 = vadd.f32 0.0, %v6421
        %6423 = vmatmul.bf16.gmra.mxu0 %v669
        %v6424 = vpop.f32.mrf.mxu0
        %v6425 = vadd.f32 0.0, %v6424
        %v6426 = vpop.f32.mrf.mxu0
        %v6427 = vadd.f32 0.0, %v6426
        %6428 = vmatmul.bf16.gmra.mxu0 %v672
        %v6429 = vpop.f32.mrf.mxu0
        %v6430 = vadd.f32 0.0, %v6429
        %v6431 = vpop.f32.mrf.mxu0
        %v6432 = vadd.f32 0.0, %v6431
        %6433 = vmatmul.bf16.gmra.mxu0 %v675
        %v6434 = vpop.f32.mrf.mxu0
        %v6435 = vadd.f32 0.0, %v6434
        %v6436 = vpop.f32.mrf.mxu0
        %v6437 = vadd.f32 0.0, %v6436
        %6438 = vdwg.mxu0
        %6439 = vmatpush.bf16.msra.mxu0 %v6145
        %6440 = vmatpush.bf16.msra.mxu0 %v6142
        %6441 = vmatpush.bf16.msra.mxu0 %v6139
        %6442 = vmatpush.bf16.msra.mxu0 %v6136
        %6443 = vmatpush.bf16.msra.mxu0 %v6133
        %6444 = vmatpush.bf16.msra.mxu0 %v6130
        %6445 = vmatpush.bf16.msra.mxu0 %v6127
        %6446 = vmatpush.bf16.msra.mxu0 %v6124
        %6447 = vmatmul.bf16.gmra.mxu0 %v655
        %v6448 = vpop.f32.mrf.mxu0
        %v6449 = vadd.f32 %v6400, %v6448
        %v6450 = vpop.f32.mrf.mxu0
        %v6451 = vadd.f32 %v6402, %v6450
        %6452 = vmatmul.bf16.gmra.mxu0 %v658
        %v6453 = vpop.f32.mrf.mxu0
        %v6454 = vadd.f32 %v6405, %v6453
        %v6455 = vpop.f32.mrf.mxu0
        %v6456 = vadd.f32 %v6407, %v6455
        %6457 = vmatmul.bf16.gmra.mxu0 %v661
        %v6458 = vpop.f32.mrf.mxu0
        %v6459 = vadd.f32 %v6410, %v6458
        %v6460 = vpop.f32.mrf.mxu0
        %v6461 = vadd.f32 %v6412, %v6460
        %6462 = vmatmul.bf16.gmra.mxu0 %v664
        %v6463 = vpop.f32.mrf.mxu0
        %v6464 = vadd.f32 %v6415, %v6463
        %v6465 = vpop.f32.mrf.mxu0
        %v6466 = vadd.f32 %v6417, %v6465
        %6467 = vmatmul.bf16.gmra.mxu0 %v667
        %v6468 = vpop.f32.mrf.mxu0
        %v6469 = vadd.f32 %v6420, %v6468
        %v6470 = vpop.f32.mrf.mxu0
        %v6471 = vadd.f32 %v6422, %v6470
        %6472 = vmatmul.bf16.gmra.mxu0 %v670
        %v6473 = vpop.f32.mrf.mxu0
        %v6474 = vadd.f32 %v6425, %v6473
        %v6475 = vpop.f32.mrf.mxu0
        %v6476 = vadd.f32 %v6427, %v6475
        %6477 = vmatmul.bf16.gmra.mxu0 %v673
        %v6478 = vpop.f32.mrf.mxu0
        %v6479 = vadd.f32 %v6430, %v6478
        %v6480 = vpop.f32.mrf.mxu0
        %v6481 = vadd.f32 %v6432, %v6480
        %6482 = vmatmul.bf16.gmra.mxu0 %v676
        %v6483 = vpop.f32.mrf.mxu0
        %v6484 = vadd.f32 %v6435, %v6483
        %v6485 = vpop.f32.mrf.mxu0
        %v6486 = vadd.f32 %v6437, %v6485
        %6487 = vdwg.mxu0
        %6488 = vmatpush.bf16.msra.mxu0 0
        %6489 = vmatpush.bf16.msra.mxu0 0
        %6490 = vmatpush.bf16.msra.mxu0 0
        %6491 = vmatpush.bf16.msra.mxu0 0
        %6492 = vmatpush.bf16.msra.mxu0 0
        %6493 = vmatpush.bf16.msra.mxu0 %v6238
        %6494 = vmatpush.bf16.msra.mxu0 %v6151
        %6495 = vmatpush.bf16.msra.mxu0 %v6148
        %6496 = vmatmul.bf16.gmra.mxu0 %v6211
        %v6497 = vpop.f32.mrf.mxu0
        %v6498 = vadd.f32 %v6449, %v6497
        %v6499 = vpop.f32.mrf.mxu0
        %v6500 = vadd.f32 %v6451, %v6499
        %6501 = vmatmul.bf16.gmra.mxu0 %v6214
        %v6502 = vpop.f32.mrf.mxu0
        %v6503 = vadd.f32 %v6454, %v6502
        %v6504 = vpop.f32.mrf.mxu0
        %v6505 = vadd.f32 %v6456, %v6504
        %6506 = vmatmul.bf16.gmra.mxu0 %v6217
        %v6507 = vpop.f32.mrf.mxu0
        %v6508 = vadd.f32 %v6459, %v6507
        %v6509 = vpop.f32.mrf.mxu0
        %v6510 = vadd.f32 %v6461, %v6509
        %6511 = vmatmul.bf16.gmra.mxu0 %v6220
        %v6512 = vpop.f32.mrf.mxu0
        %v6513 = vadd.f32 %v6464, %v6512
        %v6514 = vpop.f32.mrf.mxu0
        %v6515 = vadd.f32 %v6466, %v6514
        %6516 = vmatmul.bf16.gmra.mxu0 %v6223
        %v6517 = vpop.f32.mrf.mxu0
        %v6518 = vadd.f32 %v6469, %v6517
        %v6519 = vpop.f32.mrf.mxu0
        %v6520 = vadd.f32 %v6471, %v6519
        %6521 = vmatmul.bf16.gmra.mxu0 %v6226
        %v6522 = vpop.f32.mrf.mxu0
        %v6523 = vadd.f32 %v6474, %v6522
        %v6524 = vpop.f32.mrf.mxu0
        %v6525 = vadd.f32 %v6476, %v6524
        %6526 = vmatmul.bf16.gmra.mxu0 %v6229
        %v6527 = vpop.f32.mrf.mxu0
        %v6528 = vadd.f32 %v6479, %v6527
        %v6529 = vpop.f32.mrf.mxu0
        %v6530 = vadd.f32 %v6481, %v6529
        %6531 = vmatmul.bf16.gmra.mxu0 %v6232
        %v6532 = vpop.f32.mrf.mxu0
        %v6533 = vadd.f32 %v6484, %v6532
        %v6534 = vpop.f32.mrf.mxu0
        %v6535 = vadd.f32 %v6486, %v6534
        %6536 = vdwg.mxu0
        %6537 = vmatpush.bf16.msra.mxu0 %v6122
        %6538 = vmatpush.bf16.msra.mxu0 %v6119
        %6539 = vmatpush.bf16.msra.mxu0 %v6116
        %6540 = vmatpush.bf16.msra.mxu0 %v6113
        %6541 = vmatpush.bf16.msra.mxu0 %v6110
        %6542 = vmatpush.bf16.msra.mxu0 %v6107
        %6543 = vmatpush.bf16.msra.mxu0 %v6104
        %6544 = vmatpush.bf16.msra.mxu0 %v6101
        %6545 = vmatmul.bf16.gmra.mxu0 %v654
        %v6546 = vpop.f32.mrf.mxu0
        %v6547 = vadd.f32 0.0, %v6546
        %v6548 = vpop.f32.mrf.mxu0
        %v6549 = vadd.f32 0.0, %v6548
        %6550 = vmatmul.bf16.gmra.mxu0 %v657
        %v6551 = vpop.f32.mrf.mxu0
        %v6552 = vadd.f32 0.0, %v6551
        %v6553 = vpop.f32.mrf.mxu0
        %v6554 = vadd.f32 0.0, %v6553
        %6555 = vmatmul.bf16.gmra.mxu0 %v660
        %v6556 = vpop.f32.mrf.mxu0
        %v6557 = vadd.f32 0.0, %v6556
        %v6558 = vpop.f32.mrf.mxu0
        %v6559 = vadd.f32 0.0, %v6558
        %6560 = vmatmul.bf16.gmra.mxu0 %v663
        %v6561 = vpop.f32.mrf.mxu0
        %v6562 = vadd.f32 0.0, %v6561
        %v6563 = vpop.f32.mrf.mxu0
        %v6564 = vadd.f32 0.0, %v6563
        %6565 = vmatmul.bf16.gmra.mxu0 %v666
        %v6566 = vpop.f32.mrf.mxu0
        %v6567 = vadd.f32 0.0, %v6566
        %v6568 = vpop.f32.mrf.mxu0
        %v6569 = vadd.f32 0.0, %v6568
        %6570 = vmatmul.bf16.gmra.mxu0 %v669
        %v6571 = vpop.f32.mrf.mxu0
        %v6572 = vadd.f32 0.0, %v6571
        %v6573 = vpop.f32.mrf.mxu0
        %v6574 = vadd.f32 0.0, %v6573
        %6575 = vmatmul.bf16.gmra.mxu0 %v672
        %v6576 = vpop.f32.mrf.mxu0
        %v6577 = vadd.f32 0.0, %v6576
        %v6578 = vpop.f32.mrf.mxu0
        %v6579 = vadd.f32 0.0, %v6578
        %6580 = vmatmul.bf16.gmra.mxu0 %v675
        %v6581 = vpop.f32.mrf.mxu0
        %v6582 = vadd.f32 0.0, %v6581
        %v6583 = vpop.f32.mrf.mxu0
        %v6584 = vadd.f32 0.0, %v6583
        %6585 = vdwg.mxu0
        %6586 = vmatpush.bf16.msra.mxu0 %v6146
        %6587 = vmatpush.bf16.msra.mxu0 %v6143
        %6588 = vmatpush.bf16.msra.mxu0 %v6140
        %6589 = vmatpush.bf16.msra.mxu0 %v6137
        %6590 = vmatpush.bf16.msra.mxu0 %v6134
        %6591 = vmatpush.bf16.msra.mxu0 %v6131
        %6592 = vmatpush.bf16.msra.mxu0 %v6128
        %6593 = vmatpush.bf16.msra.mxu0 %v6125
        %6594 = vmatmul.bf16.gmra.mxu0 %v655
        %v6595 = vpop.f32.mrf.mxu0
        %v6596 = vadd.f32 %v6547, %v6595
        %v6597 = vpop.f32.mrf.mxu0
        %v6598 = vadd.f32 %v6549, %v6597
        %6599 = vmatmul.bf16.gmra.mxu0 %v658
        %v6600 = vpop.f32.mrf.mxu0
        %v6601 = vadd.f32 %v6552, %v6600
        %v6602 = vpop.f32.mrf.mxu0
        %v6603 = vadd.f32 %v6554, %v6602
        %6604 = vmatmul.bf16.gmra.mxu0 %v661
        %v6605 = vpop.f32.mrf.mxu0
        %v6606 = vadd.f32 %v6557, %v6605
        %v6607 = vpop.f32.mrf.mxu0
        %v6608 = vadd.f32 %v6559, %v6607
        %6609 = vmatmul.bf16.gmra.mxu0 %v664
        %v6610 = vpop.f32.mrf.mxu0
        %v6611 = vadd.f32 %v6562, %v6610
        %v6612 = vpop.f32.mrf.mxu0
        %v6613 = vadd.f32 %v6564, %v6612
        %6614 = vmatmul.bf16.gmra.mxu0 %v667
        %v6615 = vpop.f32.mrf.mxu0
        %v6616 = vadd.f32 %v6567, %v6615
        %v6617 = vpop.f32.mrf.mxu0
        %v6618 = vadd.f32 %v6569, %v6617
        %6619 = vmatmul.bf16.gmra.mxu0 %v670
        %v6620 = vpop.f32.mrf.mxu0
        %v6621 = vadd.f32 %v6572, %v6620
        %v6622 = vpop.f32.mrf.mxu0
        %v6623 = vadd.f32 %v6574, %v6622
        %6624 = vmatmul.bf16.gmra.mxu0 %v673
        %v6625 = vpop.f32.mrf.mxu0
        %v6626 = vadd.f32 %v6577, %v6625
        %v6627 = vpop.f32.mrf.mxu0
        %v6628 = vadd.f32 %v6579, %v6627
        %6629 = vmatmul.bf16.gmra.mxu0 %v676
        %v6630 = vpop.f32.mrf.mxu0
        %v6631 = vadd.f32 %v6582, %v6630
        %v6632 = vpop.f32.mrf.mxu0
        %v6633 = vadd.f32 %v6584, %v6632
        %6634 = vdwg.mxu0
        %6635 = vmatpush.bf16.msra.mxu0 0
        %6636 = vmatpush.bf16.msra.mxu0 0
        %6637 = vmatpush.bf16.msra.mxu0 0
        %6638 = vmatpush.bf16.msra.mxu0 0
        %6639 = vmatpush.bf16.msra.mxu0 0
        %6640 = vmatpush.bf16.msra.mxu0 %v6241
        %6641 = vmatpush.bf16.msra.mxu0 %v6152
        %6642 = vmatpush.bf16.msra.mxu0 %v6149
        %6643 = vmatmul.bf16.gmra.mxu0 %v6211
        %v6644 = vpop.f32.mrf.mxu0
        %v6645 = vadd.f32 %v6596, %v6644
        %v6646 = vpop.f32.mrf.mxu0
        %v6647 = vadd.f32 %v6598, %v6646
        %6648 = vmatmul.bf16.gmra.mxu0 %v6214
        %v6649 = vpop.f32.mrf.mxu0
        %v6650 = vadd.f32 %v6601, %v6649
        %v6651 = vpop.f32.mrf.mxu0
        %v6652 = vadd.f32 %v6603, %v6651
        %6653 = vmatmul.bf16.gmra.mxu0 %v6217
        %v6654 = vpop.f32.mrf.mxu0
        %v6655 = vadd.f32 %v6606, %v6654
        %v6656 = vpop.f32.mrf.mxu0
        %v6657 = vadd.f32 %v6608, %v6656
        %6658 = vmatmul.bf16.gmra.mxu0 %v6220
        %v6659 = vpop.f32.mrf.mxu0
        %v6660 = vadd.f32 %v6611, %v6659
        %v6661 = vpop.f32.mrf.mxu0
        %v6662 = vadd.f32 %v6613, %v6661
        %6663 = vmatmul.bf16.gmra.mxu0 %v6223
        %v6664 = vpop.f32.mrf.mxu0
        %v6665 = vadd.f32 %v6616, %v6664
        %v6666 = vpop.f32.mrf.mxu0
        %v6667 = vadd.f32 %v6618, %v6666
        %6668 = vmatmul.bf16.gmra.mxu0 %v6226
        %v6669 = vpop.f32.mrf.mxu0
        %v6670 = vadd.f32 %v6621, %v6669
        %v6671 = vpop.f32.mrf.mxu0
        %v6672 = vadd.f32 %v6623, %v6671
        %6673 = vmatmul.bf16.gmra.mxu0 %v6229
        %v6674 = vpop.f32.mrf.mxu0
        %v6675 = vadd.f32 %v6626, %v6674
        %v6676 = vpop.f32.mrf.mxu0
        %v6677 = vadd.f32 %v6628, %v6676
        %6678 = vmatmul.bf16.gmra.mxu0 %v6232
        %v6679 = vpop.f32.mrf.mxu0
        %v6680 = vadd.f32 %v6631, %v6679
        %v6681 = vpop.f32.mrf.mxu0
        %v6682 = vadd.f32 %v6633, %v6681
        %6683 = vdwg.mxu0
        %v6684 = vadd.f32 %v5499, %v6351
        %v6685 = vadd.f32 %v5646, %v6498
        %v6686 = vadd.f32 %v5793, %v6645
        %v6687 = vadd.f32 %v5501, %v6353
        %v6688 = vadd.f32 %v5648, %v6500
        %v6689 = vadd.f32 %v5795, %v6647
        %v6690 = vadd.f32 %v5504, %v6356
        %v6691 = vadd.f32 %v5651, %v6503
        %v6692 = vadd.f32 %v5798, %v6650
        %v6693 = vadd.f32 %v5506, %v6358
        %v6694 = vadd.f32 %v5653, %v6505
        %v6695 = vadd.f32 %v5800, %v6652
        %v6696 = vadd.f32 %v5509, %v6361
        %v6697 = vadd.f32 %v5656, %v6508
        %v6698 = vadd.f32 %v5803, %v6655
        %v6699 = vadd.f32 %v5511, %v6363
        %v6700 = vadd.f32 %v5658, %v6510
        %v6701 = vadd.f32 %v5805, %v6657
        %v6702 = vadd.f32 %v5514, %v6366
        %v6703 = vadd.f32 %v5661, %v6513
        %v6704 = vadd.f32 %v5808, %v6660
        %v6705 = vadd.f32 %v5516, %v6368
        %v6706 = vadd.f32 %v5663, %v6515
        %v6707 = vadd.f32 %v5810, %v6662
        %v6708 = vadd.f32 %v5519, %v6371
        %v6709 = vadd.f32 %v5666, %v6518
        %v6710 = vadd.f32 %v5813, %v6665
        %v6711 = vadd.f32 %v5521, %v6373
        %v6712 = vadd.f32 %v5668, %v6520
        %v6713 = vadd.f32 %v5815, %v6667
        %v6714 = vadd.f32 %v5524, %v6376
        %v6715 = vadd.f32 %v5671, %v6523
        %v6716 = vadd.f32 %v5818, %v6670
        %v6717 = vadd.f32 %v5526, %v6378
        %v6718 = vadd.f32 %v5673, %v6525
        %v6719 = vadd.f32 %v5820, %v6672
        %v6720 = vadd.f32 %v5529, %v6381
        %v6721 = vadd.f32 %v5676, %v6528
        %v6722 = vadd.f32 %v5823, %v6675
        %v6723 = vadd.f32 %v5531, %v6383
        %v6724 = vadd.f32 %v5678, %v6530
        %v6725 = vadd.f32 %v5825, %v6677
        %v6726 = vadd.f32 %v5534, %v6386
        %v6727 = vadd.f32 %v5681, %v6533
        %v6728 = vadd.f32 %v5828, %v6680
        %v6729 = vadd.f32 %v5536, %v6388
        %v6730 = vadd.f32 %v5683, %v6535
        %v6731 = vadd.f32 %v5830, %v6682
        %vm6732 = vcmp.le.s32.totalorder %v679, 5
        %v6733 = vsel %vm6732, 1, 0
        %vm6734 = vcmp.eq.s32.totalorder %v6733, 1
        %v6735 = vsel %vm6734, %v6684, -inf
        %v6736 = vsel %vm6734, %v6685, -inf
        %v6737 = vsel %vm6734, %v6686, -inf
        %v6738 = vsel %vm6734, %v6687, -inf
        %v6739 = vsel %vm6734, %v6688, -inf
        %v6740 = vsel %vm6734, %v6689, -inf
        %v6741 = vsel %vm6734, %v6690, -inf
        %v6742 = vsel %vm6734, %v6691, -inf
        %v6743 = vsel %vm6734, %v6692, -inf
        %v6744 = vsel %vm6734, %v6693, -inf
        %v6745 = vsel %vm6734, %v6694, -inf
        %v6746 = vsel %vm6734, %v6695, -inf
        %v6747 = vsel %vm6734, %v6696, -inf
        %v6748 = vsel %vm6734, %v6697, -inf
        %v6749 = vsel %vm6734, %v6698, -inf
        %v6750 = vsel %vm6734, %v6699, -inf
        %v6751 = vsel %vm6734, %v6700, -inf
        %v6752 = vsel %vm6734, %v6701, -inf
        %v6753 = vsel %vm6734, %v6702, -inf
        %v6754 = vsel %vm6734, %v6703, -inf
        %v6755 = vsel %vm6734, %v6704, -inf
        %v6756 = vsel %vm6734, %v6705, -inf
        %v6757 = vsel %vm6734, %v6706, -inf
        %v6758 = vsel %vm6734, %v6707, -inf
        %v6759 = vsel %vm6734, %v6708, -inf
        %v6760 = vsel %vm6734, %v6709, -inf
        %v6761 = vsel %vm6734, %v6710, -inf
        %v6762 = vsel %vm6734, %v6711, -inf
        %v6763 = vsel %vm6734, %v6712, -inf
        %v6764 = vsel %vm6734, %v6713, -inf
        %v6765 = vsel %vm6734, %v6714, -inf
        %v6766 = vsel %vm6734, %v6715, -inf
        %v6767 = vsel %vm6734, %v6716, -inf
        %v6768 = vsel %vm6734, %v6717, -inf
        %v6769 = vsel %vm6734, %v6718, -inf
        %v6770 = vsel %vm6734, %v6719, -inf
        %v6771 = vsel %vm6734, %v6720, -inf
        %v6772 = vsel %vm6734, %v6721, -inf
        %v6773 = vsel %vm6734, %v6722, -inf
        %v6774 = vsel %vm6734, %v6723, -inf
        %v6775 = vsel %vm6734, %v6724, -inf
        %v6776 = vsel %vm6734, %v6725, -inf
        %v6777 = vsel %vm6734, %v6726, -inf
        %v6778 = vsel %vm6734, %v6727, -inf
        %v6779 = vsel %vm6734, %v6728, -inf
        %v6780 = vsel %vm6734, %v6729, -inf
        %v6781 = vsel %vm6734, %v6730, -inf
        %v6782 = vsel %vm6734, %v6731, -inf
        %v6783 = vrot.slane %v6735, 4
        %v6784 = vmax.f32 %v6735, %v6783
        %v6785 = vrot.slane %v6784, 2
        %v6786 = vmax.f32 %v6784, %v6785
        %v6787 = vrot.slane %v6786, 1
        %v6788 = vmax.f32 %v6786, %v6787
        %v6789 = vrot.slane %v6736, 4
        %v6790 = vmax.f32 %v6736, %v6789
        %v6791 = vrot.slane %v6790, 2
        %v6792 = vmax.f32 %v6790, %v6791
        %v6793 = vrot.slane %v6792, 1
        %v6794 = vmax.f32 %v6792, %v6793
        %v6795 = vsel %vm1057, %v6737, -inf
        %v6796 = vrot.slane %v6795, 4
        %v6797 = vmax.f32 %v6795, %v6796
        %v6798 = vrot.slane %v6797, 2
        %v6799 = vmax.f32 %v6797, %v6798
        %v6800 = vrot.slane %v6799, 1
        %v6801 = vmax.f32 %v6799, %v6800
        %v6802 = vrot.slane %v6738, 4
        %v6803 = vmax.f32 %v6738, %v6802
        %v6804 = vrot.slane %v6803, 2
        %v6805 = vmax.f32 %v6803, %v6804
        %v6806 = vrot.slane %v6805, 1
        %v6807 = vmax.f32 %v6805, %v6806
        %v6808 = vrot.slane %v6739, 4
        %v6809 = vmax.f32 %v6739, %v6808
        %v6810 = vrot.slane %v6809, 2
        %v6811 = vmax.f32 %v6809, %v6810
        %v6812 = vrot.slane %v6811, 1
        %v6813 = vmax.f32 %v6811, %v6812
        %v6814 = vsel %vm1057, %v6740, -inf
        %v6815 = vrot.slane %v6814, 4
        %v6816 = vmax.f32 %v6814, %v6815
        %v6817 = vrot.slane %v6816, 2
        %v6818 = vmax.f32 %v6816, %v6817
        %v6819 = vrot.slane %v6818, 1
        %v6820 = vmax.f32 %v6818, %v6819
        %v6821 = vrot.slane %v6741, 4
        %v6822 = vmax.f32 %v6741, %v6821
        %v6823 = vrot.slane %v6822, 2
        %v6824 = vmax.f32 %v6822, %v6823
        %v6825 = vrot.slane %v6824, 1
        %v6826 = vmax.f32 %v6824, %v6825
        %v6827 = vrot.slane %v6742, 4
        %v6828 = vmax.f32 %v6742, %v6827
        %v6829 = vrot.slane %v6828, 2
        %v6830 = vmax.f32 %v6828, %v6829
        %v6831 = vrot.slane %v6830, 1
        %v6832 = vmax.f32 %v6830, %v6831
        %v6833 = vsel %vm1057, %v6743, -inf
        %v6834 = vrot.slane %v6833, 4
        %v6835 = vmax.f32 %v6833, %v6834
        %v6836 = vrot.slane %v6835, 2
        %v6837 = vmax.f32 %v6835, %v6836
        %v6838 = vrot.slane %v6837, 1
        %v6839 = vmax.f32 %v6837, %v6838
        %v6840 = vrot.slane %v6744, 4
        %v6841 = vmax.f32 %v6744, %v6840
        %v6842 = vrot.slane %v6841, 2
        %v6843 = vmax.f32 %v6841, %v6842
        %v6844 = vrot.slane %v6843, 1
        %v6845 = vmax.f32 %v6843, %v6844
        %v6846 = vrot.slane %v6745, 4
        %v6847 = vmax.f32 %v6745, %v6846
        %v6848 = vrot.slane %v6847, 2
        %v6849 = vmax.f32 %v6847, %v6848
        %v6850 = vrot.slane %v6849, 1
        %v6851 = vmax.f32 %v6849, %v6850
        %v6852 = vsel %vm1057, %v6746, -inf
        %v6853 = vrot.slane %v6852, 4
        %v6854 = vmax.f32 %v6852, %v6853
        %v6855 = vrot.slane %v6854, 2
        %v6856 = vmax.f32 %v6854, %v6855
        %v6857 = vrot.slane %v6856, 1
        %v6858 = vmax.f32 %v6856, %v6857
        %v6859 = vrot.slane %v6747, 4
        %v6860 = vmax.f32 %v6747, %v6859
        %v6861 = vrot.slane %v6860, 2
        %v6862 = vmax.f32 %v6860, %v6861
        %v6863 = vrot.slane %v6862, 1
        %v6864 = vmax.f32 %v6862, %v6863
        %v6865 = vrot.slane %v6748, 4
        %v6866 = vmax.f32 %v6748, %v6865
        %v6867 = vrot.slane %v6866, 2
        %v6868 = vmax.f32 %v6866, %v6867
        %v6869 = vrot.slane %v6868, 1
        %v6870 = vmax.f32 %v6868, %v6869
        %v6871 = vsel %vm1057, %v6749, -inf
        %v6872 = vrot.slane %v6871, 4
        %v6873 = vmax.f32 %v6871, %v6872
        %v6874 = vrot.slane %v6873, 2
        %v6875 = vmax.f32 %v6873, %v6874
        %v6876 = vrot.slane %v6875, 1
        %v6877 = vmax.f32 %v6875, %v6876
        %v6878 = vrot.slane %v6750, 4
        %v6879 = vmax.f32 %v6750, %v6878
        %v6880 = vrot.slane %v6879, 2
        %v6881 = vmax.f32 %v6879, %v6880
        %v6882 = vrot.slane %v6881, 1
        %v6883 = vmax.f32 %v6881, %v6882
        %v6884 = vrot.slane %v6751, 4
        %v6885 = vmax.f32 %v6751, %v6884
        %v6886 = vrot.slane %v6885, 2
        %v6887 = vmax.f32 %v6885, %v6886
        %v6888 = vrot.slane %v6887, 1
        %v6889 = vmax.f32 %v6887, %v6888
        %v6890 = vsel %vm1057, %v6752, -inf
        %v6891 = vrot.slane %v6890, 4
        %v6892 = vmax.f32 %v6890, %v6891
        %v6893 = vrot.slane %v6892, 2
        %v6894 = vmax.f32 %v6892, %v6893
        %v6895 = vrot.slane %v6894, 1
        %v6896 = vmax.f32 %v6894, %v6895
        %v6897 = vrot.slane %v6753, 4
        %v6898 = vmax.f32 %v6753, %v6897
        %v6899 = vrot.slane %v6898, 2
        %v6900 = vmax.f32 %v6898, %v6899
        %v6901 = vrot.slane %v6900, 1
        %v6902 = vmax.f32 %v6900, %v6901
        %v6903 = vrot.slane %v6754, 4
        %v6904 = vmax.f32 %v6754, %v6903
        %v6905 = vrot.slane %v6904, 2
        %v6906 = vmax.f32 %v6904, %v6905
        %v6907 = vrot.slane %v6906, 1
        %v6908 = vmax.f32 %v6906, %v6907
        %v6909 = vsel %vm1057, %v6755, -inf
        %v6910 = vrot.slane %v6909, 4
        %v6911 = vmax.f32 %v6909, %v6910
        %v6912 = vrot.slane %v6911, 2
        %v6913 = vmax.f32 %v6911, %v6912
        %v6914 = vrot.slane %v6913, 1
        %v6915 = vmax.f32 %v6913, %v6914
        %v6916 = vrot.slane %v6756, 4
        %v6917 = vmax.f32 %v6756, %v6916
        %v6918 = vrot.slane %v6917, 2
        %v6919 = vmax.f32 %v6917, %v6918
        %v6920 = vrot.slane %v6919, 1
        %v6921 = vmax.f32 %v6919, %v6920
        %v6922 = vrot.slane %v6757, 4
        %v6923 = vmax.f32 %v6757, %v6922
        %v6924 = vrot.slane %v6923, 2
        %v6925 = vmax.f32 %v6923, %v6924
        %v6926 = vrot.slane %v6925, 1
        %v6927 = vmax.f32 %v6925, %v6926
        %v6928 = vsel %vm1057, %v6758, -inf
        %v6929 = vrot.slane %v6928, 4
        %v6930 = vmax.f32 %v6928, %v6929
        %v6931 = vrot.slane %v6930, 2
        %v6932 = vmax.f32 %v6930, %v6931
        %v6933 = vrot.slane %v6932, 1
        %v6934 = vmax.f32 %v6932, %v6933
        %v6935 = vrot.slane %v6759, 4
        %v6936 = vmax.f32 %v6759, %v6935
        %v6937 = vrot.slane %v6936, 2
        %v6938 = vmax.f32 %v6936, %v6937
        %v6939 = vrot.slane %v6938, 1
        %v6940 = vmax.f32 %v6938, %v6939
        %v6941 = vrot.slane %v6760, 4
        %v6942 = vmax.f32 %v6760, %v6941
        %v6943 = vrot.slane %v6942, 2
        %v6944 = vmax.f32 %v6942, %v6943
        %v6945 = vrot.slane %v6944, 1
        %v6946 = vmax.f32 %v6944, %v6945
        %v6947 = vsel %vm1057, %v6761, -inf
        %v6948 = vrot.slane %v6947, 4
        %v6949 = vmax.f32 %v6947, %v6948
        %v6950 = vrot.slane %v6949, 2
        %v6951 = vmax.f32 %v6949, %v6950
        %v6952 = vrot.slane %v6951, 1
        %v6953 = vmax.f32 %v6951, %v6952
        %v6954 = vrot.slane %v6762, 4
        %v6955 = vmax.f32 %v6762, %v6954
        %v6956 = vrot.slane %v6955, 2
        %v6957 = vmax.f32 %v6955, %v6956
        %v6958 = vrot.slane %v6957, 1
        %v6959 = vmax.f32 %v6957, %v6958
        %v6960 = vrot.slane %v6763, 4
        %v6961 = vmax.f32 %v6763, %v6960
        %v6962 = vrot.slane %v6961, 2
        %v6963 = vmax.f32 %v6961, %v6962
        %v6964 = vrot.slane %v6963, 1
        %v6965 = vmax.f32 %v6963, %v6964
        %v6966 = vsel %vm1057, %v6764, -inf
        %v6967 = vrot.slane %v6966, 4
        %v6968 = vmax.f32 %v6966, %v6967
        %v6969 = vrot.slane %v6968, 2
        %v6970 = vmax.f32 %v6968, %v6969
        %v6971 = vrot.slane %v6970, 1
        %v6972 = vmax.f32 %v6970, %v6971
        %v6973 = vrot.slane %v6765, 4
        %v6974 = vmax.f32 %v6765, %v6973
        %v6975 = vrot.slane %v6974, 2
        %v6976 = vmax.f32 %v6974, %v6975
        %v6977 = vrot.slane %v6976, 1
        %v6978 = vmax.f32 %v6976, %v6977
        %v6979 = vrot.slane %v6766, 4
        %v6980 = vmax.f32 %v6766, %v6979
        %v6981 = vrot.slane %v6980, 2
        %v6982 = vmax.f32 %v6980, %v6981
        %v6983 = vrot.slane %v6982, 1
        %v6984 = vmax.f32 %v6982, %v6983
        %v6985 = vsel %vm1057, %v6767, -inf
        %v6986 = vrot.slane %v6985, 4
        %v6987 = vmax.f32 %v6985, %v6986
        %v6988 = vrot.slane %v6987, 2
        %v6989 = vmax.f32 %v6987, %v6988
        %v6990 = vrot.slane %v6989, 1
        %v6991 = vmax.f32 %v6989, %v6990
        %v6992 = vrot.slane %v6768, 4
        %v6993 = vmax.f32 %v6768, %v6992
        %v6994 = vrot.slane %v6993, 2
        %v6995 = vmax.f32 %v6993, %v6994
        %v6996 = vrot.slane %v6995, 1
        %v6997 = vmax.f32 %v6995, %v6996
        %v6998 = vrot.slane %v6769, 4
        %v6999 = vmax.f32 %v6769, %v6998
        %v7000 = vrot.slane %v6999, 2
        %v7001 = vmax.f32 %v6999, %v7000
        %v7002 = vrot.slane %v7001, 1
        %v7003 = vmax.f32 %v7001, %v7002
        %v7004 = vsel %vm1057, %v6770, -inf
        %v7005 = vrot.slane %v7004, 4
        %v7006 = vmax.f32 %v7004, %v7005
        %v7007 = vrot.slane %v7006, 2
        %v7008 = vmax.f32 %v7006, %v7007
        %v7009 = vrot.slane %v7008, 1
        %v7010 = vmax.f32 %v7008, %v7009
        %v7011 = vrot.slane %v6771, 4
        %v7012 = vmax.f32 %v6771, %v7011
        %v7013 = vrot.slane %v7012, 2
        %v7014 = vmax.f32 %v7012, %v7013
        %v7015 = vrot.slane %v7014, 1
        %v7016 = vmax.f32 %v7014, %v7015
        %v7017 = vrot.slane %v6772, 4
        %v7018 = vmax.f32 %v6772, %v7017
        %v7019 = vrot.slane %v7018, 2
        %v7020 = vmax.f32 %v7018, %v7019
        %v7021 = vrot.slane %v7020, 1
        %v7022 = vmax.f32 %v7020, %v7021
        %v7023 = vsel %vm1057, %v6773, -inf
        %v7024 = vrot.slane %v7023, 4
        %v7025 = vmax.f32 %v7023, %v7024
        %v7026 = vrot.slane %v7025, 2
        %v7027 = vmax.f32 %v7025, %v7026
        %v7028 = vrot.slane %v7027, 1
        %v7029 = vmax.f32 %v7027, %v7028
        %v7030 = vrot.slane %v6774, 4
        %v7031 = vmax.f32 %v6774, %v7030
        %v7032 = vrot.slane %v7031, 2
        %v7033 = vmax.f32 %v7031, %v7032
        %v7034 = vrot.slane %v7033, 1
        %v7035 = vmax.f32 %v7033, %v7034
        %v7036 = vrot.slane %v6775, 4
        %v7037 = vmax.f32 %v6775, %v7036
        %v7038 = vrot.slane %v7037, 2
        %v7039 = vmax.f32 %v7037, %v7038
        %v7040 = vrot.slane %v7039, 1
        %v7041 = vmax.f32 %v7039, %v7040
        %v7042 = vsel %vm1057, %v6776, -inf
        %v7043 = vrot.slane %v7042, 4
        %v7044 = vmax.f32 %v7042, %v7043
        %v7045 = vrot.slane %v7044, 2
        %v7046 = vmax.f32 %v7044, %v7045
        %v7047 = vrot.slane %v7046, 1
        %v7048 = vmax.f32 %v7046, %v7047
        %v7049 = vrot.slane %v6777, 4
        %v7050 = vmax.f32 %v6777, %v7049
        %v7051 = vrot.slane %v7050, 2
        %v7052 = vmax.f32 %v7050, %v7051
        %v7053 = vrot.slane %v7052, 1
        %v7054 = vmax.f32 %v7052, %v7053
        %v7055 = vrot.slane %v6778, 4
        %v7056 = vmax.f32 %v6778, %v7055
        %v7057 = vrot.slane %v7056, 2
        %v7058 = vmax.f32 %v7056, %v7057
        %v7059 = vrot.slane %v7058, 1
        %v7060 = vmax.f32 %v7058, %v7059
        %v7061 = vsel %vm1057, %v6779, -inf
        %v7062 = vrot.slane %v7061, 4
        %v7063 = vmax.f32 %v7061, %v7062
        %v7064 = vrot.slane %v7063, 2
        %v7065 = vmax.f32 %v7063, %v7064
        %v7066 = vrot.slane %v7065, 1
        %v7067 = vmax.f32 %v7065, %v7066
        %v7068 = vrot.slane %v6780, 4
        %v7069 = vmax.f32 %v6780, %v7068
        %v7070 = vrot.slane %v7069, 2
        %v7071 = vmax.f32 %v7069, %v7070
        %v7072 = vrot.slane %v7071, 1
        %v7073 = vmax.f32 %v7071, %v7072
        %v7074 = vrot.slane %v6781, 4
        %v7075 = vmax.f32 %v6781, %v7074
        %v7076 = vrot.slane %v7075, 2
        %v7077 = vmax.f32 %v7075, %v7076
        %v7078 = vrot.slane %v7077, 1
        %v7079 = vmax.f32 %v7077, %v7078
        %v7080 = vsel %vm1057, %v6782, -inf
        %v7081 = vrot.slane %v7080, 4
        %v7082 = vmax.f32 %v7080, %v7081
        %v7083 = vrot.slane %v7082, 2
        %v7084 = vmax.f32 %v7082, %v7083
        %v7085 = vrot.slane %v7084, 1
        %v7086 = vmax.f32 %v7084, %v7085
        %s7087 = scalar_lea.vmem [#allocation4], 6
        %v7088 = vld [vmem:[%s7087] sm:$0x7]
        %v7090 = vperm.slane %v7088, 0
        %v7091 = vperm.slane %v7088, 1
        %v7092 = vperm.slane %v7088, 2
        %v7096 = vadd.f32 %v6788, %v7090
        %v7097 = vadd.f32 %v6794, %v7091
        %v7098 = vadd.f32 %v6801, %v7092
        %v7099 = vadd.f32 %v6807, %v7090
        %v7100 = vadd.f32 %v6813, %v7091
        %v7101 = vadd.f32 %v6820, %v7092
        %v7102 = vadd.f32 %v6826, %v7090
        %v7103 = vadd.f32 %v6832, %v7091
        %v7104 = vadd.f32 %v6839, %v7092
        %v7105 = vadd.f32 %v6845, %v7090
        %v7106 = vadd.f32 %v6851, %v7091
        %v7107 = vadd.f32 %v6858, %v7092
        %v7108 = vadd.f32 %v6864, %v7090
        %v7109 = vadd.f32 %v6870, %v7091
        %v7110 = vadd.f32 %v6877, %v7092
        %v7111 = vadd.f32 %v6883, %v7090
        %v7112 = vadd.f32 %v6889, %v7091
        %v7113 = vadd.f32 %v6896, %v7092
        %v7114 = vadd.f32 %v6902, %v7090
        %v7115 = vadd.f32 %v6908, %v7091
        %v7116 = vadd.f32 %v6915, %v7092
        %v7117 = vadd.f32 %v6921, %v7090
        %v7118 = vadd.f32 %v6927, %v7091
        %v7119 = vadd.f32 %v6934, %v7092
        %v7120 = vadd.f32 %v6940, %v7090
        %v7121 = vadd.f32 %v6946, %v7091
        %v7122 = vadd.f32 %v6953, %v7092
        %v7123 = vadd.f32 %v6959, %v7090
        %v7124 = vadd.f32 %v6965, %v7091
        %v7125 = vadd.f32 %v6972, %v7092
        %v7126 = vadd.f32 %v6978, %v7090
        %v7127 = vadd.f32 %v6984, %v7091
        %v7128 = vadd.f32 %v6991, %v7092
        %v7129 = vadd.f32 %v6997, %v7090
        %v7130 = vadd.f32 %v7003, %v7091
        %v7131 = vadd.f32 %v7010, %v7092
        %v7132 = vadd.f32 %v7016, %v7090
        %v7133 = vadd.f32 %v7022, %v7091
        %v7134 = vadd.f32 %v7029, %v7092
        %v7135 = vadd.f32 %v7035, %v7090
        %v7136 = vadd.f32 %v7041, %v7091
        %v7137 = vadd.f32 %v7048, %v7092
        %v7138 = vadd.f32 %v7054, %v7090
        %v7139 = vadd.f32 %v7060, %v7091
        %v7140 = vadd.f32 %v7067, %v7092
        %v7141 = vadd.f32 %v7073, %v7090
        %v7142 = vadd.f32 %v7079, %v7091
        %v7143 = vadd.f32 %v7086, %v7092
        %v7144 = vmax.f32 %v7096, 0.0
        %v7145 = vmax.f32 %v7097, 0.0
        %v7146 = vmax.f32 %v7098, 0.0
        %v7147 = vmax.f32 %v7099, 0.0
        %v7148 = vmax.f32 %v7100, 0.0
        %v7149 = vmax.f32 %v7101, 0.0
        %v7150 = vmax.f32 %v7102, 0.0
        %v7151 = vmax.f32 %v7103, 0.0
        %v7152 = vmax.f32 %v7104, 0.0
        %v7153 = vmax.f32 %v7105, 0.0
        %v7154 = vmax.f32 %v7106, 0.0
        %v7155 = vmax.f32 %v7107, 0.0
        %v7156 = vmax.f32 %v7108, 0.0
        %v7157 = vmax.f32 %v7109, 0.0
        %v7158 = vmax.f32 %v7110, 0.0
        %v7159 = vmax.f32 %v7111, 0.0
        %v7160 = vmax.f32 %v7112, 0.0
        %v7161 = vmax.f32 %v7113, 0.0
        %v7162 = vmax.f32 %v7114, 0.0
        %v7163 = vmax.f32 %v7115, 0.0
        %v7164 = vmax.f32 %v7116, 0.0
        %v7165 = vmax.f32 %v7117, 0.0
        %v7166 = vmax.f32 %v7118, 0.0
        %v7167 = vmax.f32 %v7119, 0.0
        %v7168 = vmax.f32 %v7120, 0.0
        %v7169 = vmax.f32 %v7121, 0.0
        %v7170 = vmax.f32 %v7122, 0.0
        %v7171 = vmax.f32 %v7123, 0.0
        %v7172 = vmax.f32 %v7124, 0.0
        %v7173 = vmax.f32 %v7125, 0.0
        %v7174 = vmax.f32 %v7126, 0.0
        %v7175 = vmax.f32 %v7127, 0.0
        %v7176 = vmax.f32 %v7128, 0.0
        %v7177 = vmax.f32 %v7129, 0.0
        %v7178 = vmax.f32 %v7130, 0.0
        %v7179 = vmax.f32 %v7131, 0.0
        %v7180 = vmax.f32 %v7132, 0.0
        %v7181 = vmax.f32 %v7133, 0.0
        %v7182 = vmax.f32 %v7134, 0.0
        %v7183 = vmax.f32 %v7135, 0.0
        %v7184 = vmax.f32 %v7136, 0.0
        %v7185 = vmax.f32 %v7137, 0.0
        %v7186 = vmax.f32 %v7138, 0.0
        %v7187 = vmax.f32 %v7139, 0.0
        %v7188 = vmax.f32 %v7140, 0.0
        %v7189 = vmax.f32 %v7141, 0.0
        %v7190 = vmax.f32 %v7142, 0.0
        %v7191 = vmax.f32 %v7143, 0.0
        %v7192 = vadd.f32 %v4128, %v7144
        %v7193 = vadd.f32 %v4129, %v7145
        %v7194 = vadd.f32 %v4130, %v7146
        %v7195 = vadd.f32 %v4131, %v7147
        %v7196 = vadd.f32 %v4132, %v7148
        %v7197 = vadd.f32 %v4133, %v7149
        %v7198 = vadd.f32 %v4134, %v7150
        %v7199 = vadd.f32 %v4135, %v7151
        %v7200 = vadd.f32 %v4136, %v7152
        %v7201 = vadd.f32 %v4137, %v7153
        %v7202 = vadd.f32 %v4138, %v7154
        %v7203 = vadd.f32 %v4139, %v7155
        %v7204 = vadd.f32 %v4140, %v7156
        %v7205 = vadd.f32 %v4141, %v7157
        %v7206 = vadd.f32 %v4142, %v7158
        %v7207 = vadd.f32 %v4143, %v7159
        %v7208 = vadd.f32 %v4144, %v7160
        %v7209 = vadd.f32 %v4145, %v7161
        %v7210 = vadd.f32 %v4146, %v7162
        %v7211 = vadd.f32 %v4147, %v7163
        %v7212 = vadd.f32 %v4148, %v7164
        %v7213 = vadd.f32 %v4149, %v7165
        %v7214 = vadd.f32 %v4150, %v7166
        %v7215 = vadd.f32 %v4151, %v7167
        %v7216 = vadd.f32 %v4152, %v7168
        %v7217 = vadd.f32 %v4153, %v7169
        %v7218 = vadd.f32 %v4154, %v7170
        %v7219 = vadd.f32 %v4155, %v7171
        %v7220 = vadd.f32 %v4156, %v7172
        %v7221 = vadd.f32 %v4157, %v7173
        %v7222 = vadd.f32 %v4158, %v7174
        %v7223 = vadd.f32 %v4159, %v7175
        %v7224 = vadd.f32 %v4160, %v7176
        %v7225 = vadd.f32 %v4161, %v7177
        %v7226 = vadd.f32 %v4162, %v7178
        %v7227 = vadd.f32 %v4163, %v7179
        %v7228 = vadd.f32 %v4164, %v7180
        %v7229 = vadd.f32 %v4165, %v7181
        %v7230 = vadd.f32 %v4166, %v7182
        %v7231 = vadd.f32 %v4167, %v7183
        %v7232 = vadd.f32 %v4168, %v7184
        %v7233 = vadd.f32 %v4169, %v7185
        %v7234 = vadd.f32 %v4170, %v7186
        %v7235 = vadd.f32 %v4171, %v7187
        %v7236 = vadd.f32 %v4172, %v7188
        %v7237 = vadd.f32 %v4173, %v7189
        %v7238 = vadd.f32 %v4174, %v7190
        %v7239 = vadd.f32 %v4175, %v7191
        %v7288 = vrot.slane %v7195, 7
        %vm7289 = vcmask 1041409
        %v7290 = vsel %vm7289, %v7288, %v7192
        %v7291 = vrot.slane %v7198, 6
        %vm7292 = vcmask 1042434
        %v7293 = vsel %vm7292, %v7291, %v7290
        %v7294 = vrot.slane %v7201, 5
        %vm7295 = vcmask 1043459
        %v7296 = vsel %vm7295, %v7294, %v7293
        %v7297 = vrot.slane %v7204, 4
        %vm7298 = vcmask 1044484
        %v7299 = vsel %vm7298, %v7297, %v7296
        %v7300 = vrot.slane %v7207, 3
        %vm7301 = vcmask 1045509
        %v7302 = vsel %vm7301, %v7300, %v7299
        %v7303 = vrot.slane %v7210, 2
        %vm7304 = vcmask 1046534
        %v7305 = vsel %vm7304, %v7303, %v7302
        %v7306 = vrot.slane %v7213, 1
        %vm7307 = vcmask 1047559
        %v7308 = vsel %vm7307, %v7306, %v7305
        %v7309 = vrot.slane %v7196, 7
        %v7310 = vsel %vm7289, %v7309, %v7193
        %v7311 = vrot.slane %v7199, 6
        %v7312 = vsel %vm7292, %v7311, %v7310
        %v7313 = vrot.slane %v7202, 5
        %v7314 = vsel %vm7295, %v7313, %v7312
        %v7315 = vrot.slane %v7205, 4
        %v7316 = vsel %vm7298, %v7315, %v7314
        %v7317 = vrot.slane %v7208, 3
        %v7318 = vsel %vm7301, %v7317, %v7316
        %v7319 = vrot.slane %v7211, 2
        %v7320 = vsel %vm7304, %v7319, %v7318
        %v7321 = vrot.slane %v7214, 1
        %v7322 = vsel %vm7307, %v7321, %v7320
        %v7323 = vrot.slane %v7197, 7
        %v7324 = vsel %vm7289, %v7323, %v7194
        %v7325 = vrot.slane %v7200, 6
        %v7326 = vsel %vm7292, %v7325, %v7324
        %v7327 = vrot.slane %v7203, 5
        %v7328 = vsel %vm7295, %v7327, %v7326
        %v7329 = vrot.slane %v7206, 4
        %v7330 = vsel %vm7298, %v7329, %v7328
        %v7331 = vrot.slane %v7209, 3
        %v7332 = vsel %vm7301, %v7331, %v7330
        %v7333 = vrot.slane %v7212, 2
        %v7334 = vsel %vm7304, %v7333, %v7332
        %v7335 = vrot.slane %v7215, 1
        %v7336 = vsel %vm7307, %v7335, %v7334
        %v7337 = vrot.slane %v7219, 7
        %v7338 = vsel %vm7289, %v7337, %v7216
        %v7339 = vrot.slane %v7222, 6
        %v7340 = vsel %vm7292, %v7339, %v7338
        %v7341 = vrot.slane %v7225, 5
        %v7342 = vsel %vm7295, %v7341, %v7340
        %v7343 = vrot.slane %v7228, 4
        %v7344 = vsel %vm7298, %v7343, %v7342
        %v7345 = vrot.slane %v7231, 3
        %v7346 = vsel %vm7301, %v7345, %v7344
        %v7347 = vrot.slane %v7234, 2
        %v7348 = vsel %vm7304, %v7347, %v7346
        %v7349 = vrot.slane %v7237, 1
        %v7350 = vsel %vm7307, %v7349, %v7348
        %v7351 = vrot.slane %v7220, 7
        %v7352 = vsel %vm7289, %v7351, %v7217
        %v7353 = vrot.slane %v7223, 6
        %v7354 = vsel %vm7292, %v7353, %v7352
        %v7355 = vrot.slane %v7226, 5
        %v7356 = vsel %vm7295, %v7355, %v7354
        %v7357 = vrot.slane %v7229, 4
        %v7358 = vsel %vm7298, %v7357, %v7356
        %v7359 = vrot.slane %v7232, 3
        %v7360 = vsel %vm7301, %v7359, %v7358
        %v7361 = vrot.slane %v7235, 2
        %v7362 = vsel %vm7304, %v7361, %v7360
        %v7363 = vrot.slane %v7238, 1
        %v7364 = vsel %vm7307, %v7363, %v7362
        %v7365 = vrot.slane %v7221, 7
        %v7366 = vsel %vm7289, %v7365, %v7218
        %v7367 = vrot.slane %v7224, 6
        %v7368 = vsel %vm7292, %v7367, %v7366
        %v7369 = vrot.slane %v7227, 5
        %v7370 = vsel %vm7295, %v7369, %v7368
        %v7371 = vrot.slane %v7230, 4
        %v7372 = vsel %vm7298, %v7371, %v7370
        %v7373 = vrot.slane %v7233, 3
        %v7374 = vsel %vm7301, %v7373, %v7372
        %v7375 = vrot.slane %v7236, 2
        %v7376 = vsel %vm7304, %v7375, %v7374
        %v7377 = vrot.slane %v7239, 1
        %v7378 = vsel %vm7307, %v7377, %v7376
        %7385 = vst [vmem:[%s211] sm:$0xff] %v7308
        %7386 = vst [vmem:[%s211 + $0x8] sm:$0xff] %v7322
        %7387 = vst.msk [vmem:[%s211 + $0x10] sm:$0xff] %vm1057, %v7336
        %7388 = vst [vmem:[%s211 + $0x18] sm:$0xff] %v7350
        %7389 = vst [vmem:[%s211 + $0x20] sm:$0xff] %v7364
        %7390 = vst.msk [vmem:[%s211 + $0x28] sm:$0xff] %vm1057, %v7378
        %s7391 = smul.u32 2, %s16
        %p7392 = scmp.lt.s32.totalorder %s7391, 3
        %s7393 = scalar_select %p7392, %s7391, 3
        %s7394 = smul.addr %s7393, 3
        %s7395 = smul.addr %s7394, 8
        %s7396 = scalar_lea.vmem %s3, %s7395
        // Predicated region
        $region41: #{rl_cnn_pallas.1} parent=31 // pred_check
          %p7397 = pneg %p102
        $region42: #{rl_cnn_pallas.1} parent=31 // pred_check_branch
          %7399 = sbr.rel (%p7397) target = $region44
        $region43: #{rl_cnn_pallas.1} parent=31 // pred_region
          %s7400 = smul.u32 2, %s16
        $region44: #{rl_cnn_pallas.1} parent=31 // pred_fallthru
          _
      $region32: #{rl_cnn_pallas.1} parent=5 // pred_fallthru
        _
      %p7401 = scmp.le.s32.totalorder 2, %s11
      // Predicated region
      $region45: #{rl_cnn_pallas.1} parent=5 // pred_check
        %p7402 = pneg %p7401
      $region46: #{rl_cnn_pallas.1} parent=5 // pred_check_branch
        %7404 = sbr.rel (%p7402) target = $region48
      $region47: #{rl_cnn_pallas.1} parent=5 // pred_region
        %s7405 = ssub.s32 %s11, 2
        // Predicated region
        $region49: #{rl_cnn_pallas.1} parent=47 // pred_check
          %p7406 = pneg %p108
        $region50: #{rl_cnn_pallas.1} parent=47 // pred_check_branch
          %7408 = sbr.rel (%p7406) target = $region52
        $region51: #{rl_cnn_pallas.1} parent=47 // pred_region
          %s7409 = smul.u32 2, %s17
          %p7410 = scmp.lt.s32.totalorder %s7409, 3
          %s7411 = scalar_select %p7410, %s7409, 3
          %s7412 = smul.addr %s7411, 3
          %s7413 = smul.addr %s7412, 8
          %s7414 = scalar_lea.vmem %s3, %s7413
        $region52: #{rl_cnn_pallas.1} parent=47 // pred_fallthru
          _
      $region48: #{rl_cnn_pallas.1} parent=5 // pred_fallthru
        _
    $region6: #{rl_cnn_pallas.1} parent=1 // loop_footer
      %s15 = sadd.s32 1, %s11
    $region7: #{rl_cnn_pallas.1} parent=1 // loop_footer_branch
      %10 = sbr.rel target = $region3
    $region8: #{rl_cnn_pallas.1} parent=1 // loop_exit
      _
    %7415 = vsyncpa [#allocation3], 1
    %s7416 = scalar_lea.sflag [#allocation3], 1
    %7417 = vsyncpa %s7416, 1
    %7418 = vsyncpa [#allocation5], 1

</llo_original>
